<compile_context>
chip_gen: v6e
topology: v6e:2x2x1
jax: 0.10.0
libtpu: 0.0.40
codegen_flags: <defaults>
</compile_context>

<pallas_src>
from functools import partial

import numpy as np
import jax
import jax.numpy as jnp
from jax.experimental import pallas as pl
from jax.experimental.pallas import tpu as pltpu


_KC = 2          # number of channel chunks in the reduction grid
_NC_PAD = 128    # lane-dense classifier output width (real classes sliced later)


def _round_up(x, m):
    return ((x + m - 1) // m) * m


# ----------------------------------------------------------------------------
# Fused Pallas kernel:
#   superpixel mean pool -> MLP(Cp->1024->1024->D) -> classifier -> softmax
#   + cosine affinity of all superpixel pairs
# streamed over channel chunks of size tk (grid axis k).
# ----------------------------------------------------------------------------
def _wesup_fused_kernel(a_ref, sz_ref, f_ref, w1_ref, b1_ref, w2_ref, b2_ref,
                        w3_ref, b3_ref, wc_ref, bc_ref,
                        preds_ref, aff_ref,
                        acc1_ref, gram_ref):
    """Refs:
      a_ref  : (Mp, HW)   bf16  0/1 assignment matrix          (constant over k)
      sz_ref : (Mp, 1)    f32   superpixel pixel counts        (constant over k)
      f_ref  : (HW, tk)   bf16  pixel-feature channel chunk    (streamed over k)
      w1_ref : (tk, H1)   bf16  layer-1 weight chunk           (streamed over k)
      b1/w2/b2/w3/b3/wc/bc : remaining MLP + classifier params (constant over k)
      preds_ref: (Mp, 128) f32  softmax probs (padded lanes are garbage-by-design)
      aff_ref  : (Mp, Mp)  f32  cosine affinity (padded rows/cols are 0)
      acc1_ref : (Mp, H1)  f32  layer-1 pre-activation accumulator
      gram_ref : (Mp, Mp)  f32  sp_feat @ sp_feat.T accumulator
    """
    k = pl.program_id(0)

    @pl.when(k == 0)
    def _init():
        acc1_ref[...] = jnp.zeros_like(acc1_ref)
        gram_ref[...] = jnp.zeros_like(gram_ref)

    # --- superpixel mean pooling for this channel chunk (MXU, f32 acc) -------
    pooled = jnp.dot(a_ref[...], f_ref[...], preferred_element_type=jnp.float32)
    sp_chunk = pooled / sz_ref[...]          # exact f32 mean, (Mp, tk)

    # --- cosine-affinity gram partial (contract the channel chunk) -----------
    gram_ref[...] += jax.lax.dot_general(
        sp_chunk, sp_chunk, (((1,), (1,)), ((), ())),
        preferred_element_type=jnp.float32)

    # --- layer-1 partial contraction ------------------------------------------
    acc1_ref[...] += jnp.dot(sp_chunk.astype(jnp.bfloat16), w1_ref[...],
                             preferred_element_type=jnp.float32)

    @pl.when(k == pl.num_programs(0) - 1)
    def _finalize():
        # MLP tail: bf16 MXU inputs, f32 accumulation, ReLU on the VPU.
        h = jnp.maximum(acc1_ref[...] + b1_ref[...], 0.0)
        h = jnp.dot(h.astype(jnp.bfloat16), w2_ref[...],
                    preferred_element_type=jnp.float32) + b2_ref[...]
        h = jnp.maximum(h, 0.0)
        h = jnp.dot(h.astype(jnp.bfloat16), w3_ref[...],
                    preferred_element_type=jnp.float32) + b3_ref[...]
        h = jnp.maximum(h, 0.0)

        # Classifier + exact softmax (padded lanes carry bias -1e30 -> exp == 0).
        logits = jnp.dot(h.astype(jnp.bfloat16), wc_ref[...],
                         preferred_element_type=jnp.float32) + bc_ref[...]
        m = jnp.max(logits, axis=-1, keepdims=True)
        e = jnp.exp(logits - m)
        preds_ref[...] = e / jnp.sum(e, axis=-1, keepdims=True)

        # Cosine affinity: aff[i,j] = gram[i,j] / sqrt(gram[i,i]*gram[j,j]).
        # Diagonal extracted with a broadcasted-iota mask (no transpose/gather).
        mp = gram_ref.shape[0]
        g = gram_ref[...]
        eye = (jax.lax.broadcasted_iota(jnp.int32, (mp, mp), 0) ==
               jax.lax.broadcasted_iota(jnp.int32, (mp, mp), 1))
        diag = jnp.where(eye, g, 0.0)
        nr = jnp.sum(diag, axis=1, keepdims=True)      # (Mp, 1)  row |x_i|^2
        nc = jnp.sum(diag, axis=0, keepdims=True)      # (1, Mp)  col |x_j|^2
        # eps clamp keeps zero-padded superpixel rows at affinity 0 (no NaN).
        aff_ref[...] = g * jax.lax.rsqrt(jnp.maximum(nr * nc, 1e-24))


def _fused_pallas_call(A, sizes, F, w1, b1, w2, b2, w3, b3, wc, bc,
                       *, kc, tk, vmem_limit_bytes=32 * 1024 * 1024):
    Mp, HW = A.shape
    Cp = F.shape[1]
    H1 = w1.shape[1]
    H2 = w2.shape[1]
    D = w3.shape[1]
    NCp = wc.shape[1]
    assert Cp == kc * tk and tk % 128 == 0

    def const(shape):
        return pl.BlockSpec(shape, lambda k, _n=len(shape): (0,) * _n)

    return pl.pallas_call(
        _wesup_fused_kernel,
        out_shape=(jax.ShapeDtypeStruct((Mp, NCp), jnp.float32),   # softmax probs
                   jax.ShapeDtypeStruct((Mp, Mp), jnp.float32)),   # cosine affinity
        grid_spec=pltpu.PrefetchScalarGridSpec(
            num_scalar_prefetch=0,
            grid=(kc,),
            in_specs=[
                const((Mp, HW)),                              # A (0/1)
                const((Mp, 1)),                               # superpixel sizes
                pl.BlockSpec((HW, tk), lambda k: (0, k)),     # F channel chunk
                pl.BlockSpec((tk, H1), lambda k: (k, 0)),     # w1 chunk
                const((1, H1)),                               # b1
                const((H1, H2)), const((1, H2)),              # w2, b2
                const((H2, D)), const((1, D)),                # w3, b3
                const((D, NCp)), const((1, NCp)),             # wc, bc (padded)
            ],
            out_specs=(const((Mp, NCp)), const((Mp, Mp))),
            scratch_shapes=[pltpu.VMEM((Mp, H1), jnp.float32),   # layer-1 acc
                            pltpu.VMEM((Mp, Mp), jnp.float32)],  # gram acc
        ),
        compiler_params=pltpu.CompilerParams(
            dimension_semantics=("arbitrary",),      # k is a reduction axis
            vmem_limit_bytes=vmem_limit_bytes,
        ),
    )(A, sizes, F, w1, b1, w2, b2, w3, b3, wc, bc)


# ----------------------------------------------------------------------------
# Device-side wrapper: all padding / casting fused around the pallas_call in
# one jitted dispatch.
# ----------------------------------------------------------------------------
@jax.jit
def _device_forward(A, sizes, fmaps, w1, b1, w2, b2, w3, b3, wc, bc):
    C_fm, H, W = fmaps.shape
    HW = H * W
    H1 = w1.shape[1]
    D = w3.shape[1]
    n_cls = wc.shape[1]

    tk = _round_up(-(-C_fm // _KC), 128)     # lane-dense chunk width
    C_pad = _KC * tk

    # channels-last pixel features, lane-padded, bf16 (f32 MXU accumulation).
    F_pix = fmaps.reshape(C_fm, HW).T.astype(jnp.bfloat16)        # (HW, C_fm)
    F_pad = jnp.zeros((HW, C_pad), jnp.bfloat16).at[:, :C_fm].set(F_pix)
    w1_p = jnp.zeros((C_pad, H1), jnp.bfloat16).at[:C_fm, :].set(
        w1.astype(jnp.bfloat16))
    wc_p = jnp.zeros((D, _NC_PAD), jnp.bfloat16).at[:, :n_cls].set(
        wc.astype(jnp.bfloat16))
    bc_p = jnp.full((1, _NC_PAD), -1e30, jnp.float32).at[0, :n_cls].set(
        bc.astype(jnp.float32))

    return _fused_pallas_call(
        A.astype(jnp.bfloat16), sizes.astype(jnp.float32),
        F_pad, w1_p, b1.reshape(1, -1).astype(jnp.float32),
        w2.astype(jnp.bfloat16), b2.reshape(1, -1).astype(jnp.float32),
        w3.astype(jnp.bfloat16), b3.reshape(1, -1).astype(jnp.float32),
        wc_p, bc_p, kc=_KC, tk=tk)


@partial(jax.jit, static_argnums=(3, 4))
def _gather_preds(preds_pad, l_idx, u_idx, n_sp, n_cls):
    """Single dispatch for the post-kernel slice + labeled/unlabeled gathers."""
    p = preds_pad[:n_sp, :n_cls]
    return jnp.take(p, l_idx, axis=0), jnp.take(p, u_idx, axis=0)


# ----------------------------------------------------------------------------
# Host-side glue mirroring WESUP.forward (phase='train')
# ----------------------------------------------------------------------------
def build_superpixels(H, W, gh, gw):
    """Stand-in for SLIC: regular grid of superpixels labeled 1..gh*gw."""
    sp = np.zeros((H, W), dtype=np.int32)
    bh, bw = H // gh, W // gw
    for i in range(gh):
        for j in range(gw):
            sp[i * bh:(i + 1) * bh, j * bw:(j + 1) * bw] = i * gw + j + 1
    return sp


def init_params(key, d_in=2112, d_hidden=1024, D=32, n_cls=2):
    """PyTorch-Linear-style uniform init, weights stored (in, out)."""
    ks = jax.random.split(key, 8)

    def lin(kw, kb, fan_in, fan_out):
        bound = 1.0 / np.sqrt(fan_in)
        w = jax.random.uniform(kw, (fan_in, fan_out), jnp.float32, -bound, bound)
        b = jax.random.uniform(kb, (fan_out,), jnp.float32, -bound, bound)
        return w, b

    w1, b1 = lin(ks[0], ks[1], d_in, d_hidden)
    w2, b2 = lin(ks[2], ks[3], d_hidden, d_hidden)
    w3, b3 = lin(ks[4], ks[5], d_hidden, D)
    wc, bc = lin(ks[6], ks[7], D, n_cls)
    return (w1, b1, w2, b2, w3, b3, wc, bc)


def wesup_forward_train(feature_maps, y, sp, params):
    """feature_maps: (C_fm, H, W) f32;  y: (H, W) int in {0,1,2};  sp: (H, W) int (1..N_sp)."""
    C_fm, H, W = feature_maps.shape
    sp = np.asarray(sp)
    y_flat = np.asarray(y).reshape(-1).astype(np.int64)
    n_sp = int(sp.max())
    HW = H * W
    w1, b1, w2, b2, w3, b3, wc, bc = params
    n_cls = wc.shape[1]

    # superpixel rows padded to a multiple of 16 (bf16 sublane packing).
    M_pad = _round_up(n_sp, 16)

    # ---- 0/1 assignment matrix + pixel counts (host build, vectorized) ------
    flat = sp.reshape(-1).astype(np.int64)
    sp_sizes = np.bincount(flat, minlength=n_sp + 1)[1:].astype(np.float32)
    A = np.zeros((M_pad, HW), dtype=np.float32)
    A[flat - 1, np.arange(HW)] = 1.0
    sizes = np.ones((M_pad, 1), dtype=np.float32)      # padded rows: size 1 (no NaN)
    sizes[:n_sp, 0] = sp_sizes

    # ---- dispatch the fused device forward (async; overlaps host voting) ----
    preds_pad, aff = _device_forward(
        jnp.asarray(A), jnp.asarray(sizes), jnp.asarray(feature_maps),
        w1, b1, w2, b2, w3, b3, wc, bc)

    # ---- per-superpixel weak-label voting (host numpy, data-dependent) ------
    counts = np.zeros((n_sp, 3), dtype=np.int64)
    np.add.at(counts, (flat - 1, y_flat), 1)
    ones_c, twos_c = counts[:, 1], counts[:, 2]
    labs = counts.argmax(axis=1)
    # tie-break exactly as in the reference: if argmax==0, compare ones vs twos
    labs = np.where((labs == 0) & (twos_c > ones_c), 2, labs)
    labs = np.where((labs == 0) & (ones_c > twos_c), 1, labs)
    labs = labs.astype(np.int64)

    labeled_mask = labs != 0
    l_idx = np.nonzero(labeled_mask)[0]
    u_idx = np.nonzero(~labeled_mask)[0]
    l_label = labs[l_idx].copy()
    u_label = labs[u_idx].copy()

    # ---- cosine-affinity label propagation (tiny matrix pulled to host) -----
    if u_idx.size > 0 and l_idx.size > 0:
        aff_np = np.asarray(aff)                        # blocks here (after voting)
        sub = aff_np[np.ix_(u_idx, l_idx)]              # (Nu, Nl)
        m_j = sub.argmax(axis=1)
        m_v = sub[np.arange(u_idx.size), m_j]
        prop = m_v >= 0.97
        u_label[prop] = l_label[m_j[prop]]

    # ---- split predictions on device: one fused dispatch ---------------------
    l_pred, u_pred = _gather_preds(
        preds_pad,
        jnp.asarray(l_idx.astype(np.int32)),
        jnp.asarray(u_idx.astype(np.int32)),
        n_sp, n_cls)

    return (l_pred, jnp.asarray(l_label), u_pred, jnp.asarray(u_label))


# ----------------------------------------------------------------------------
if __name__ == "__main__":
    H, W = 16, 16
    C_FM = 2112      # hard-coded MLP input dim in the reference module
    D = 32

    key = jax.random.PRNGKey(0)
    k_fm, k_params = jax.random.split(key)

    # synthetic stand-in for VGG16 backbone + side-conv hooks (see TODO above)
    feature_maps = jax.random.normal(k_fm, (C_FM, H, W), dtype=jnp.float32) * 0.5

    # synthetic weak labels y in {0, 1, 2}: top-left -> 1, top-right -> 2, rest 0
    y = np.zeros((H, W), dtype=np.int32)
    y[0:H // 2, 0:W // 2] = 1
    y[0:H // 2, W // 2:] = 2

    # synthetic SLIC replacement: 4x4 grid of superpixels (ids 1..16)
    sp = build_superpixels(H, W, 4, 4)

    params = init_params(k_params, d_in=C_FM, d_hidden=1024, D=D, n_cls=2)

    l_pred, l_label, u_pred, u_label = wesup_forward_train(feature_maps, y, sp, params)
    jax.block_until_ready((l_pred, u_pred))

    assert l_pred.shape[1] == 2 and u_pred.shape[1] == 2
    assert l_pred.shape[0] == l_label.shape[0]
    assert u_pred.shape[0] == u_label.shape[0]
    lp = np.asarray(l_pred)
    up = np.asarray(u_pred)
    assert np.all(np.isfinite(lp)) and np.all(np.isfinite(up))
    # exact softmax divide -> rows sum to 1 within float rounding
    assert np.allclose(lp.sum(-1), 1.0, atol=1e-3)
    assert np.allclose(up.sum(-1), 1.0, atol=1e-3)

    print("KERNEL_OK")
</pallas_src>

<mosaic_0001>
module attributes {stable_mosaic.version = 11 : i64} {
  func.func @_wesup_fused_kernel(%arg0: i32, %arg1: memref<16x256xbf16, #tpu.memory_space<vmem>>, %arg2: memref<16x1xf32, #tpu.memory_space<vmem>>, %arg3: memref<256x1152xbf16, #tpu.memory_space<vmem>>, %arg4: memref<1152x1024xbf16, #tpu.memory_space<vmem>>, %arg5: memref<1x1024xf32, #tpu.memory_space<vmem>>, %arg6: memref<1024x1024xbf16, #tpu.memory_space<vmem>>, %arg7: memref<1x1024xf32, #tpu.memory_space<vmem>>, %arg8: memref<1024x32xbf16, #tpu.memory_space<vmem>>, %arg9: memref<1x32xf32, #tpu.memory_space<vmem>>, %arg10: memref<32x128xbf16, #tpu.memory_space<vmem>>, %arg11: memref<1x128xf32, #tpu.memory_space<vmem>>, %arg12: memref<16x128xf32, #tpu.memory_space<vmem>>, %arg13: memref<16x16xf32, #tpu.memory_space<vmem>>, %arg14: memref<16x1024xf32, #tpu.memory_space<vmem>>, %arg15: memref<16x16xf32, #tpu.memory_space<vmem>>) attributes {dimension_semantics = [#tpu.dimension_semantics<arbitrary>], iteration_bounds = array<i64: 2>, scalar_prefetch = 0 : i64, scratch_operands = 2 : i64, tpu.core_type = #tpu.core_type<tc>, window_params = [{pipeline_mode = #tpu.pipeline_mode<synchronous>, transform_indices = @transform_0, window_bounds = array<i64: 16, 256>}, {pipeline_mode = #tpu.pipeline_mode<synchronous>, transform_indices = @transform_1, window_bounds = array<i64: 16, 1>}, {transform_indices = @transform_2, window_bounds = array<i64: 256, 1152>}, {transform_indices = @transform_3, window_bounds = array<i64: 1152, 1024>}, {pipeline_mode = #tpu.pipeline_mode<synchronous>, transform_indices = @transform_4, window_bounds = array<i64: 1, 1024>}, {pipeline_mode = #tpu.pipeline_mode<synchronous>, transform_indices = @transform_5, window_bounds = array<i64: 1024, 1024>}, {pipeline_mode = #tpu.pipeline_mode<synchronous>, transform_indices = @transform_6, window_bounds = array<i64: 1, 1024>}, {pipeline_mode = #tpu.pipeline_mode<synchronous>, transform_indices = @transform_7, window_bounds = array<i64: 1024, 32>}, {pipeline_mode = #tpu.pipeline_mode<synchronous>, transform_indices = @transform_8, window_bounds = array<i64: 1, 32>}, {pipeline_mode = #tpu.pipeline_mode<synchronous>, transform_indices = @transform_9, window_bounds = array<i64: 32, 128>}, {pipeline_mode = #tpu.pipeline_mode<synchronous>, transform_indices = @transform_10, window_bounds = array<i64: 1, 128>}, {pipeline_mode = #tpu.pipeline_mode<synchronous>, transform_indices = @transform_11, window_bounds = array<i64: 16, 128>}, {pipeline_mode = #tpu.pipeline_mode<synchronous>, transform_indices = @transform_12, window_bounds = array<i64: 16, 16>}]} {
    %c0_i32 = arith.constant 0 : i32
    %0 = arith.cmpi eq, %arg0, %c0_i32 : i32
    %1 = arith.extui %0 : i1 to i32
    %c0_i32_0 = arith.constant 0 : i32
    %2 = arith.cmpi ne, %1, %c0_i32_0 : i32
    scf.if %2 {
      %cst_19 = arith.constant 0.000000e+00 : f32
      %22 = vector.broadcast %cst_19 : f32 to vector<16x1024xf32>
      %c0_20 = arith.constant 0 : index
      %c0_21 = arith.constant 0 : index
      %23 = vector.load %arg14[%c0_20, %c0_21] : memref<16x1024xf32, #tpu.memory_space<vmem>>, vector<16x1024xf32>
      tpu.vector_store %arg14[%c0_20, %c0_21], %22 {strides = array<i32>} : memref<16x1024xf32, #tpu.memory_space<vmem>>, vector<16x1024xf32>,
      %cst_22 = arith.constant 0.000000e+00 : f32
      %24 = vector.broadcast %cst_22 : f32 to vector<16x16xf32>
      %c0_23 = arith.constant 0 : index
      %c0_24 = arith.constant 0 : index
      %25 = vector.load %arg15[%c0_23, %c0_24] : memref<16x16xf32, #tpu.memory_space<vmem>>, vector<16x16xf32>
      tpu.vector_store %arg15[%c0_23, %c0_24], %24 {strides = array<i32>} : memref<16x16xf32, #tpu.memory_space<vmem>>, vector<16x16xf32>,
    } else {
    }
    %c0 = arith.constant 0 : index
    %c0_1 = arith.constant 0 : index
    %3 = vector.load %arg1[%c0, %c0_1] : memref<16x256xbf16, #tpu.memory_space<vmem>>, vector<16x256xbf16>
    %c0_2 = arith.constant 0 : index
    %c0_3 = arith.constant 0 : index
    %4 = vector.load %arg3[%c0_2, %c0_3] : memref<256x1152xbf16, #tpu.memory_space<vmem>>, vector<256x1152xbf16>
    %cst = arith.constant dense<0.000000e+00> : vector<16x1152xf32>
    %5 = tpu.matmul %3, %4, %cst {dimension_numbers = #tpu.dot_dimension_numbers<[1], [0], [0], [1], [0, 0, 1, 1], [], []>} : vector<16x256xbf16>, vector<256x1152xbf16>, vector<16x1152xf32> -> vector<16x1152xf32>
    %c0_4 = arith.constant 0 : index
    %c0_5 = arith.constant 0 : index
    %6 = vector.load %arg2[%c0_4, %c0_5] : memref<16x1xf32, #tpu.memory_space<vmem>>, vector<16x1xf32>
    %7 = vector.broadcast %6 : vector<16x1xf32> to vector<16x1152xf32>
    %8 = arith.divf %5, %7 : vector<16x1152xf32>
    %c0_6 = arith.constant 0 : index
    %c0_7 = arith.constant 0 : index
    %9 = vector.load %arg15[%c0_6, %c0_7] : memref<16x16xf32, #tpu.memory_space<vmem>>, vector<16x16xf32>
    %cst_8 = arith.constant dense<0.000000e+00> : vector<16x16xf32>
    %10 = tpu.matmul %8, %8, %cst_8 {dimension_numbers = #tpu.dot_dimension_numbers<[1], [1], [0], [0], [0, 0, 1, 0], [], []>} : vector<16x1152xf32>, vector<16x1152xf32>, vector<16x16xf32> -> vector<16x16xf32>
    %11 = arith.addf %9, %10 : vector<16x16xf32>
    %c0_9 = arith.constant 0 : index
    %c0_10 = arith.constant 0 : index
    %12 = vector.load %arg15[%c0_9, %c0_10] : memref<16x16xf32, #tpu.memory_space<vmem>>, vector<16x16xf32>
    tpu.vector_store %arg15[%c0_9, %c0_10], %11 {strides = array<i32>} : memref<16x16xf32, #tpu.memory_space<vmem>>, vector<16x16xf32>,
    %c0_11 = arith.constant 0 : index
    %c0_12 = arith.constant 0 : index
    %13 = vector.load %arg14[%c0_11, %c0_12] : memref<16x1024xf32, #tpu.memory_space<vmem>>, vector<16x1024xf32>
    %14 = arith.truncf %8 : vector<16x1152xf32> to vector<16x1152xbf16>
    %c0_13 = arith.constant 0 : index
    %c0_14 = arith.constant 0 : index
    %15 = vector.load %arg4[%c0_13, %c0_14] : memref<1152x1024xbf16, #tpu.memory_space<vmem>>, vector<1152x1024xbf16>
    %cst_15 = arith.constant dense<0.000000e+00> : vector<16x1024xf32>
    %16 = tpu.matmul %14, %15, %cst_15 {dimension_numbers = #tpu.dot_dimension_numbers<[1], [0], [0], [1], [0, 0, 1, 1], [], []>} : vector<16x1152xbf16>, vector<1152x1024xbf16>, vector<16x1024xf32> -> vector<16x1024xf32>
    %17 = arith.addf %13, %16 : vector<16x1024xf32>
    %c0_16 = arith.constant 0 : index
    %c0_17 = arith.constant 0 : index
    %18 = vector.load %arg14[%c0_16, %c0_17] : memref<16x1024xf32, #tpu.memory_space<vmem>>, vector<16x1024xf32>
    tpu.vector_store %arg14[%c0_16, %c0_17], %17 {strides = array<i32>} : memref<16x1024xf32, #tpu.memory_space<vmem>>, vector<16x1024xf32>,
    %c1_i32 = arith.constant 1 : i32
    %19 = arith.cmpi eq, %arg0, %c1_i32 : i32
    %20 = arith.extui %19 : i1 to i32
    %c0_i32_18 = arith.constant 0 : i32
    %21 = arith.cmpi ne, %20, %c0_i32_18 : i32
    scf.if %21 {
      %c0_19 = arith.constant 0 : index
      %c0_20 = arith.constant 0 : index
      %22 = vector.load %arg14[%c0_19, %c0_20] : memref<16x1024xf32, #tpu.memory_space<vmem>>, vector<16x1024xf32>
      %c0_21 = arith.constant 0 : index
      %c0_22 = arith.constant 0 : index
      %23 = vector.load %arg5[%c0_21, %c0_22] : memref<1x1024xf32, #tpu.memory_space<vmem>>, vector<1x1024xf32>
      %24 = vector.broadcast %23 : vector<1x1024xf32> to vector<16x1024xf32>
      %25 = arith.addf %22, %24 : vector<16x1024xf32>
      %cst_23 = arith.constant 0.000000e+00 : f32
      %26 = vector.broadcast %cst_23 : f32 to vector<16x1024xf32>
      %27 = arith.maximumf %25, %26 : vector<16x1024xf32>
      %28 = arith.truncf %27 : vector<16x1024xf32> to vector<16x1024xbf16>
      %c0_24 = arith.constant 0 : index
      %c0_25 = arith.constant 0 : index
      %29 = vector.load %arg6[%c0_24, %c0_25] : memref<1024x1024xbf16, #tpu.memory_space<vmem>>, vector<1024x1024xbf16>
      %cst_26 = arith.constant dense<0.000000e+00> : vector<16x1024xf32>
      %30 = tpu.matmul %28, %29, %cst_26 {dimension_numbers = #tpu.dot_dimension_numbers<[1], [0], [0], [1], [0, 0, 1, 1], [], []>} : vector<16x1024xbf16>, vector<1024x1024xbf16>, vector<16x1024xf32> -> vector<16x1024xf32>
      %c0_27 = arith.constant 0 : index
      %c0_28 = arith.constant 0 : index
      %31 = vector.load %arg7[%c0_27, %c0_28] : memref<1x1024xf32, #tpu.memory_space<vmem>>, vector<1x1024xf32>
      %32 = vector.broadcast %31 : vector<1x1024xf32> to vector<16x1024xf32>
      %33 = arith.addf %30, %32 : vector<16x1024xf32>
      %cst_29 = arith.constant 0.000000e+00 : f32
      %34 = vector.broadcast %cst_29 : f32 to vector<16x1024xf32>
      %35 = arith.maximumf %33, %34 : vector<16x1024xf32>
      %36 = arith.truncf %35 : vector<16x1024xf32> to vector<16x1024xbf16>
      %c0_30 = arith.constant 0 : index
      %c0_31 = arith.constant 0 : index
      %37 = vector.load %arg8[%c0_30, %c0_31] : memref<1024x32xbf16, #tpu.memory_space<vmem>>, vector<1024x32xbf16>
      %cst_32 = arith.constant dense<0.000000e+00> : vector<16x32xf32>
      %38 = tpu.matmul %36, %37, %cst_32 {dimension_numbers = #tpu.dot_dimension_numbers<[1], [0], [0], [1], [0, 0, 1, 1], [], []>} : vector<16x1024xbf16>, vector<1024x32xbf16>, vector<16x32xf32> -> vector<16x32xf32>
      %c0_33 = arith.constant 0 : index
      %c0_34 = arith.constant 0 : index
      %39 = vector.load %arg9[%c0_33, %c0_34] : memref<1x32xf32, #tpu.memory_space<vmem>>, vector<1x32xf32>
      %40 = vector.broadcast %39 : vector<1x32xf32> to vector<16x32xf32>
      %41 = arith.addf %38, %40 : vector<16x32xf32>
      %cst_35 = arith.constant 0.000000e+00 : f32
      %42 = vector.broadcast %cst_35 : f32 to vector<16x32xf32>
      %43 = arith.maximumf %41, %42 : vector<16x32xf32>
      %44 = arith.truncf %43 : vector<16x32xf32> to vector<16x32xbf16>
      %c0_36 = arith.constant 0 : index
      %c0_37 = arith.constant 0 : index
      %45 = vector.load %arg10[%c0_36, %c0_37] : memref<32x128xbf16, #tpu.memory_space<vmem>>, vector<32x128xbf16>
      %cst_38 = arith.constant dense<0.000000e+00> : vector<16x128xf32>
      %46 = tpu.matmul %44, %45, %cst_38 {dimension_numbers = #tpu.dot_dimension_numbers<[1], [0], [0], [1], [0, 0, 1, 1], [], []>} : vector<16x32xbf16>, vector<32x128xbf16>, vector<16x128xf32> -> vector<16x128xf32>
      %c0_39 = arith.constant 0 : index
      %c0_40 = arith.constant 0 : index
      %47 = vector.load %arg11[%c0_39, %c0_40] : memref<1x128xf32, #tpu.memory_space<vmem>>, vector<1x128xf32>
      %48 = vector.broadcast %47 : vector<1x128xf32> to vector<16x128xf32>
      %49 = arith.addf %46, %48 : vector<16x128xf32>
      %cst_41 = arith.constant dense<0xFF800000> : vector<16xf32>
      %50 = vector.multi_reduction <maximumf>, %49, %cst_41 [1] : vector<16x128xf32> to vector<16xf32>
      %51 = vector.shape_cast %50 : vector<16xf32> to vector<16x1xf32>
      %52 = vector.broadcast %51 : vector<16x1xf32> to vector<16x128xf32>
      %53 = arith.subf %49, %52 : vector<16x128xf32>
      %54 = math.exp %53 : vector<16x128xf32>
      %cst_42 = arith.constant dense<0.000000e+00> : vector<16xf32>
      %55 = vector.multi_reduction <add>, %54, %cst_42 [1] : vector<16x128xf32> to vector<16xf32>
      %56 = vector.shape_cast %55 : vector<16xf32> to vector<16x1xf32>
      %57 = vector.broadcast %56 : vector<16x1xf32> to vector<16x128xf32>
      %58 = arith.divf %54, %57 : vector<16x128xf32>
      %c0_43 = arith.constant 0 : index
      %c0_44 = arith.constant 0 : index
      %59 = vector.load %arg12[%c0_43, %c0_44] : memref<16x128xf32, #tpu.memory_space<vmem>>, vector<16x128xf32>
      tpu.vector_store %arg12[%c0_43, %c0_44], %58 {strides = array<i32>} : memref<16x128xf32, #tpu.memory_space<vmem>>, vector<16x128xf32>,
      %c0_45 = arith.constant 0 : index
      %c0_46 = arith.constant 0 : index
      %60 = vector.load %arg15[%c0_45, %c0_46] : memref<16x16xf32, #tpu.memory_space<vmem>>, vector<16x16xf32>
      %61 = tpu.iota {dimensions = array<i32: 0>} : vector<16x16xi32>
      %62 = tpu.iota {dimensions = array<i32: 1>} : vector<16x16xi32>
      %63 = arith.cmpi eq, %61, %62 : vector<16x16xi32>
      %cst_47 = arith.constant 0.000000e+00 : f32
      %64 = vector.broadcast %cst_47 : f32 to vector<16x16xf32>
      %65 = arith.select %63, %60, %64 : vector<16x16xi1>, vector<16x16xf32>
      %cst_48 = arith.constant dense<0.000000e+00> : vector<16xf32>
      %66 = vector.multi_reduction <add>, %65, %cst_48 [1] : vector<16x16xf32> to vector<16xf32>
      %67 = vector.shape_cast %66 : vector<16xf32> to vector<16x1xf32>
      %cst_49 = arith.constant dense<0.000000e+00> : vector<16xf32>
      %68 = vector.multi_reduction <add>, %65, %cst_49 [0] : vector<16x16xf32> to vector<16xf32>
      %69 = vector.shape_cast %68 : vector<16xf32> to vector<1x16xf32>
      %70 = vector.broadcast %67 : vector<16x1xf32> to vector<16x16xf32>
      %71 = vector.broadcast %69 : vector<1x16xf32> to vector<16x16xf32>
      %72 = arith.mulf %70, %71 : vector<16x16xf32>
      %cst_50 = arith.constant 1.000000e-24 : f32
      %73 = vector.broadcast %cst_50 : f32 to vector<16x16xf32>
      %74 = arith.maximumf %72, %73 : vector<16x16xf32>
      %75 = math.rsqrt %74 : vector<16x16xf32>
      %76 = arith.mulf %60, %75 : vector<16x16xf32>
      %c0_51 = arith.constant 0 : index
      %c0_52 = arith.constant 0 : index
      %77 = vector.load %arg13[%c0_51, %c0_52] : memref<16x16xf32, #tpu.memory_space<vmem>>, vector<16x16xf32>
      tpu.vector_store %arg13[%c0_51, %c0_52], %76 {strides = array<i32>} : memref<16x16xf32, #tpu.memory_space<vmem>>, vector<16x16xf32>,
    } else {
    }
    return
  }
  func.func @transform_0(%arg0: i32) -> (i32, i32) {
    %c0_i32 = arith.constant 0 : i32
    %c0_i32_0 = arith.constant 0 : i32
    %c0_i32_1 = arith.constant 0 : i32
    return %c0_i32, %c0_i32_0 : i32, i32
  }
  func.func @transform_1(%arg0: i32) -> (i32, i32) {
    %c0_i32 = arith.constant 0 : i32
    %c0_i32_0 = arith.constant 0 : i32
    %c0_i32_1 = arith.constant 0 : i32
    return %c0_i32, %c0_i32_0 : i32, i32
  }
  func.func @transform_2(%arg0: i32) -> (i32, i32) {
    %c0_i32 = arith.constant 0 : i32
    %c0_i32_0 = arith.constant 0 : i32
    return %c0_i32, %arg0 : i32, i32
  }
  func.func @transform_3(%arg0: i32) -> (i32, i32) {
    %c0_i32 = arith.constant 0 : i32
    %c0_i32_0 = arith.constant 0 : i32
    return %arg0, %c0_i32 : i32, i32
  }
  func.func @transform_4(%arg0: i32) -> (i32, i32) {
    %c0_i32 = arith.constant 0 : i32
    %c0_i32_0 = arith.constant 0 : i32
    %c0_i32_1 = arith.constant 0 : i32
    return %c0_i32, %c0_i32_0 : i32, i32
  }
  func.func @transform_5(%arg0: i32) -> (i32, i32) {
    %c0_i32 = arith.constant 0 : i32
    %c0_i32_0 = arith.constant 0 : i32
    %c0_i32_1 = arith.constant 0 : i32
    return %c0_i32, %c0_i32_0 : i32, i32
  }
  func.func @transform_6(%arg0: i32) -> (i32, i32) {
    %c0_i32 = arith.constant 0 : i32
    %c0_i32_0 = arith.constant 0 : i32
    %c0_i32_1 = arith.constant 0 : i32
    return %c0_i32, %c0_i32_0 : i32, i32
  }
  func.func @transform_7(%arg0: i32) -> (i32, i32) {
    %c0_i32 = arith.constant 0 : i32
    %c0_i32_0 = arith.constant 0 : i32
    %c0_i32_1 = arith.constant 0 : i32
    return %c0_i32, %c0_i32_0 : i32, i32
  }
  func.func @transform_8(%arg0: i32) -> (i32, i32) {
    %c0_i32 = arith.constant 0 : i32
    %c0_i32_0 = arith.constant 0 : i32
    %c0_i32_1 = arith.constant 0 : i32
    return %c0_i32, %c0_i32_0 : i32, i32
  }
  func.func @transform_9(%arg0: i32) -> (i32, i32) {
    %c0_i32 = arith.constant 0 : i32
    %c0_i32_0 = arith.constant 0 : i32
    %c0_i32_1 = arith.constant 0 : i32
    return %c0_i32, %c0_i32_0 : i32, i32
  }
  func.func @transform_10(%arg0: i32) -> (i32, i32) {
    %c0_i32 = arith.constant 0 : i32
    %c0_i32_0 = arith.constant 0 : i32
    %c0_i32_1 = arith.constant 0 : i32
    return %c0_i32, %c0_i32_0 : i32, i32
  }
  func.func @transform_11(%arg0: i32) -> (i32, i32) {
    %c0_i32 = arith.constant 0 : i32
    %c0_i32_0 = arith.constant 0 : i32
    %c0_i32_1 = arith.constant 0 : i32
    return %c0_i32, %c0_i32_0 : i32, i32
  }
  func.func @transform_12(%arg0: i32) -> (i32, i32) {
    %c0_i32 = arith.constant 0 : i32
    %c0_i32_0 = arith.constant 0 : i32
    %c0_i32_1 = arith.constant 0 : i32
    return %c0_i32, %c0_i32_0 : i32, i32
  }
}

</mosaic_0001>

<llo_original>
// kernel: _device_forward.1
$region0: #{_device_forward.1}
  #allocation0 [shape = 'u32[]', space=smem, size = 0x4, offset = 0x4, fixed_abs, tag = 'smem constant byte address 0x4 - core index']
  #allocation1 [shape = 'u32[144,128]{1,0:T(1,128)}', space=vmem, size = 0x12000, scoped, tag = 'internal scratch']
  #allocation2 [shape = 'f32[16,1024]{1,0:T(8,128)}', space=vmem, size = 0x10000, scoped, tag = 'scratch operand']
  #allocation3 [shape = 'f32[16,16]{1,0:T(8,128)}', space=vmem, size = 0x2000, scoped, tag = 'scratch operand']
  %s0 = inlined_call_operand.vmem [shape: bf16[16,256], index: 0, kind: input, shape index: {}]
  %s1 = inlined_call_operand.vmem [shape: f32[16,1], index: 1, kind: input, shape index: {}]
  %s2 = inlined_call_operand.vmem [shape: bf16[256,2304], index: 2, kind: input, shape index: {}]
  %s3 = inlined_call_operand.vmem [shape: bf16[2304,1024], index: 3, kind: input, shape index: {}]
  %s4 = inlined_call_operand.vmem [shape: f32[1,1024], index: 4, kind: input, shape index: {}]
  %s5 = inlined_call_operand.vmem [shape: bf16[1024,1024], index: 5, kind: input, shape index: {}]
  %s6 = inlined_call_operand.vmem [shape: f32[1,1024], index: 6, kind: input, shape index: {}]
  %s7 = inlined_call_operand.vmem [shape: bf16[1024,32], index: 7, kind: input, shape index: {}]
  %s8 = inlined_call_operand.vmem [shape: f32[1,32], index: 8, kind: input, shape index: {}]
  %s9 = inlined_call_operand.vmem [shape: bf16[32,128], index: 9, kind: input, shape index: {}]
  %s10 = inlined_call_operand.vmem [shape: f32[1,128], index: 10, kind: input, shape index: {}]
  %s11 = inlined_call_operand.hbm [shape: f32[16,128], index: 11, kind: output, shape index: {0}]
  %s12 = inlined_call_operand.hbm [shape: f32[16,16], index: 12, kind: output, shape index: {1}]
  %13 = xla_tuple %s11, %s12
  %s14 = sld [smem:[#allocation0]]
  $region119: #{_device_forward.1} parent=0
    _
  %s16 = ssub.s32 1, %s14
  %s17 = scalar_select 0, %s16, %s14
  $region1: #{_device_forward.1} parent=0
    #allocation4 [shape = 'u8[1179648]{0}', space=vmem, size = 0x120000, scoped, tag = 'input window, operand 2']
    #allocation5 [shape = 'u8[8192]{0}', space=vmem, size = 0x2000, scoped, tag = 'output window, operand 0, single buffered']
    #allocation6 [shape = 's32[2]{0}', space=sflag, size = 0x8, scoped, tag = 'scoped memory for _device_forward.1']
    #allocation7 [shape = 'u8[8192]{0}', space=vmem, size = 0x2000, scoped, tag = 'output window, operand 1, single buffered']
    #allocation8 [shape = 's32[1]{0}', space=sflag, size = 0x4, scoped, tag = 'scoped memory for _device_forward.1']
    %18 = vsyncpa [#allocation6], 0
    %19 = vsyncpa [#allocation8], 0
    loop: start=0, step=1, limit=4
    $region2: #{_device_forward.1} parent=1 // loop_pre_header
      _
    $region3: #{_device_forward.1} parent=1 // loop_header
      %s21 = sphi 0, %s25
      %p22 = scmp.ge.s32.totalorder %s21, 4
      %s29 = sphi 0, %s29
      %s31 = sphi 0, %s29
      %s32 = sphi 0, %s31
      %s46 = sphi 0, %s32
      %s50 = sphi 0, %s50
      %s52 = sphi 0, %s50
      %s53 = sphi 0, %s52
      %s67 = sphi 0, %s53
      %s73 = sphi 0, %s75
      %s76 = sphi 0, %s73
      %s77 = sphi 0, %s76
      %s93 = sphi 0, %s77
      %s99 = sphi 0, %s101
      %s102 = sphi 0, %s99
      %s103 = sphi 0, %s102
      %s119 = sphi 0, %s103
      %s123 = sphi 0, %s123
      %s125 = sphi 0, %s123
      %s126 = sphi 0, %s125
      %s140 = sphi 0, %s126
      %s144 = sphi 0, %s144
      %s146 = sphi 0, %s144
      %s147 = sphi 0, %s146
      %s161 = sphi 0, %s147
      %s165 = sphi 0, %s165
      %s167 = sphi 0, %s165
      %s168 = sphi 0, %s167
      %s182 = sphi 0, %s168
      %s186 = sphi 0, %s186
      %s188 = sphi 0, %s186
      %s189 = sphi 0, %s188
      %s203 = sphi 0, %s189
      %s207 = sphi 0, %s207
      %s209 = sphi 0, %s207
      %s210 = sphi 0, %s209
      %s224 = sphi 0, %s210
      %s228 = sphi 0, %s228
      %s230 = sphi 0, %s228
      %s231 = sphi 0, %s230
      %s245 = sphi 0, %s231
      %s249 = sphi 0, %s249
      %s251 = sphi 0, %s249
      %s252 = sphi 0, %s251
      %s266 = sphi 0, %s252
      %s270 = sphi 0, %s270
      %s272 = sphi 0, %s270
      %s273 = sphi 0, %s272
      %s287 = sphi 0, %s273
      %s291 = sphi 0, %s291
      %s293 = sphi 0, %s291
      %s294 = sphi 0, %s293
      %s308 = sphi 0, %s294
    $region4: #{_device_forward.1} parent=1 // loop_header_branch
      %24 = sbr.rel (%p22) target = $region8
    $region5: #{_device_forward.1} parent=1 // loop_body
      %s26 = ssub.s32 %s21, 1
      %s27 = ssub.s32 %s21, 2
      %s28 = sadd.s32 %s21, 1
      %s30 = sadd.s32 %s29, 1
      %p33 = scmp.eq.s32.totalorder %s21, 1
      %p34 = scmp.ne.s32.totalorder %s29, %s31
      %p35 = scmp.eq.s32.totalorder %s21, 0
      %p36 = por %p34, %p35
      %p37 = scmp.ne.s32.totalorder %s29, %s31
      %p38 = scmp.eq.s32.totalorder %s26, 1
      %p39 = por %p37, %p38
      %p40 = scmp.ne.s32.totalorder %s31, %s32
      %p41 = scmp.eq.s32.totalorder %s26, 0
      %p42 = por %p40, %p41
      %p43 = scmp.ne.s32.totalorder %s31, %s32
      %p44 = scmp.eq.s32.totalorder %s27, 1
      %p45 = por %p43, %p44
      %p47 = scmp.ne.s32.totalorder %s32, %s46
      %p48 = scmp.eq.s32.totalorder %s27, 0
      %p49 = por %p47, %p48
      %s51 = sadd.s32 %s50, 1
      %p54 = scmp.eq.s32.totalorder %s21, 1
      %p55 = scmp.ne.s32.totalorder %s50, %s52
      %p56 = scmp.eq.s32.totalorder %s21, 0
      %p57 = por %p55, %p56
      %p58 = scmp.ne.s32.totalorder %s50, %s52
      %p59 = scmp.eq.s32.totalorder %s26, 1
      %p60 = por %p58, %p59
      %p61 = scmp.ne.s32.totalorder %s52, %s53
      %p62 = scmp.eq.s32.totalorder %s26, 0
      %p63 = por %p61, %p62
      %p64 = scmp.ne.s32.totalorder %s52, %s53
      %p65 = scmp.eq.s32.totalorder %s27, 1
      %p66 = por %p64, %p65
      %p68 = scmp.ne.s32.totalorder %s53, %s67
      %p69 = scmp.eq.s32.totalorder %s27, 0
      %p70 = por %p68, %p69
      %s71 = ssub.s32 %s21, %s28
      %p72 = scmp.eq.s32.totalorder %s71, 0
      %s74 = sadd.s32 %s73, 1
      %s75 = scalar_select %p72, %s73, %s74
      %p78 = pneg %p72
      %p79 = scmp.eq.s32.totalorder %s21, 1
      %p80 = por %p78, %p79
      %p81 = scmp.ne.s32.totalorder %s73, %s76
      %p82 = scmp.eq.s32.totalorder %s21, 0
      %p83 = por %p81, %p82
      %p84 = scmp.ne.s32.totalorder %s73, %s76
      %p85 = scmp.eq.s32.totalorder %s26, 1
      %p86 = por %p84, %p85
      %p87 = scmp.ne.s32.totalorder %s76, %s77
      %p88 = scmp.eq.s32.totalorder %s26, 0
      %p89 = por %p87, %p88
      %p90 = scmp.ne.s32.totalorder %s76, %s77
      %p91 = scmp.eq.s32.totalorder %s27, 1
      %p92 = por %p90, %p91
      %p94 = scmp.ne.s32.totalorder %s77, %s93
      %p95 = scmp.eq.s32.totalorder %s27, 0
      %p96 = por %p94, %p95
      %s97 = ssub.s32 %s21, %s28
      %p98 = scmp.eq.s32.totalorder %s97, 0
      %s100 = sadd.s32 %s99, 1
      %s101 = scalar_select %p98, %s99, %s100
      %p104 = pneg %p98
      %p105 = scmp.eq.s32.totalorder %s21, 1
      %p106 = por %p104, %p105
      %p107 = scmp.ne.s32.totalorder %s99, %s102
      %p108 = scmp.eq.s32.totalorder %s21, 0
      %p109 = por %p107, %p108
      %p110 = scmp.ne.s32.totalorder %s99, %s102
      %p111 = scmp.eq.s32.totalorder %s26, 1
      %p112 = por %p110, %p111
      %p113 = scmp.ne.s32.totalorder %s102, %s103
      %p114 = scmp.eq.s32.totalorder %s26, 0
      %p115 = por %p113, %p114
      %p116 = scmp.ne.s32.totalorder %s102, %s103
      %p117 = scmp.eq.s32.totalorder %s27, 1
      %p118 = por %p116, %p117
      %p120 = scmp.ne.s32.totalorder %s103, %s119
      %p121 = scmp.eq.s32.totalorder %s27, 0
      %p122 = por %p120, %p121
      %s124 = sadd.s32 %s123, 1
      %p127 = scmp.eq.s32.totalorder %s21, 1
      %p128 = scmp.ne.s32.totalorder %s123, %s125
      %p129 = scmp.eq.s32.totalorder %s21, 0
      %p130 = por %p128, %p129
      %p131 = scmp.ne.s32.totalorder %s123, %s125
      %p132 = scmp.eq.s32.totalorder %s26, 1
      %p133 = por %p131, %p132
      %p134 = scmp.ne.s32.totalorder %s125, %s126
      %p135 = scmp.eq.s32.totalorder %s26, 0
      %p136 = por %p134, %p135
      %p137 = scmp.ne.s32.totalorder %s125, %s126
      %p138 = scmp.eq.s32.totalorder %s27, 1
      %p139 = por %p137, %p138
      %p141 = scmp.ne.s32.totalorder %s126, %s140
      %p142 = scmp.eq.s32.totalorder %s27, 0
      %p143 = por %p141, %p142
      %s145 = sadd.s32 %s144, 1
      %p148 = scmp.eq.s32.totalorder %s21, 1
      %p149 = scmp.ne.s32.totalorder %s144, %s146
      %p150 = scmp.eq.s32.totalorder %s21, 0
      %p151 = por %p149, %p150
      %p152 = scmp.ne.s32.totalorder %s144, %s146
      %p153 = scmp.eq.s32.totalorder %s26, 1
      %p154 = por %p152, %p153
      %p155 = scmp.ne.s32.totalorder %s146, %s147
      %p156 = scmp.eq.s32.totalorder %s26, 0
      %p157 = por %p155, %p156
      %p158 = scmp.ne.s32.totalorder %s146, %s147
      %p159 = scmp.eq.s32.totalorder %s27, 1
      %p160 = por %p158, %p159
      %p162 = scmp.ne.s32.totalorder %s147, %s161
      %p163 = scmp.eq.s32.totalorder %s27, 0
      %p164 = por %p162, %p163
      %s166 = sadd.s32 %s165, 1
      %p169 = scmp.eq.s32.totalorder %s21, 1
      %p170 = scmp.ne.s32.totalorder %s165, %s167
      %p171 = scmp.eq.s32.totalorder %s21, 0
      %p172 = por %p170, %p171
      %p173 = scmp.ne.s32.totalorder %s165, %s167
      %p174 = scmp.eq.s32.totalorder %s26, 1
      %p175 = por %p173, %p174
      %p176 = scmp.ne.s32.totalorder %s167, %s168
      %p177 = scmp.eq.s32.totalorder %s26, 0
      %p178 = por %p176, %p177
      %p179 = scmp.ne.s32.totalorder %s167, %s168
      %p180 = scmp.eq.s32.totalorder %s27, 1
      %p181 = por %p179, %p180
      %p183 = scmp.ne.s32.totalorder %s168, %s182
      %p184 = scmp.eq.s32.totalorder %s27, 0
      %p185 = por %p183, %p184
      %s187 = sadd.s32 %s186, 1
      %p190 = scmp.eq.s32.totalorder %s21, 1
      %p191 = scmp.ne.s32.totalorder %s186, %s188
      %p192 = scmp.eq.s32.totalorder %s21, 0
      %p193 = por %p191, %p192
      %p194 = scmp.ne.s32.totalorder %s186, %s188
      %p195 = scmp.eq.s32.totalorder %s26, 1
      %p196 = por %p194, %p195
      %p197 = scmp.ne.s32.totalorder %s188, %s189
      %p198 = scmp.eq.s32.totalorder %s26, 0
      %p199 = por %p197, %p198
      %p200 = scmp.ne.s32.totalorder %s188, %s189
      %p201 = scmp.eq.s32.totalorder %s27, 1
      %p202 = por %p200, %p201
      %p204 = scmp.ne.s32.totalorder %s189, %s203
      %p205 = scmp.eq.s32.totalorder %s27, 0
      %p206 = por %p204, %p205
      %s208 = sadd.s32 %s207, 1
      %p211 = scmp.eq.s32.totalorder %s21, 1
      %p212 = scmp.ne.s32.totalorder %s207, %s209
      %p213 = scmp.eq.s32.totalorder %s21, 0
      %p214 = por %p212, %p213
      %p215 = scmp.ne.s32.totalorder %s207, %s209
      %p216 = scmp.eq.s32.totalorder %s26, 1
      %p217 = por %p215, %p216
      %p218 = scmp.ne.s32.totalorder %s209, %s210
      %p219 = scmp.eq.s32.totalorder %s26, 0
      %p220 = por %p218, %p219
      %p221 = scmp.ne.s32.totalorder %s209, %s210
      %p222 = scmp.eq.s32.totalorder %s27, 1
      %p223 = por %p221, %p222
      %p225 = scmp.ne.s32.totalorder %s210, %s224
      %p226 = scmp.eq.s32.totalorder %s27, 0
      %p227 = por %p225, %p226
      %s229 = sadd.s32 %s228, 1
      %p232 = scmp.eq.s32.totalorder %s21, 1
      %p233 = scmp.ne.s32.totalorder %s228, %s230
      %p234 = scmp.eq.s32.totalorder %s21, 0
      %p235 = por %p233, %p234
      %p236 = scmp.ne.s32.totalorder %s228, %s230
      %p237 = scmp.eq.s32.totalorder %s26, 1
      %p238 = por %p236, %p237
      %p239 = scmp.ne.s32.totalorder %s230, %s231
      %p240 = scmp.eq.s32.totalorder %s26, 0
      %p241 = por %p239, %p240
      %p242 = scmp.ne.s32.totalorder %s230, %s231
      %p243 = scmp.eq.s32.totalorder %s27, 1
      %p244 = por %p242, %p243
      %p246 = scmp.ne.s32.totalorder %s231, %s245
      %p247 = scmp.eq.s32.totalorder %s27, 0
      %p248 = por %p246, %p247
      %s250 = sadd.s32 %s249, 1
      %p253 = scmp.eq.s32.totalorder %s21, 1
      %p254 = scmp.ne.s32.totalorder %s249, %s251
      %p255 = scmp.eq.s32.totalorder %s21, 0
      %p256 = por %p254, %p255
      %p257 = scmp.ne.s32.totalorder %s249, %s251
      %p258 = scmp.eq.s32.totalorder %s26, 1
      %p259 = por %p257, %p258
      %p260 = scmp.ne.s32.totalorder %s251, %s252
      %p261 = scmp.eq.s32.totalorder %s26, 0
      %p262 = por %p260, %p261
      %p263 = scmp.ne.s32.totalorder %s251, %s252
      %p264 = scmp.eq.s32.totalorder %s27, 1
      %p265 = por %p263, %p264
      %p267 = scmp.ne.s32.totalorder %s252, %s266
      %p268 = scmp.eq.s32.totalorder %s27, 0
      %p269 = por %p267, %p268
      %s271 = sadd.s32 %s270, 1
      %p274 = scmp.eq.s32.totalorder %s21, 1
      %p275 = scmp.ne.s32.totalorder %s270, %s272
      %p276 = scmp.eq.s32.totalorder %s21, 0
      %p277 = por %p275, %p276
      %p278 = scmp.ne.s32.totalorder %s270, %s272
      %p279 = scmp.eq.s32.totalorder %s26, 1
      %p280 = por %p278, %p279
      %p281 = scmp.ne.s32.totalorder %s272, %s273
      %p282 = scmp.eq.s32.totalorder %s26, 0
      %p283 = por %p281, %p282
      %p284 = scmp.ne.s32.totalorder %s272, %s273
      %p285 = scmp.eq.s32.totalorder %s27, 1
      %p286 = por %p284, %p285
      %p288 = scmp.ne.s32.totalorder %s273, %s287
      %p289 = scmp.eq.s32.totalorder %s27, 0
      %p290 = por %p288, %p289
      %s292 = sadd.s32 %s291, 1
      %p295 = scmp.eq.s32.totalorder %s21, 1
      %p296 = scmp.ne.s32.totalorder %s291, %s293
      %p297 = scmp.eq.s32.totalorder %s21, 0
      %p298 = por %p296, %p297
      %p299 = scmp.ne.s32.totalorder %s291, %s293
      %p300 = scmp.eq.s32.totalorder %s26, 1
      %p301 = por %p299, %p300
      %p302 = scmp.ne.s32.totalorder %s293, %s294
      %p303 = scmp.eq.s32.totalorder %s26, 0
      %p304 = por %p302, %p303
      %p305 = scmp.ne.s32.totalorder %s293, %s294
      %p306 = scmp.eq.s32.totalorder %s27, 1
      %p307 = por %p305, %p306
      %p309 = scmp.ne.s32.totalorder %s294, %s308
      %p310 = scmp.eq.s32.totalorder %s27, 0
      %p311 = por %p309, %p310
      %p312 = scmp.le.s32.totalorder 1, %s21
      %p313 = scmp.lt.s32.totalorder %s21, 3
      %p314 = pnand %p312, %p313
      %p315 = pneg %p314
      // Predicated region
      $region9: #{_device_forward.1} parent=5 // pred_check
        _
      $region10: #{_device_forward.1} parent=5 // pred_check_branch
        %317 = sbr.rel (%p314) target = $region12
      $region11: #{_device_forward.1} parent=5 // pred_region
        %s318 = ssub.s32 %s21, 1
        // Predicated region
        $region13: #{_device_forward.1} parent=11 // pred_check
          %p319 = pneg %p42
        $region14: #{_device_forward.1} parent=11 // pred_check_branch
          %321 = sbr.rel (%p319) target = $region16
        $region15: #{_device_forward.1} parent=11 // pred_region
          _
        $region16: #{_device_forward.1} parent=11 // pred_fallthru
          _
        // Predicated region
        $region17: #{_device_forward.1} parent=11 // pred_check
          %p322 = pneg %p63
        $region18: #{_device_forward.1} parent=11 // pred_check_branch
          %324 = sbr.rel (%p322) target = $region20
        $region19: #{_device_forward.1} parent=11 // pred_region
          _
        $region20: #{_device_forward.1} parent=11 // pred_fallthru
          _
        // Predicated region
        $region21: #{_device_forward.1} parent=11 // pred_check
          %p325 = pneg %p136
        $region22: #{_device_forward.1} parent=11 // pred_check_branch
          %327 = sbr.rel (%p325) target = $region24
        $region23: #{_device_forward.1} parent=11 // pred_region
          _
        $region24: #{_device_forward.1} parent=11 // pred_fallthru
          _
        // Predicated region
        $region25: #{_device_forward.1} parent=11 // pred_check
          %p328 = pneg %p157
        $region26: #{_device_forward.1} parent=11 // pred_check_branch
          %330 = sbr.rel (%p328) target = $region28
        $region27: #{_device_forward.1} parent=11 // pred_region
          _
        $region28: #{_device_forward.1} parent=11 // pred_fallthru
          _
        // Predicated region
        $region29: #{_device_forward.1} parent=11 // pred_check
          %p331 = pneg %p178
        $region30: #{_device_forward.1} parent=11 // pred_check_branch
          %333 = sbr.rel (%p331) target = $region32
        $region31: #{_device_forward.1} parent=11 // pred_region
          _
        $region32: #{_device_forward.1} parent=11 // pred_fallthru
          _
        // Predicated region
        $region33: #{_device_forward.1} parent=11 // pred_check
          %p334 = pneg %p199
        $region34: #{_device_forward.1} parent=11 // pred_check_branch
          %336 = sbr.rel (%p334) target = $region36
        $region35: #{_device_forward.1} parent=11 // pred_region
          _
        $region36: #{_device_forward.1} parent=11 // pred_fallthru
          _
        // Predicated region
        $region37: #{_device_forward.1} parent=11 // pred_check
          %p337 = pneg %p220
        $region38: #{_device_forward.1} parent=11 // pred_check_branch
          %339 = sbr.rel (%p337) target = $region40
        $region39: #{_device_forward.1} parent=11 // pred_region
          _
        $region40: #{_device_forward.1} parent=11 // pred_fallthru
          _
        // Predicated region
        $region41: #{_device_forward.1} parent=11 // pred_check
          %p340 = pneg %p241
        $region42: #{_device_forward.1} parent=11 // pred_check_branch
          %342 = sbr.rel (%p340) target = $region44
        $region43: #{_device_forward.1} parent=11 // pred_region
          _
        $region44: #{_device_forward.1} parent=11 // pred_fallthru
          _
        // Predicated region
        $region45: #{_device_forward.1} parent=11 // pred_check
          %p343 = pneg %p262
        $region46: #{_device_forward.1} parent=11 // pred_check_branch
          %345 = sbr.rel (%p343) target = $region48
        $region47: #{_device_forward.1} parent=11 // pred_region
          _
        $region48: #{_device_forward.1} parent=11 // pred_fallthru
          _
      $region12: #{_device_forward.1} parent=5 // pred_fallthru
        _
      %p346 = scmp.lt.s32.totalorder %s21, 2
      // Predicated region
      $region49: #{_device_forward.1} parent=5 // pred_check
        %p347 = pneg %p346
      $region50: #{_device_forward.1} parent=5 // pred_check_branch
        %349 = sbr.rel (%p347) target = $region52
      $region51: #{_device_forward.1} parent=5 // pred_region
        // Predicated region
        $region53: #{_device_forward.1} parent=51 // pred_check
          %p350 = pneg %p83
        $region54: #{_device_forward.1} parent=51 // pred_check_branch
          %352 = sbr.rel (%p350) target = $region56
        $region55: #{_device_forward.1} parent=51 // pred_region
          %s353 = sand.u32 %s73, 1
          %s354 = sand.u32 %s73, 1
          %s355 = smul.addr %s354, 1152
          %s356 = scalar_lea.vmem [#allocation4], %s355
          %s357 = smul.u32 9, %s21
          %s358 = smul.addr %s357, 4
          %s359 = scalar_lea.vmem %s2, %s358
          // Predicated region
          $region57: #{_device_forward.1} parent=55 // pred_check
            _
          $region58: #{_device_forward.1} parent=55 // pred_check_branch
            %361 = sbr.rel (0) target = $region60
          $region59: #{_device_forward.1} parent=55 // pred_region
            // Predicated region
            $region61: #{_device_forward.1} parent=59 // pred_check
              _
            $region62: #{_device_forward.1} parent=59 // pred_check_branch
              %363 = sbr.rel (0) target = $region64
            $region63: #{_device_forward.1} parent=59 // pred_region
              %s364 = scalar_lea.vmem %s359, 32
              %s365 = scalar_lea.vmem %s356, 32 [#allocation4]
              loop: start=0, step=1, limit=1
              $region65: #{_device_forward.1} parent=63 // loop_pre_header
                _
              $region66: #{_device_forward.1} parent=63 // loop_header
                %s367 = sphi 0, %s371
                %p368 = scmp.ge.s32.totalorder %s367, 1
                %s372 = sphi %s359, %s359
                %s373 = sphi %s356, %s356
              $region67: #{_device_forward.1} parent=63 // loop_header_branch
                %370 = sbr.rel (%p368) target = $region71
              $region68: #{_device_forward.1} parent=63 // loop_body
                %v374 = vld [vmem:[%s372] sm:$0xff]
                %375 = vst [vmem:[%s373] sm:$0xff] %v374
                %v376 = vld [vmem:[%s372 + $0x8] sm:$0xff]
                %377 = vst [vmem:[%s373 + $0x8] sm:$0xff] %v376
                %v378 = vld [vmem:[%s372 + $0x10] sm:$0xff]
                %379 = vst [vmem:[%s373 + $0x10] sm:$0xff] %v378
                %v380 = vld [vmem:[%s372 + $0x18] sm:$0xff]
                %381 = vst [vmem:[%s373 + $0x18] sm:$0xff] %v380
                %v382 = vld [vmem:[%s372 + $0x48] sm:$0xff]
                %383 = vst [vmem:[%s373 + $0x24] sm:$0xff] %v382
                %v384 = vld [vmem:[%s372 + $0x50] sm:$0xff]
                %385 = vst [vmem:[%s373 + $0x2c] sm:$0xff] %v384
                %v386 = vld [vmem:[%s372 + $0x58] sm:$0xff]
                %387 = vst [vmem:[%s373 + $0x34] sm:$0xff] %v386
                %v388 = vld [vmem:[%s372 + $0x60] sm:$0xff]
                %389 = vst [vmem:[%s373 + $0x3c] sm:$0xff] %v388
                %v390 = vld [vmem:[%s372 + $0x90] sm:$0xff]
                %391 = vst [vmem:[%s373 + $0x48] sm:$0xff] %v390
                %v392 = vld [vmem:[%s372 + $0x98] sm:$0xff]
                %393 = vst [vmem:[%s373 + $0x50] sm:$0xff] %v392
                %v394 = vld [vmem:[%s372 + $0xa0] sm:$0xff]
                %395 = vst [vmem:[%s373 + $0x58] sm:$0xff] %v394
                %v396 = vld [vmem:[%s372 + $0xa8] sm:$0xff]
                %397 = vst [vmem:[%s373 + $0x60] sm:$0xff] %v396
                %v398 = vld [vmem:[%s372 + $0xd8] sm:$0xff]
                %399 = vst [vmem:[%s373 + $0x6c] sm:$0xff] %v398
                %v400 = vld [vmem:[%s372 + $0xe0] sm:$0xff]
                %401 = vst [vmem:[%s373 + $0x74] sm:$0xff] %v400
                %v402 = vld [vmem:[%s372 + $0xe8] sm:$0xff]
                %403 = vst [vmem:[%s373 + $0x7c] sm:$0xff] %v402
                %v404 = vld [vmem:[%s372 + $0xf0] sm:$0xff]
                %405 = vst [vmem:[%s373 + $0x84] sm:$0xff] %v404
                %v406 = vld [vmem:[%s372 + $0x120] sm:$0xff]
                %407 = vst [vmem:[%s373 + $0x90] sm:$0xff] %v406
                %v408 = vld [vmem:[%s372 + $0x128] sm:$0xff]
                %409 = vst [vmem:[%s373 + $0x98] sm:$0xff] %v408
                %v410 = vld [vmem:[%s372 + $0x130] sm:$0xff]
                %411 = vst [vmem:[%s373 + $0xa0] sm:$0xff] %v410
                %v412 = vld [vmem:[%s372 + $0x138] sm:$0xff]
                %413 = vst [vmem:[%s373 + $0xa8] sm:$0xff] %v412
                %v414 = vld [vmem:[%s372 + $0x168] sm:$0xff]
                %415 = vst [vmem:[%s373 + $0xb4] sm:$0xff] %v414
                %v416 = vld [vmem:[%s372 + $0x170] sm:$0xff]
                %417 = vst [vmem:[%s373 + $0xbc] sm:$0xff] %v416
                %v418 = vld [vmem:[%s372 + $0x178] sm:$0xff]
                %419 = vst [vmem:[%s373 + $0xc4] sm:$0xff] %v418
                %v420 = vld [vmem:[%s372 + $0x180] sm:$0xff]
                %421 = vst [vmem:[%s373 + $0xcc] sm:$0xff] %v420
                %v422 = vld [vmem:[%s372 + $0x1b0] sm:$0xff]
                %423 = vst [vmem:[%s373 + $0xd8] sm:$0xff] %v422
                %v424 = vld [vmem:[%s372 + $0x1b8] sm:$0xff]
                %425 = vst [vmem:[%s373 + $0xe0] sm:$0xff] %v424
                %v426 = vld [vmem:[%s372 + $0x1c0] sm:$0xff]
                %427 = vst [vmem:[%s373 + $0xe8] sm:$0xff] %v426
                %v428 = vld [vmem:[%s372 + $0x1c8] sm:$0xff]
                %429 = vst [vmem:[%s373 + $0xf0] sm:$0xff] %v428
                %v430 = vld [vmem:[%s372 + $0x1f8] sm:$0xff]
                %431 = vst [vmem:[%s373 + $0xfc] sm:$0xff] %v430
                %v432 = vld [vmem:[%s372 + $0x200] sm:$0xff]
                %433 = vst [vmem:[%s373 + $0x104] sm:$0xff] %v432
                %v434 = vld [vmem:[%s372 + $0x208] sm:$0xff]
                %435 = vst [vmem:[%s373 + $0x10c] sm:$0xff] %v434
                %v436 = vld [vmem:[%s372 + $0x210] sm:$0xff]
                %437 = vst [vmem:[%s373 + $0x114] sm:$0xff] %v436
                %v438 = vld [vmem:[%s372 + $0x240] sm:$0xff]
                %439 = vst [vmem:[%s373 + $0x120] sm:$0xff] %v438
                %v440 = vld [vmem:[%s372 + $0x248] sm:$0xff]
                %441 = vst [vmem:[%s373 + $0x128] sm:$0xff] %v440
                %v442 = vld [vmem:[%s372 + $0x250] sm:$0xff]
                %443 = vst [vmem:[%s373 + $0x130] sm:$0xff] %v442
                %v444 = vld [vmem:[%s372 + $0x258] sm:$0xff]
                %445 = vst [vmem:[%s373 + $0x138] sm:$0xff] %v444
                %v446 = vld [vmem:[%s372 + $0x288] sm:$0xff]
                %447 = vst [vmem:[%s373 + $0x144] sm:$0xff] %v446
                %v448 = vld [vmem:[%s372 + $0x290] sm:$0xff]
                %449 = vst [vmem:[%s373 + $0x14c] sm:$0xff] %v448
                %v450 = vld [vmem:[%s372 + $0x298] sm:$0xff]
                %451 = vst [vmem:[%s373 + $0x154] sm:$0xff] %v450
                %v452 = vld [vmem:[%s372 + $0x2a0] sm:$0xff]
                %453 = vst [vmem:[%s373 + $0x15c] sm:$0xff] %v452
                %v454 = vld [vmem:[%s372 + $0x2d0] sm:$0xff]
                %455 = vst [vmem:[%s373 + $0x168] sm:$0xff] %v454
                %v456 = vld [vmem:[%s372 + $0x2d8] sm:$0xff]
                %457 = vst [vmem:[%s373 + $0x170] sm:$0xff] %v456
                %v458 = vld [vmem:[%s372 + $0x2e0] sm:$0xff]
                %459 = vst [vmem:[%s373 + $0x178] sm:$0xff] %v458
                %v460 = vld [vmem:[%s372 + $0x2e8] sm:$0xff]
                %461 = vst [vmem:[%s373 + $0x180] sm:$0xff] %v460
                %v462 = vld [vmem:[%s372 + $0x318] sm:$0xff]
                %463 = vst [vmem:[%s373 + $0x18c] sm:$0xff] %v462
                %v464 = vld [vmem:[%s372 + $0x320] sm:$0xff]
                %465 = vst [vmem:[%s373 + $0x194] sm:$0xff] %v464
                %v466 = vld [vmem:[%s372 + $0x328] sm:$0xff]
                %467 = vst [vmem:[%s373 + $0x19c] sm:$0xff] %v466
                %v468 = vld [vmem:[%s372 + $0x330] sm:$0xff]
                %469 = vst [vmem:[%s373 + $0x1a4] sm:$0xff] %v468
                %v470 = vld [vmem:[%s372 + $0x360] sm:$0xff]
                %471 = vst [vmem:[%s373 + $0x1b0] sm:$0xff] %v470
                %v472 = vld [vmem:[%s372 + $0x368] sm:$0xff]
                %473 = vst [vmem:[%s373 + $0x1b8] sm:$0xff] %v472
                %v474 = vld [vmem:[%s372 + $0x370] sm:$0xff]
                %475 = vst [vmem:[%s373 + $0x1c0] sm:$0xff] %v474
                %v476 = vld [vmem:[%s372 + $0x378] sm:$0xff]
                %477 = vst [vmem:[%s373 + $0x1c8] sm:$0xff] %v476
                %v478 = vld [vmem:[%s372 + $0x3a8] sm:$0xff]
                %479 = vst [vmem:[%s373 + $0x1d4] sm:$0xff] %v478
                %v480 = vld [vmem:[%s372 + $0x3b0] sm:$0xff]
                %481 = vst [vmem:[%s373 + $0x1dc] sm:$0xff] %v480
                %v482 = vld [vmem:[%s372 + $0x3b8] sm:$0xff]
                %483 = vst [vmem:[%s373 + $0x1e4] sm:$0xff] %v482
                %v484 = vld [vmem:[%s372 + $0x3c0] sm:$0xff]
                %485 = vst [vmem:[%s373 + $0x1ec] sm:$0xff] %v484
                %v486 = vld [vmem:[%s372 + $0x3f0] sm:$0xff]
                %487 = vst [vmem:[%s373 + $0x1f8] sm:$0xff] %v486
                %v488 = vld [vmem:[%s372 + $0x3f8] sm:$0xff]
                %489 = vst [vmem:[%s373 + $0x200] sm:$0xff] %v488
                %v490 = vld [vmem:[%s372 + $0x400] sm:$0xff]
                %491 = vst [vmem:[%s373 + $0x208] sm:$0xff] %v490
                %v492 = vld [vmem:[%s372 + $0x408] sm:$0xff]
                %493 = vst [vmem:[%s373 + $0x210] sm:$0xff] %v492
                %v494 = vld [vmem:[%s372 + $0x438] sm:$0xff]
                %495 = vst [vmem:[%s373 + $0x21c] sm:$0xff] %v494
                %v496 = vld [vmem:[%s372 + $0x440] sm:$0xff]
                %497 = vst [vmem:[%s373 + $0x224] sm:$0xff] %v496
                %v498 = vld [vmem:[%s372 + $0x448] sm:$0xff]
                %499 = vst [vmem:[%s373 + $0x22c] sm:$0xff] %v498
                %v500 = vld [vmem:[%s372 + $0x450] sm:$0xff]
                %501 = vst [vmem:[%s373 + $0x234] sm:$0xff] %v500
                %v502 = vld [vmem:[%s372 + $0x480] sm:$0xff]
                %503 = vst [vmem:[%s373 + $0x240] sm:$0xff] %v502
                %v504 = vld [vmem:[%s372 + $0x488] sm:$0xff]
                %505 = vst [vmem:[%s373 + $0x248] sm:$0xff] %v504
                %v506 = vld [vmem:[%s372 + $0x490] sm:$0xff]
                %507 = vst [vmem:[%s373 + $0x250] sm:$0xff] %v506
                %v508 = vld [vmem:[%s372 + $0x498] sm:$0xff]
                %509 = vst [vmem:[%s373 + $0x258] sm:$0xff] %v508
                %v510 = vld [vmem:[%s372 + $0x4c8] sm:$0xff]
                %511 = vst [vmem:[%s373 + $0x264] sm:$0xff] %v510
                %v512 = vld [vmem:[%s372 + $0x4d0] sm:$0xff]
                %513 = vst [vmem:[%s373 + $0x26c] sm:$0xff] %v512
                %v514 = vld [vmem:[%s372 + $0x4d8] sm:$0xff]
                %515 = vst [vmem:[%s373 + $0x274] sm:$0xff] %v514
                %v516 = vld [vmem:[%s372 + $0x4e0] sm:$0xff]
                %517 = vst [vmem:[%s373 + $0x27c] sm:$0xff] %v516
                %v518 = vld [vmem:[%s372 + $0x510] sm:$0xff]
                %519 = vst [vmem:[%s373 + $0x288] sm:$0xff] %v518
                %v520 = vld [vmem:[%s372 + $0x518] sm:$0xff]
                %521 = vst [vmem:[%s373 + $0x290] sm:$0xff] %v520
                %v522 = vld [vmem:[%s372 + $0x520] sm:$0xff]
                %523 = vst [vmem:[%s373 + $0x298] sm:$0xff] %v522
                %v524 = vld [vmem:[%s372 + $0x528] sm:$0xff]
                %525 = vst [vmem:[%s373 + $0x2a0] sm:$0xff] %v524
                %v526 = vld [vmem:[%s372 + $0x558] sm:$0xff]
                %527 = vst [vmem:[%s373 + $0x2ac] sm:$0xff] %v526
                %v528 = vld [vmem:[%s372 + $0x560] sm:$0xff]
                %529 = vst [vmem:[%s373 + $0x2b4] sm:$0xff] %v528
                %v530 = vld [vmem:[%s372 + $0x568] sm:$0xff]
                %531 = vst [vmem:[%s373 + $0x2bc] sm:$0xff] %v530
                %v532 = vld [vmem:[%s372 + $0x570] sm:$0xff]
                %533 = vst [vmem:[%s373 + $0x2c4] sm:$0xff] %v532
                %v534 = vld [vmem:[%s372 + $0x5a0] sm:$0xff]
                %535 = vst [vmem:[%s373 + $0x2d0] sm:$0xff] %v534
                %v536 = vld [vmem:[%s372 + $0x5a8] sm:$0xff]
                %537 = vst [vmem:[%s373 + $0x2d8] sm:$0xff] %v536
                %v538 = vld [vmem:[%s372 + $0x5b0] sm:$0xff]
                %539 = vst [vmem:[%s373 + $0x2e0] sm:$0xff] %v538
                %v540 = vld [vmem:[%s372 + $0x5b8] sm:$0xff]
                %541 = vst [vmem:[%s373 + $0x2e8] sm:$0xff] %v540
                %v542 = vld [vmem:[%s372 + $0x5e8] sm:$0xff]
                %543 = vst [vmem:[%s373 + $0x2f4] sm:$0xff] %v542
                %v544 = vld [vmem:[%s372 + $0x5f0] sm:$0xff]
                %545 = vst [vmem:[%s373 + $0x2fc] sm:$0xff] %v544
                %v546 = vld [vmem:[%s372 + $0x5f8] sm:$0xff]
                %547 = vst [vmem:[%s373 + $0x304] sm:$0xff] %v546
                %v548 = vld [vmem:[%s372 + $0x600] sm:$0xff]
                %549 = vst [vmem:[%s373 + $0x30c] sm:$0xff] %v548
                %v550 = vld [vmem:[%s372 + $0x630] sm:$0xff]
                %551 = vst [vmem:[%s373 + $0x318] sm:$0xff] %v550
                %v552 = vld [vmem:[%s372 + $0x638] sm:$0xff]
                %553 = vst [vmem:[%s373 + $0x320] sm:$0xff] %v552
                %v554 = vld [vmem:[%s372 + $0x640] sm:$0xff]
                %555 = vst [vmem:[%s373 + $0x328] sm:$0xff] %v554
                %v556 = vld [vmem:[%s372 + $0x648] sm:$0xff]
                %557 = vst [vmem:[%s373 + $0x330] sm:$0xff] %v556
                %v558 = vld [vmem:[%s372 + $0x678] sm:$0xff]
                %559 = vst [vmem:[%s373 + $0x33c] sm:$0xff] %v558
                %v560 = vld [vmem:[%s372 + $0x680] sm:$0xff]
                %561 = vst [vmem:[%s373 + $0x344] sm:$0xff] %v560
                %v562 = vld [vmem:[%s372 + $0x688] sm:$0xff]
                %563 = vst [vmem:[%s373 + $0x34c] sm:$0xff] %v562
                %v564 = vld [vmem:[%s372 + $0x690] sm:$0xff]
                %565 = vst [vmem:[%s373 + $0x354] sm:$0xff] %v564
                %v566 = vld [vmem:[%s372 + $0x6c0] sm:$0xff]
                %567 = vst [vmem:[%s373 + $0x360] sm:$0xff] %v566
                %v568 = vld [vmem:[%s372 + $0x6c8] sm:$0xff]
                %569 = vst [vmem:[%s373 + $0x368] sm:$0xff] %v568
                %v570 = vld [vmem:[%s372 + $0x6d0] sm:$0xff]
                %571 = vst [vmem:[%s373 + $0x370] sm:$0xff] %v570
                %v572 = vld [vmem:[%s372 + $0x6d8] sm:$0xff]
                %573 = vst [vmem:[%s373 + $0x378] sm:$0xff] %v572
                %v574 = vld [vmem:[%s372 + $0x708] sm:$0xff]
                %575 = vst [vmem:[%s373 + $0x384] sm:$0xff] %v574
                %v576 = vld [vmem:[%s372 + $0x710] sm:$0xff]
                %577 = vst [vmem:[%s373 + $0x38c] sm:$0xff] %v576
                %v578 = vld [vmem:[%s372 + $0x718] sm:$0xff]
                %579 = vst [vmem:[%s373 + $0x394] sm:$0xff] %v578
                %v580 = vld [vmem:[%s372 + $0x720] sm:$0xff]
                %581 = vst [vmem:[%s373 + $0x39c] sm:$0xff] %v580
                %v582 = vld [vmem:[%s372 + $0x750] sm:$0xff]
                %583 = vst [vmem:[%s373 + $0x3a8] sm:$0xff] %v582
                %v584 = vld [vmem:[%s372 + $0x758] sm:$0xff]
                %585 = vst [vmem:[%s373 + $0x3b0] sm:$0xff] %v584
                %v586 = vld [vmem:[%s372 + $0x760] sm:$0xff]
                %587 = vst [vmem:[%s373 + $0x3b8] sm:$0xff] %v586
                %v588 = vld [vmem:[%s372 + $0x768] sm:$0xff]
                %589 = vst [vmem:[%s373 + $0x3c0] sm:$0xff] %v588
                %v590 = vld [vmem:[%s372 + $0x798] sm:$0xff]
                %591 = vst [vmem:[%s373 + $0x3cc] sm:$0xff] %v590
                %v592 = vld [vmem:[%s372 + $0x7a0] sm:$0xff]
                %593 = vst [vmem:[%s373 + $0x3d4] sm:$0xff] %v592
                %v594 = vld [vmem:[%s372 + $0x7a8] sm:$0xff]
                %595 = vst [vmem:[%s373 + $0x3dc] sm:$0xff] %v594
                %v596 = vld [vmem:[%s372 + $0x7b0] sm:$0xff]
                %597 = vst [vmem:[%s373 + $0x3e4] sm:$0xff] %v596
                %v598 = vld [vmem:[%s372 + $0x7e0] sm:$0xff]
                %599 = vst [vmem:[%s373 + $0x3f0] sm:$0xff] %v598
                %v600 = vld [vmem:[%s372 + $0x7e8] sm:$0xff]
                %601 = vst [vmem:[%s373 + $0x3f8] sm:$0xff] %v600
                %v602 = vld [vmem:[%s372 + $0x7f0] sm:$0xff]
                %603 = vst [vmem:[%s373 + $0x400] sm:$0xff] %v602
                %v604 = vld [vmem:[%s372 + $0x7f8] sm:$0xff]
                %605 = vst [vmem:[%s373 + $0x408] sm:$0xff] %v604
                %v606 = vld [vmem:[%s372 + $0x828] sm:$0xff]
                %607 = vst [vmem:[%s373 + $0x414] sm:$0xff] %v606
                %v608 = vld [vmem:[%s372 + $0x830] sm:$0xff]
                %609 = vst [vmem:[%s373 + $0x41c] sm:$0xff] %v608
                %v610 = vld [vmem:[%s372 + $0x838] sm:$0xff]
                %611 = vst [vmem:[%s373 + $0x424] sm:$0xff] %v610
                %v612 = vld [vmem:[%s372 + $0x840] sm:$0xff]
                %613 = vst [vmem:[%s373 + $0x42c] sm:$0xff] %v612
                %v614 = vld [vmem:[%s372 + $0x870] sm:$0xff]
                %615 = vst [vmem:[%s373 + $0x438] sm:$0xff] %v614
                %v616 = vld [vmem:[%s372 + $0x878] sm:$0xff]
                %617 = vst [vmem:[%s373 + $0x440] sm:$0xff] %v616
                %v618 = vld [vmem:[%s372 + $0x880] sm:$0xff]
                %619 = vst [vmem:[%s373 + $0x448] sm:$0xff] %v618
                %v620 = vld [vmem:[%s372 + $0x888] sm:$0xff]
                %621 = vst [vmem:[%s373 + $0x450] sm:$0xff] %v620
                %v622 = vld [vmem:[%s372 + $0x8b8] sm:$0xff]
                %623 = vst [vmem:[%s373 + $0x45c] sm:$0xff] %v622
                %v624 = vld [vmem:[%s372 + $0x8c0] sm:$0xff]
                %625 = vst [vmem:[%s373 + $0x464] sm:$0xff] %v624
                %v626 = vld [vmem:[%s372 + $0x8c8] sm:$0xff]
                %627 = vst [vmem:[%s373 + $0x46c] sm:$0xff] %v626
                %v628 = vld [vmem:[%s372 + $0x8d0] sm:$0xff]
                %629 = vst [vmem:[%s373 + $0x474] sm:$0xff] %v628
              $region69: #{_device_forward.1} parent=63 // loop_footer
                %s371 = sadd.s32 1, %s367
              $region70: #{_device_forward.1} parent=63 // loop_footer_branch
                %366 = sbr.rel target = $region66
              $region71: #{_device_forward.1} parent=63 // loop_exit
                _
              %s631 = ssub.s32 16, 1
              loop: start=0, step=1, limit=1
              $region72: #{_device_forward.1} parent=63 // loop_pre_header
                _
              $region73: #{_device_forward.1} parent=63 // loop_header
                %s633 = sphi 0, %s637
                %p634 = scmp.ge.s32.totalorder %s633, 1
                %s638 = sphi %s364, %s364
                %s639 = sphi %s365, %s365
              $region74: #{_device_forward.1} parent=63 // loop_header_branch
                %636 = sbr.rel (%p634) target = $region78
              $region75: #{_device_forward.1} parent=63 // loop_body
                %v640 = vld [vmem:[%s638] sm:%s631]
                %641 = vst [vmem:[%s639] sm:%s631] %v640
                %v642 = vld [vmem:[%s638 + $0x48] sm:%s631]
                %643 = vst [vmem:[%s639 + $0x24] sm:%s631] %v642
                %v644 = vld [vmem:[%s638 + $0x90] sm:%s631]
                %645 = vst [vmem:[%s639 + $0x48] sm:%s631] %v644
                %v646 = vld [vmem:[%s638 + $0xd8] sm:%s631]
                %647 = vst [vmem:[%s639 + $0x6c] sm:%s631] %v646
                %v648 = vld [vmem:[%s638 + $0x120] sm:%s631]
                %649 = vst [vmem:[%s639 + $0x90] sm:%s631] %v648
                %v650 = vld [vmem:[%s638 + $0x168] sm:%s631]
                %651 = vst [vmem:[%s639 + $0xb4] sm:%s631] %v650
                %v652 = vld [vmem:[%s638 + $0x1b0] sm:%s631]
                %653 = vst [vmem:[%s639 + $0xd8] sm:%s631] %v652
                %v654 = vld [vmem:[%s638 + $0x1f8] sm:%s631]
                %655 = vst [vmem:[%s639 + $0xfc] sm:%s631] %v654
                %v656 = vld [vmem:[%s638 + $0x240] sm:%s631]
                %657 = vst [vmem:[%s639 + $0x120] sm:%s631] %v656
                %v658 = vld [vmem:[%s638 + $0x288] sm:%s631]
                %659 = vst [vmem:[%s639 + $0x144] sm:%s631] %v658
                %v660 = vld [vmem:[%s638 + $0x2d0] sm:%s631]
                %661 = vst [vmem:[%s639 + $0x168] sm:%s631] %v660
                %v662 = vld [vmem:[%s638 + $0x318] sm:%s631]
                %663 = vst [vmem:[%s639 + $0x18c] sm:%s631] %v662
                %v664 = vld [vmem:[%s638 + $0x360] sm:%s631]
                %665 = vst [vmem:[%s639 + $0x1b0] sm:%s631] %v664
                %v666 = vld [vmem:[%s638 + $0x3a8] sm:%s631]
                %667 = vst [vmem:[%s639 + $0x1d4] sm:%s631] %v666
                %v668 = vld [vmem:[%s638 + $0x3f0] sm:%s631]
                %669 = vst [vmem:[%s639 + $0x1f8] sm:%s631] %v668
                %v670 = vld [vmem:[%s638 + $0x438] sm:%s631]
                %671 = vst [vmem:[%s639 + $0x21c] sm:%s631] %v670
                %v672 = vld [vmem:[%s638 + $0x480] sm:%s631]
                %673 = vst [vmem:[%s639 + $0x240] sm:%s631] %v672
                %v674 = vld [vmem:[%s638 + $0x4c8] sm:%s631]
                %675 = vst [vmem:[%s639 + $0x264] sm:%s631] %v674
                %v676 = vld [vmem:[%s638 + $0x510] sm:%s631]
                %677 = vst [vmem:[%s639 + $0x288] sm:%s631] %v676
                %v678 = vld [vmem:[%s638 + $0x558] sm:%s631]
                %679 = vst [vmem:[%s639 + $0x2ac] sm:%s631] %v678
                %v680 = vld [vmem:[%s638 + $0x5a0] sm:%s631]
                %681 = vst [vmem:[%s639 + $0x2d0] sm:%s631] %v680
                %v682 = vld [vmem:[%s638 + $0x5e8] sm:%s631]
                %683 = vst [vmem:[%s639 + $0x2f4] sm:%s631] %v682
                %v684 = vld [vmem:[%s638 + $0x630] sm:%s631]
                %685 = vst [vmem:[%s639 + $0x318] sm:%s631] %v684
                %v686 = vld [vmem:[%s638 + $0x678] sm:%s631]
                %687 = vst [vmem:[%s639 + $0x33c] sm:%s631] %v686
                %v688 = vld [vmem:[%s638 + $0x6c0] sm:%s631]
                %689 = vst [vmem:[%s639 + $0x360] sm:%s631] %v688
                %v690 = vld [vmem:[%s638 + $0x708] sm:%s631]
                %691 = vst [vmem:[%s639 + $0x384] sm:%s631] %v690
                %v692 = vld [vmem:[%s638 + $0x750] sm:%s631]
                %693 = vst [vmem:[%s639 + $0x3a8] sm:%s631] %v692
                %v694 = vld [vmem:[%s638 + $0x798] sm:%s631]
                %695 = vst [vmem:[%s639 + $0x3cc] sm:%s631] %v694
                %v696 = vld [vmem:[%s638 + $0x7e0] sm:%s631]
                %697 = vst [vmem:[%s639 + $0x3f0] sm:%s631] %v696
                %v698 = vld [vmem:[%s638 + $0x828] sm:%s631]
                %699 = vst [vmem:[%s639 + $0x414] sm:%s631] %v698
                %v700 = vld [vmem:[%s638 + $0x870] sm:%s631]
                %701 = vst [vmem:[%s639 + $0x438] sm:%s631] %v700
                %v702 = vld [vmem:[%s638 + $0x8b8] sm:%s631]
                %703 = vst [vmem:[%s639 + $0x45c] sm:%s631] %v702
              $region76: #{_device_forward.1} parent=63 // loop_footer
                %s637 = sadd.s32 1, %s633
              $region77: #{_device_forward.1} parent=63 // loop_footer_branch
                %632 = sbr.rel target = $region73
              $region78: #{_device_forward.1} parent=63 // loop_exit
                _
            $region64: #{_device_forward.1} parent=59 // pred_fallthru
              _
          $region60: #{_device_forward.1} parent=55 // pred_fallthru
            _
          %704 = vnop
        $region56: #{_device_forward.1} parent=51 // pred_fallthru
          _
        // Predicated region
        $region79: #{_device_forward.1} parent=51 // pred_check
          %p705 = pneg %p109
        $region80: #{_device_forward.1} parent=51 // pred_check_branch
          %707 = sbr.rel (%p705) target = $region82
        $region81: #{_device_forward.1} parent=51 // pred_region
          %s708 = smul.u32 144, %s21
          %p709 = scmp.lt.s32.totalorder %s708, 287
          %s710 = scalar_select %p709, %s708, 287
          %s711 = smul.addr %s710, 8
          %s712 = smul.addr %s711, 4
          %s713 = scalar_lea.vmem %s3, %s712
          %s714 = smul.u32 144, %s21
        $region82: #{_device_forward.1} parent=51 // pred_fallthru
          _
      $region52: #{_device_forward.1} parent=5 // pred_fallthru
        _
      %p715 = scmp.le.s32.totalorder 1, %s21
      %p716 = scmp.lt.s32.totalorder %s21, 3
      %p717 = pnand %p715, %p716
      %p718 = pneg %p717
      // Predicated region
      $region83: #{_device_forward.1} parent=5 // pred_check
        _
      $region84: #{_device_forward.1} parent=5 // pred_check_branch
        %720 = sbr.rel (%p717) target = $region86
      $region85: #{_device_forward.1} parent=5 // pred_region
        %s721 = ssub.s32 %s21, 1
        %s722 = sand.u32 %s76, 1
        %s723 = sand.u32 %s76, 1
        %s724 = smul.addr %s723, 1152
        %s725 = scalar_lea.vmem [#allocation4], %s724
        // Predicated region
        $region87: #{_device_forward.1} parent=85 // pred_check
          %p726 = pneg %p89
        $region88: #{_device_forward.1} parent=85 // pred_check_branch
          %728 = sbr.rel (%p726) target = $region90
        $region89: #{_device_forward.1} parent=85 // pred_region
          _
        $region90: #{_device_forward.1} parent=85 // pred_fallthru
          _
        %p729 = pneg %p42
        %p730 = pneg %p39
        %p731 = pneg %p63
        %p732 = pneg %p60
        %s733 = sand.u32 %s76, 1
        %s734 = sand.u32 %s76, 1
        %s735 = smul.addr %s734, 1152
        %s736 = scalar_lea.vmem [#allocation4], %s735
        %p737 = pneg %p89
        %p738 = pneg %p86
        %s739 = smul.u32 144, %s26
        %p740 = scmp.lt.s32.totalorder %s739, 287
        %s741 = scalar_select %p740, %s739, 287
        %s742 = smul.addr %s741, 8
        %s743 = smul.addr %s742, 4
        %s744 = scalar_lea.vmem %s3, %s743
        %p745 = pneg %p115
        %p746 = pneg %p112
        %p747 = pneg %p136
        %p748 = pneg %p133
        %p749 = pneg %p157
        %p750 = pneg %p154
        %p751 = pneg %p178
        %p752 = pneg %p175
        %p753 = pneg %p199
        %p754 = pneg %p196
        %p755 = pneg %p220
        %p756 = pneg %p217
        %p757 = pneg %p241
        %p758 = pneg %p238
        %p759 = pneg %p262
        %p760 = pneg %p259
        %p761 = pneg %p283
        %p762 = pneg %p280
        %p763 = pneg %p304
        %p764 = pneg %p301
        %s765 = smul.u32 9, %s26
        %s766 = smul.u32 144, %s26
        %p767 = scmp.lt.s32.totalorder %s766, 287
        %s768 = scalar_select %p767, %s766, 287
        %s769 = smul.addr %s768, 8
        %s770 = smul.addr %s769, 4
        %s771 = scalar_lea.vmem %s3, %s770
        %s772 = smul.u32 144, %s26
        %p774 = scmp.eq.s32.totalorder %s26, 0
        // Predicated region
        $region91: #{_device_forward.1} parent=85 // pred_check
          %p775 = pneg %p774
        $region92: #{_device_forward.1} parent=85 // pred_check_branch
          %777 = sbr.rel (%p775) target = $region94
        $region93: #{_device_forward.1} parent=85 // pred_region
          %778 = vst [vmem:[#allocation2] sm:$0xff] 0.0
          %779 = vst [vmem:[#allocation2 + $0x8] sm:$0xff] 0.0
          %780 = vst [vmem:[#allocation2 + $0x10] sm:$0xff] 0.0
          %781 = vst [vmem:[#allocation2 + $0x18] sm:$0xff] 0.0
          %782 = vst [vmem:[#allocation2 + $0x20] sm:$0xff] 0.0
          %783 = vst [vmem:[#allocation2 + $0x28] sm:$0xff] 0.0
          %784 = vst [vmem:[#allocation2 + $0x30] sm:$0xff] 0.0
          %785 = vst [vmem:[#allocation2 + $0x38] sm:$0xff] 0.0
          %786 = vst [vmem:[#allocation2 + $0x40] sm:$0xff] 0.0
          %787 = vst [vmem:[#allocation2 + $0x48] sm:$0xff] 0.0
          %788 = vst [vmem:[#allocation2 + $0x50] sm:$0xff] 0.0
          %789 = vst [vmem:[#allocation2 + $0x58] sm:$0xff] 0.0
          %790 = vst [vmem:[#allocation2 + $0x60] sm:$0xff] 0.0
          %791 = vst [vmem:[#allocation2 + $0x68] sm:$0xff] 0.0
          %792 = vst [vmem:[#allocation2 + $0x70] sm:$0xff] 0.0
          %793 = vst [vmem:[#allocation2 + $0x78] sm:$0xff] 0.0
          %vm794 = vcmask 130048
          %795 = vst.msk [vmem:[#allocation3] sm:$0xff] %vm794, 0.0
          %796 = vst.msk [vmem:[#allocation3 + $0x8] sm:$0xff] %vm794, 0.0
        $region94: #{_device_forward.1} parent=85 // pred_fallthru
          _
        %v797 = vld [vmem:[%s0] sm:$0xff]
        %v798 = vld [vmem:[%s0 + $0x8] sm:$0xff]
        %v799 = vld [vmem:[%s725] sm:$0xff]
        %v800 = vld [vmem:[%s725 + $0x8] sm:$0xff]
        %v801 = vld [vmem:[%s725 + $0x10] sm:$0xff]
        %v802 = vld [vmem:[%s725 + $0x18] sm:$0xff]
        %v803 = vld [vmem:[%s725 + $0x20] sm:$0xf]
        %v804 = vld [vmem:[%s725 + $0x24] sm:$0xff]
        %v805 = vld [vmem:[%s725 + $0x2c] sm:$0xff]
        %v806 = vld [vmem:[%s725 + $0x34] sm:$0xff]
        %v807 = vld [vmem:[%s725 + $0x3c] sm:$0xff]
        %v808 = vld [vmem:[%s725 + $0x44] sm:$0xf]
        %v809 = vld [vmem:[%s725 + $0x48] sm:$0xff]
        %v810 = vld [vmem:[%s725 + $0x50] sm:$0xff]
        %v811 = vld [vmem:[%s725 + $0x58] sm:$0xff]
        %v812 = vld [vmem:[%s725 + $0x60] sm:$0xff]
        %v813 = vld [vmem:[%s725 + $0x68] sm:$0xf]
        %v814 = vld [vmem:[%s725 + $0x6c] sm:$0xff]
        %v815 = vld [vmem:[%s725 + $0x74] sm:$0xff]
        %v816 = vld [vmem:[%s725 + $0x7c] sm:$0xff]
        %v817 = vld [vmem:[%s725 + $0x84] sm:$0xff]
        %v818 = vld [vmem:[%s725 + $0x8c] sm:$0xf]
        %v819 = vld [vmem:[%s725 + $0x90] sm:$0xff]
        %v820 = vld [vmem:[%s725 + $0x98] sm:$0xff]
        %v821 = vld [vmem:[%s725 + $0xa0] sm:$0xff]
        %v822 = vld [vmem:[%s725 + $0xa8] sm:$0xff]
        %v823 = vld [vmem:[%s725 + $0xb0] sm:$0xf]
        %v824 = vld [vmem:[%s725 + $0xb4] sm:$0xff]
        %v825 = vld [vmem:[%s725 + $0xbc] sm:$0xff]
        %v826 = vld [vmem:[%s725 + $0xc4] sm:$0xff]
        %v827 = vld [vmem:[%s725 + $0xcc] sm:$0xff]
        %v828 = vld [vmem:[%s725 + $0xd4] sm:$0xf]
        %v829 = vld [vmem:[%s725 + $0xd8] sm:$0xff]
        %v830 = vld [vmem:[%s725 + $0xe0] sm:$0xff]
        %v831 = vld [vmem:[%s725 + $0xe8] sm:$0xff]
        %v832 = vld [vmem:[%s725 + $0xf0] sm:$0xff]
        %v833 = vld [vmem:[%s725 + $0xf8] sm:$0xf]
        %v834 = vld [vmem:[%s725 + $0xfc] sm:$0xff]
        %v835 = vld [vmem:[%s725 + $0x104] sm:$0xff]
        %v836 = vld [vmem:[%s725 + $0x10c] sm:$0xff]
        %v837 = vld [vmem:[%s725 + $0x114] sm:$0xff]
        %v838 = vld [vmem:[%s725 + $0x11c] sm:$0xf]
        %v839 = vld [vmem:[%s725 + $0x120] sm:$0xff]
        %v840 = vld [vmem:[%s725 + $0x128] sm:$0xff]
        %v841 = vld [vmem:[%s725 + $0x130] sm:$0xff]
        %v842 = vld [vmem:[%s725 + $0x138] sm:$0xff]
        %v843 = vld [vmem:[%s725 + $0x140] sm:$0xf]
        %v844 = vld [vmem:[%s725 + $0x144] sm:$0xff]
        %v845 = vld [vmem:[%s725 + $0x14c] sm:$0xff]
        %v846 = vld [vmem:[%s725 + $0x154] sm:$0xff]
        %v847 = vld [vmem:[%s725 + $0x15c] sm:$0xff]
        %v848 = vld [vmem:[%s725 + $0x164] sm:$0xf]
        %v849 = vld [vmem:[%s725 + $0x168] sm:$0xff]
        %v850 = vld [vmem:[%s725 + $0x170] sm:$0xff]
        %v851 = vld [vmem:[%s725 + $0x178] sm:$0xff]
        %v852 = vld [vmem:[%s725 + $0x180] sm:$0xff]
        %v853 = vld [vmem:[%s725 + $0x188] sm:$0xf]
        %v854 = vld [vmem:[%s725 + $0x18c] sm:$0xff]
        %v855 = vld [vmem:[%s725 + $0x194] sm:$0xff]
        %v856 = vld [vmem:[%s725 + $0x19c] sm:$0xff]
        %v857 = vld [vmem:[%s725 + $0x1a4] sm:$0xff]
        %v858 = vld [vmem:[%s725 + $0x1ac] sm:$0xf]
        %v859 = vld [vmem:[%s725 + $0x1b0] sm:$0xff]
        %v860 = vld [vmem:[%s725 + $0x1b8] sm:$0xff]
        %v861 = vld [vmem:[%s725 + $0x1c0] sm:$0xff]
        %v862 = vld [vmem:[%s725 + $0x1c8] sm:$0xff]
        %v863 = vld [vmem:[%s725 + $0x1d0] sm:$0xf]
        %v864 = vld [vmem:[%s725 + $0x1d4] sm:$0xff]
        %v865 = vld [vmem:[%s725 + $0x1dc] sm:$0xff]
        %v866 = vld [vmem:[%s725 + $0x1e4] sm:$0xff]
        %v867 = vld [vmem:[%s725 + $0x1ec] sm:$0xff]
        %v868 = vld [vmem:[%s725 + $0x1f4] sm:$0xf]
        %v869 = vld [vmem:[%s725 + $0x1f8] sm:$0xff]
        %v870 = vld [vmem:[%s725 + $0x200] sm:$0xff]
        %v871 = vld [vmem:[%s725 + $0x208] sm:$0xff]
        %v872 = vld [vmem:[%s725 + $0x210] sm:$0xff]
        %v873 = vld [vmem:[%s725 + $0x218] sm:$0xf]
        %v874 = vld [vmem:[%s725 + $0x21c] sm:$0xff]
        %v875 = vld [vmem:[%s725 + $0x224] sm:$0xff]
        %v876 = vld [vmem:[%s725 + $0x22c] sm:$0xff]
        %v877 = vld [vmem:[%s725 + $0x234] sm:$0xff]
        %v878 = vld [vmem:[%s725 + $0x23c] sm:$0xf]
        %v879 = vld [vmem:[%s725 + $0x240] sm:$0xff]
        %v880 = vld [vmem:[%s725 + $0x248] sm:$0xff]
        %v881 = vld [vmem:[%s725 + $0x250] sm:$0xff]
        %v882 = vld [vmem:[%s725 + $0x258] sm:$0xff]
        %v883 = vld [vmem:[%s725 + $0x260] sm:$0xf]
        %v884 = vld [vmem:[%s725 + $0x264] sm:$0xff]
        %v885 = vld [vmem:[%s725 + $0x26c] sm:$0xff]
        %v886 = vld [vmem:[%s725 + $0x274] sm:$0xff]
        %v887 = vld [vmem:[%s725 + $0x27c] sm:$0xff]
        %v888 = vld [vmem:[%s725 + $0x284] sm:$0xf]
        %v889 = vld [vmem:[%s725 + $0x288] sm:$0xff]
        %v890 = vld [vmem:[%s725 + $0x290] sm:$0xff]
        %v891 = vld [vmem:[%s725 + $0x298] sm:$0xff]
        %v892 = vld [vmem:[%s725 + $0x2a0] sm:$0xff]
        %v893 = vld [vmem:[%s725 + $0x2a8] sm:$0xf]
        %v894 = vld [vmem:[%s725 + $0x2ac] sm:$0xff]
        %v895 = vld [vmem:[%s725 + $0x2b4] sm:$0xff]
        %v896 = vld [vmem:[%s725 + $0x2bc] sm:$0xff]
        %v897 = vld [vmem:[%s725 + $0x2c4] sm:$0xff]
        %v898 = vld [vmem:[%s725 + $0x2cc] sm:$0xf]
        %v899 = vld [vmem:[%s725 + $0x2d0] sm:$0xff]
        %v900 = vld [vmem:[%s725 + $0x2d8] sm:$0xff]
        %v901 = vld [vmem:[%s725 + $0x2e0] sm:$0xff]
        %v902 = vld [vmem:[%s725 + $0x2e8] sm:$0xff]
        %v903 = vld [vmem:[%s725 + $0x2f0] sm:$0xf]
        %v904 = vld [vmem:[%s725 + $0x2f4] sm:$0xff]
        %v905 = vld [vmem:[%s725 + $0x2fc] sm:$0xff]
        %v906 = vld [vmem:[%s725 + $0x304] sm:$0xff]
        %v907 = vld [vmem:[%s725 + $0x30c] sm:$0xff]
        %v908 = vld [vmem:[%s725 + $0x314] sm:$0xf]
        %v909 = vld [vmem:[%s725 + $0x318] sm:$0xff]
        %v910 = vld [vmem:[%s725 + $0x320] sm:$0xff]
        %v911 = vld [vmem:[%s725 + $0x328] sm:$0xff]
        %v912 = vld [vmem:[%s725 + $0x330] sm:$0xff]
        %v913 = vld [vmem:[%s725 + $0x338] sm:$0xf]
        %v914 = vld [vmem:[%s725 + $0x33c] sm:$0xff]
        %v915 = vld [vmem:[%s725 + $0x344] sm:$0xff]
        %v916 = vld [vmem:[%s725 + $0x34c] sm:$0xff]
        %v917 = vld [vmem:[%s725 + $0x354] sm:$0xff]
        %v918 = vld [vmem:[%s725 + $0x35c] sm:$0xf]
        %v919 = vld [vmem:[%s725 + $0x360] sm:$0xff]
        %v920 = vld [vmem:[%s725 + $0x368] sm:$0xff]
        %v921 = vld [vmem:[%s725 + $0x370] sm:$0xff]
        %v922 = vld [vmem:[%s725 + $0x378] sm:$0xff]
        %v923 = vld [vmem:[%s725 + $0x380] sm:$0xf]
        %v924 = vld [vmem:[%s725 + $0x384] sm:$0xff]
        %v925 = vld [vmem:[%s725 + $0x38c] sm:$0xff]
        %v926 = vld [vmem:[%s725 + $0x394] sm:$0xff]
        %v927 = vld [vmem:[%s725 + $0x39c] sm:$0xff]
        %v928 = vld [vmem:[%s725 + $0x3a4] sm:$0xf]
        %v929 = vld [vmem:[%s725 + $0x3a8] sm:$0xff]
        %v930 = vld [vmem:[%s725 + $0x3b0] sm:$0xff]
        %v931 = vld [vmem:[%s725 + $0x3b8] sm:$0xff]
        %v932 = vld [vmem:[%s725 + $0x3c0] sm:$0xff]
        %v933 = vld [vmem:[%s725 + $0x3c8] sm:$0xf]
        %v934 = vld [vmem:[%s725 + $0x3cc] sm:$0xff]
        %v935 = vld [vmem:[%s725 + $0x3d4] sm:$0xff]
        %v936 = vld [vmem:[%s725 + $0x3dc] sm:$0xff]
        %v937 = vld [vmem:[%s725 + $0x3e4] sm:$0xff]
        %v938 = vld [vmem:[%s725 + $0x3ec] sm:$0xf]
        %v939 = vld [vmem:[%s725 + $0x3f0] sm:$0xff]
        %v940 = vld [vmem:[%s725 + $0x3f8] sm:$0xff]
        %v941 = vld [vmem:[%s725 + $0x400] sm:$0xff]
        %v942 = vld [vmem:[%s725 + $0x408] sm:$0xff]
        %v943 = vld [vmem:[%s725 + $0x410] sm:$0xf]
        %v944 = vld [vmem:[%s725 + $0x414] sm:$0xff]
        %v945 = vld [vmem:[%s725 + $0x41c] sm:$0xff]
        %v946 = vld [vmem:[%s725 + $0x424] sm:$0xff]
        %v947 = vld [vmem:[%s725 + $0x42c] sm:$0xff]
        %v948 = vld [vmem:[%s725 + $0x434] sm:$0xf]
        %v949 = vld [vmem:[%s725 + $0x438] sm:$0xff]
        %v950 = vld [vmem:[%s725 + $0x440] sm:$0xff]
        %v951 = vld [vmem:[%s725 + $0x448] sm:$0xff]
        %v952 = vld [vmem:[%s725 + $0x450] sm:$0xff]
        %v953 = vld [vmem:[%s725 + $0x458] sm:$0xf]
        %v954 = vld [vmem:[%s725 + $0x45c] sm:$0xff]
        %v955 = vld [vmem:[%s725 + $0x464] sm:$0xff]
        %v956 = vld [vmem:[%s725 + $0x46c] sm:$0xff]
        %v957 = vld [vmem:[%s725 + $0x474] sm:$0xff]
        %v958 = vld [vmem:[%s725 + $0x47c] sm:$0xf]
        %v961 = vunpack.c.l.b16 %v797
        %v962 = vunpack.c.h.b16 %v797
        %v963 = vunpack.c.l.b16 %v798
        %v964 = vunpack.c.h.b16 %v798
        %v965 = vpack.c.b16 %v963, %v961
        %v966 = vpack.c.b16 %v964, %v962
        %v1129 = vunpack.c.l.b16 %v799
        %v1130 = vunpack.c.h.b16 %v799
        %v1131 = vunpack.c.l.b16 %v800
        %v1132 = vunpack.c.h.b16 %v800
        %v1133 = vunpack.c.l.b16 %v801
        %v1134 = vunpack.c.h.b16 %v801
        %v1135 = vunpack.c.l.b16 %v802
        %v1136 = vunpack.c.h.b16 %v802
        %v1137 = vunpack.c.l.b16 %v803
        %v1138 = vunpack.c.l.b16 %v804
        %v1139 = vunpack.c.h.b16 %v804
        %v1140 = vunpack.c.l.b16 %v805
        %v1141 = vunpack.c.h.b16 %v805
        %v1142 = vunpack.c.l.b16 %v806
        %v1143 = vunpack.c.h.b16 %v806
        %v1144 = vunpack.c.l.b16 %v807
        %v1145 = vunpack.c.h.b16 %v807
        %v1146 = vunpack.c.l.b16 %v808
        %v1147 = vunpack.c.l.b16 %v809
        %v1148 = vunpack.c.h.b16 %v809
        %v1149 = vunpack.c.l.b16 %v810
        %v1150 = vunpack.c.h.b16 %v810
        %v1151 = vunpack.c.l.b16 %v811
        %v1152 = vunpack.c.h.b16 %v811
        %v1153 = vunpack.c.l.b16 %v812
        %v1154 = vunpack.c.h.b16 %v812
        %v1155 = vunpack.c.l.b16 %v813
        %v1156 = vunpack.c.l.b16 %v814
        %v1157 = vunpack.c.h.b16 %v814
        %v1158 = vunpack.c.l.b16 %v815
        %v1159 = vunpack.c.h.b16 %v815
        %v1160 = vunpack.c.l.b16 %v816
        %v1161 = vunpack.c.h.b16 %v816
        %v1162 = vunpack.c.l.b16 %v817
        %v1163 = vunpack.c.h.b16 %v817
        %v1164 = vunpack.c.l.b16 %v818
        %v1165 = vunpack.c.l.b16 %v819
        %v1166 = vunpack.c.h.b16 %v819
        %v1167 = vunpack.c.l.b16 %v820
        %v1168 = vunpack.c.h.b16 %v820
        %v1169 = vunpack.c.l.b16 %v821
        %v1170 = vunpack.c.h.b16 %v821
        %v1171 = vunpack.c.l.b16 %v822
        %v1172 = vunpack.c.h.b16 %v822
        %v1173 = vunpack.c.l.b16 %v823
        %v1174 = vunpack.c.l.b16 %v824
        %v1175 = vunpack.c.h.b16 %v824
        %v1176 = vunpack.c.l.b16 %v825
        %v1177 = vunpack.c.h.b16 %v825
        %v1178 = vunpack.c.l.b16 %v826
        %v1179 = vunpack.c.h.b16 %v826
        %v1180 = vunpack.c.l.b16 %v827
        %v1181 = vunpack.c.h.b16 %v827
        %v1182 = vunpack.c.l.b16 %v828
        %v1183 = vunpack.c.l.b16 %v829
        %v1184 = vunpack.c.h.b16 %v829
        %v1185 = vunpack.c.l.b16 %v830
        %v1186 = vunpack.c.h.b16 %v830
        %v1187 = vunpack.c.l.b16 %v831
        %v1188 = vunpack.c.h.b16 %v831
        %v1189 = vunpack.c.l.b16 %v832
        %v1190 = vunpack.c.h.b16 %v832
        %v1191 = vunpack.c.l.b16 %v833
        %v1192 = vunpack.c.l.b16 %v834
        %v1193 = vunpack.c.h.b16 %v834
        %v1194 = vunpack.c.l.b16 %v835
        %v1195 = vunpack.c.h.b16 %v835
        %v1196 = vunpack.c.l.b16 %v836
        %v1197 = vunpack.c.h.b16 %v836
        %v1198 = vunpack.c.l.b16 %v837
        %v1199 = vunpack.c.h.b16 %v837
        %v1200 = vunpack.c.l.b16 %v838
        %v1201 = vunpack.c.l.b16 %v839
        %v1202 = vunpack.c.h.b16 %v839
        %v1203 = vunpack.c.l.b16 %v840
        %v1204 = vunpack.c.h.b16 %v840
        %v1205 = vunpack.c.l.b16 %v841
        %v1206 = vunpack.c.h.b16 %v841
        %v1207 = vunpack.c.l.b16 %v842
        %v1208 = vunpack.c.h.b16 %v842
        %v1209 = vunpack.c.l.b16 %v843
        %v1210 = vunpack.c.l.b16 %v844
        %v1211 = vunpack.c.h.b16 %v844
        %v1212 = vunpack.c.l.b16 %v845
        %v1213 = vunpack.c.h.b16 %v845
        %v1214 = vunpack.c.l.b16 %v846
        %v1215 = vunpack.c.h.b16 %v846
        %v1216 = vunpack.c.l.b16 %v847
        %v1217 = vunpack.c.h.b16 %v847
        %v1218 = vunpack.c.l.b16 %v848
        %v1219 = vunpack.c.l.b16 %v849
        %v1220 = vunpack.c.h.b16 %v849
        %v1221 = vunpack.c.l.b16 %v850
        %v1222 = vunpack.c.h.b16 %v850
        %v1223 = vunpack.c.l.b16 %v851
        %v1224 = vunpack.c.h.b16 %v851
        %v1225 = vunpack.c.l.b16 %v852
        %v1226 = vunpack.c.h.b16 %v852
        %v1227 = vunpack.c.l.b16 %v853
        %v1228 = vunpack.c.l.b16 %v854
        %v1229 = vunpack.c.h.b16 %v854
        %v1230 = vunpack.c.l.b16 %v855
        %v1231 = vunpack.c.h.b16 %v855
        %v1232 = vunpack.c.l.b16 %v856
        %v1233 = vunpack.c.h.b16 %v856
        %v1234 = vunpack.c.l.b16 %v857
        %v1235 = vunpack.c.h.b16 %v857
        %v1236 = vunpack.c.l.b16 %v858
        %v1237 = vunpack.c.l.b16 %v859
        %v1238 = vunpack.c.h.b16 %v859
        %v1239 = vunpack.c.l.b16 %v860
        %v1240 = vunpack.c.h.b16 %v860
        %v1241 = vunpack.c.l.b16 %v861
        %v1242 = vunpack.c.h.b16 %v861
        %v1243 = vunpack.c.l.b16 %v862
        %v1244 = vunpack.c.h.b16 %v862
        %v1245 = vunpack.c.l.b16 %v863
        %v1246 = vunpack.c.l.b16 %v864
        %v1247 = vunpack.c.h.b16 %v864
        %v1248 = vunpack.c.l.b16 %v865
        %v1249 = vunpack.c.h.b16 %v865
        %v1250 = vunpack.c.l.b16 %v866
        %v1251 = vunpack.c.h.b16 %v866
        %v1252 = vunpack.c.l.b16 %v867
        %v1253 = vunpack.c.h.b16 %v867
        %v1254 = vunpack.c.l.b16 %v868
        %v1255 = vunpack.c.l.b16 %v869
        %v1256 = vunpack.c.h.b16 %v869
        %v1257 = vunpack.c.l.b16 %v870
        %v1258 = vunpack.c.h.b16 %v870
        %v1259 = vunpack.c.l.b16 %v871
        %v1260 = vunpack.c.h.b16 %v871
        %v1261 = vunpack.c.l.b16 %v872
        %v1262 = vunpack.c.h.b16 %v872
        %v1263 = vunpack.c.l.b16 %v873
        %v1264 = vunpack.c.l.b16 %v874
        %v1265 = vunpack.c.h.b16 %v874
        %v1266 = vunpack.c.l.b16 %v875
        %v1267 = vunpack.c.h.b16 %v875
        %v1268 = vunpack.c.l.b16 %v876
        %v1269 = vunpack.c.h.b16 %v876
        %v1270 = vunpack.c.l.b16 %v877
        %v1271 = vunpack.c.h.b16 %v877
        %v1272 = vunpack.c.l.b16 %v878
        %v1273 = vunpack.c.l.b16 %v879
        %v1274 = vunpack.c.h.b16 %v879
        %v1275 = vunpack.c.l.b16 %v880
        %v1276 = vunpack.c.h.b16 %v880
        %v1277 = vunpack.c.l.b16 %v881
        %v1278 = vunpack.c.h.b16 %v881
        %v1279 = vunpack.c.l.b16 %v882
        %v1280 = vunpack.c.h.b16 %v882
        %v1281 = vunpack.c.l.b16 %v883
        %v1282 = vunpack.c.l.b16 %v884
        %v1283 = vunpack.c.h.b16 %v884
        %v1284 = vunpack.c.l.b16 %v885
        %v1285 = vunpack.c.h.b16 %v885
        %v1286 = vunpack.c.l.b16 %v886
        %v1287 = vunpack.c.h.b16 %v886
        %v1288 = vunpack.c.l.b16 %v887
        %v1289 = vunpack.c.h.b16 %v887
        %v1290 = vunpack.c.l.b16 %v888
        %v1291 = vunpack.c.l.b16 %v889
        %v1292 = vunpack.c.h.b16 %v889
        %v1293 = vunpack.c.l.b16 %v890
        %v1294 = vunpack.c.h.b16 %v890
        %v1295 = vunpack.c.l.b16 %v891
        %v1296 = vunpack.c.h.b16 %v891
        %v1297 = vunpack.c.l.b16 %v892
        %v1298 = vunpack.c.h.b16 %v892
        %v1299 = vunpack.c.l.b16 %v893
        %v1300 = vunpack.c.l.b16 %v894
        %v1301 = vunpack.c.h.b16 %v894
        %v1302 = vunpack.c.l.b16 %v895
        %v1303 = vunpack.c.h.b16 %v895
        %v1304 = vunpack.c.l.b16 %v896
        %v1305 = vunpack.c.h.b16 %v896
        %v1306 = vunpack.c.l.b16 %v897
        %v1307 = vunpack.c.h.b16 %v897
        %v1308 = vunpack.c.l.b16 %v898
        %v1309 = vunpack.c.l.b16 %v899
        %v1310 = vunpack.c.h.b16 %v899
        %v1311 = vunpack.c.l.b16 %v900
        %v1312 = vunpack.c.h.b16 %v900
        %v1313 = vunpack.c.l.b16 %v901
        %v1314 = vunpack.c.h.b16 %v901
        %v1315 = vunpack.c.l.b16 %v902
        %v1316 = vunpack.c.h.b16 %v902
        %v1317 = vunpack.c.l.b16 %v903
        %v1318 = vunpack.c.l.b16 %v904
        %v1319 = vunpack.c.h.b16 %v904
        %v1320 = vunpack.c.l.b16 %v905
        %v1321 = vunpack.c.h.b16 %v905
        %v1322 = vunpack.c.l.b16 %v906
        %v1323 = vunpack.c.h.b16 %v906
        %v1324 = vunpack.c.l.b16 %v907
        %v1325 = vunpack.c.h.b16 %v907
        %v1326 = vunpack.c.l.b16 %v908
        %v1327 = vunpack.c.l.b16 %v909
        %v1328 = vunpack.c.h.b16 %v909
        %v1329 = vunpack.c.l.b16 %v910
        %v1330 = vunpack.c.h.b16 %v910
        %v1331 = vunpack.c.l.b16 %v911
        %v1332 = vunpack.c.h.b16 %v911
        %v1333 = vunpack.c.l.b16 %v912
        %v1334 = vunpack.c.h.b16 %v912
        %v1335 = vunpack.c.l.b16 %v913
        %v1336 = vunpack.c.l.b16 %v914
        %v1337 = vunpack.c.h.b16 %v914
        %v1338 = vunpack.c.l.b16 %v915
        %v1339 = vunpack.c.h.b16 %v915
        %v1340 = vunpack.c.l.b16 %v916
        %v1341 = vunpack.c.h.b16 %v916
        %v1342 = vunpack.c.l.b16 %v917
        %v1343 = vunpack.c.h.b16 %v917
        %v1344 = vunpack.c.l.b16 %v918
        %v1345 = vunpack.c.l.b16 %v919
        %v1346 = vunpack.c.h.b16 %v919
        %v1347 = vunpack.c.l.b16 %v920
        %v1348 = vunpack.c.h.b16 %v920
        %v1349 = vunpack.c.l.b16 %v921
        %v1350 = vunpack.c.h.b16 %v921
        %v1351 = vunpack.c.l.b16 %v922
        %v1352 = vunpack.c.h.b16 %v922
        %v1353 = vunpack.c.l.b16 %v923
        %v1354 = vunpack.c.l.b16 %v924
        %v1355 = vunpack.c.h.b16 %v924
        %v1356 = vunpack.c.l.b16 %v925
        %v1357 = vunpack.c.h.b16 %v925
        %v1358 = vunpack.c.l.b16 %v926
        %v1359 = vunpack.c.h.b16 %v926
        %v1360 = vunpack.c.l.b16 %v927
        %v1361 = vunpack.c.h.b16 %v927
        %v1362 = vunpack.c.l.b16 %v928
        %v1363 = vunpack.c.l.b16 %v929
        %v1364 = vunpack.c.h.b16 %v929
        %v1365 = vunpack.c.l.b16 %v930
        %v1366 = vunpack.c.h.b16 %v930
        %v1367 = vunpack.c.l.b16 %v931
        %v1368 = vunpack.c.h.b16 %v931
        %v1369 = vunpack.c.l.b16 %v932
        %v1370 = vunpack.c.h.b16 %v932
        %v1371 = vunpack.c.l.b16 %v933
        %v1372 = vunpack.c.l.b16 %v934
        %v1373 = vunpack.c.h.b16 %v934
        %v1374 = vunpack.c.l.b16 %v935
        %v1375 = vunpack.c.h.b16 %v935
        %v1376 = vunpack.c.l.b16 %v936
        %v1377 = vunpack.c.h.b16 %v936
        %v1378 = vunpack.c.l.b16 %v937
        %v1379 = vunpack.c.h.b16 %v937
        %v1380 = vunpack.c.l.b16 %v938
        %v1381 = vunpack.c.l.b16 %v939
        %v1382 = vunpack.c.h.b16 %v939
        %v1383 = vunpack.c.l.b16 %v940
        %v1384 = vunpack.c.h.b16 %v940
        %v1385 = vunpack.c.l.b16 %v941
        %v1386 = vunpack.c.h.b16 %v941
        %v1387 = vunpack.c.l.b16 %v942
        %v1388 = vunpack.c.h.b16 %v942
        %v1389 = vunpack.c.l.b16 %v943
        %v1390 = vunpack.c.l.b16 %v944
        %v1391 = vunpack.c.h.b16 %v944
        %v1392 = vunpack.c.l.b16 %v945
        %v1393 = vunpack.c.h.b16 %v945
        %v1394 = vunpack.c.l.b16 %v946
        %v1395 = vunpack.c.h.b16 %v946
        %v1396 = vunpack.c.l.b16 %v947
        %v1397 = vunpack.c.h.b16 %v947
        %v1398 = vunpack.c.l.b16 %v948
        %v1399 = vunpack.c.l.b16 %v949
        %v1400 = vunpack.c.h.b16 %v949
        %v1401 = vunpack.c.l.b16 %v950
        %v1402 = vunpack.c.h.b16 %v950
        %v1403 = vunpack.c.l.b16 %v951
        %v1404 = vunpack.c.h.b16 %v951
        %v1405 = vunpack.c.l.b16 %v952
        %v1406 = vunpack.c.h.b16 %v952
        %v1407 = vunpack.c.l.b16 %v953
        %v1408 = vunpack.c.l.b16 %v954
        %v1409 = vunpack.c.h.b16 %v954
        %v1410 = vunpack.c.l.b16 %v955
        %v1411 = vunpack.c.h.b16 %v955
        %v1412 = vunpack.c.l.b16 %v956
        %v1413 = vunpack.c.h.b16 %v956
        %v1414 = vunpack.c.l.b16 %v957
        %v1415 = vunpack.c.h.b16 %v957
        %v1416 = vunpack.c.l.b16 %v958
        %v1417 = vpack.c.b16 %v1138, %v1129
        %v1418 = vpack.c.b16 %v1139, %v1130
        %v1419 = vpack.c.b16 %v1140, %v1131
        %v1420 = vpack.c.b16 %v1141, %v1132
        %v1421 = vpack.c.b16 %v1142, %v1133
        %v1422 = vpack.c.b16 %v1143, %v1134
        %v1423 = vpack.c.b16 %v1144, %v1135
        %v1424 = vpack.c.b16 %v1145, %v1136
        %v1425 = vpack.c.b16 %v1146, %v1137
        %v1426 = vpack.c.b16 %v1156, %v1147
        %v1427 = vpack.c.b16 %v1157, %v1148
        %v1428 = vpack.c.b16 %v1158, %v1149
        %v1429 = vpack.c.b16 %v1159, %v1150
        %v1430 = vpack.c.b16 %v1160, %v1151
        %v1431 = vpack.c.b16 %v1161, %v1152
        %v1432 = vpack.c.b16 %v1162, %v1153
        %v1433 = vpack.c.b16 %v1163, %v1154
        %v1434 = vpack.c.b16 %v1164, %v1155
        %v1435 = vpack.c.b16 %v1174, %v1165
        %v1436 = vpack.c.b16 %v1175, %v1166
        %v1437 = vpack.c.b16 %v1176, %v1167
        %v1438 = vpack.c.b16 %v1177, %v1168
        %v1439 = vpack.c.b16 %v1178, %v1169
        %v1440 = vpack.c.b16 %v1179, %v1170
        %v1441 = vpack.c.b16 %v1180, %v1171
        %v1442 = vpack.c.b16 %v1181, %v1172
        %v1443 = vpack.c.b16 %v1182, %v1173
        %v1444 = vpack.c.b16 %v1192, %v1183
        %v1445 = vpack.c.b16 %v1193, %v1184
        %v1446 = vpack.c.b16 %v1194, %v1185
        %v1447 = vpack.c.b16 %v1195, %v1186
        %v1448 = vpack.c.b16 %v1196, %v1187
        %v1449 = vpack.c.b16 %v1197, %v1188
        %v1450 = vpack.c.b16 %v1198, %v1189
        %v1451 = vpack.c.b16 %v1199, %v1190
        %v1452 = vpack.c.b16 %v1200, %v1191
        %v1453 = vpack.c.b16 %v1210, %v1201
        %v1454 = vpack.c.b16 %v1211, %v1202
        %v1455 = vpack.c.b16 %v1212, %v1203
        %v1456 = vpack.c.b16 %v1213, %v1204
        %v1457 = vpack.c.b16 %v1214, %v1205
        %v1458 = vpack.c.b16 %v1215, %v1206
        %v1459 = vpack.c.b16 %v1216, %v1207
        %v1460 = vpack.c.b16 %v1217, %v1208
        %v1461 = vpack.c.b16 %v1218, %v1209
        %v1462 = vpack.c.b16 %v1228, %v1219
        %v1463 = vpack.c.b16 %v1229, %v1220
        %v1464 = vpack.c.b16 %v1230, %v1221
        %v1465 = vpack.c.b16 %v1231, %v1222
        %v1466 = vpack.c.b16 %v1232, %v1223
        %v1467 = vpack.c.b16 %v1233, %v1224
        %v1468 = vpack.c.b16 %v1234, %v1225
        %v1469 = vpack.c.b16 %v1235, %v1226
        %v1470 = vpack.c.b16 %v1236, %v1227
        %v1471 = vpack.c.b16 %v1246, %v1237
        %v1472 = vpack.c.b16 %v1247, %v1238
        %v1473 = vpack.c.b16 %v1248, %v1239
        %v1474 = vpack.c.b16 %v1249, %v1240
        %v1475 = vpack.c.b16 %v1250, %v1241
        %v1476 = vpack.c.b16 %v1251, %v1242
        %v1477 = vpack.c.b16 %v1252, %v1243
        %v1478 = vpack.c.b16 %v1253, %v1244
        %v1479 = vpack.c.b16 %v1254, %v1245
        %v1480 = vpack.c.b16 %v1264, %v1255
        %v1481 = vpack.c.b16 %v1265, %v1256
        %v1482 = vpack.c.b16 %v1266, %v1257
        %v1483 = vpack.c.b16 %v1267, %v1258
        %v1484 = vpack.c.b16 %v1268, %v1259
        %v1485 = vpack.c.b16 %v1269, %v1260
        %v1486 = vpack.c.b16 %v1270, %v1261
        %v1487 = vpack.c.b16 %v1271, %v1262
        %v1488 = vpack.c.b16 %v1272, %v1263
        %v1489 = vpack.c.b16 %v1282, %v1273
        %v1490 = vpack.c.b16 %v1283, %v1274
        %v1491 = vpack.c.b16 %v1284, %v1275
        %v1492 = vpack.c.b16 %v1285, %v1276
        %v1493 = vpack.c.b16 %v1286, %v1277
        %v1494 = vpack.c.b16 %v1287, %v1278
        %v1495 = vpack.c.b16 %v1288, %v1279
        %v1496 = vpack.c.b16 %v1289, %v1280
        %v1497 = vpack.c.b16 %v1290, %v1281
        %v1498 = vpack.c.b16 %v1300, %v1291
        %v1499 = vpack.c.b16 %v1301, %v1292
        %v1500 = vpack.c.b16 %v1302, %v1293
        %v1501 = vpack.c.b16 %v1303, %v1294
        %v1502 = vpack.c.b16 %v1304, %v1295
        %v1503 = vpack.c.b16 %v1305, %v1296
        %v1504 = vpack.c.b16 %v1306, %v1297
        %v1505 = vpack.c.b16 %v1307, %v1298
        %v1506 = vpack.c.b16 %v1308, %v1299
        %v1507 = vpack.c.b16 %v1318, %v1309
        %v1508 = vpack.c.b16 %v1319, %v1310
        %v1509 = vpack.c.b16 %v1320, %v1311
        %v1510 = vpack.c.b16 %v1321, %v1312
        %v1511 = vpack.c.b16 %v1322, %v1313
        %v1512 = vpack.c.b16 %v1323, %v1314
        %v1513 = vpack.c.b16 %v1324, %v1315
        %v1514 = vpack.c.b16 %v1325, %v1316
        %v1515 = vpack.c.b16 %v1326, %v1317
        %v1516 = vpack.c.b16 %v1336, %v1327
        %v1517 = vpack.c.b16 %v1337, %v1328
        %v1518 = vpack.c.b16 %v1338, %v1329
        %v1519 = vpack.c.b16 %v1339, %v1330
        %v1520 = vpack.c.b16 %v1340, %v1331
        %v1521 = vpack.c.b16 %v1341, %v1332
        %v1522 = vpack.c.b16 %v1342, %v1333
        %v1523 = vpack.c.b16 %v1343, %v1334
        %v1524 = vpack.c.b16 %v1344, %v1335
        %v1525 = vpack.c.b16 %v1354, %v1345
        %v1526 = vpack.c.b16 %v1355, %v1346
        %v1527 = vpack.c.b16 %v1356, %v1347
        %v1528 = vpack.c.b16 %v1357, %v1348
        %v1529 = vpack.c.b16 %v1358, %v1349
        %v1530 = vpack.c.b16 %v1359, %v1350
        %v1531 = vpack.c.b16 %v1360, %v1351
        %v1532 = vpack.c.b16 %v1361, %v1352
        %v1533 = vpack.c.b16 %v1362, %v1353
        %v1534 = vpack.c.b16 %v1372, %v1363
        %v1535 = vpack.c.b16 %v1373, %v1364
        %v1536 = vpack.c.b16 %v1374, %v1365
        %v1537 = vpack.c.b16 %v1375, %v1366
        %v1538 = vpack.c.b16 %v1376, %v1367
        %v1539 = vpack.c.b16 %v1377, %v1368
        %v1540 = vpack.c.b16 %v1378, %v1369
        %v1541 = vpack.c.b16 %v1379, %v1370
        %v1542 = vpack.c.b16 %v1380, %v1371
        %v1543 = vpack.c.b16 %v1390, %v1381
        %v1544 = vpack.c.b16 %v1391, %v1382
        %v1545 = vpack.c.b16 %v1392, %v1383
        %v1546 = vpack.c.b16 %v1393, %v1384
        %v1547 = vpack.c.b16 %v1394, %v1385
        %v1548 = vpack.c.b16 %v1395, %v1386
        %v1549 = vpack.c.b16 %v1396, %v1387
        %v1550 = vpack.c.b16 %v1397, %v1388
        %v1551 = vpack.c.b16 %v1398, %v1389
        %v1552 = vpack.c.b16 %v1408, %v1399
        %v1553 = vpack.c.b16 %v1409, %v1400
        %v1554 = vpack.c.b16 %v1410, %v1401
        %v1555 = vpack.c.b16 %v1411, %v1402
        %v1556 = vpack.c.b16 %v1412, %v1403
        %v1557 = vpack.c.b16 %v1413, %v1404
        %v1558 = vpack.c.b16 %v1414, %v1405
        %v1559 = vpack.c.b16 %v1415, %v1406
        %v1560 = vpack.c.b16 %v1416, %v1407
        %1705 = vmatprep.subr.bf16.mxu0 %v1481
        %1706 = vmatpush1.bf16.msra.mxu0 %v1480
        %1707 = vmatprep.subr.bf16.mxu0 %v1472
        %1708 = vmatpush1.bf16.msra.mxu0 %v1471
        %1709 = vmatprep.subr.bf16.mxu0 %v1463
        %1710 = vmatpush1.bf16.msra.mxu0 %v1462
        %1711 = vmatprep.subr.bf16.mxu0 %v1454
        %1712 = vmatpush1.bf16.msra.mxu0 %v1453
        %1713 = vmatprep.subr.bf16.mxu0 %v1445
        %1714 = vmatpush1.bf16.msra.mxu0 %v1444
        %1715 = vmatprep.subr.bf16.mxu0 %v1436
        %1716 = vmatpush1.bf16.msra.mxu0 %v1435
        %1717 = vmatprep.subr.bf16.mxu0 %v1427
        %1718 = vmatpush1.bf16.msra.mxu0 %v1426
        %1719 = vmatprep.subr.bf16.mxu0 %v1418
        %1720 = vmatpush1.bf16.msra.mxu0 %v1417
        %1721 = vmatprep.subr.bf16.mxu0 %v1553
        %1722 = vmatpush2.bf16.msra.mxu0 %v1552
        %1723 = vmatprep.subr.bf16.mxu0 %v1544
        %1724 = vmatpush2.bf16.msra.mxu0 %v1543
        %1725 = vmatprep.subr.bf16.mxu0 %v1535
        %1726 = vmatpush2.bf16.msra.mxu0 %v1534
        %1727 = vmatprep.subr.bf16.mxu0 %v1526
        %1728 = vmatpush2.bf16.msra.mxu0 %v1525
        %1729 = vmatprep.subr.bf16.mxu0 %v1517
        %1730 = vmatpush2.bf16.msra.mxu0 %v1516
        %1731 = vmatprep.subr.bf16.mxu0 %v1508
        %1732 = vmatpush2.bf16.msra.mxu0 %v1507
        %1733 = vmatprep.subr.bf16.mxu0 %v1499
        %1734 = vmatpush2.bf16.msra.mxu0 %v1498
        %1735 = vmatprep.subr.bf16.mxu0 %v1490
        %1736 = vmatpush2.bf16.msra.mxu0 %v1489
        %1737 = vmatprep.mubr.bf16.mxu0 %v966
        %1738 = vmatmul.mubr.bf16.gmra.mxu0 %v965
        %v1739 = vpop.f32.mrf.mxu0
        %v1740 = vadd.f32 0.0, %v1739
        %v1741 = vpop.f32.mrf.mxu0
        %v1742 = vadd.f32 0.0, %v1741
        %v1743 = vpop.f32.mrf.mxu0
        %v1744 = vadd.f32 0.0, %v1743
        %v1745 = vpop.f32.mrf.mxu0
        %v1746 = vadd.f32 0.0, %v1745
        %1747 = vdwg.mxu0
        %1748 = vmatprep.subr.bf16.mxu0 %v1483
        %1749 = vmatpush1.bf16.msra.mxu0 %v1482
        %1750 = vmatprep.subr.bf16.mxu0 %v1474
        %1751 = vmatpush1.bf16.msra.mxu0 %v1473
        %1752 = vmatprep.subr.bf16.mxu0 %v1465
        %1753 = vmatpush1.bf16.msra.mxu0 %v1464
        %1754 = vmatprep.subr.bf16.mxu0 %v1456
        %1755 = vmatpush1.bf16.msra.mxu0 %v1455
        %1756 = vmatprep.subr.bf16.mxu0 %v1447
        %1757 = vmatpush1.bf16.msra.mxu0 %v1446
        %1758 = vmatprep.subr.bf16.mxu0 %v1438
        %1759 = vmatpush1.bf16.msra.mxu0 %v1437
        %1760 = vmatprep.subr.bf16.mxu0 %v1429
        %1761 = vmatpush1.bf16.msra.mxu0 %v1428
        %1762 = vmatprep.subr.bf16.mxu0 %v1420
        %1763 = vmatpush1.bf16.msra.mxu0 %v1419
        %1764 = vmatprep.subr.bf16.mxu0 %v1555
        %1765 = vmatpush2.bf16.msra.mxu0 %v1554
        %1766 = vmatprep.subr.bf16.mxu0 %v1546
        %1767 = vmatpush2.bf16.msra.mxu0 %v1545
        %1768 = vmatprep.subr.bf16.mxu0 %v1537
        %1769 = vmatpush2.bf16.msra.mxu0 %v1536
        %1770 = vmatprep.subr.bf16.mxu0 %v1528
        %1771 = vmatpush2.bf16.msra.mxu0 %v1527
        %1772 = vmatprep.subr.bf16.mxu0 %v1519
        %1773 = vmatpush2.bf16.msra.mxu0 %v1518
        %1774 = vmatprep.subr.bf16.mxu0 %v1510
        %1775 = vmatpush2.bf16.msra.mxu0 %v1509
        %1776 = vmatprep.subr.bf16.mxu0 %v1501
        %1777 = vmatpush2.bf16.msra.mxu0 %v1500
        %1778 = vmatprep.subr.bf16.mxu0 %v1492
        %1779 = vmatpush2.bf16.msra.mxu0 %v1491
        %1780 = vmatprep.mubr.bf16.mxu0 %v966
        %1781 = vmatmul.mubr.bf16.gmra.mxu0 %v965
        %v1782 = vpop.f32.mrf.mxu0
        %v1783 = vadd.f32 0.0, %v1782
        %v1784 = vpop.f32.mrf.mxu0
        %v1785 = vadd.f32 0.0, %v1784
        %v1786 = vpop.f32.mrf.mxu0
        %v1787 = vadd.f32 0.0, %v1786
        %v1788 = vpop.f32.mrf.mxu0
        %v1789 = vadd.f32 0.0, %v1788
        %1790 = vdwg.mxu0
        %1791 = vmatprep.subr.bf16.mxu0 %v1485
        %1792 = vmatpush1.bf16.msra.mxu0 %v1484
        %1793 = vmatprep.subr.bf16.mxu0 %v1476
        %1794 = vmatpush1.bf16.msra.mxu0 %v1475
        %1795 = vmatprep.subr.bf16.mxu0 %v1467
        %1796 = vmatpush1.bf16.msra.mxu0 %v1466
        %1797 = vmatprep.subr.bf16.mxu0 %v1458
        %1798 = vmatpush1.bf16.msra.mxu0 %v1457
        %1799 = vmatprep.subr.bf16.mxu0 %v1449
        %1800 = vmatpush1.bf16.msra.mxu0 %v1448
        %1801 = vmatprep.subr.bf16.mxu0 %v1440
        %1802 = vmatpush1.bf16.msra.mxu0 %v1439
        %1803 = vmatprep.subr.bf16.mxu0 %v1431
        %1804 = vmatpush1.bf16.msra.mxu0 %v1430
        %1805 = vmatprep.subr.bf16.mxu0 %v1422
        %1806 = vmatpush1.bf16.msra.mxu0 %v1421
        %1807 = vmatprep.subr.bf16.mxu0 %v1557
        %1808 = vmatpush2.bf16.msra.mxu0 %v1556
        %1809 = vmatprep.subr.bf16.mxu0 %v1548
        %1810 = vmatpush2.bf16.msra.mxu0 %v1547
        %1811 = vmatprep.subr.bf16.mxu0 %v1539
        %1812 = vmatpush2.bf16.msra.mxu0 %v1538
        %1813 = vmatprep.subr.bf16.mxu0 %v1530
        %1814 = vmatpush2.bf16.msra.mxu0 %v1529
        %1815 = vmatprep.subr.bf16.mxu0 %v1521
        %1816 = vmatpush2.bf16.msra.mxu0 %v1520
        %1817 = vmatprep.subr.bf16.mxu0 %v1512
        %1818 = vmatpush2.bf16.msra.mxu0 %v1511
        %1819 = vmatprep.subr.bf16.mxu0 %v1503
        %1820 = vmatpush2.bf16.msra.mxu0 %v1502
        %1821 = vmatprep.subr.bf16.mxu0 %v1494
        %1822 = vmatpush2.bf16.msra.mxu0 %v1493
        %1823 = vmatprep.mubr.bf16.mxu0 %v966
        %1824 = vmatmul.mubr.bf16.gmra.mxu0 %v965
        %v1825 = vpop.f32.mrf.mxu0
        %v1826 = vadd.f32 0.0, %v1825
        %v1827 = vpop.f32.mrf.mxu0
        %v1828 = vadd.f32 0.0, %v1827
        %v1829 = vpop.f32.mrf.mxu0
        %v1830 = vadd.f32 0.0, %v1829
        %v1831 = vpop.f32.mrf.mxu0
        %v1832 = vadd.f32 0.0, %v1831
        %1833 = vdwg.mxu0
        %1834 = vmatprep.subr.bf16.mxu0 %v1487
        %1835 = vmatpush1.bf16.msra.mxu0 %v1486
        %1836 = vmatprep.subr.bf16.mxu0 %v1478
        %1837 = vmatpush1.bf16.msra.mxu0 %v1477
        %1838 = vmatprep.subr.bf16.mxu0 %v1469
        %1839 = vmatpush1.bf16.msra.mxu0 %v1468
        %1840 = vmatprep.subr.bf16.mxu0 %v1460
        %1841 = vmatpush1.bf16.msra.mxu0 %v1459
        %1842 = vmatprep.subr.bf16.mxu0 %v1451
        %1843 = vmatpush1.bf16.msra.mxu0 %v1450
        %1844 = vmatprep.subr.bf16.mxu0 %v1442
        %1845 = vmatpush1.bf16.msra.mxu0 %v1441
        %1846 = vmatprep.subr.bf16.mxu0 %v1433
        %1847 = vmatpush1.bf16.msra.mxu0 %v1432
        %1848 = vmatprep.subr.bf16.mxu0 %v1424
        %1849 = vmatpush1.bf16.msra.mxu0 %v1423
        %1850 = vmatprep.subr.bf16.mxu0 %v1559
        %1851 = vmatpush2.bf16.msra.mxu0 %v1558
        %1852 = vmatprep.subr.bf16.mxu0 %v1550
        %1853 = vmatpush2.bf16.msra.mxu0 %v1549
        %1854 = vmatprep.subr.bf16.mxu0 %v1541
        %1855 = vmatpush2.bf16.msra.mxu0 %v1540
        %1856 = vmatprep.subr.bf16.mxu0 %v1532
        %1857 = vmatpush2.bf16.msra.mxu0 %v1531
        %1858 = vmatprep.subr.bf16.mxu0 %v1523
        %1859 = vmatpush2.bf16.msra.mxu0 %v1522
        %1860 = vmatprep.subr.bf16.mxu0 %v1514
        %1861 = vmatpush2.bf16.msra.mxu0 %v1513
        %1862 = vmatprep.subr.bf16.mxu0 %v1505
        %1863 = vmatpush2.bf16.msra.mxu0 %v1504
        %1864 = vmatprep.subr.bf16.mxu0 %v1496
        %1865 = vmatpush2.bf16.msra.mxu0 %v1495
        %1866 = vmatprep.mubr.bf16.mxu0 %v966
        %1867 = vmatmul.mubr.bf16.gmra.mxu0 %v965
        %v1868 = vpop.f32.mrf.mxu0
        %v1869 = vadd.f32 0.0, %v1868
        %v1870 = vpop.f32.mrf.mxu0
        %v1871 = vadd.f32 0.0, %v1870
        %v1872 = vpop.f32.mrf.mxu0
        %v1873 = vadd.f32 0.0, %v1872
        %v1874 = vpop.f32.mrf.mxu0
        %v1875 = vadd.f32 0.0, %v1874
        %1876 = vdwg.mxu0
        %1877 = vmatprep.subr.bf16.mxu0 0
        %1878 = vmatpush1.bf16.msra.mxu0 %v1488
        %1879 = vmatprep.subr.bf16.mxu0 0
        %1880 = vmatpush1.bf16.msra.mxu0 %v1479
        %1881 = vmatprep.subr.bf16.mxu0 0
        %1882 = vmatpush1.bf16.msra.mxu0 %v1470
        %1883 = vmatprep.subr.bf16.mxu0 0
        %1884 = vmatpush1.bf16.msra.mxu0 %v1461
        %1885 = vmatprep.subr.bf16.mxu0 0
        %1886 = vmatpush1.bf16.msra.mxu0 %v1452
        %1887 = vmatprep.subr.bf16.mxu0 0
        %1888 = vmatpush1.bf16.msra.mxu0 %v1443
        %1889 = vmatprep.subr.bf16.mxu0 0
        %1890 = vmatpush1.bf16.msra.mxu0 %v1434
        %1891 = vmatprep.subr.bf16.mxu0 0
        %1892 = vmatpush1.bf16.msra.mxu0 %v1425
        %1893 = vmatprep.subr.bf16.mxu0 0
        %1894 = vmatpush2.bf16.msra.mxu0 %v1560
        %1895 = vmatprep.subr.bf16.mxu0 0
        %1896 = vmatpush2.bf16.msra.mxu0 %v1551
        %1897 = vmatprep.subr.bf16.mxu0 0
        %1898 = vmatpush2.bf16.msra.mxu0 %v1542
        %1899 = vmatprep.subr.bf16.mxu0 0
        %1900 = vmatpush2.bf16.msra.mxu0 %v1533
        %1901 = vmatprep.subr.bf16.mxu0 0
        %1902 = vmatpush2.bf16.msra.mxu0 %v1524
        %1903 = vmatprep.subr.bf16.mxu0 0
        %1904 = vmatpush2.bf16.msra.mxu0 %v1515
        %1905 = vmatprep.subr.bf16.mxu0 0
        %1906 = vmatpush2.bf16.msra.mxu0 %v1506
        %1907 = vmatprep.subr.bf16.mxu0 0
        %1908 = vmatpush2.bf16.msra.mxu0 %v1497
        %1909 = vmatprep.mubr.bf16.mxu0 %v966
        %1910 = vmatmul.mubr.bf16.gmra.mxu0 %v965
        %v1911 = vpop.f32.mrf.mxu0
        %v1912 = vadd.f32 0.0, %v1911
        %v1913 = vpop.f32.mrf.mxu0
        %v1914 = vpop.f32.mrf.mxu0
        %v1915 = vadd.f32 0.0, %v1914
        %v1916 = vpop.f32.mrf.mxu0
        %1917 = vdwg.mxu0
        %v1918 = vld [vmem:[%s1] sm:$0xff]
        %v1919 = vld [vmem:[%s1 + $0x8] sm:$0xff]
        %1921 = vset.pattern.permute.xlu0 0
        %1922 = vperm.xlu0 %1921, %v1918
        %v1923 = vpop.permute.xlu0 %1922
        %1926 = vset.pattern.permute.xlu0 0
        %1927 = vperm.xlu0 %1926, %v1919
        %v1928 = vpop.permute.xlu0 %1927
        %v1930 = vrcp.pop %v1923
        %v1931 = vmul.f32 %v1740, %v1930
        %v1932 = vmul.f32 %v1742, %v1930
        %v1933 = vmul.f32 %v1783, %v1930
        %v1934 = vmul.f32 %v1785, %v1930
        %v1935 = vmul.f32 %v1826, %v1930
        %v1936 = vmul.f32 %v1828, %v1930
        %v1937 = vmul.f32 %v1869, %v1930
        %v1938 = vmul.f32 %v1871, %v1930
        %v1939 = vmul.f32 %v1912, %v1930
        %v1940 = vrcp.pop %v1928
        %v1941 = vmul.f32 %v1744, %v1940
        %v1942 = vmul.f32 %v1746, %v1940
        %v1943 = vmul.f32 %v1787, %v1940
        %v1944 = vmul.f32 %v1789, %v1940
        %v1945 = vmul.f32 %v1830, %v1940
        %v1946 = vmul.f32 %v1832, %v1940
        %v1947 = vmul.f32 %v1873, %v1940
        %v1948 = vmul.f32 %v1875, %v1940
        %v1949 = vmul.f32 %v1915, %v1940
        %v1950 = vld [vmem:[#allocation3] sm:$0xff]
        %v1951 = vld [vmem:[#allocation3 + $0x8] sm:$0xff]
        %1952 = vmatprep.subr.mxu0 0.0
        %1953 = vmatpush1.xpose.msra.mxu0 0.0
        %1954 = vmatprep.subr.mxu0 0.0
        %1955 = vmatpush1.xpose.msra.mxu0 0.0
        %1956 = vmatprep.subr.mxu0 0.0
        %1957 = vmatpush1.xpose.msra.mxu0 0.0
        %1958 = vmatprep.subr.mxu0 0.0
        %1959 = vmatpush1.xpose.msra.mxu0 0.0
        %1960 = vmatprep.subr.mxu0 0.0
        %1961 = vmatpush1.xpose.msra.mxu0 0.0
        %1962 = vmatprep.subr.mxu0 0.0
        %1963 = vmatpush1.xpose.msra.mxu0 0.0
        %1964 = vmatprep.subr.mxu0 0.0
        %1965 = vmatpush1.xpose.msra.mxu0 0.0
        %1966 = vmatprep.subr.mxu0 0.0
        %1967 = vmatpush1.xpose.msra.mxu0 0.0
        %1968 = vmatprep.subr.mxu0 0.0
        %1969 = vmatpush1.xpose.msra.mxu0 0.0
        %1970 = vmatprep.subr.mxu0 0.0
        %1971 = vmatpush1.xpose.msra.mxu0 0.0
        %1972 = vmatprep.subr.mxu0 0.0
        %1973 = vmatpush1.xpose.msra.mxu0 0.0
        %1974 = vmatprep.subr.mxu0 0.0
        %1975 = vmatpush1.xpose.msra.mxu0 0.0
        %1976 = vmatprep.subr.mxu0 0.0
        %1977 = vmatpush1.xpose.msra.mxu0 0.0
        %1978 = vmatprep.subr.mxu0 0.0
        %1979 = vmatpush1.xpose.msra.mxu0 0.0
        %1980 = vmatprep.subr.mxu0 %v1942
        %1981 = vmatpush1.xpose.msra.mxu0 %v1941
        %1982 = vmatprep.subr.mxu0 %v1932
        %1983 = vmatpush1.xpose.msra.mxu0 %v1931
        %1984 = vmatprep.subr.mxu0 0.0
        %1985 = vmatpush2.xpose.msra.mxu0 0.0
        %1986 = vmatprep.subr.mxu0 0.0
        %1987 = vmatpush2.xpose.msra.mxu0 0.0
        %1988 = vmatprep.subr.mxu0 0.0
        %1989 = vmatpush2.xpose.msra.mxu0 0.0
        %1990 = vmatprep.subr.mxu0 0.0
        %1991 = vmatpush2.xpose.msra.mxu0 0.0
        %1992 = vmatprep.subr.mxu0 0.0
        %1993 = vmatpush2.xpose.msra.mxu0 0.0
        %1994 = vmatprep.subr.mxu0 0.0
        %1995 = vmatpush2.xpose.msra.mxu0 0.0
        %1996 = vmatprep.subr.mxu0 0.0
        %1997 = vmatpush2.xpose.msra.mxu0 0.0
        %1998 = vmatprep.subr.mxu0 0.0
        %1999 = vmatpush2.xpose.msra.mxu0 0.0
        %2000 = vmatprep.subr.mxu0 0.0
        %2001 = vmatpush2.xpose.msra.mxu0 0.0
        %2002 = vmatprep.subr.mxu0 0.0
        %2003 = vmatpush2.xpose.msra.mxu0 0.0
        %2004 = vmatprep.subr.mxu0 0.0
        %2005 = vmatpush2.xpose.msra.mxu0 0.0
        %2006 = vmatprep.subr.mxu0 0.0
        %2007 = vmatpush2.xpose.msra.mxu0 0.0
        %2008 = vmatprep.subr.mxu0 0.0
        %2009 = vmatpush2.xpose.msra.mxu0 0.0
        %2010 = vmatprep.subr.mxu0 0.0
        %2011 = vmatpush2.xpose.msra.mxu0 0.0
        %2012 = vmatprep.subr.mxu0 0.0
        %2013 = vmatpush2.xpose.msra.mxu0 0.0
        %2014 = vmatprep.subr.mxu0 0.0
        %2015 = vmatpush2.xpose.msra.mxu0 0.0
        %2016 = vmatprep.mubr.f32.mxu0 %v1932
        %2017 = vmatmul.mubr.f32.gmra.mxu0 %v1931
        %v2018 = vpop.f32.mrf.mxu0
        %v2019 = vadd.f32 0.0, %v2018
        %v2020 = vpop.f32.mrf.mxu0
        %2021 = vmatprep.mubr.f32.mxu0 %v1942
        %2022 = vmatmul.mubr.f32.gmra.mxu0 %v1941
        %v2023 = vpop.f32.mrf.mxu0
        %v2024 = vadd.f32 0.0, %v2023
        %v2025 = vpop.f32.mrf.mxu0
        %2026 = vdwg.mxu0
        %2027 = vmatprep.subr.mxu0 0.0
        %2028 = vmatpush1.xpose.msra.mxu0 0.0
        %2029 = vmatprep.subr.mxu0 0.0
        %2030 = vmatpush1.xpose.msra.mxu0 0.0
        %2031 = vmatprep.subr.mxu0 0.0
        %2032 = vmatpush1.xpose.msra.mxu0 0.0
        %2033 = vmatprep.subr.mxu0 0.0
        %2034 = vmatpush1.xpose.msra.mxu0 0.0
        %2035 = vmatprep.subr.mxu0 0.0
        %2036 = vmatpush1.xpose.msra.mxu0 0.0
        %2037 = vmatprep.subr.mxu0 0.0
        %2038 = vmatpush1.xpose.msra.mxu0 0.0
        %2039 = vmatprep.subr.mxu0 0.0
        %2040 = vmatpush1.xpose.msra.mxu0 0.0
        %2041 = vmatprep.subr.mxu0 0.0
        %2042 = vmatpush1.xpose.msra.mxu0 0.0
        %2043 = vmatprep.subr.mxu0 0.0
        %2044 = vmatpush1.xpose.msra.mxu0 0.0
        %2045 = vmatprep.subr.mxu0 0.0
        %2046 = vmatpush1.xpose.msra.mxu0 0.0
        %2047 = vmatprep.subr.mxu0 0.0
        %2048 = vmatpush1.xpose.msra.mxu0 0.0
        %2049 = vmatprep.subr.mxu0 0.0
        %2050 = vmatpush1.xpose.msra.mxu0 0.0
        %2051 = vmatprep.subr.mxu0 0.0
        %2052 = vmatpush1.xpose.msra.mxu0 0.0
        %2053 = vmatprep.subr.mxu0 0.0
        %2054 = vmatpush1.xpose.msra.mxu0 0.0
        %2055 = vmatprep.subr.mxu0 %v1944
        %2056 = vmatpush1.xpose.msra.mxu0 %v1943
        %2057 = vmatprep.subr.mxu0 %v1934
        %2058 = vmatpush1.xpose.msra.mxu0 %v1933
        %2059 = vmatprep.subr.mxu0 0.0
        %2060 = vmatpush2.xpose.msra.mxu0 0.0
        %2061 = vmatprep.subr.mxu0 0.0
        %2062 = vmatpush2.xpose.msra.mxu0 0.0
        %2063 = vmatprep.subr.mxu0 0.0
        %2064 = vmatpush2.xpose.msra.mxu0 0.0
        %2065 = vmatprep.subr.mxu0 0.0
        %2066 = vmatpush2.xpose.msra.mxu0 0.0
        %2067 = vmatprep.subr.mxu0 0.0
        %2068 = vmatpush2.xpose.msra.mxu0 0.0
        %2069 = vmatprep.subr.mxu0 0.0
        %2070 = vmatpush2.xpose.msra.mxu0 0.0
        %2071 = vmatprep.subr.mxu0 0.0
        %2072 = vmatpush2.xpose.msra.mxu0 0.0
        %2073 = vmatprep.subr.mxu0 0.0
        %2074 = vmatpush2.xpose.msra.mxu0 0.0
        %2075 = vmatprep.subr.mxu0 0.0
        %2076 = vmatpush2.xpose.msra.mxu0 0.0
        %2077 = vmatprep.subr.mxu0 0.0
        %2078 = vmatpush2.xpose.msra.mxu0 0.0
        %2079 = vmatprep.subr.mxu0 0.0
        %2080 = vmatpush2.xpose.msra.mxu0 0.0
        %2081 = vmatprep.subr.mxu0 0.0
        %2082 = vmatpush2.xpose.msra.mxu0 0.0
        %2083 = vmatprep.subr.mxu0 0.0
        %2084 = vmatpush2.xpose.msra.mxu0 0.0
        %2085 = vmatprep.subr.mxu0 0.0
        %2086 = vmatpush2.xpose.msra.mxu0 0.0
        %2087 = vmatprep.subr.mxu0 0.0
        %2088 = vmatpush2.xpose.msra.mxu0 0.0
        %2089 = vmatprep.subr.mxu0 0.0
        %2090 = vmatpush2.xpose.msra.mxu0 0.0
        %2091 = vmatprep.mubr.f32.mxu0 %v1934
        %2092 = vmatmul.mubr.f32.gmra.mxu0 %v1933
        %v2093 = vpop.f32.mrf.mxu0
        %v2094 = vadd.f32 %v2019, %v2093
        %v2095 = vpop.f32.mrf.mxu0
        %2096 = vmatprep.mubr.f32.mxu0 %v1944
        %2097 = vmatmul.mubr.f32.gmra.mxu0 %v1943
        %v2098 = vpop.f32.mrf.mxu0
        %v2099 = vadd.f32 %v2024, %v2098
        %v2100 = vpop.f32.mrf.mxu0
        %2101 = vdwg.mxu0
        %2102 = vmatprep.subr.mxu0 0.0
        %2103 = vmatpush1.xpose.msra.mxu0 0.0
        %2104 = vmatprep.subr.mxu0 0.0
        %2105 = vmatpush1.xpose.msra.mxu0 0.0
        %2106 = vmatprep.subr.mxu0 0.0
        %2107 = vmatpush1.xpose.msra.mxu0 0.0
        %2108 = vmatprep.subr.mxu0 0.0
        %2109 = vmatpush1.xpose.msra.mxu0 0.0
        %2110 = vmatprep.subr.mxu0 0.0
        %2111 = vmatpush1.xpose.msra.mxu0 0.0
        %2112 = vmatprep.subr.mxu0 0.0
        %2113 = vmatpush1.xpose.msra.mxu0 0.0
        %2114 = vmatprep.subr.mxu0 0.0
        %2115 = vmatpush1.xpose.msra.mxu0 0.0
        %2116 = vmatprep.subr.mxu0 0.0
        %2117 = vmatpush1.xpose.msra.mxu0 0.0
        %2118 = vmatprep.subr.mxu0 0.0
        %2119 = vmatpush1.xpose.msra.mxu0 0.0
        %2120 = vmatprep.subr.mxu0 0.0
        %2121 = vmatpush1.xpose.msra.mxu0 0.0
        %2122 = vmatprep.subr.mxu0 0.0
        %2123 = vmatpush1.xpose.msra.mxu0 0.0
        %2124 = vmatprep.subr.mxu0 0.0
        %2125 = vmatpush1.xpose.msra.mxu0 0.0
        %2126 = vmatprep.subr.mxu0 0.0
        %2127 = vmatpush1.xpose.msra.mxu0 0.0
        %2128 = vmatprep.subr.mxu0 0.0
        %2129 = vmatpush1.xpose.msra.mxu0 0.0
        %2130 = vmatprep.subr.mxu0 %v1946
        %2131 = vmatpush1.xpose.msra.mxu0 %v1945
        %2132 = vmatprep.subr.mxu0 %v1936
        %2133 = vmatpush1.xpose.msra.mxu0 %v1935
        %2134 = vmatprep.subr.mxu0 0.0
        %2135 = vmatpush2.xpose.msra.mxu0 0.0
        %2136 = vmatprep.subr.mxu0 0.0
        %2137 = vmatpush2.xpose.msra.mxu0 0.0
        %2138 = vmatprep.subr.mxu0 0.0
        %2139 = vmatpush2.xpose.msra.mxu0 0.0
        %2140 = vmatprep.subr.mxu0 0.0
        %2141 = vmatpush2.xpose.msra.mxu0 0.0
        %2142 = vmatprep.subr.mxu0 0.0
        %2143 = vmatpush2.xpose.msra.mxu0 0.0
        %2144 = vmatprep.subr.mxu0 0.0
        %2145 = vmatpush2.xpose.msra.mxu0 0.0
        %2146 = vmatprep.subr.mxu0 0.0
        %2147 = vmatpush2.xpose.msra.mxu0 0.0
        %2148 = vmatprep.subr.mxu0 0.0
        %2149 = vmatpush2.xpose.msra.mxu0 0.0
        %2150 = vmatprep.subr.mxu0 0.0
        %2151 = vmatpush2.xpose.msra.mxu0 0.0
        %2152 = vmatprep.subr.mxu0 0.0
        %2153 = vmatpush2.xpose.msra.mxu0 0.0
        %2154 = vmatprep.subr.mxu0 0.0
        %2155 = vmatpush2.xpose.msra.mxu0 0.0
        %2156 = vmatprep.subr.mxu0 0.0
        %2157 = vmatpush2.xpose.msra.mxu0 0.0
        %2158 = vmatprep.subr.mxu0 0.0
        %2159 = vmatpush2.xpose.msra.mxu0 0.0
        %2160 = vmatprep.subr.mxu0 0.0
        %2161 = vmatpush2.xpose.msra.mxu0 0.0
        %2162 = vmatprep.subr.mxu0 0.0
        %2163 = vmatpush2.xpose.msra.mxu0 0.0
        %2164 = vmatprep.subr.mxu0 0.0
        %2165 = vmatpush2.xpose.msra.mxu0 0.0
        %2166 = vmatprep.mubr.f32.mxu0 %v1936
        %2167 = vmatmul.mubr.f32.gmra.mxu0 %v1935
        %v2168 = vpop.f32.mrf.mxu0
        %v2169 = vadd.f32 %v2094, %v2168
        %v2170 = vpop.f32.mrf.mxu0
        %2171 = vmatprep.mubr.f32.mxu0 %v1946
        %2172 = vmatmul.mubr.f32.gmra.mxu0 %v1945
        %v2173 = vpop.f32.mrf.mxu0
        %v2174 = vadd.f32 %v2099, %v2173
        %v2175 = vpop.f32.mrf.mxu0
        %2176 = vdwg.mxu0
        %2177 = vmatprep.subr.mxu0 0.0
        %2178 = vmatpush1.xpose.msra.mxu0 0.0
        %2179 = vmatprep.subr.mxu0 0.0
        %2180 = vmatpush1.xpose.msra.mxu0 0.0
        %2181 = vmatprep.subr.mxu0 0.0
        %2182 = vmatpush1.xpose.msra.mxu0 0.0
        %2183 = vmatprep.subr.mxu0 0.0
        %2184 = vmatpush1.xpose.msra.mxu0 0.0
        %2185 = vmatprep.subr.mxu0 0.0
        %2186 = vmatpush1.xpose.msra.mxu0 0.0
        %2187 = vmatprep.subr.mxu0 0.0
        %2188 = vmatpush1.xpose.msra.mxu0 0.0
        %2189 = vmatprep.subr.mxu0 0.0
        %2190 = vmatpush1.xpose.msra.mxu0 0.0
        %2191 = vmatprep.subr.mxu0 0.0
        %2192 = vmatpush1.xpose.msra.mxu0 0.0
        %2193 = vmatprep.subr.mxu0 0.0
        %2194 = vmatpush1.xpose.msra.mxu0 0.0
        %2195 = vmatprep.subr.mxu0 0.0
        %2196 = vmatpush1.xpose.msra.mxu0 0.0
        %2197 = vmatprep.subr.mxu0 0.0
        %2198 = vmatpush1.xpose.msra.mxu0 0.0
        %2199 = vmatprep.subr.mxu0 0.0
        %2200 = vmatpush1.xpose.msra.mxu0 0.0
        %2201 = vmatprep.subr.mxu0 0.0
        %2202 = vmatpush1.xpose.msra.mxu0 0.0
        %2203 = vmatprep.subr.mxu0 0.0
        %2204 = vmatpush1.xpose.msra.mxu0 0.0
        %2205 = vmatprep.subr.mxu0 %v1948
        %2206 = vmatpush1.xpose.msra.mxu0 %v1947
        %2207 = vmatprep.subr.mxu0 %v1938
        %2208 = vmatpush1.xpose.msra.mxu0 %v1937
        %2209 = vmatprep.subr.mxu0 0.0
        %2210 = vmatpush2.xpose.msra.mxu0 0.0
        %2211 = vmatprep.subr.mxu0 0.0
        %2212 = vmatpush2.xpose.msra.mxu0 0.0
        %2213 = vmatprep.subr.mxu0 0.0
        %2214 = vmatpush2.xpose.msra.mxu0 0.0
        %2215 = vmatprep.subr.mxu0 0.0
        %2216 = vmatpush2.xpose.msra.mxu0 0.0
        %2217 = vmatprep.subr.mxu0 0.0
        %2218 = vmatpush2.xpose.msra.mxu0 0.0
        %2219 = vmatprep.subr.mxu0 0.0
        %2220 = vmatpush2.xpose.msra.mxu0 0.0
        %2221 = vmatprep.subr.mxu0 0.0
        %2222 = vmatpush2.xpose.msra.mxu0 0.0
        %2223 = vmatprep.subr.mxu0 0.0
        %2224 = vmatpush2.xpose.msra.mxu0 0.0
        %2225 = vmatprep.subr.mxu0 0.0
        %2226 = vmatpush2.xpose.msra.mxu0 0.0
        %2227 = vmatprep.subr.mxu0 0.0
        %2228 = vmatpush2.xpose.msra.mxu0 0.0
        %2229 = vmatprep.subr.mxu0 0.0
        %2230 = vmatpush2.xpose.msra.mxu0 0.0
        %2231 = vmatprep.subr.mxu0 0.0
        %2232 = vmatpush2.xpose.msra.mxu0 0.0
        %2233 = vmatprep.subr.mxu0 0.0
        %2234 = vmatpush2.xpose.msra.mxu0 0.0
        %2235 = vmatprep.subr.mxu0 0.0
        %2236 = vmatpush2.xpose.msra.mxu0 0.0
        %2237 = vmatprep.subr.mxu0 0.0
        %2238 = vmatpush2.xpose.msra.mxu0 0.0
        %2239 = vmatprep.subr.mxu0 0.0
        %2240 = vmatpush2.xpose.msra.mxu0 0.0
        %2241 = vmatprep.mubr.f32.mxu0 %v1938
        %2242 = vmatmul.mubr.f32.gmra.mxu0 %v1937
        %v2243 = vpop.f32.mrf.mxu0
        %v2244 = vadd.f32 %v2169, %v2243
        %v2245 = vpop.f32.mrf.mxu0
        %2246 = vmatprep.mubr.f32.mxu0 %v1948
        %2247 = vmatmul.mubr.f32.gmra.mxu0 %v1947
        %v2248 = vpop.f32.mrf.mxu0
        %v2249 = vadd.f32 %v2174, %v2248
        %v2250 = vpop.f32.mrf.mxu0
        %2251 = vdwg.mxu0
        %2252 = vmatprep.subr.mxu0 0.0
        %2253 = vmatpush1.xpose.msra.mxu0 0.0
        %2254 = vmatprep.subr.mxu0 0.0
        %2255 = vmatpush1.xpose.msra.mxu0 0.0
        %2256 = vmatprep.subr.mxu0 0.0
        %2257 = vmatpush1.xpose.msra.mxu0 0.0
        %2258 = vmatprep.subr.mxu0 0.0
        %2259 = vmatpush1.xpose.msra.mxu0 0.0
        %2260 = vmatprep.subr.mxu0 0.0
        %2261 = vmatpush1.xpose.msra.mxu0 0.0
        %2262 = vmatprep.subr.mxu0 0.0
        %2263 = vmatpush1.xpose.msra.mxu0 0.0
        %2264 = vmatprep.subr.mxu0 0.0
        %2265 = vmatpush1.xpose.msra.mxu0 0.0
        %2266 = vmatprep.subr.mxu0 0.0
        %2267 = vmatpush1.xpose.msra.mxu0 0.0
        %2268 = vmatprep.subr.mxu0 0.0
        %2269 = vmatpush1.xpose.msra.mxu0 0.0
        %2270 = vmatprep.subr.mxu0 0.0
        %2271 = vmatpush1.xpose.msra.mxu0 0.0
        %2272 = vmatprep.subr.mxu0 0.0
        %2273 = vmatpush1.xpose.msra.mxu0 0.0
        %2274 = vmatprep.subr.mxu0 0.0
        %2275 = vmatpush1.xpose.msra.mxu0 0.0
        %2276 = vmatprep.subr.mxu0 0.0
        %2277 = vmatpush1.xpose.msra.mxu0 0.0
        %2278 = vmatprep.subr.mxu0 0.0
        %2279 = vmatpush1.xpose.msra.mxu0 0.0
        %2280 = vmatprep.subr.mxu0 0.0
        %2281 = vmatpush1.xpose.msra.mxu0 %v1949
        %2282 = vmatprep.subr.mxu0 0.0
        %2283 = vmatpush1.xpose.msra.mxu0 %v1939
        %2284 = vmatprep.subr.mxu0 0.0
        %2285 = vmatpush2.xpose.msra.mxu0 0.0
        %2286 = vmatprep.subr.mxu0 0.0
        %2287 = vmatpush2.xpose.msra.mxu0 0.0
        %2288 = vmatprep.subr.mxu0 0.0
        %2289 = vmatpush2.xpose.msra.mxu0 0.0
        %2290 = vmatprep.subr.mxu0 0.0
        %2291 = vmatpush2.xpose.msra.mxu0 0.0
        %2292 = vmatprep.subr.mxu0 0.0
        %2293 = vmatpush2.xpose.msra.mxu0 0.0
        %2294 = vmatprep.subr.mxu0 0.0
        %2295 = vmatpush2.xpose.msra.mxu0 0.0
        %2296 = vmatprep.subr.mxu0 0.0
        %2297 = vmatpush2.xpose.msra.mxu0 0.0
        %2298 = vmatprep.subr.mxu0 0.0
        %2299 = vmatpush2.xpose.msra.mxu0 0.0
        %2300 = vmatprep.subr.mxu0 0.0
        %2301 = vmatpush2.xpose.msra.mxu0 0.0
        %2302 = vmatprep.subr.mxu0 0.0
        %2303 = vmatpush2.xpose.msra.mxu0 0.0
        %2304 = vmatprep.subr.mxu0 0.0
        %2305 = vmatpush2.xpose.msra.mxu0 0.0
        %2306 = vmatprep.subr.mxu0 0.0
        %2307 = vmatpush2.xpose.msra.mxu0 0.0
        %2308 = vmatprep.subr.mxu0 0.0
        %2309 = vmatpush2.xpose.msra.mxu0 0.0
        %2310 = vmatprep.subr.mxu0 0.0
        %2311 = vmatpush2.xpose.msra.mxu0 0.0
        %2312 = vmatprep.subr.mxu0 0.0
        %2313 = vmatpush2.xpose.msra.mxu0 0.0
        %2314 = vmatprep.subr.mxu0 0.0
        %2315 = vmatpush2.xpose.msra.mxu0 0.0
        %2316 = vmatprep.mubr.f32.mxu0 0.0
        %2317 = vmatmul.mubr.f32.gmra.mxu0 %v1939
        %v2318 = vpop.f32.mrf.mxu0
        %v2319 = vadd.f32 %v2244, %v2318
        %v2320 = vpop.f32.mrf.mxu0
        %2321 = vmatprep.mubr.f32.mxu0 0.0
        %2322 = vmatmul.mubr.f32.gmra.mxu0 %v1949
        %v2323 = vpop.f32.mrf.mxu0
        %v2324 = vadd.f32 %v2249, %v2323
        %v2325 = vpop.f32.mrf.mxu0
        %2326 = vdwg.mxu0
        %v2327 = vadd.f32 %v1950, %v2319
        %v2328 = vadd.f32 %v1951, %v2324
        %vm2329 = vcmask 130048
        %2330 = vst.msk [vmem:[#allocation3] sm:$0xff] %vm2329, %v2327
        %2331 = vst.msk [vmem:[#allocation3 + $0x8] sm:$0xff] %vm2329, %v2328
        %v2332 = vld [vmem:[#allocation2] sm:$0xff]
        %v2333 = vld [vmem:[#allocation2 + $0x8] sm:$0xff]
        %v2334 = vld [vmem:[#allocation2 + $0x10] sm:$0xff]
        %v2335 = vld [vmem:[#allocation2 + $0x18] sm:$0xff]
        %v2336 = vld [vmem:[#allocation2 + $0x20] sm:$0xff]
        %v2337 = vld [vmem:[#allocation2 + $0x28] sm:$0xff]
        %v2338 = vld [vmem:[#allocation2 + $0x30] sm:$0xff]
        %v2339 = vld [vmem:[#allocation2 + $0x38] sm:$0xff]
        %v2340 = vld [vmem:[#allocation2 + $0x40] sm:$0xff]
        %v2341 = vld [vmem:[#allocation2 + $0x48] sm:$0xff]
        %v2342 = vld [vmem:[#allocation2 + $0x50] sm:$0xff]
        %v2343 = vld [vmem:[#allocation2 + $0x58] sm:$0xff]
        %v2344 = vld [vmem:[#allocation2 + $0x60] sm:$0xff]
        %v2345 = vld [vmem:[#allocation2 + $0x68] sm:$0xff]
        %v2346 = vld [vmem:[#allocation2 + $0x70] sm:$0xff]
        %v2347 = vld [vmem:[#allocation2 + $0x78] sm:$0xff]
        %v2348 = vpack.c.bf16 %v1941, %v1931
        %v2349 = vpack.c.bf16 %v1942, %v1932
        %v2350 = vpack.c.bf16 %v1943, %v1933
        %v2351 = vpack.c.bf16 %v1944, %v1934
        %v2352 = vpack.c.bf16 %v1945, %v1935
        %v2353 = vpack.c.bf16 %v1946, %v1936
        %v2354 = vpack.c.bf16 %v1947, %v1937
        %v2355 = vpack.c.bf16 %v1948, %v1938
        %v2356 = vpack.c.bf16 %v1949, %v1939
        %v2357 = vld [vmem:[%s771] sm:$0xff]
        %v2358 = vld [vmem:[%s771 + $0x8] sm:$0xff]
        %v2359 = vld [vmem:[%s771 + $0x10] sm:$0xff]
        %v2360 = vld [vmem:[%s771 + $0x18] sm:$0xff]
        %v2361 = vld [vmem:[%s771 + $0x20] sm:$0xff]
        %v2362 = vld [vmem:[%s771 + $0x28] sm:$0xff]
        %v2363 = vld [vmem:[%s771 + $0x30] sm:$0xff]
        %v2364 = vld [vmem:[%s771 + $0x38] sm:$0xff]
        %v2365 = vld [vmem:[%s771 + $0x40] sm:$0xff]
        %v2366 = vld [vmem:[%s771 + $0x48] sm:$0xff]
        %v2367 = vld [vmem:[%s771 + $0x50] sm:$0xff]
        %v2368 = vld [vmem:[%s771 + $0x58] sm:$0xff]
        %v2369 = vld [vmem:[%s771 + $0x60] sm:$0xff]
        %v2370 = vld [vmem:[%s771 + $0x68] sm:$0xff]
        %v2371 = vld [vmem:[%s771 + $0x70] sm:$0xff]
        %v2372 = vld [vmem:[%s771 + $0x78] sm:$0xff]
        %v2373 = vld [vmem:[%s771 + $0x80] sm:$0xff]
        %v2374 = vld [vmem:[%s771 + $0x88] sm:$0xff]
        %v2375 = vld [vmem:[%s771 + $0x90] sm:$0xff]
        %v2376 = vld [vmem:[%s771 + $0x98] sm:$0xff]
        %v2377 = vld [vmem:[%s771 + $0xa0] sm:$0xff]
        %v2378 = vld [vmem:[%s771 + $0xa8] sm:$0xff]
        %v2379 = vld [vmem:[%s771 + $0xb0] sm:$0xff]
        %v2380 = vld [vmem:[%s771 + $0xb8] sm:$0xff]
        %v2381 = vld [vmem:[%s771 + $0xc0] sm:$0xff]
        %v2382 = vld [vmem:[%s771 + $0xc8] sm:$0xff]
        %v2383 = vld [vmem:[%s771 + $0xd0] sm:$0xff]
        %v2384 = vld [vmem:[%s771 + $0xd8] sm:$0xff]
        %v2385 = vld [vmem:[%s771 + $0xe0] sm:$0xff]
        %v2386 = vld [vmem:[%s771 + $0xe8] sm:$0xff]
        %v2387 = vld [vmem:[%s771 + $0xf0] sm:$0xff]
        %v2388 = vld [vmem:[%s771 + $0xf8] sm:$0xff]
        %v2389 = vld [vmem:[%s771 + $0x100] sm:$0xff]
        %v2390 = vld [vmem:[%s771 + $0x108] sm:$0xff]
        %v2391 = vld [vmem:[%s771 + $0x110] sm:$0xff]
        %v2392 = vld [vmem:[%s771 + $0x118] sm:$0xff]
        %v2393 = vld [vmem:[%s771 + $0x120] sm:$0xff]
        %v2394 = vld [vmem:[%s771 + $0x128] sm:$0xff]
        %v2395 = vld [vmem:[%s771 + $0x130] sm:$0xff]
        %v2396 = vld [vmem:[%s771 + $0x138] sm:$0xff]
        %v2397 = vld [vmem:[%s771 + $0x140] sm:$0xff]
        %v2398 = vld [vmem:[%s771 + $0x148] sm:$0xff]
        %v2399 = vld [vmem:[%s771 + $0x150] sm:$0xff]
        %v2400 = vld [vmem:[%s771 + $0x158] sm:$0xff]
        %v2401 = vld [vmem:[%s771 + $0x160] sm:$0xff]
        %v2402 = vld [vmem:[%s771 + $0x168] sm:$0xff]
        %v2403 = vld [vmem:[%s771 + $0x170] sm:$0xff]
        %v2404 = vld [vmem:[%s771 + $0x178] sm:$0xff]
        %v2405 = vld [vmem:[%s771 + $0x180] sm:$0xff]
        %v2406 = vld [vmem:[%s771 + $0x188] sm:$0xff]
        %v2407 = vld [vmem:[%s771 + $0x190] sm:$0xff]
        %v2408 = vld [vmem:[%s771 + $0x198] sm:$0xff]
        %v2409 = vld [vmem:[%s771 + $0x1a0] sm:$0xff]
        %v2410 = vld [vmem:[%s771 + $0x1a8] sm:$0xff]
        %v2411 = vld [vmem:[%s771 + $0x1b0] sm:$0xff]
        %v2412 = vld [vmem:[%s771 + $0x1b8] sm:$0xff]
        %v2413 = vld [vmem:[%s771 + $0x1c0] sm:$0xff]
        %v2414 = vld [vmem:[%s771 + $0x1c8] sm:$0xff]
        %v2415 = vld [vmem:[%s771 + $0x1d0] sm:$0xff]
        %v2416 = vld [vmem:[%s771 + $0x1d8] sm:$0xff]
        %v2417 = vld [vmem:[%s771 + $0x1e0] sm:$0xff]
        %v2418 = vld [vmem:[%s771 + $0x1e8] sm:$0xff]
        %v2419 = vld [vmem:[%s771 + $0x1f0] sm:$0xff]
        %v2420 = vld [vmem:[%s771 + $0x1f8] sm:$0xff]
        %v2421 = vld [vmem:[%s771 + $0x200] sm:$0xff]
        %v2422 = vld [vmem:[%s771 + $0x208] sm:$0xff]
        %v2423 = vld [vmem:[%s771 + $0x210] sm:$0xff]
        %v2424 = vld [vmem:[%s771 + $0x218] sm:$0xff]
        %v2425 = vld [vmem:[%s771 + $0x220] sm:$0xff]
        %v2426 = vld [vmem:[%s771 + $0x228] sm:$0xff]
        %v2427 = vld [vmem:[%s771 + $0x230] sm:$0xff]
        %v2428 = vld [vmem:[%s771 + $0x238] sm:$0xff]
        %v2429 = vld [vmem:[%s771 + $0x240] sm:$0xff]
        %v2430 = vld [vmem:[%s771 + $0x248] sm:$0xff]
        %v2431 = vld [vmem:[%s771 + $0x250] sm:$0xff]
        %v2432 = vld [vmem:[%s771 + $0x258] sm:$0xff]
        %v2433 = vld [vmem:[%s771 + $0x260] sm:$0xff]
        %v2434 = vld [vmem:[%s771 + $0x268] sm:$0xff]
        %v2435 = vld [vmem:[%s771 + $0x270] sm:$0xff]
        %v2436 = vld [vmem:[%s771 + $0x278] sm:$0xff]
        %v2437 = vld [vmem:[%s771 + $0x280] sm:$0xff]
        %v2438 = vld [vmem:[%s771 + $0x288] sm:$0xff]
        %v2439 = vld [vmem:[%s771 + $0x290] sm:$0xff]
        %v2440 = vld [vmem:[%s771 + $0x298] sm:$0xff]
        %v2441 = vld [vmem:[%s771 + $0x2a0] sm:$0xff]
        %v2442 = vld [vmem:[%s771 + $0x2a8] sm:$0xff]
        %v2443 = vld [vmem:[%s771 + $0x2b0] sm:$0xff]
        %v2444 = vld [vmem:[%s771 + $0x2b8] sm:$0xff]
        %v2445 = vld [vmem:[%s771 + $0x2c0] sm:$0xff]
        %v2446 = vld [vmem:[%s771 + $0x2c8] sm:$0xff]
        %v2447 = vld [vmem:[%s771 + $0x2d0] sm:$0xff]
        %v2448 = vld [vmem:[%s771 + $0x2d8] sm:$0xff]
        %v2449 = vld [vmem:[%s771 + $0x2e0] sm:$0xff]
        %v2450 = vld [vmem:[%s771 + $0x2e8] sm:$0xff]
        %v2451 = vld [vmem:[%s771 + $0x2f0] sm:$0xff]
        %v2452 = vld [vmem:[%s771 + $0x2f8] sm:$0xff]
        %v2453 = vld [vmem:[%s771 + $0x300] sm:$0xff]
        %v2454 = vld [vmem:[%s771 + $0x308] sm:$0xff]
        %v2455 = vld [vmem:[%s771 + $0x310] sm:$0xff]
        %v2456 = vld [vmem:[%s771 + $0x318] sm:$0xff]
        %v2457 = vld [vmem:[%s771 + $0x320] sm:$0xff]
        %v2458 = vld [vmem:[%s771 + $0x328] sm:$0xff]
        %v2459 = vld [vmem:[%s771 + $0x330] sm:$0xff]
        %v2460 = vld [vmem:[%s771 + $0x338] sm:$0xff]
        %v2461 = vld [vmem:[%s771 + $0x340] sm:$0xff]
        %v2462 = vld [vmem:[%s771 + $0x348] sm:$0xff]
        %v2463 = vld [vmem:[%s771 + $0x350] sm:$0xff]
        %v2464 = vld [vmem:[%s771 + $0x358] sm:$0xff]
        %v2465 = vld [vmem:[%s771 + $0x360] sm:$0xff]
        %v2466 = vld [vmem:[%s771 + $0x368] sm:$0xff]
        %v2467 = vld [vmem:[%s771 + $0x370] sm:$0xff]
        %v2468 = vld [vmem:[%s771 + $0x378] sm:$0xff]
        %v2469 = vld [vmem:[%s771 + $0x380] sm:$0xff]
        %v2470 = vld [vmem:[%s771 + $0x388] sm:$0xff]
        %v2471 = vld [vmem:[%s771 + $0x390] sm:$0xff]
        %v2472 = vld [vmem:[%s771 + $0x398] sm:$0xff]
        %v2473 = vld [vmem:[%s771 + $0x3a0] sm:$0xff]
        %v2474 = vld [vmem:[%s771 + $0x3a8] sm:$0xff]
        %v2475 = vld [vmem:[%s771 + $0x3b0] sm:$0xff]
        %v2476 = vld [vmem:[%s771 + $0x3b8] sm:$0xff]
        %v2477 = vld [vmem:[%s771 + $0x3c0] sm:$0xff]
        %v2478 = vld [vmem:[%s771 + $0x3c8] sm:$0xff]
        %v2479 = vld [vmem:[%s771 + $0x3d0] sm:$0xff]
        %v2480 = vld [vmem:[%s771 + $0x3d8] sm:$0xff]
        %v2481 = vld [vmem:[%s771 + $0x3e0] sm:$0xff]
        %v2482 = vld [vmem:[%s771 + $0x3e8] sm:$0xff]
        %v2483 = vld [vmem:[%s771 + $0x3f0] sm:$0xff]
        %v2484 = vld [vmem:[%s771 + $0x3f8] sm:$0xff]
        %v2485 = vld [vmem:[%s771 + $0x400] sm:$0xff]
        %v2486 = vld [vmem:[%s771 + $0x408] sm:$0xff]
        %v2487 = vld [vmem:[%s771 + $0x410] sm:$0xff]
        %v2488 = vld [vmem:[%s771 + $0x418] sm:$0xff]
        %v2489 = vld [vmem:[%s771 + $0x420] sm:$0xff]
        %v2490 = vld [vmem:[%s771 + $0x428] sm:$0xff]
        %v2491 = vld [vmem:[%s771 + $0x430] sm:$0xff]
        %v2492 = vld [vmem:[%s771 + $0x438] sm:$0xff]
        %v2493 = vld [vmem:[%s771 + $0x440] sm:$0xff]
        %v2494 = vld [vmem:[%s771 + $0x448] sm:$0xff]
        %v2495 = vld [vmem:[%s771 + $0x450] sm:$0xff]
        %v2496 = vld [vmem:[%s771 + $0x458] sm:$0xff]
        %v2497 = vld [vmem:[%s771 + $0x460] sm:$0xff]
        %v2498 = vld [vmem:[%s771 + $0x468] sm:$0xff]
        %v2499 = vld [vmem:[%s771 + $0x470] sm:$0xff]
        %v2500 = vld [vmem:[%s771 + $0x478] sm:$0xff]
        %v2501 = vld [vmem:[%s771 + $0x480] sm:$0xff]
        %v2502 = vld [vmem:[%s771 + $0x488] sm:$0xff]
        %v2503 = vld [vmem:[%s771 + $0x490] sm:$0xff]
        %v2504 = vld [vmem:[%s771 + $0x498] sm:$0xff]
        %v2505 = vld [vmem:[%s771 + $0x4a0] sm:$0xff]
        %v2506 = vld [vmem:[%s771 + $0x4a8] sm:$0xff]
        %v2507 = vld [vmem:[%s771 + $0x4b0] sm:$0xff]
        %v2508 = vld [vmem:[%s771 + $0x4b8] sm:$0xff]
        %v2509 = vld [vmem:[%s771 + $0x4c0] sm:$0xff]
        %v2510 = vld [vmem:[%s771 + $0x4c8] sm:$0xff]
        %v2511 = vld [vmem:[%s771 + $0x4d0] sm:$0xff]
        %v2512 = vld [vmem:[%s771 + $0x4d8] sm:$0xff]
        %v2513 = vld [vmem:[%s771 + $0x4e0] sm:$0xff]
        %v2514 = vld [vmem:[%s771 + $0x4e8] sm:$0xff]
        %v2515 = vld [vmem:[%s771 + $0x4f0] sm:$0xff]
        %v2516 = vld [vmem:[%s771 + $0x4f8] sm:$0xff]
        %v2517 = vld [vmem:[%s771 + $0x500] sm:$0xff]
        %v2518 = vld [vmem:[%s771 + $0x508] sm:$0xff]
        %v2519 = vld [vmem:[%s771 + $0x510] sm:$0xff]
        %v2520 = vld [vmem:[%s771 + $0x518] sm:$0xff]
        %v2521 = vld [vmem:[%s771 + $0x520] sm:$0xff]
        %v2522 = vld [vmem:[%s771 + $0x528] sm:$0xff]
        %v2523 = vld [vmem:[%s771 + $0x530] sm:$0xff]
        %v2524 = vld [vmem:[%s771 + $0x538] sm:$0xff]
        %v2525 = vld [vmem:[%s771 + $0x540] sm:$0xff]
        %v2526 = vld [vmem:[%s771 + $0x548] sm:$0xff]
        %v2527 = vld [vmem:[%s771 + $0x550] sm:$0xff]
        %v2528 = vld [vmem:[%s771 + $0x558] sm:$0xff]
        %v2529 = vld [vmem:[%s771 + $0x560] sm:$0xff]
        %v2530 = vld [vmem:[%s771 + $0x568] sm:$0xff]
        %v2531 = vld [vmem:[%s771 + $0x570] sm:$0xff]
        %v2532 = vld [vmem:[%s771 + $0x578] sm:$0xff]
        %v2533 = vld [vmem:[%s771 + $0x580] sm:$0xff]
        %v2534 = vld [vmem:[%s771 + $0x588] sm:$0xff]
        %v2535 = vld [vmem:[%s771 + $0x590] sm:$0xff]
        %v2536 = vld [vmem:[%s771 + $0x598] sm:$0xff]
        %v2537 = vld [vmem:[%s771 + $0x5a0] sm:$0xff]
        %v2538 = vld [vmem:[%s771 + $0x5a8] sm:$0xff]
        %v2539 = vld [vmem:[%s771 + $0x5b0] sm:$0xff]
        %v2540 = vld [vmem:[%s771 + $0x5b8] sm:$0xff]
        %v2541 = vld [vmem:[%s771 + $0x5c0] sm:$0xff]
        %v2542 = vld [vmem:[%s771 + $0x5c8] sm:$0xff]
        %v2543 = vld [vmem:[%s771 + $0x5d0] sm:$0xff]
        %v2544 = vld [vmem:[%s771 + $0x5d8] sm:$0xff]
        %v2545 = vld [vmem:[%s771 + $0x5e0] sm:$0xff]
        %v2546 = vld [vmem:[%s771 + $0x5e8] sm:$0xff]
        %v2547 = vld [vmem:[%s771 + $0x5f0] sm:$0xff]
        %v2548 = vld [vmem:[%s771 + $0x5f8] sm:$0xff]
        %v2549 = vld [vmem:[%s771 + $0x600] sm:$0xff]
        %v2550 = vld [vmem:[%s771 + $0x608] sm:$0xff]
        %v2551 = vld [vmem:[%s771 + $0x610] sm:$0xff]
        %v2552 = vld [vmem:[%s771 + $0x618] sm:$0xff]
        %v2553 = vld [vmem:[%s771 + $0x620] sm:$0xff]
        %v2554 = vld [vmem:[%s771 + $0x628] sm:$0xff]
        %v2555 = vld [vmem:[%s771 + $0x630] sm:$0xff]
        %v2556 = vld [vmem:[%s771 + $0x638] sm:$0xff]
        %v2557 = vld [vmem:[%s771 + $0x640] sm:$0xff]
        %v2558 = vld [vmem:[%s771 + $0x648] sm:$0xff]
        %v2559 = vld [vmem:[%s771 + $0x650] sm:$0xff]
        %v2560 = vld [vmem:[%s771 + $0x658] sm:$0xff]
        %v2561 = vld [vmem:[%s771 + $0x660] sm:$0xff]
        %v2562 = vld [vmem:[%s771 + $0x668] sm:$0xff]
        %v2563 = vld [vmem:[%s771 + $0x670] sm:$0xff]
        %v2564 = vld [vmem:[%s771 + $0x678] sm:$0xff]
        %v2565 = vld [vmem:[%s771 + $0x680] sm:$0xff]
        %v2566 = vld [vmem:[%s771 + $0x688] sm:$0xff]
        %v2567 = vld [vmem:[%s771 + $0x690] sm:$0xff]
        %v2568 = vld [vmem:[%s771 + $0x698] sm:$0xff]
        %v2569 = vld [vmem:[%s771 + $0x6a0] sm:$0xff]
        %v2570 = vld [vmem:[%s771 + $0x6a8] sm:$0xff]
        %v2571 = vld [vmem:[%s771 + $0x6b0] sm:$0xff]
        %v2572 = vld [vmem:[%s771 + $0x6b8] sm:$0xff]
        %v2573 = vld [vmem:[%s771 + $0x6c0] sm:$0xff]
        %v2574 = vld [vmem:[%s771 + $0x6c8] sm:$0xff]
        %v2575 = vld [vmem:[%s771 + $0x6d0] sm:$0xff]
        %v2576 = vld [vmem:[%s771 + $0x6d8] sm:$0xff]
        %v2577 = vld [vmem:[%s771 + $0x6e0] sm:$0xff]
        %v2578 = vld [vmem:[%s771 + $0x6e8] sm:$0xff]
        %v2579 = vld [vmem:[%s771 + $0x6f0] sm:$0xff]
        %v2580 = vld [vmem:[%s771 + $0x6f8] sm:$0xff]
        %v2581 = vld [vmem:[%s771 + $0x700] sm:$0xff]
        %v2582 = vld [vmem:[%s771 + $0x708] sm:$0xff]
        %v2583 = vld [vmem:[%s771 + $0x710] sm:$0xff]
        %v2584 = vld [vmem:[%s771 + $0x718] sm:$0xff]
        %v2585 = vld [vmem:[%s771 + $0x720] sm:$0xff]
        %v2586 = vld [vmem:[%s771 + $0x728] sm:$0xff]
        %v2587 = vld [vmem:[%s771 + $0x730] sm:$0xff]
        %v2588 = vld [vmem:[%s771 + $0x738] sm:$0xff]
        %v2589 = vld [vmem:[%s771 + $0x740] sm:$0xff]
        %v2590 = vld [vmem:[%s771 + $0x748] sm:$0xff]
        %v2591 = vld [vmem:[%s771 + $0x750] sm:$0xff]
        %v2592 = vld [vmem:[%s771 + $0x758] sm:$0xff]
        %v2593 = vld [vmem:[%s771 + $0x760] sm:$0xff]
        %v2594 = vld [vmem:[%s771 + $0x768] sm:$0xff]
        %v2595 = vld [vmem:[%s771 + $0x770] sm:$0xff]
        %v2596 = vld [vmem:[%s771 + $0x778] sm:$0xff]
        %v2597 = vld [vmem:[%s771 + $0x780] sm:$0xff]
        %v2598 = vld [vmem:[%s771 + $0x788] sm:$0xff]
        %v2599 = vld [vmem:[%s771 + $0x790] sm:$0xff]
        %v2600 = vld [vmem:[%s771 + $0x798] sm:$0xff]
        %v2601 = vld [vmem:[%s771 + $0x7a0] sm:$0xff]
        %v2602 = vld [vmem:[%s771 + $0x7a8] sm:$0xff]
        %v2603 = vld [vmem:[%s771 + $0x7b0] sm:$0xff]
        %v2604 = vld [vmem:[%s771 + $0x7b8] sm:$0xff]
        %v2605 = vld [vmem:[%s771 + $0x7c0] sm:$0xff]
        %v2606 = vld [vmem:[%s771 + $0x7c8] sm:$0xff]
        %v2607 = vld [vmem:[%s771 + $0x7d0] sm:$0xff]
        %v2608 = vld [vmem:[%s771 + $0x7d8] sm:$0xff]
        %v2609 = vld [vmem:[%s771 + $0x7e0] sm:$0xff]
        %v2610 = vld [vmem:[%s771 + $0x7e8] sm:$0xff]
        %v2611 = vld [vmem:[%s771 + $0x7f0] sm:$0xff]
        %v2612 = vld [vmem:[%s771 + $0x7f8] sm:$0xff]
        %v2613 = vld [vmem:[%s771 + $0x800] sm:$0xff]
        %v2614 = vld [vmem:[%s771 + $0x808] sm:$0xff]
        %v2615 = vld [vmem:[%s771 + $0x810] sm:$0xff]
        %v2616 = vld [vmem:[%s771 + $0x818] sm:$0xff]
        %v2617 = vld [vmem:[%s771 + $0x820] sm:$0xff]
        %v2618 = vld [vmem:[%s771 + $0x828] sm:$0xff]
        %v2619 = vld [vmem:[%s771 + $0x830] sm:$0xff]
        %v2620 = vld [vmem:[%s771 + $0x838] sm:$0xff]
        %v2621 = vld [vmem:[%s771 + $0x840] sm:$0xff]
        %v2622 = vld [vmem:[%s771 + $0x848] sm:$0xff]
        %v2623 = vld [vmem:[%s771 + $0x850] sm:$0xff]
        %v2624 = vld [vmem:[%s771 + $0x858] sm:$0xff]
        %v2625 = vld [vmem:[%s771 + $0x860] sm:$0xff]
        %v2626 = vld [vmem:[%s771 + $0x868] sm:$0xff]
        %v2627 = vld [vmem:[%s771 + $0x870] sm:$0xff]
        %v2628 = vld [vmem:[%s771 + $0x878] sm:$0xff]
        %v2629 = vld [vmem:[%s771 + $0x880] sm:$0xff]
        %v2630 = vld [vmem:[%s771 + $0x888] sm:$0xff]
        %v2631 = vld [vmem:[%s771 + $0x890] sm:$0xff]
        %v2632 = vld [vmem:[%s771 + $0x898] sm:$0xff]
        %v2633 = vld [vmem:[%s771 + $0x8a0] sm:$0xff]
        %v2634 = vld [vmem:[%s771 + $0x8a8] sm:$0xff]
        %v2635 = vld [vmem:[%s771 + $0x8b0] sm:$0xff]
        %v2636 = vld [vmem:[%s771 + $0x8b8] sm:$0xff]
        %v2637 = vld [vmem:[%s771 + $0x8c0] sm:$0xff]
        %v2638 = vld [vmem:[%s771 + $0x8c8] sm:$0xff]
        %v2639 = vld [vmem:[%s771 + $0x8d0] sm:$0xff]
        %v2640 = vld [vmem:[%s771 + $0x8d8] sm:$0xff]
        %v2641 = vld [vmem:[%s771 + $0x8e0] sm:$0xff]
        %v2642 = vld [vmem:[%s771 + $0x8e8] sm:$0xff]
        %v2643 = vld [vmem:[%s771 + $0x8f0] sm:$0xff]
        %v2644 = vld [vmem:[%s771 + $0x8f8] sm:$0xff]
        %v2645 = vld [vmem:[%s771 + $0x900] sm:$0xff]
        %v2646 = vld [vmem:[%s771 + $0x908] sm:$0xff]
        %v2647 = vld [vmem:[%s771 + $0x910] sm:$0xff]
        %v2648 = vld [vmem:[%s771 + $0x918] sm:$0xff]
        %v2649 = vld [vmem:[%s771 + $0x920] sm:$0xff]
        %v2650 = vld [vmem:[%s771 + $0x928] sm:$0xff]
        %v2651 = vld [vmem:[%s771 + $0x930] sm:$0xff]
        %v2652 = vld [vmem:[%s771 + $0x938] sm:$0xff]
        %v2653 = vld [vmem:[%s771 + $0x940] sm:$0xff]
        %v2654 = vld [vmem:[%s771 + $0x948] sm:$0xff]
        %v2655 = vld [vmem:[%s771 + $0x950] sm:$0xff]
        %v2656 = vld [vmem:[%s771 + $0x958] sm:$0xff]
        %v2657 = vld [vmem:[%s771 + $0x960] sm:$0xff]
        %v2658 = vld [vmem:[%s771 + $0x968] sm:$0xff]
        %v2659 = vld [vmem:[%s771 + $0x970] sm:$0xff]
        %v2660 = vld [vmem:[%s771 + $0x978] sm:$0xff]
        %v2661 = vld [vmem:[%s771 + $0x980] sm:$0xff]
        %v2662 = vld [vmem:[%s771 + $0x988] sm:$0xff]
        %v2663 = vld [vmem:[%s771 + $0x990] sm:$0xff]
        %v2664 = vld [vmem:[%s771 + $0x998] sm:$0xff]
        %v2665 = vld [vmem:[%s771 + $0x9a0] sm:$0xff]
        %v2666 = vld [vmem:[%s771 + $0x9a8] sm:$0xff]
        %v2667 = vld [vmem:[%s771 + $0x9b0] sm:$0xff]
        %v2668 = vld [vmem:[%s771 + $0x9b8] sm:$0xff]
        %v2669 = vld [vmem:[%s771 + $0x9c0] sm:$0xff]
        %v2670 = vld [vmem:[%s771 + $0x9c8] sm:$0xff]
        %v2671 = vld [vmem:[%s771 + $0x9d0] sm:$0xff]
        %v2672 = vld [vmem:[%s771 + $0x9d8] sm:$0xff]
        %v2673 = vld [vmem:[%s771 + $0x9e0] sm:$0xff]
        %v2674 = vld [vmem:[%s771 + $0x9e8] sm:$0xff]
        %v2675 = vld [vmem:[%s771 + $0x9f0] sm:$0xff]
        %v2676 = vld [vmem:[%s771 + $0x9f8] sm:$0xff]
        %v2677 = vld [vmem:[%s771 + $0xa00] sm:$0xff]
        %v2678 = vld [vmem:[%s771 + $0xa08] sm:$0xff]
        %v2679 = vld [vmem:[%s771 + $0xa10] sm:$0xff]
        %v2680 = vld [vmem:[%s771 + $0xa18] sm:$0xff]
        %v2681 = vld [vmem:[%s771 + $0xa20] sm:$0xff]
        %v2682 = vld [vmem:[%s771 + $0xa28] sm:$0xff]
        %v2683 = vld [vmem:[%s771 + $0xa30] sm:$0xff]
        %v2684 = vld [vmem:[%s771 + $0xa38] sm:$0xff]
        %v2685 = vld [vmem:[%s771 + $0xa40] sm:$0xff]
        %v2686 = vld [vmem:[%s771 + $0xa48] sm:$0xff]
        %v2687 = vld [vmem:[%s771 + $0xa50] sm:$0xff]
        %v2688 = vld [vmem:[%s771 + $0xa58] sm:$0xff]
        %v2689 = vld [vmem:[%s771 + $0xa60] sm:$0xff]
        %v2690 = vld [vmem:[%s771 + $0xa68] sm:$0xff]
        %v2691 = vld [vmem:[%s771 + $0xa70] sm:$0xff]
        %v2692 = vld [vmem:[%s771 + $0xa78] sm:$0xff]
        %v2693 = vld [vmem:[%s771 + $0xa80] sm:$0xff]
        %v2694 = vld [vmem:[%s771 + $0xa88] sm:$0xff]
        %v2695 = vld [vmem:[%s771 + $0xa90] sm:$0xff]
        %v2696 = vld [vmem:[%s771 + $0xa98] sm:$0xff]
        %v2697 = vld [vmem:[%s771 + $0xaa0] sm:$0xff]
        %v2698 = vld [vmem:[%s771 + $0xaa8] sm:$0xff]
        %v2699 = vld [vmem:[%s771 + $0xab0] sm:$0xff]
        %v2700 = vld [vmem:[%s771 + $0xab8] sm:$0xff]
        %v2701 = vld [vmem:[%s771 + $0xac0] sm:$0xff]
        %v2702 = vld [vmem:[%s771 + $0xac8] sm:$0xff]
        %v2703 = vld [vmem:[%s771 + $0xad0] sm:$0xff]
        %v2704 = vld [vmem:[%s771 + $0xad8] sm:$0xff]
        %v2705 = vld [vmem:[%s771 + $0xae0] sm:$0xff]
        %v2706 = vld [vmem:[%s771 + $0xae8] sm:$0xff]
        %v2707 = vld [vmem:[%s771 + $0xaf0] sm:$0xff]
        %v2708 = vld [vmem:[%s771 + $0xaf8] sm:$0xff]
        %v2709 = vld [vmem:[%s771 + $0xb00] sm:$0xff]
        %v2710 = vld [vmem:[%s771 + $0xb08] sm:$0xff]
        %v2711 = vld [vmem:[%s771 + $0xb10] sm:$0xff]
        %v2712 = vld [vmem:[%s771 + $0xb18] sm:$0xff]
        %v2713 = vld [vmem:[%s771 + $0xb20] sm:$0xff]
        %v2714 = vld [vmem:[%s771 + $0xb28] sm:$0xff]
        %v2715 = vld [vmem:[%s771 + $0xb30] sm:$0xff]
        %v2716 = vld [vmem:[%s771 + $0xb38] sm:$0xff]
        %v2717 = vld [vmem:[%s771 + $0xb40] sm:$0xff]
        %v2718 = vld [vmem:[%s771 + $0xb48] sm:$0xff]
        %v2719 = vld [vmem:[%s771 + $0xb50] sm:$0xff]
        %v2720 = vld [vmem:[%s771 + $0xb58] sm:$0xff]
        %v2721 = vld [vmem:[%s771 + $0xb60] sm:$0xff]
        %v2722 = vld [vmem:[%s771 + $0xb68] sm:$0xff]
        %v2723 = vld [vmem:[%s771 + $0xb70] sm:$0xff]
        %v2724 = vld [vmem:[%s771 + $0xb78] sm:$0xff]
        %v2725 = vld [vmem:[%s771 + $0xb80] sm:$0xff]
        %v2726 = vld [vmem:[%s771 + $0xb88] sm:$0xff]
        %v2727 = vld [vmem:[%s771 + $0xb90] sm:$0xff]
        %v2728 = vld [vmem:[%s771 + $0xb98] sm:$0xff]
        %v2729 = vld [vmem:[%s771 + $0xba0] sm:$0xff]
        %v2730 = vld [vmem:[%s771 + $0xba8] sm:$0xff]
        %v2731 = vld [vmem:[%s771 + $0xbb0] sm:$0xff]
        %v2732 = vld [vmem:[%s771 + $0xbb8] sm:$0xff]
        %v2733 = vld [vmem:[%s771 + $0xbc0] sm:$0xff]
        %v2734 = vld [vmem:[%s771 + $0xbc8] sm:$0xff]
        %v2735 = vld [vmem:[%s771 + $0xbd0] sm:$0xff]
        %v2736 = vld [vmem:[%s771 + $0xbd8] sm:$0xff]
        %v2737 = vld [vmem:[%s771 + $0xbe0] sm:$0xff]
        %v2738 = vld [vmem:[%s771 + $0xbe8] sm:$0xff]
        %v2739 = vld [vmem:[%s771 + $0xbf0] sm:$0xff]
        %v2740 = vld [vmem:[%s771 + $0xbf8] sm:$0xff]
        %v2741 = vld [vmem:[%s771 + $0xc00] sm:$0xff]
        %v2742 = vld [vmem:[%s771 + $0xc08] sm:$0xff]
        %v2743 = vld [vmem:[%s771 + $0xc10] sm:$0xff]
        %v2744 = vld [vmem:[%s771 + $0xc18] sm:$0xff]
        %v2745 = vld [vmem:[%s771 + $0xc20] sm:$0xff]
        %v2746 = vld [vmem:[%s771 + $0xc28] sm:$0xff]
        %v2747 = vld [vmem:[%s771 + $0xc30] sm:$0xff]
        %v2748 = vld [vmem:[%s771 + $0xc38] sm:$0xff]
        %v2749 = vld [vmem:[%s771 + $0xc40] sm:$0xff]
        %v2750 = vld [vmem:[%s771 + $0xc48] sm:$0xff]
        %v2751 = vld [vmem:[%s771 + $0xc50] sm:$0xff]
        %v2752 = vld [vmem:[%s771 + $0xc58] sm:$0xff]
        %v2753 = vld [vmem:[%s771 + $0xc60] sm:$0xff]
        %v2754 = vld [vmem:[%s771 + $0xc68] sm:$0xff]
        %v2755 = vld [vmem:[%s771 + $0xc70] sm:$0xff]
        %v2756 = vld [vmem:[%s771 + $0xc78] sm:$0xff]
        %v2757 = vld [vmem:[%s771 + $0xc80] sm:$0xff]
        %v2758 = vld [vmem:[%s771 + $0xc88] sm:$0xff]
        %v2759 = vld [vmem:[%s771 + $0xc90] sm:$0xff]
        %v2760 = vld [vmem:[%s771 + $0xc98] sm:$0xff]
        %v2761 = vld [vmem:[%s771 + $0xca0] sm:$0xff]
        %v2762 = vld [vmem:[%s771 + $0xca8] sm:$0xff]
        %v2763 = vld [vmem:[%s771 + $0xcb0] sm:$0xff]
        %v2764 = vld [vmem:[%s771 + $0xcb8] sm:$0xff]
        %v2765 = vld [vmem:[%s771 + $0xcc0] sm:$0xff]
        %v2766 = vld [vmem:[%s771 + $0xcc8] sm:$0xff]
        %v2767 = vld [vmem:[%s771 + $0xcd0] sm:$0xff]
        %v2768 = vld [vmem:[%s771 + $0xcd8] sm:$0xff]
        %v2769 = vld [vmem:[%s771 + $0xce0] sm:$0xff]
        %v2770 = vld [vmem:[%s771 + $0xce8] sm:$0xff]
        %v2771 = vld [vmem:[%s771 + $0xcf0] sm:$0xff]
        %v2772 = vld [vmem:[%s771 + $0xcf8] sm:$0xff]
        %v2773 = vld [vmem:[%s771 + $0xd00] sm:$0xff]
        %v2774 = vld [vmem:[%s771 + $0xd08] sm:$0xff]
        %v2775 = vld [vmem:[%s771 + $0xd10] sm:$0xff]
        %v2776 = vld [vmem:[%s771 + $0xd18] sm:$0xff]
        %v2777 = vld [vmem:[%s771 + $0xd20] sm:$0xff]
        %v2778 = vld [vmem:[%s771 + $0xd28] sm:$0xff]
        %v2779 = vld [vmem:[%s771 + $0xd30] sm:$0xff]
        %v2780 = vld [vmem:[%s771 + $0xd38] sm:$0xff]
        %v2781 = vld [vmem:[%s771 + $0xd40] sm:$0xff]
        %v2782 = vld [vmem:[%s771 + $0xd48] sm:$0xff]
        %v2783 = vld [vmem:[%s771 + $0xd50] sm:$0xff]
        %v2784 = vld [vmem:[%s771 + $0xd58] sm:$0xff]
        %v2785 = vld [vmem:[%s771 + $0xd60] sm:$0xff]
        %v2786 = vld [vmem:[%s771 + $0xd68] sm:$0xff]
        %v2787 = vld [vmem:[%s771 + $0xd70] sm:$0xff]
        %v2788 = vld [vmem:[%s771 + $0xd78] sm:$0xff]
        %v2789 = vld [vmem:[%s771 + $0xd80] sm:$0xff]
        %v2790 = vld [vmem:[%s771 + $0xd88] sm:$0xff]
        %v2791 = vld [vmem:[%s771 + $0xd90] sm:$0xff]
        %v2792 = vld [vmem:[%s771 + $0xd98] sm:$0xff]
        %v2793 = vld [vmem:[%s771 + $0xda0] sm:$0xff]
        %v2794 = vld [vmem:[%s771 + $0xda8] sm:$0xff]
        %v2795 = vld [vmem:[%s771 + $0xdb0] sm:$0xff]
        %v2796 = vld [vmem:[%s771 + $0xdb8] sm:$0xff]
        %v2797 = vld [vmem:[%s771 + $0xdc0] sm:$0xff]
        %v2798 = vld [vmem:[%s771 + $0xdc8] sm:$0xff]
        %v2799 = vld [vmem:[%s771 + $0xdd0] sm:$0xff]
        %v2800 = vld [vmem:[%s771 + $0xdd8] sm:$0xff]
        %v2801 = vld [vmem:[%s771 + $0xde0] sm:$0xff]
        %v2802 = vld [vmem:[%s771 + $0xde8] sm:$0xff]
        %v2803 = vld [vmem:[%s771 + $0xdf0] sm:$0xff]
        %v2804 = vld [vmem:[%s771 + $0xdf8] sm:$0xff]
        %v2805 = vld [vmem:[%s771 + $0xe00] sm:$0xff]
        %v2806 = vld [vmem:[%s771 + $0xe08] sm:$0xff]
        %v2807 = vld [vmem:[%s771 + $0xe10] sm:$0xff]
        %v2808 = vld [vmem:[%s771 + $0xe18] sm:$0xff]
        %v2809 = vld [vmem:[%s771 + $0xe20] sm:$0xff]
        %v2810 = vld [vmem:[%s771 + $0xe28] sm:$0xff]
        %v2811 = vld [vmem:[%s771 + $0xe30] sm:$0xff]
        %v2812 = vld [vmem:[%s771 + $0xe38] sm:$0xff]
        %v2813 = vld [vmem:[%s771 + $0xe40] sm:$0xff]
        %v2814 = vld [vmem:[%s771 + $0xe48] sm:$0xff]
        %v2815 = vld [vmem:[%s771 + $0xe50] sm:$0xff]
        %v2816 = vld [vmem:[%s771 + $0xe58] sm:$0xff]
        %v2817 = vld [vmem:[%s771 + $0xe60] sm:$0xff]
        %v2818 = vld [vmem:[%s771 + $0xe68] sm:$0xff]
        %v2819 = vld [vmem:[%s771 + $0xe70] sm:$0xff]
        %v2820 = vld [vmem:[%s771 + $0xe78] sm:$0xff]
        %v2821 = vld [vmem:[%s771 + $0xe80] sm:$0xff]
        %v2822 = vld [vmem:[%s771 + $0xe88] sm:$0xff]
        %v2823 = vld [vmem:[%s771 + $0xe90] sm:$0xff]
        %v2824 = vld [vmem:[%s771 + $0xe98] sm:$0xff]
        %v2825 = vld [vmem:[%s771 + $0xea0] sm:$0xff]
        %v2826 = vld [vmem:[%s771 + $0xea8] sm:$0xff]
        %v2827 = vld [vmem:[%s771 + $0xeb0] sm:$0xff]
        %v2828 = vld [vmem:[%s771 + $0xeb8] sm:$0xff]
        %v2829 = vld [vmem:[%s771 + $0xec0] sm:$0xff]
        %v2830 = vld [vmem:[%s771 + $0xec8] sm:$0xff]
        %v2831 = vld [vmem:[%s771 + $0xed0] sm:$0xff]
        %v2832 = vld [vmem:[%s771 + $0xed8] sm:$0xff]
        %v2833 = vld [vmem:[%s771 + $0xee0] sm:$0xff]
        %v2834 = vld [vmem:[%s771 + $0xee8] sm:$0xff]
        %v2835 = vld [vmem:[%s771 + $0xef0] sm:$0xff]
        %v2836 = vld [vmem:[%s771 + $0xef8] sm:$0xff]
        %v2837 = vld [vmem:[%s771 + $0xf00] sm:$0xff]
        %v2838 = vld [vmem:[%s771 + $0xf08] sm:$0xff]
        %v2839 = vld [vmem:[%s771 + $0xf10] sm:$0xff]
        %v2840 = vld [vmem:[%s771 + $0xf18] sm:$0xff]
        %v2841 = vld [vmem:[%s771 + $0xf20] sm:$0xff]
        %v2842 = vld [vmem:[%s771 + $0xf28] sm:$0xff]
        %v2843 = vld [vmem:[%s771 + $0xf30] sm:$0xff]
        %v2844 = vld [vmem:[%s771 + $0xf38] sm:$0xff]
        %v2845 = vld [vmem:[%s771 + $0xf40] sm:$0xff]
        %v2846 = vld [vmem:[%s771 + $0xf48] sm:$0xff]
        %v2847 = vld [vmem:[%s771 + $0xf50] sm:$0xff]
        %v2848 = vld [vmem:[%s771 + $0xf58] sm:$0xff]
        %v2849 = vld [vmem:[%s771 + $0xf60] sm:$0xff]
        %v2850 = vld [vmem:[%s771 + $0xf68] sm:$0xff]
        %v2851 = vld [vmem:[%s771 + $0xf70] sm:$0xff]
        %v2852 = vld [vmem:[%s771 + $0xf78] sm:$0xff]
        %v2853 = vld [vmem:[%s771 + $0xf80] sm:$0xff]
        %v2854 = vld [vmem:[%s771 + $0xf88] sm:$0xff]
        %v2855 = vld [vmem:[%s771 + $0xf90] sm:$0xff]
        %v2856 = vld [vmem:[%s771 + $0xf98] sm:$0xff]
        %v2857 = vld [vmem:[%s771 + $0xfa0] sm:$0xff]
        %v2858 = vld [vmem:[%s771 + $0xfa8] sm:$0xff]
        %v2859 = vld [vmem:[%s771 + $0xfb0] sm:$0xff]
        %v2860 = vld [vmem:[%s771 + $0xfb8] sm:$0xff]
        %v2861 = vld [vmem:[%s771 + $0xfc0] sm:$0xff]
        %v2862 = vld [vmem:[%s771 + $0xfc8] sm:$0xff]
        %v2863 = vld [vmem:[%s771 + $0xfd0] sm:$0xff]
        %v2864 = vld [vmem:[%s771 + $0xfd8] sm:$0xff]
        %v2865 = vld [vmem:[%s771 + $0xfe0] sm:$0xff]
        %v2866 = vld [vmem:[%s771 + $0xfe8] sm:$0xff]
        %v2867 = vld [vmem:[%s771 + $0xff0] sm:$0xff]
        %v2868 = vld [vmem:[%s771 + $0xff8] sm:$0xff]
        %v2869 = vld [vmem:[%s771 + $0x1000] sm:$0xff]
        %v2870 = vld [vmem:[%s771 + $0x1008] sm:$0xff]
        %v2871 = vld [vmem:[%s771 + $0x1010] sm:$0xff]
        %v2872 = vld [vmem:[%s771 + $0x1018] sm:$0xff]
        %v2873 = vld [vmem:[%s771 + $0x1020] sm:$0xff]
        %v2874 = vld [vmem:[%s771 + $0x1028] sm:$0xff]
        %v2875 = vld [vmem:[%s771 + $0x1030] sm:$0xff]
        %v2876 = vld [vmem:[%s771 + $0x1038] sm:$0xff]
        %v2877 = vld [vmem:[%s771 + $0x1040] sm:$0xff]
        %v2878 = vld [vmem:[%s771 + $0x1048] sm:$0xff]
        %v2879 = vld [vmem:[%s771 + $0x1050] sm:$0xff]
        %v2880 = vld [vmem:[%s771 + $0x1058] sm:$0xff]
        %v2881 = vld [vmem:[%s771 + $0x1060] sm:$0xff]
        %v2882 = vld [vmem:[%s771 + $0x1068] sm:$0xff]
        %v2883 = vld [vmem:[%s771 + $0x1070] sm:$0xff]
        %v2884 = vld [vmem:[%s771 + $0x1078] sm:$0xff]
        %v2885 = vld [vmem:[%s771 + $0x1080] sm:$0xff]
        %v2886 = vld [vmem:[%s771 + $0x1088] sm:$0xff]
        %v2887 = vld [vmem:[%s771 + $0x1090] sm:$0xff]
        %v2888 = vld [vmem:[%s771 + $0x1098] sm:$0xff]
        %v2889 = vld [vmem:[%s771 + $0x10a0] sm:$0xff]
        %v2890 = vld [vmem:[%s771 + $0x10a8] sm:$0xff]
        %v2891 = vld [vmem:[%s771 + $0x10b0] sm:$0xff]
        %v2892 = vld [vmem:[%s771 + $0x10b8] sm:$0xff]
        %v2893 = vld [vmem:[%s771 + $0x10c0] sm:$0xff]
        %v2894 = vld [vmem:[%s771 + $0x10c8] sm:$0xff]
        %v2895 = vld [vmem:[%s771 + $0x10d0] sm:$0xff]
        %v2896 = vld [vmem:[%s771 + $0x10d8] sm:$0xff]
        %v2897 = vld [vmem:[%s771 + $0x10e0] sm:$0xff]
        %v2898 = vld [vmem:[%s771 + $0x10e8] sm:$0xff]
        %v2899 = vld [vmem:[%s771 + $0x10f0] sm:$0xff]
        %v2900 = vld [vmem:[%s771 + $0x10f8] sm:$0xff]
        %v2901 = vld [vmem:[%s771 + $0x1100] sm:$0xff]
        %v2902 = vld [vmem:[%s771 + $0x1108] sm:$0xff]
        %v2903 = vld [vmem:[%s771 + $0x1110] sm:$0xff]
        %v2904 = vld [vmem:[%s771 + $0x1118] sm:$0xff]
        %v2905 = vld [vmem:[%s771 + $0x1120] sm:$0xff]
        %v2906 = vld [vmem:[%s771 + $0x1128] sm:$0xff]
        %v2907 = vld [vmem:[%s771 + $0x1130] sm:$0xff]
        %v2908 = vld [vmem:[%s771 + $0x1138] sm:$0xff]
        %v2909 = vld [vmem:[%s771 + $0x1140] sm:$0xff]
        %v2910 = vld [vmem:[%s771 + $0x1148] sm:$0xff]
        %v2911 = vld [vmem:[%s771 + $0x1150] sm:$0xff]
        %v2912 = vld [vmem:[%s771 + $0x1158] sm:$0xff]
        %v2913 = vld [vmem:[%s771 + $0x1160] sm:$0xff]
        %v2914 = vld [vmem:[%s771 + $0x1168] sm:$0xff]
        %v2915 = vld [vmem:[%s771 + $0x1170] sm:$0xff]
        %v2916 = vld [vmem:[%s771 + $0x1178] sm:$0xff]
        %v2917 = vld [vmem:[%s771 + $0x1180] sm:$0xff]
        %v2918 = vld [vmem:[%s771 + $0x1188] sm:$0xff]
        %v2919 = vld [vmem:[%s771 + $0x1190] sm:$0xff]
        %v2920 = vld [vmem:[%s771 + $0x1198] sm:$0xff]
        %v2921 = vld [vmem:[%s771 + $0x11a0] sm:$0xff]
        %v2922 = vld [vmem:[%s771 + $0x11a8] sm:$0xff]
        %v2923 = vld [vmem:[%s771 + $0x11b0] sm:$0xff]
        %v2924 = vld [vmem:[%s771 + $0x11b8] sm:$0xff]
        %v2925 = vld [vmem:[%s771 + $0x11c0] sm:$0xff]
        %v2926 = vld [vmem:[%s771 + $0x11c8] sm:$0xff]
        %v2927 = vld [vmem:[%s771 + $0x11d0] sm:$0xff]
        %v2928 = vld [vmem:[%s771 + $0x11d8] sm:$0xff]
        %v2929 = vld [vmem:[%s771 + $0x11e0] sm:$0xff]
        %v2930 = vld [vmem:[%s771 + $0x11e8] sm:$0xff]
        %v2931 = vld [vmem:[%s771 + $0x11f0] sm:$0xff]
        %v2932 = vld [vmem:[%s771 + $0x11f8] sm:$0xff]
        %v3509 = vunpack.c.l.b16 %v2357
        %v3510 = vunpack.c.h.b16 %v2357
        %v3511 = vunpack.c.l.b16 %v2358
        %v3512 = vunpack.c.h.b16 %v2358
        %v3513 = vunpack.c.l.b16 %v2359
        %v3514 = vunpack.c.h.b16 %v2359
        %v3515 = vunpack.c.l.b16 %v2360
        %v3516 = vunpack.c.h.b16 %v2360
        %v3517 = vunpack.c.l.b16 %v2361
        %v3518 = vunpack.c.h.b16 %v2361
        %v3519 = vunpack.c.l.b16 %v2362
        %v3520 = vunpack.c.h.b16 %v2362
        %v3521 = vunpack.c.l.b16 %v2363
        %v3522 = vunpack.c.h.b16 %v2363
        %v3523 = vunpack.c.l.b16 %v2364
        %v3524 = vunpack.c.h.b16 %v2364
        %v3525 = vunpack.c.l.b16 %v2365
        %v3526 = vunpack.c.h.b16 %v2365
        %v3527 = vunpack.c.l.b16 %v2366
        %v3528 = vunpack.c.h.b16 %v2366
        %v3529 = vunpack.c.l.b16 %v2367
        %v3530 = vunpack.c.h.b16 %v2367
        %v3531 = vunpack.c.l.b16 %v2368
        %v3532 = vunpack.c.h.b16 %v2368
        %v3533 = vunpack.c.l.b16 %v2369
        %v3534 = vunpack.c.h.b16 %v2369
        %v3535 = vunpack.c.l.b16 %v2370
        %v3536 = vunpack.c.h.b16 %v2370
        %v3537 = vunpack.c.l.b16 %v2371
        %v3538 = vunpack.c.h.b16 %v2371
        %v3539 = vunpack.c.l.b16 %v2372
        %v3540 = vunpack.c.h.b16 %v2372
        %v3541 = vunpack.c.l.b16 %v2373
        %v3542 = vunpack.c.h.b16 %v2373
        %v3543 = vunpack.c.l.b16 %v2374
        %v3544 = vunpack.c.h.b16 %v2374
        %v3545 = vunpack.c.l.b16 %v2375
        %v3546 = vunpack.c.h.b16 %v2375
        %v3547 = vunpack.c.l.b16 %v2376
        %v3548 = vunpack.c.h.b16 %v2376
        %v3549 = vunpack.c.l.b16 %v2377
        %v3550 = vunpack.c.h.b16 %v2377
        %v3551 = vunpack.c.l.b16 %v2378
        %v3552 = vunpack.c.h.b16 %v2378
        %v3553 = vunpack.c.l.b16 %v2379
        %v3554 = vunpack.c.h.b16 %v2379
        %v3555 = vunpack.c.l.b16 %v2380
        %v3556 = vunpack.c.h.b16 %v2380
        %v3557 = vunpack.c.l.b16 %v2381
        %v3558 = vunpack.c.h.b16 %v2381
        %v3559 = vunpack.c.l.b16 %v2382
        %v3560 = vunpack.c.h.b16 %v2382
        %v3561 = vunpack.c.l.b16 %v2383
        %v3562 = vunpack.c.h.b16 %v2383
        %v3563 = vunpack.c.l.b16 %v2384
        %v3564 = vunpack.c.h.b16 %v2384
        %v3565 = vunpack.c.l.b16 %v2385
        %v3566 = vunpack.c.h.b16 %v2385
        %v3567 = vunpack.c.l.b16 %v2386
        %v3568 = vunpack.c.h.b16 %v2386
        %v3569 = vunpack.c.l.b16 %v2387
        %v3570 = vunpack.c.h.b16 %v2387
        %v3571 = vunpack.c.l.b16 %v2388
        %v3572 = vunpack.c.h.b16 %v2388
        %v3573 = vunpack.c.l.b16 %v2389
        %v3574 = vunpack.c.h.b16 %v2389
        %v3575 = vunpack.c.l.b16 %v2390
        %v3576 = vunpack.c.h.b16 %v2390
        %v3577 = vunpack.c.l.b16 %v2391
        %v3578 = vunpack.c.h.b16 %v2391
        %v3579 = vunpack.c.l.b16 %v2392
        %v3580 = vunpack.c.h.b16 %v2392
        %v3581 = vunpack.c.l.b16 %v2393
        %v3582 = vunpack.c.h.b16 %v2393
        %v3583 = vunpack.c.l.b16 %v2394
        %v3584 = vunpack.c.h.b16 %v2394
        %v3585 = vunpack.c.l.b16 %v2395
        %v3586 = vunpack.c.h.b16 %v2395
        %v3587 = vunpack.c.l.b16 %v2396
        %v3588 = vunpack.c.h.b16 %v2396
        %v3589 = vunpack.c.l.b16 %v2397
        %v3590 = vunpack.c.h.b16 %v2397
        %v3591 = vunpack.c.l.b16 %v2398
        %v3592 = vunpack.c.h.b16 %v2398
        %v3593 = vunpack.c.l.b16 %v2399
        %v3594 = vunpack.c.h.b16 %v2399
        %v3595 = vunpack.c.l.b16 %v2400
        %v3596 = vunpack.c.h.b16 %v2400
        %v3597 = vunpack.c.l.b16 %v2401
        %v3598 = vunpack.c.h.b16 %v2401
        %v3599 = vunpack.c.l.b16 %v2402
        %v3600 = vunpack.c.h.b16 %v2402
        %v3601 = vunpack.c.l.b16 %v2403
        %v3602 = vunpack.c.h.b16 %v2403
        %v3603 = vunpack.c.l.b16 %v2404
        %v3604 = vunpack.c.h.b16 %v2404
        %v3605 = vunpack.c.l.b16 %v2405
        %v3606 = vunpack.c.h.b16 %v2405
        %v3607 = vunpack.c.l.b16 %v2406
        %v3608 = vunpack.c.h.b16 %v2406
        %v3609 = vunpack.c.l.b16 %v2407
        %v3610 = vunpack.c.h.b16 %v2407
        %v3611 = vunpack.c.l.b16 %v2408
        %v3612 = vunpack.c.h.b16 %v2408
        %v3613 = vunpack.c.l.b16 %v2409
        %v3614 = vunpack.c.h.b16 %v2409
        %v3615 = vunpack.c.l.b16 %v2410
        %v3616 = vunpack.c.h.b16 %v2410
        %v3617 = vunpack.c.l.b16 %v2411
        %v3618 = vunpack.c.h.b16 %v2411
        %v3619 = vunpack.c.l.b16 %v2412
        %v3620 = vunpack.c.h.b16 %v2412
        %v3621 = vunpack.c.l.b16 %v2413
        %v3622 = vunpack.c.h.b16 %v2413
        %v3623 = vunpack.c.l.b16 %v2414
        %v3624 = vunpack.c.h.b16 %v2414
        %v3625 = vunpack.c.l.b16 %v2415
        %v3626 = vunpack.c.h.b16 %v2415
        %v3627 = vunpack.c.l.b16 %v2416
        %v3628 = vunpack.c.h.b16 %v2416
        %v3629 = vunpack.c.l.b16 %v2417
        %v3630 = vunpack.c.h.b16 %v2417
        %v3631 = vunpack.c.l.b16 %v2418
        %v3632 = vunpack.c.h.b16 %v2418
        %v3633 = vunpack.c.l.b16 %v2419
        %v3634 = vunpack.c.h.b16 %v2419
        %v3635 = vunpack.c.l.b16 %v2420
        %v3636 = vunpack.c.h.b16 %v2420
        %v3637 = vunpack.c.l.b16 %v2421
        %v3638 = vunpack.c.h.b16 %v2421
        %v3639 = vunpack.c.l.b16 %v2422
        %v3640 = vunpack.c.h.b16 %v2422
        %v3641 = vunpack.c.l.b16 %v2423
        %v3642 = vunpack.c.h.b16 %v2423
        %v3643 = vunpack.c.l.b16 %v2424
        %v3644 = vunpack.c.h.b16 %v2424
        %v3645 = vunpack.c.l.b16 %v2425
        %v3646 = vunpack.c.h.b16 %v2425
        %v3647 = vunpack.c.l.b16 %v2426
        %v3648 = vunpack.c.h.b16 %v2426
        %v3649 = vunpack.c.l.b16 %v2427
        %v3650 = vunpack.c.h.b16 %v2427
        %v3651 = vunpack.c.l.b16 %v2428
        %v3652 = vunpack.c.h.b16 %v2428
        %v3653 = vunpack.c.l.b16 %v2429
        %v3654 = vunpack.c.h.b16 %v2429
        %v3655 = vunpack.c.l.b16 %v2430
        %v3656 = vunpack.c.h.b16 %v2430
        %v3657 = vunpack.c.l.b16 %v2431
        %v3658 = vunpack.c.h.b16 %v2431
        %v3659 = vunpack.c.l.b16 %v2432
        %v3660 = vunpack.c.h.b16 %v2432
        %v3661 = vunpack.c.l.b16 %v2433
        %v3662 = vunpack.c.h.b16 %v2433
        %v3663 = vunpack.c.l.b16 %v2434
        %v3664 = vunpack.c.h.b16 %v2434
        %v3665 = vunpack.c.l.b16 %v2435
        %v3666 = vunpack.c.h.b16 %v2435
        %v3667 = vunpack.c.l.b16 %v2436
        %v3668 = vunpack.c.h.b16 %v2436
        %v3669 = vunpack.c.l.b16 %v2437
        %v3670 = vunpack.c.h.b16 %v2437
        %v3671 = vunpack.c.l.b16 %v2438
        %v3672 = vunpack.c.h.b16 %v2438
        %v3673 = vunpack.c.l.b16 %v2439
        %v3674 = vunpack.c.h.b16 %v2439
        %v3675 = vunpack.c.l.b16 %v2440
        %v3676 = vunpack.c.h.b16 %v2440
        %v3677 = vunpack.c.l.b16 %v2441
        %v3678 = vunpack.c.h.b16 %v2441
        %v3679 = vunpack.c.l.b16 %v2442
        %v3680 = vunpack.c.h.b16 %v2442
        %v3681 = vunpack.c.l.b16 %v2443
        %v3682 = vunpack.c.h.b16 %v2443
        %v3683 = vunpack.c.l.b16 %v2444
        %v3684 = vunpack.c.h.b16 %v2444
        %v3685 = vunpack.c.l.b16 %v2445
        %v3686 = vunpack.c.h.b16 %v2445
        %v3687 = vunpack.c.l.b16 %v2446
        %v3688 = vunpack.c.h.b16 %v2446
        %v3689 = vunpack.c.l.b16 %v2447
        %v3690 = vunpack.c.h.b16 %v2447
        %v3691 = vunpack.c.l.b16 %v2448
        %v3692 = vunpack.c.h.b16 %v2448
        %v3693 = vunpack.c.l.b16 %v2449
        %v3694 = vunpack.c.h.b16 %v2449
        %v3695 = vunpack.c.l.b16 %v2450
        %v3696 = vunpack.c.h.b16 %v2450
        %v3697 = vunpack.c.l.b16 %v2451
        %v3698 = vunpack.c.h.b16 %v2451
        %v3699 = vunpack.c.l.b16 %v2452
        %v3700 = vunpack.c.h.b16 %v2452
        %v3701 = vunpack.c.l.b16 %v2453
        %v3702 = vunpack.c.h.b16 %v2453
        %v3703 = vunpack.c.l.b16 %v2454
        %v3704 = vunpack.c.h.b16 %v2454
        %v3705 = vunpack.c.l.b16 %v2455
        %v3706 = vunpack.c.h.b16 %v2455
        %v3707 = vunpack.c.l.b16 %v2456
        %v3708 = vunpack.c.h.b16 %v2456
        %v3709 = vunpack.c.l.b16 %v2457
        %v3710 = vunpack.c.h.b16 %v2457
        %v3711 = vunpack.c.l.b16 %v2458
        %v3712 = vunpack.c.h.b16 %v2458
        %v3713 = vunpack.c.l.b16 %v2459
        %v3714 = vunpack.c.h.b16 %v2459
        %v3715 = vunpack.c.l.b16 %v2460
        %v3716 = vunpack.c.h.b16 %v2460
        %v3717 = vunpack.c.l.b16 %v2461
        %v3718 = vunpack.c.h.b16 %v2461
        %v3719 = vunpack.c.l.b16 %v2462
        %v3720 = vunpack.c.h.b16 %v2462
        %v3721 = vunpack.c.l.b16 %v2463
        %v3722 = vunpack.c.h.b16 %v2463
        %v3723 = vunpack.c.l.b16 %v2464
        %v3724 = vunpack.c.h.b16 %v2464
        %v3725 = vunpack.c.l.b16 %v2465
        %v3726 = vunpack.c.h.b16 %v2465
        %v3727 = vunpack.c.l.b16 %v2466
        %v3728 = vunpack.c.h.b16 %v2466
        %v3729 = vunpack.c.l.b16 %v2467
        %v3730 = vunpack.c.h.b16 %v2467
        %v3731 = vunpack.c.l.b16 %v2468
        %v3732 = vunpack.c.h.b16 %v2468
        %v3733 = vunpack.c.l.b16 %v2469
        %v3734 = vunpack.c.h.b16 %v2469
        %v3735 = vunpack.c.l.b16 %v2470
        %v3736 = vunpack.c.h.b16 %v2470
        %v3737 = vunpack.c.l.b16 %v2471
        %v3738 = vunpack.c.h.b16 %v2471
        %v3739 = vunpack.c.l.b16 %v2472
        %v3740 = vunpack.c.h.b16 %v2472
        %v3741 = vunpack.c.l.b16 %v2473
        %v3742 = vunpack.c.h.b16 %v2473
        %v3743 = vunpack.c.l.b16 %v2474
        %v3744 = vunpack.c.h.b16 %v2474
        %v3745 = vunpack.c.l.b16 %v2475
        %v3746 = vunpack.c.h.b16 %v2475
        %v3747 = vunpack.c.l.b16 %v2476
        %v3748 = vunpack.c.h.b16 %v2476
        %v3749 = vunpack.c.l.b16 %v2477
        %v3750 = vunpack.c.h.b16 %v2477
        %v3751 = vunpack.c.l.b16 %v2478
        %v3752 = vunpack.c.h.b16 %v2478
        %v3753 = vunpack.c.l.b16 %v2479
        %v3754 = vunpack.c.h.b16 %v2479
        %v3755 = vunpack.c.l.b16 %v2480
        %v3756 = vunpack.c.h.b16 %v2480
        %v3757 = vunpack.c.l.b16 %v2481
        %v3758 = vunpack.c.h.b16 %v2481
        %v3759 = vunpack.c.l.b16 %v2482
        %v3760 = vunpack.c.h.b16 %v2482
        %v3761 = vunpack.c.l.b16 %v2483
        %v3762 = vunpack.c.h.b16 %v2483
        %v3763 = vunpack.c.l.b16 %v2484
        %v3764 = vunpack.c.h.b16 %v2484
        %v3765 = vunpack.c.l.b16 %v2485
        %v3766 = vunpack.c.h.b16 %v2485
        %v3767 = vunpack.c.l.b16 %v2486
        %v3768 = vunpack.c.h.b16 %v2486
        %v3769 = vunpack.c.l.b16 %v2487
        %v3770 = vunpack.c.h.b16 %v2487
        %v3771 = vunpack.c.l.b16 %v2488
        %v3772 = vunpack.c.h.b16 %v2488
        %v3773 = vunpack.c.l.b16 %v2489
        %v3774 = vunpack.c.h.b16 %v2489
        %v3775 = vunpack.c.l.b16 %v2490
        %v3776 = vunpack.c.h.b16 %v2490
        %v3777 = vunpack.c.l.b16 %v2491
        %v3778 = vunpack.c.h.b16 %v2491
        %v3779 = vunpack.c.l.b16 %v2492
        %v3780 = vunpack.c.h.b16 %v2492
        %v3781 = vunpack.c.l.b16 %v2493
        %v3782 = vunpack.c.h.b16 %v2493
        %v3783 = vunpack.c.l.b16 %v2494
        %v3784 = vunpack.c.h.b16 %v2494
        %v3785 = vunpack.c.l.b16 %v2495
        %v3786 = vunpack.c.h.b16 %v2495
        %v3787 = vunpack.c.l.b16 %v2496
        %v3788 = vunpack.c.h.b16 %v2496
        %v3789 = vunpack.c.l.b16 %v2497
        %v3790 = vunpack.c.h.b16 %v2497
        %v3791 = vunpack.c.l.b16 %v2498
        %v3792 = vunpack.c.h.b16 %v2498
        %v3793 = vunpack.c.l.b16 %v2499
        %v3794 = vunpack.c.h.b16 %v2499
        %v3795 = vunpack.c.l.b16 %v2500
        %v3796 = vunpack.c.h.b16 %v2500
        %v3797 = vunpack.c.l.b16 %v2501
        %v3798 = vunpack.c.h.b16 %v2501
        %v3799 = vunpack.c.l.b16 %v2502
        %v3800 = vunpack.c.h.b16 %v2502
        %v3801 = vunpack.c.l.b16 %v2503
        %v3802 = vunpack.c.h.b16 %v2503
        %v3803 = vunpack.c.l.b16 %v2504
        %v3804 = vunpack.c.h.b16 %v2504
        %v3805 = vunpack.c.l.b16 %v2505
        %v3806 = vunpack.c.h.b16 %v2505
        %v3807 = vunpack.c.l.b16 %v2506
        %v3808 = vunpack.c.h.b16 %v2506
        %v3809 = vunpack.c.l.b16 %v2507
        %v3810 = vunpack.c.h.b16 %v2507
        %v3811 = vunpack.c.l.b16 %v2508
        %v3812 = vunpack.c.h.b16 %v2508
        %v3813 = vunpack.c.l.b16 %v2509
        %v3814 = vunpack.c.h.b16 %v2509
        %v3815 = vunpack.c.l.b16 %v2510
        %v3816 = vunpack.c.h.b16 %v2510
        %v3817 = vunpack.c.l.b16 %v2511
        %v3818 = vunpack.c.h.b16 %v2511
        %v3819 = vunpack.c.l.b16 %v2512
        %v3820 = vunpack.c.h.b16 %v2512
        %v3821 = vunpack.c.l.b16 %v2513
        %v3822 = vunpack.c.h.b16 %v2513
        %v3823 = vunpack.c.l.b16 %v2514
        %v3824 = vunpack.c.h.b16 %v2514
        %v3825 = vunpack.c.l.b16 %v2515
        %v3826 = vunpack.c.h.b16 %v2515
        %v3827 = vunpack.c.l.b16 %v2516
        %v3828 = vunpack.c.h.b16 %v2516
        %v3829 = vunpack.c.l.b16 %v2517
        %v3830 = vunpack.c.h.b16 %v2517
        %v3831 = vunpack.c.l.b16 %v2518
        %v3832 = vunpack.c.h.b16 %v2518
        %v3833 = vunpack.c.l.b16 %v2519
        %v3834 = vunpack.c.h.b16 %v2519
        %v3835 = vunpack.c.l.b16 %v2520
        %v3836 = vunpack.c.h.b16 %v2520
        %v3837 = vunpack.c.l.b16 %v2521
        %v3838 = vunpack.c.h.b16 %v2521
        %v3839 = vunpack.c.l.b16 %v2522
        %v3840 = vunpack.c.h.b16 %v2522
        %v3841 = vunpack.c.l.b16 %v2523
        %v3842 = vunpack.c.h.b16 %v2523
        %v3843 = vunpack.c.l.b16 %v2524
        %v3844 = vunpack.c.h.b16 %v2524
        %v3845 = vunpack.c.l.b16 %v2525
        %v3846 = vunpack.c.h.b16 %v2525
        %v3847 = vunpack.c.l.b16 %v2526
        %v3848 = vunpack.c.h.b16 %v2526
        %v3849 = vunpack.c.l.b16 %v2527
        %v3850 = vunpack.c.h.b16 %v2527
        %v3851 = vunpack.c.l.b16 %v2528
        %v3852 = vunpack.c.h.b16 %v2528
        %v3853 = vunpack.c.l.b16 %v2529
        %v3854 = vunpack.c.h.b16 %v2529
        %v3855 = vunpack.c.l.b16 %v2530
        %v3856 = vunpack.c.h.b16 %v2530
        %v3857 = vunpack.c.l.b16 %v2531
        %v3858 = vunpack.c.h.b16 %v2531
        %v3859 = vunpack.c.l.b16 %v2532
        %v3860 = vunpack.c.h.b16 %v2532
        %v3861 = vunpack.c.l.b16 %v2533
        %v3862 = vunpack.c.h.b16 %v2533
        %v3863 = vunpack.c.l.b16 %v2534
        %v3864 = vunpack.c.h.b16 %v2534
        %v3865 = vunpack.c.l.b16 %v2535
        %v3866 = vunpack.c.h.b16 %v2535
        %v3867 = vunpack.c.l.b16 %v2536
        %v3868 = vunpack.c.h.b16 %v2536
        %v3869 = vunpack.c.l.b16 %v2537
        %v3870 = vunpack.c.h.b16 %v2537
        %v3871 = vunpack.c.l.b16 %v2538
        %v3872 = vunpack.c.h.b16 %v2538
        %v3873 = vunpack.c.l.b16 %v2539
        %v3874 = vunpack.c.h.b16 %v2539
        %v3875 = vunpack.c.l.b16 %v2540
        %v3876 = vunpack.c.h.b16 %v2540
        %v3877 = vunpack.c.l.b16 %v2541
        %v3878 = vunpack.c.h.b16 %v2541
        %v3879 = vunpack.c.l.b16 %v2542
        %v3880 = vunpack.c.h.b16 %v2542
        %v3881 = vunpack.c.l.b16 %v2543
        %v3882 = vunpack.c.h.b16 %v2543
        %v3883 = vunpack.c.l.b16 %v2544
        %v3884 = vunpack.c.h.b16 %v2544
        %v3885 = vunpack.c.l.b16 %v2545
        %v3886 = vunpack.c.h.b16 %v2545
        %v3887 = vunpack.c.l.b16 %v2546
        %v3888 = vunpack.c.h.b16 %v2546
        %v3889 = vunpack.c.l.b16 %v2547
        %v3890 = vunpack.c.h.b16 %v2547
        %v3891 = vunpack.c.l.b16 %v2548
        %v3892 = vunpack.c.h.b16 %v2548
        %v3893 = vunpack.c.l.b16 %v2549
        %v3894 = vunpack.c.h.b16 %v2549
        %v3895 = vunpack.c.l.b16 %v2550
        %v3896 = vunpack.c.h.b16 %v2550
        %v3897 = vunpack.c.l.b16 %v2551
        %v3898 = vunpack.c.h.b16 %v2551
        %v3899 = vunpack.c.l.b16 %v2552
        %v3900 = vunpack.c.h.b16 %v2552
        %v3901 = vunpack.c.l.b16 %v2553
        %v3902 = vunpack.c.h.b16 %v2553
        %v3903 = vunpack.c.l.b16 %v2554
        %v3904 = vunpack.c.h.b16 %v2554
        %v3905 = vunpack.c.l.b16 %v2555
        %v3906 = vunpack.c.h.b16 %v2555
        %v3907 = vunpack.c.l.b16 %v2556
        %v3908 = vunpack.c.h.b16 %v2556
        %v3909 = vunpack.c.l.b16 %v2557
        %v3910 = vunpack.c.h.b16 %v2557
        %v3911 = vunpack.c.l.b16 %v2558
        %v3912 = vunpack.c.h.b16 %v2558
        %v3913 = vunpack.c.l.b16 %v2559
        %v3914 = vunpack.c.h.b16 %v2559
        %v3915 = vunpack.c.l.b16 %v2560
        %v3916 = vunpack.c.h.b16 %v2560
        %v3917 = vunpack.c.l.b16 %v2561
        %v3918 = vunpack.c.h.b16 %v2561
        %v3919 = vunpack.c.l.b16 %v2562
        %v3920 = vunpack.c.h.b16 %v2562
        %v3921 = vunpack.c.l.b16 %v2563
        %v3922 = vunpack.c.h.b16 %v2563
        %v3923 = vunpack.c.l.b16 %v2564
        %v3924 = vunpack.c.h.b16 %v2564
        %v3925 = vunpack.c.l.b16 %v2565
        %v3926 = vunpack.c.h.b16 %v2565
        %v3927 = vunpack.c.l.b16 %v2566
        %v3928 = vunpack.c.h.b16 %v2566
        %v3929 = vunpack.c.l.b16 %v2567
        %v3930 = vunpack.c.h.b16 %v2567
        %v3931 = vunpack.c.l.b16 %v2568
        %v3932 = vunpack.c.h.b16 %v2568
        %v3933 = vunpack.c.l.b16 %v2569
        %v3934 = vunpack.c.h.b16 %v2569
        %v3935 = vunpack.c.l.b16 %v2570
        %v3936 = vunpack.c.h.b16 %v2570
        %v3937 = vunpack.c.l.b16 %v2571
        %v3938 = vunpack.c.h.b16 %v2571
        %v3939 = vunpack.c.l.b16 %v2572
        %v3940 = vunpack.c.h.b16 %v2572
        %v3941 = vunpack.c.l.b16 %v2573
        %v3942 = vunpack.c.h.b16 %v2573
        %v3943 = vunpack.c.l.b16 %v2574
        %v3944 = vunpack.c.h.b16 %v2574
        %v3945 = vunpack.c.l.b16 %v2575
        %v3946 = vunpack.c.h.b16 %v2575
        %v3947 = vunpack.c.l.b16 %v2576
        %v3948 = vunpack.c.h.b16 %v2576
        %v3949 = vunpack.c.l.b16 %v2577
        %v3950 = vunpack.c.h.b16 %v2577
        %v3951 = vunpack.c.l.b16 %v2578
        %v3952 = vunpack.c.h.b16 %v2578
        %v3953 = vunpack.c.l.b16 %v2579
        %v3954 = vunpack.c.h.b16 %v2579
        %v3955 = vunpack.c.l.b16 %v2580
        %v3956 = vunpack.c.h.b16 %v2580
        %v3957 = vunpack.c.l.b16 %v2581
        %v3958 = vunpack.c.h.b16 %v2581
        %v3959 = vunpack.c.l.b16 %v2582
        %v3960 = vunpack.c.h.b16 %v2582
        %v3961 = vunpack.c.l.b16 %v2583
        %v3962 = vunpack.c.h.b16 %v2583
        %v3963 = vunpack.c.l.b16 %v2584
        %v3964 = vunpack.c.h.b16 %v2584
        %v3965 = vunpack.c.l.b16 %v2585
        %v3966 = vunpack.c.h.b16 %v2585
        %v3967 = vunpack.c.l.b16 %v2586
        %v3968 = vunpack.c.h.b16 %v2586
        %v3969 = vunpack.c.l.b16 %v2587
        %v3970 = vunpack.c.h.b16 %v2587
        %v3971 = vunpack.c.l.b16 %v2588
        %v3972 = vunpack.c.h.b16 %v2588
        %v3973 = vunpack.c.l.b16 %v2589
        %v3974 = vunpack.c.h.b16 %v2589
        %v3975 = vunpack.c.l.b16 %v2590
        %v3976 = vunpack.c.h.b16 %v2590
        %v3977 = vunpack.c.l.b16 %v2591
        %v3978 = vunpack.c.h.b16 %v2591
        %v3979 = vunpack.c.l.b16 %v2592
        %v3980 = vunpack.c.h.b16 %v2592
        %v3981 = vunpack.c.l.b16 %v2593
        %v3982 = vunpack.c.h.b16 %v2593
        %v3983 = vunpack.c.l.b16 %v2594
        %v3984 = vunpack.c.h.b16 %v2594
        %v3985 = vunpack.c.l.b16 %v2595
        %v3986 = vunpack.c.h.b16 %v2595
        %v3987 = vunpack.c.l.b16 %v2596
        %v3988 = vunpack.c.h.b16 %v2596
        %v3989 = vunpack.c.l.b16 %v2597
        %v3990 = vunpack.c.h.b16 %v2597
        %v3991 = vunpack.c.l.b16 %v2598
        %v3992 = vunpack.c.h.b16 %v2598
        %v3993 = vunpack.c.l.b16 %v2599
        %v3994 = vunpack.c.h.b16 %v2599
        %v3995 = vunpack.c.l.b16 %v2600
        %v3996 = vunpack.c.h.b16 %v2600
        %v3997 = vunpack.c.l.b16 %v2601
        %v3998 = vunpack.c.h.b16 %v2601
        %v3999 = vunpack.c.l.b16 %v2602
        %v4000 = vunpack.c.h.b16 %v2602
        %v4001 = vunpack.c.l.b16 %v2603
        %v4002 = vunpack.c.h.b16 %v2603
        %v4003 = vunpack.c.l.b16 %v2604
        %v4004 = vunpack.c.h.b16 %v2604
        %v4005 = vunpack.c.l.b16 %v2605
        %v4006 = vunpack.c.h.b16 %v2605
        %v4007 = vunpack.c.l.b16 %v2606
        %v4008 = vunpack.c.h.b16 %v2606
        %v4009 = vunpack.c.l.b16 %v2607
        %v4010 = vunpack.c.h.b16 %v2607
        %v4011 = vunpack.c.l.b16 %v2608
        %v4012 = vunpack.c.h.b16 %v2608
        %v4013 = vunpack.c.l.b16 %v2609
        %v4014 = vunpack.c.h.b16 %v2609
        %v4015 = vunpack.c.l.b16 %v2610
        %v4016 = vunpack.c.h.b16 %v2610
        %v4017 = vunpack.c.l.b16 %v2611
        %v4018 = vunpack.c.h.b16 %v2611
        %v4019 = vunpack.c.l.b16 %v2612
        %v4020 = vunpack.c.h.b16 %v2612
        %v4021 = vunpack.c.l.b16 %v2613
        %v4022 = vunpack.c.h.b16 %v2613
        %v4023 = vunpack.c.l.b16 %v2614
        %v4024 = vunpack.c.h.b16 %v2614
        %v4025 = vunpack.c.l.b16 %v2615
        %v4026 = vunpack.c.h.b16 %v2615
        %v4027 = vunpack.c.l.b16 %v2616
        %v4028 = vunpack.c.h.b16 %v2616
        %v4029 = vunpack.c.l.b16 %v2617
        %v4030 = vunpack.c.h.b16 %v2617
        %v4031 = vunpack.c.l.b16 %v2618
        %v4032 = vunpack.c.h.b16 %v2618
        %v4033 = vunpack.c.l.b16 %v2619
        %v4034 = vunpack.c.h.b16 %v2619
        %v4035 = vunpack.c.l.b16 %v2620
        %v4036 = vunpack.c.h.b16 %v2620
        %v4037 = vunpack.c.l.b16 %v2621
        %v4038 = vunpack.c.h.b16 %v2621
        %v4039 = vunpack.c.l.b16 %v2622
        %v4040 = vunpack.c.h.b16 %v2622
        %v4041 = vunpack.c.l.b16 %v2623
        %v4042 = vunpack.c.h.b16 %v2623
        %v4043 = vunpack.c.l.b16 %v2624
        %v4044 = vunpack.c.h.b16 %v2624
        %v4045 = vunpack.c.l.b16 %v2625
        %v4046 = vunpack.c.h.b16 %v2625
        %v4047 = vunpack.c.l.b16 %v2626
        %v4048 = vunpack.c.h.b16 %v2626
        %v4049 = vunpack.c.l.b16 %v2627
        %v4050 = vunpack.c.h.b16 %v2627
        %v4051 = vunpack.c.l.b16 %v2628
        %v4052 = vunpack.c.h.b16 %v2628
        %v4053 = vunpack.c.l.b16 %v2629
        %v4054 = vunpack.c.h.b16 %v2629
        %v4055 = vunpack.c.l.b16 %v2630
        %v4056 = vunpack.c.h.b16 %v2630
        %v4057 = vunpack.c.l.b16 %v2631
        %v4058 = vunpack.c.h.b16 %v2631
        %v4059 = vunpack.c.l.b16 %v2632
        %v4060 = vunpack.c.h.b16 %v2632
        %v4061 = vunpack.c.l.b16 %v2633
        %v4062 = vunpack.c.h.b16 %v2633
        %v4063 = vunpack.c.l.b16 %v2634
        %v4064 = vunpack.c.h.b16 %v2634
        %v4065 = vunpack.c.l.b16 %v2635
        %v4066 = vunpack.c.h.b16 %v2635
        %v4067 = vunpack.c.l.b16 %v2636
        %v4068 = vunpack.c.h.b16 %v2636
        %v4069 = vunpack.c.l.b16 %v2637
        %v4070 = vunpack.c.h.b16 %v2637
        %v4071 = vunpack.c.l.b16 %v2638
        %v4072 = vunpack.c.h.b16 %v2638
        %v4073 = vunpack.c.l.b16 %v2639
        %v4074 = vunpack.c.h.b16 %v2639
        %v4075 = vunpack.c.l.b16 %v2640
        %v4076 = vunpack.c.h.b16 %v2640
        %v4077 = vunpack.c.l.b16 %v2641
        %v4078 = vunpack.c.h.b16 %v2641
        %v4079 = vunpack.c.l.b16 %v2642
        %v4080 = vunpack.c.h.b16 %v2642
        %v4081 = vunpack.c.l.b16 %v2643
        %v4082 = vunpack.c.h.b16 %v2643
        %v4083 = vunpack.c.l.b16 %v2644
        %v4084 = vunpack.c.h.b16 %v2644
        %v4085 = vunpack.c.l.b16 %v2645
        %v4086 = vunpack.c.h.b16 %v2645
        %v4087 = vunpack.c.l.b16 %v2646
        %v4088 = vunpack.c.h.b16 %v2646
        %v4089 = vunpack.c.l.b16 %v2647
        %v4090 = vunpack.c.h.b16 %v2647
        %v4091 = vunpack.c.l.b16 %v2648
        %v4092 = vunpack.c.h.b16 %v2648
        %v4093 = vunpack.c.l.b16 %v2649
        %v4094 = vunpack.c.h.b16 %v2649
        %v4095 = vunpack.c.l.b16 %v2650
        %v4096 = vunpack.c.h.b16 %v2650
        %v4097 = vunpack.c.l.b16 %v2651
        %v4098 = vunpack.c.h.b16 %v2651
        %v4099 = vunpack.c.l.b16 %v2652
        %v4100 = vunpack.c.h.b16 %v2652
        %v4101 = vunpack.c.l.b16 %v2653
        %v4102 = vunpack.c.h.b16 %v2653
        %v4103 = vunpack.c.l.b16 %v2654
        %v4104 = vunpack.c.h.b16 %v2654
        %v4105 = vunpack.c.l.b16 %v2655
        %v4106 = vunpack.c.h.b16 %v2655
        %v4107 = vunpack.c.l.b16 %v2656
        %v4108 = vunpack.c.h.b16 %v2656
        %v4109 = vunpack.c.l.b16 %v2657
        %v4110 = vunpack.c.h.b16 %v2657
        %v4111 = vunpack.c.l.b16 %v2658
        %v4112 = vunpack.c.h.b16 %v2658
        %v4113 = vunpack.c.l.b16 %v2659
        %v4114 = vunpack.c.h.b16 %v2659
        %v4115 = vunpack.c.l.b16 %v2660
        %v4116 = vunpack.c.h.b16 %v2660
        %v4117 = vunpack.c.l.b16 %v2661
        %v4118 = vunpack.c.h.b16 %v2661
        %v4119 = vunpack.c.l.b16 %v2662
        %v4120 = vunpack.c.h.b16 %v2662
        %v4121 = vunpack.c.l.b16 %v2663
        %v4122 = vunpack.c.h.b16 %v2663
        %v4123 = vunpack.c.l.b16 %v2664
        %v4124 = vunpack.c.h.b16 %v2664
        %v4125 = vunpack.c.l.b16 %v2665
        %v4126 = vunpack.c.h.b16 %v2665
        %v4127 = vunpack.c.l.b16 %v2666
        %v4128 = vunpack.c.h.b16 %v2666
        %v4129 = vunpack.c.l.b16 %v2667
        %v4130 = vunpack.c.h.b16 %v2667
        %v4131 = vunpack.c.l.b16 %v2668
        %v4132 = vunpack.c.h.b16 %v2668
        %v4133 = vunpack.c.l.b16 %v2669
        %v4134 = vunpack.c.h.b16 %v2669
        %v4135 = vunpack.c.l.b16 %v2670
        %v4136 = vunpack.c.h.b16 %v2670
        %v4137 = vunpack.c.l.b16 %v2671
        %v4138 = vunpack.c.h.b16 %v2671
        %v4139 = vunpack.c.l.b16 %v2672
        %v4140 = vunpack.c.h.b16 %v2672
        %v4141 = vunpack.c.l.b16 %v2673
        %v4142 = vunpack.c.h.b16 %v2673
        %v4143 = vunpack.c.l.b16 %v2674
        %v4144 = vunpack.c.h.b16 %v2674
        %v4145 = vunpack.c.l.b16 %v2675
        %v4146 = vunpack.c.h.b16 %v2675
        %v4147 = vunpack.c.l.b16 %v2676
        %v4148 = vunpack.c.h.b16 %v2676
        %v4149 = vunpack.c.l.b16 %v2677
        %v4150 = vunpack.c.h.b16 %v2677
        %v4151 = vunpack.c.l.b16 %v2678
        %v4152 = vunpack.c.h.b16 %v2678
        %v4153 = vunpack.c.l.b16 %v2679
        %v4154 = vunpack.c.h.b16 %v2679
        %v4155 = vunpack.c.l.b16 %v2680
        %v4156 = vunpack.c.h.b16 %v2680
        %v4157 = vunpack.c.l.b16 %v2681
        %v4158 = vunpack.c.h.b16 %v2681
        %v4159 = vunpack.c.l.b16 %v2682
        %v4160 = vunpack.c.h.b16 %v2682
        %v4161 = vunpack.c.l.b16 %v2683
        %v4162 = vunpack.c.h.b16 %v2683
        %v4163 = vunpack.c.l.b16 %v2684
        %v4164 = vunpack.c.h.b16 %v2684
        %v4165 = vunpack.c.l.b16 %v2685
        %v4166 = vunpack.c.h.b16 %v2685
        %v4167 = vunpack.c.l.b16 %v2686
        %v4168 = vunpack.c.h.b16 %v2686
        %v4169 = vunpack.c.l.b16 %v2687
        %v4170 = vunpack.c.h.b16 %v2687
        %v4171 = vunpack.c.l.b16 %v2688
        %v4172 = vunpack.c.h.b16 %v2688
        %v4173 = vunpack.c.l.b16 %v2689
        %v4174 = vunpack.c.h.b16 %v2689
        %v4175 = vunpack.c.l.b16 %v2690
        %v4176 = vunpack.c.h.b16 %v2690
        %v4177 = vunpack.c.l.b16 %v2691
        %v4178 = vunpack.c.h.b16 %v2691
        %v4179 = vunpack.c.l.b16 %v2692
        %v4180 = vunpack.c.h.b16 %v2692
        %v4181 = vunpack.c.l.b16 %v2693
        %v4182 = vunpack.c.h.b16 %v2693
        %v4183 = vunpack.c.l.b16 %v2694
        %v4184 = vunpack.c.h.b16 %v2694
        %v4185 = vunpack.c.l.b16 %v2695
        %v4186 = vunpack.c.h.b16 %v2695
        %v4187 = vunpack.c.l.b16 %v2696
        %v4188 = vunpack.c.h.b16 %v2696
        %v4189 = vunpack.c.l.b16 %v2697
        %v4190 = vunpack.c.h.b16 %v2697
        %v4191 = vunpack.c.l.b16 %v2698
        %v4192 = vunpack.c.h.b16 %v2698
        %v4193 = vunpack.c.l.b16 %v2699
        %v4194 = vunpack.c.h.b16 %v2699
        %v4195 = vunpack.c.l.b16 %v2700
        %v4196 = vunpack.c.h.b16 %v2700
        %v4197 = vunpack.c.l.b16 %v2701
        %v4198 = vunpack.c.h.b16 %v2701
        %v4199 = vunpack.c.l.b16 %v2702
        %v4200 = vunpack.c.h.b16 %v2702
        %v4201 = vunpack.c.l.b16 %v2703
        %v4202 = vunpack.c.h.b16 %v2703
        %v4203 = vunpack.c.l.b16 %v2704
        %v4204 = vunpack.c.h.b16 %v2704
        %v4205 = vunpack.c.l.b16 %v2705
        %v4206 = vunpack.c.h.b16 %v2705
        %v4207 = vunpack.c.l.b16 %v2706
        %v4208 = vunpack.c.h.b16 %v2706
        %v4209 = vunpack.c.l.b16 %v2707
        %v4210 = vunpack.c.h.b16 %v2707
        %v4211 = vunpack.c.l.b16 %v2708
        %v4212 = vunpack.c.h.b16 %v2708
        %v4213 = vunpack.c.l.b16 %v2709
        %v4214 = vunpack.c.h.b16 %v2709
        %v4215 = vunpack.c.l.b16 %v2710
        %v4216 = vunpack.c.h.b16 %v2710
        %v4217 = vunpack.c.l.b16 %v2711
        %v4218 = vunpack.c.h.b16 %v2711
        %v4219 = vunpack.c.l.b16 %v2712
        %v4220 = vunpack.c.h.b16 %v2712
        %v4221 = vunpack.c.l.b16 %v2713
        %v4222 = vunpack.c.h.b16 %v2713
        %v4223 = vunpack.c.l.b16 %v2714
        %v4224 = vunpack.c.h.b16 %v2714
        %v4225 = vunpack.c.l.b16 %v2715
        %v4226 = vunpack.c.h.b16 %v2715
        %v4227 = vunpack.c.l.b16 %v2716
        %v4228 = vunpack.c.h.b16 %v2716
        %v4229 = vunpack.c.l.b16 %v2717
        %v4230 = vunpack.c.h.b16 %v2717
        %v4231 = vunpack.c.l.b16 %v2718
        %v4232 = vunpack.c.h.b16 %v2718
        %v4233 = vunpack.c.l.b16 %v2719
        %v4234 = vunpack.c.h.b16 %v2719
        %v4235 = vunpack.c.l.b16 %v2720
        %v4236 = vunpack.c.h.b16 %v2720
        %v4237 = vunpack.c.l.b16 %v2721
        %v4238 = vunpack.c.h.b16 %v2721
        %v4239 = vunpack.c.l.b16 %v2722
        %v4240 = vunpack.c.h.b16 %v2722
        %v4241 = vunpack.c.l.b16 %v2723
        %v4242 = vunpack.c.h.b16 %v2723
        %v4243 = vunpack.c.l.b16 %v2724
        %v4244 = vunpack.c.h.b16 %v2724
        %v4245 = vunpack.c.l.b16 %v2725
        %v4246 = vunpack.c.h.b16 %v2725
        %v4247 = vunpack.c.l.b16 %v2726
        %v4248 = vunpack.c.h.b16 %v2726
        %v4249 = vunpack.c.l.b16 %v2727
        %v4250 = vunpack.c.h.b16 %v2727
        %v4251 = vunpack.c.l.b16 %v2728
        %v4252 = vunpack.c.h.b16 %v2728
        %v4253 = vunpack.c.l.b16 %v2729
        %v4254 = vunpack.c.h.b16 %v2729
        %v4255 = vunpack.c.l.b16 %v2730
        %v4256 = vunpack.c.h.b16 %v2730
        %v4257 = vunpack.c.l.b16 %v2731
        %v4258 = vunpack.c.h.b16 %v2731
        %v4259 = vunpack.c.l.b16 %v2732
        %v4260 = vunpack.c.h.b16 %v2732
        %v4261 = vunpack.c.l.b16 %v2733
        %v4262 = vunpack.c.h.b16 %v2733
        %v4263 = vunpack.c.l.b16 %v2734
        %v4264 = vunpack.c.h.b16 %v2734
        %v4265 = vunpack.c.l.b16 %v2735
        %v4266 = vunpack.c.h.b16 %v2735
        %v4267 = vunpack.c.l.b16 %v2736
        %v4268 = vunpack.c.h.b16 %v2736
        %v4269 = vunpack.c.l.b16 %v2737
        %v4270 = vunpack.c.h.b16 %v2737
        %v4271 = vunpack.c.l.b16 %v2738
        %v4272 = vunpack.c.h.b16 %v2738
        %v4273 = vunpack.c.l.b16 %v2739
        %v4274 = vunpack.c.h.b16 %v2739
        %v4275 = vunpack.c.l.b16 %v2740
        %v4276 = vunpack.c.h.b16 %v2740
        %v4277 = vunpack.c.l.b16 %v2741
        %v4278 = vunpack.c.h.b16 %v2741
        %v4279 = vunpack.c.l.b16 %v2742
        %v4280 = vunpack.c.h.b16 %v2742
        %v4281 = vunpack.c.l.b16 %v2743
        %v4282 = vunpack.c.h.b16 %v2743
        %v4283 = vunpack.c.l.b16 %v2744
        %v4284 = vunpack.c.h.b16 %v2744
        %v4285 = vunpack.c.l.b16 %v2745
        %v4286 = vunpack.c.h.b16 %v2745
        %v4287 = vunpack.c.l.b16 %v2746
        %v4288 = vunpack.c.h.b16 %v2746
        %v4289 = vunpack.c.l.b16 %v2747
        %v4290 = vunpack.c.h.b16 %v2747
        %v4291 = vunpack.c.l.b16 %v2748
        %v4292 = vunpack.c.h.b16 %v2748
        %v4293 = vunpack.c.l.b16 %v2749
        %v4294 = vunpack.c.h.b16 %v2749
        %v4295 = vunpack.c.l.b16 %v2750
        %v4296 = vunpack.c.h.b16 %v2750
        %v4297 = vunpack.c.l.b16 %v2751
        %v4298 = vunpack.c.h.b16 %v2751
        %v4299 = vunpack.c.l.b16 %v2752
        %v4300 = vunpack.c.h.b16 %v2752
        %v4301 = vunpack.c.l.b16 %v2753
        %v4302 = vunpack.c.h.b16 %v2753
        %v4303 = vunpack.c.l.b16 %v2754
        %v4304 = vunpack.c.h.b16 %v2754
        %v4305 = vunpack.c.l.b16 %v2755
        %v4306 = vunpack.c.h.b16 %v2755
        %v4307 = vunpack.c.l.b16 %v2756
        %v4308 = vunpack.c.h.b16 %v2756
        %v4309 = vunpack.c.l.b16 %v2757
        %v4310 = vunpack.c.h.b16 %v2757
        %v4311 = vunpack.c.l.b16 %v2758
        %v4312 = vunpack.c.h.b16 %v2758
        %v4313 = vunpack.c.l.b16 %v2759
        %v4314 = vunpack.c.h.b16 %v2759
        %v4315 = vunpack.c.l.b16 %v2760
        %v4316 = vunpack.c.h.b16 %v2760
        %v4317 = vunpack.c.l.b16 %v2761
        %v4318 = vunpack.c.h.b16 %v2761
        %v4319 = vunpack.c.l.b16 %v2762
        %v4320 = vunpack.c.h.b16 %v2762
        %v4321 = vunpack.c.l.b16 %v2763
        %v4322 = vunpack.c.h.b16 %v2763
        %v4323 = vunpack.c.l.b16 %v2764
        %v4324 = vunpack.c.h.b16 %v2764
        %v4325 = vunpack.c.l.b16 %v2765
        %v4326 = vunpack.c.h.b16 %v2765
        %v4327 = vunpack.c.l.b16 %v2766
        %v4328 = vunpack.c.h.b16 %v2766
        %v4329 = vunpack.c.l.b16 %v2767
        %v4330 = vunpack.c.h.b16 %v2767
        %v4331 = vunpack.c.l.b16 %v2768
        %v4332 = vunpack.c.h.b16 %v2768
        %v4333 = vunpack.c.l.b16 %v2769
        %v4334 = vunpack.c.h.b16 %v2769
        %v4335 = vunpack.c.l.b16 %v2770
        %v4336 = vunpack.c.h.b16 %v2770
        %v4337 = vunpack.c.l.b16 %v2771
        %v4338 = vunpack.c.h.b16 %v2771
        %v4339 = vunpack.c.l.b16 %v2772
        %v4340 = vunpack.c.h.b16 %v2772
        %v4341 = vunpack.c.l.b16 %v2773
        %v4342 = vunpack.c.h.b16 %v2773
        %v4343 = vunpack.c.l.b16 %v2774
        %v4344 = vunpack.c.h.b16 %v2774
        %v4345 = vunpack.c.l.b16 %v2775
        %v4346 = vunpack.c.h.b16 %v2775
        %v4347 = vunpack.c.l.b16 %v2776
        %v4348 = vunpack.c.h.b16 %v2776
        %v4349 = vunpack.c.l.b16 %v2777
        %v4350 = vunpack.c.h.b16 %v2777
        %v4351 = vunpack.c.l.b16 %v2778
        %v4352 = vunpack.c.h.b16 %v2778
        %v4353 = vunpack.c.l.b16 %v2779
        %v4354 = vunpack.c.h.b16 %v2779
        %v4355 = vunpack.c.l.b16 %v2780
        %v4356 = vunpack.c.h.b16 %v2780
        %v4357 = vunpack.c.l.b16 %v2781
        %v4358 = vunpack.c.h.b16 %v2781
        %v4359 = vunpack.c.l.b16 %v2782
        %v4360 = vunpack.c.h.b16 %v2782
        %v4361 = vunpack.c.l.b16 %v2783
        %v4362 = vunpack.c.h.b16 %v2783
        %v4363 = vunpack.c.l.b16 %v2784
        %v4364 = vunpack.c.h.b16 %v2784
        %v4365 = vunpack.c.l.b16 %v2785
        %v4366 = vunpack.c.h.b16 %v2785
        %v4367 = vunpack.c.l.b16 %v2786
        %v4368 = vunpack.c.h.b16 %v2786
        %v4369 = vunpack.c.l.b16 %v2787
        %v4370 = vunpack.c.h.b16 %v2787
        %v4371 = vunpack.c.l.b16 %v2788
        %v4372 = vunpack.c.h.b16 %v2788
        %v4373 = vunpack.c.l.b16 %v2789
        %v4374 = vunpack.c.h.b16 %v2789
        %v4375 = vunpack.c.l.b16 %v2790
        %v4376 = vunpack.c.h.b16 %v2790
        %v4377 = vunpack.c.l.b16 %v2791
        %v4378 = vunpack.c.h.b16 %v2791
        %v4379 = vunpack.c.l.b16 %v2792
        %v4380 = vunpack.c.h.b16 %v2792
        %v4381 = vunpack.c.l.b16 %v2793
        %v4382 = vunpack.c.h.b16 %v2793
        %v4383 = vunpack.c.l.b16 %v2794
        %v4384 = vunpack.c.h.b16 %v2794
        %v4385 = vunpack.c.l.b16 %v2795
        %v4386 = vunpack.c.h.b16 %v2795
        %v4387 = vunpack.c.l.b16 %v2796
        %v4388 = vunpack.c.h.b16 %v2796
        %v4389 = vunpack.c.l.b16 %v2797
        %v4390 = vunpack.c.h.b16 %v2797
        %v4391 = vunpack.c.l.b16 %v2798
        %v4392 = vunpack.c.h.b16 %v2798
        %v4393 = vunpack.c.l.b16 %v2799
        %v4394 = vunpack.c.h.b16 %v2799
        %v4395 = vunpack.c.l.b16 %v2800
        %v4396 = vunpack.c.h.b16 %v2800
        %v4397 = vunpack.c.l.b16 %v2801
        %v4398 = vunpack.c.h.b16 %v2801
        %v4399 = vunpack.c.l.b16 %v2802
        %v4400 = vunpack.c.h.b16 %v2802
        %v4401 = vunpack.c.l.b16 %v2803
        %v4402 = vunpack.c.h.b16 %v2803
        %v4403 = vunpack.c.l.b16 %v2804
        %v4404 = vunpack.c.h.b16 %v2804
        %v4405 = vunpack.c.l.b16 %v2805
        %v4406 = vunpack.c.h.b16 %v2805
        %v4407 = vunpack.c.l.b16 %v2806
        %v4408 = vunpack.c.h.b16 %v2806
        %v4409 = vunpack.c.l.b16 %v2807
        %v4410 = vunpack.c.h.b16 %v2807
        %v4411 = vunpack.c.l.b16 %v2808
        %v4412 = vunpack.c.h.b16 %v2808
        %v4413 = vunpack.c.l.b16 %v2809
        %v4414 = vunpack.c.h.b16 %v2809
        %v4415 = vunpack.c.l.b16 %v2810
        %v4416 = vunpack.c.h.b16 %v2810
        %v4417 = vunpack.c.l.b16 %v2811
        %v4418 = vunpack.c.h.b16 %v2811
        %v4419 = vunpack.c.l.b16 %v2812
        %v4420 = vunpack.c.h.b16 %v2812
        %v4421 = vunpack.c.l.b16 %v2813
        %v4422 = vunpack.c.h.b16 %v2813
        %v4423 = vunpack.c.l.b16 %v2814
        %v4424 = vunpack.c.h.b16 %v2814
        %v4425 = vunpack.c.l.b16 %v2815
        %v4426 = vunpack.c.h.b16 %v2815
        %v4427 = vunpack.c.l.b16 %v2816
        %v4428 = vunpack.c.h.b16 %v2816
        %v4429 = vunpack.c.l.b16 %v2817
        %v4430 = vunpack.c.h.b16 %v2817
        %v4431 = vunpack.c.l.b16 %v2818
        %v4432 = vunpack.c.h.b16 %v2818
        %v4433 = vunpack.c.l.b16 %v2819
        %v4434 = vunpack.c.h.b16 %v2819
        %v4435 = vunpack.c.l.b16 %v2820
        %v4436 = vunpack.c.h.b16 %v2820
        %v4437 = vunpack.c.l.b16 %v2821
        %v4438 = vunpack.c.h.b16 %v2821
        %v4439 = vunpack.c.l.b16 %v2822
        %v4440 = vunpack.c.h.b16 %v2822
        %v4441 = vunpack.c.l.b16 %v2823
        %v4442 = vunpack.c.h.b16 %v2823
        %v4443 = vunpack.c.l.b16 %v2824
        %v4444 = vunpack.c.h.b16 %v2824
        %v4445 = vunpack.c.l.b16 %v2825
        %v4446 = vunpack.c.h.b16 %v2825
        %v4447 = vunpack.c.l.b16 %v2826
        %v4448 = vunpack.c.h.b16 %v2826
        %v4449 = vunpack.c.l.b16 %v2827
        %v4450 = vunpack.c.h.b16 %v2827
        %v4451 = vunpack.c.l.b16 %v2828
        %v4452 = vunpack.c.h.b16 %v2828
        %v4453 = vunpack.c.l.b16 %v2829
        %v4454 = vunpack.c.h.b16 %v2829
        %v4455 = vunpack.c.l.b16 %v2830
        %v4456 = vunpack.c.h.b16 %v2830
        %v4457 = vunpack.c.l.b16 %v2831
        %v4458 = vunpack.c.h.b16 %v2831
        %v4459 = vunpack.c.l.b16 %v2832
        %v4460 = vunpack.c.h.b16 %v2832
        %v4461 = vunpack.c.l.b16 %v2833
        %v4462 = vunpack.c.h.b16 %v2833
        %v4463 = vunpack.c.l.b16 %v2834
        %v4464 = vunpack.c.h.b16 %v2834
        %v4465 = vunpack.c.l.b16 %v2835
        %v4466 = vunpack.c.h.b16 %v2835
        %v4467 = vunpack.c.l.b16 %v2836
        %v4468 = vunpack.c.h.b16 %v2836
        %v4469 = vunpack.c.l.b16 %v2837
        %v4470 = vunpack.c.h.b16 %v2837
        %v4471 = vunpack.c.l.b16 %v2838
        %v4472 = vunpack.c.h.b16 %v2838
        %v4473 = vunpack.c.l.b16 %v2839
        %v4474 = vunpack.c.h.b16 %v2839
        %v4475 = vunpack.c.l.b16 %v2840
        %v4476 = vunpack.c.h.b16 %v2840
        %v4477 = vunpack.c.l.b16 %v2841
        %v4478 = vunpack.c.h.b16 %v2841
        %v4479 = vunpack.c.l.b16 %v2842
        %v4480 = vunpack.c.h.b16 %v2842
        %v4481 = vunpack.c.l.b16 %v2843
        %v4482 = vunpack.c.h.b16 %v2843
        %v4483 = vunpack.c.l.b16 %v2844
        %v4484 = vunpack.c.h.b16 %v2844
        %v4485 = vunpack.c.l.b16 %v2845
        %v4486 = vunpack.c.h.b16 %v2845
        %v4487 = vunpack.c.l.b16 %v2846
        %v4488 = vunpack.c.h.b16 %v2846
        %v4489 = vunpack.c.l.b16 %v2847
        %v4490 = vunpack.c.h.b16 %v2847
        %v4491 = vunpack.c.l.b16 %v2848
        %v4492 = vunpack.c.h.b16 %v2848
        %v4493 = vunpack.c.l.b16 %v2849
        %v4494 = vunpack.c.h.b16 %v2849
        %v4495 = vunpack.c.l.b16 %v2850
        %v4496 = vunpack.c.h.b16 %v2850
        %v4497 = vunpack.c.l.b16 %v2851
        %v4498 = vunpack.c.h.b16 %v2851
        %v4499 = vunpack.c.l.b16 %v2852
        %v4500 = vunpack.c.h.b16 %v2852
        %v4501 = vunpack.c.l.b16 %v2853
        %v4502 = vunpack.c.h.b16 %v2853
        %v4503 = vunpack.c.l.b16 %v2854
        %v4504 = vunpack.c.h.b16 %v2854
        %v4505 = vunpack.c.l.b16 %v2855
        %v4506 = vunpack.c.h.b16 %v2855
        %v4507 = vunpack.c.l.b16 %v2856
        %v4508 = vunpack.c.h.b16 %v2856
        %v4509 = vunpack.c.l.b16 %v2857
        %v4510 = vunpack.c.h.b16 %v2857
        %v4511 = vunpack.c.l.b16 %v2858
        %v4512 = vunpack.c.h.b16 %v2858
        %v4513 = vunpack.c.l.b16 %v2859
        %v4514 = vunpack.c.h.b16 %v2859
        %v4515 = vunpack.c.l.b16 %v2860
        %v4516 = vunpack.c.h.b16 %v2860
        %v4517 = vunpack.c.l.b16 %v2861
        %v4518 = vunpack.c.h.b16 %v2861
        %v4519 = vunpack.c.l.b16 %v2862
        %v4520 = vunpack.c.h.b16 %v2862
        %v4521 = vunpack.c.l.b16 %v2863
        %v4522 = vunpack.c.h.b16 %v2863
        %v4523 = vunpack.c.l.b16 %v2864
        %v4524 = vunpack.c.h.b16 %v2864
        %v4525 = vunpack.c.l.b16 %v2865
        %v4526 = vunpack.c.h.b16 %v2865
        %v4527 = vunpack.c.l.b16 %v2866
        %v4528 = vunpack.c.h.b16 %v2866
        %v4529 = vunpack.c.l.b16 %v2867
        %v4530 = vunpack.c.h.b16 %v2867
        %v4531 = vunpack.c.l.b16 %v2868
        %v4532 = vunpack.c.h.b16 %v2868
        %v4533 = vunpack.c.l.b16 %v2869
        %v4534 = vunpack.c.h.b16 %v2869
        %v4535 = vunpack.c.l.b16 %v2870
        %v4536 = vunpack.c.h.b16 %v2870
        %v4537 = vunpack.c.l.b16 %v2871
        %v4538 = vunpack.c.h.b16 %v2871
        %v4539 = vunpack.c.l.b16 %v2872
        %v4540 = vunpack.c.h.b16 %v2872
        %v4541 = vunpack.c.l.b16 %v2873
        %v4542 = vunpack.c.h.b16 %v2873
        %v4543 = vunpack.c.l.b16 %v2874
        %v4544 = vunpack.c.h.b16 %v2874
        %v4545 = vunpack.c.l.b16 %v2875
        %v4546 = vunpack.c.h.b16 %v2875
        %v4547 = vunpack.c.l.b16 %v2876
        %v4548 = vunpack.c.h.b16 %v2876
        %v4549 = vunpack.c.l.b16 %v2877
        %v4550 = vunpack.c.h.b16 %v2877
        %v4551 = vunpack.c.l.b16 %v2878
        %v4552 = vunpack.c.h.b16 %v2878
        %v4553 = vunpack.c.l.b16 %v2879
        %v4554 = vunpack.c.h.b16 %v2879
        %v4555 = vunpack.c.l.b16 %v2880
        %v4556 = vunpack.c.h.b16 %v2880
        %v4557 = vunpack.c.l.b16 %v2881
        %v4558 = vunpack.c.h.b16 %v2881
        %v4559 = vunpack.c.l.b16 %v2882
        %v4560 = vunpack.c.h.b16 %v2882
        %v4561 = vunpack.c.l.b16 %v2883
        %v4562 = vunpack.c.h.b16 %v2883
        %v4563 = vunpack.c.l.b16 %v2884
        %v4564 = vunpack.c.h.b16 %v2884
        %v4565 = vunpack.c.l.b16 %v2885
        %v4566 = vunpack.c.h.b16 %v2885
        %v4567 = vunpack.c.l.b16 %v2886
        %v4568 = vunpack.c.h.b16 %v2886
        %v4569 = vunpack.c.l.b16 %v2887
        %v4570 = vunpack.c.h.b16 %v2887
        %v4571 = vunpack.c.l.b16 %v2888
        %v4572 = vunpack.c.h.b16 %v2888
        %v4573 = vunpack.c.l.b16 %v2889
        %v4574 = vunpack.c.h.b16 %v2889
        %v4575 = vunpack.c.l.b16 %v2890
        %v4576 = vunpack.c.h.b16 %v2890
        %v4577 = vunpack.c.l.b16 %v2891
        %v4578 = vunpack.c.h.b16 %v2891
        %v4579 = vunpack.c.l.b16 %v2892
        %v4580 = vunpack.c.h.b16 %v2892
        %v4581 = vunpack.c.l.b16 %v2893
        %v4582 = vunpack.c.h.b16 %v2893
        %v4583 = vunpack.c.l.b16 %v2894
        %v4584 = vunpack.c.h.b16 %v2894
        %v4585 = vunpack.c.l.b16 %v2895
        %v4586 = vunpack.c.h.b16 %v2895
        %v4587 = vunpack.c.l.b16 %v2896
        %v4588 = vunpack.c.h.b16 %v2896
        %v4589 = vunpack.c.l.b16 %v2897
        %v4590 = vunpack.c.h.b16 %v2897
        %v4591 = vunpack.c.l.b16 %v2898
        %v4592 = vunpack.c.h.b16 %v2898
        %v4593 = vunpack.c.l.b16 %v2899
        %v4594 = vunpack.c.h.b16 %v2899
        %v4595 = vunpack.c.l.b16 %v2900
        %v4596 = vunpack.c.h.b16 %v2900
        %v4597 = vunpack.c.l.b16 %v2901
        %v4598 = vunpack.c.h.b16 %v2901
        %v4599 = vunpack.c.l.b16 %v2902
        %v4600 = vunpack.c.h.b16 %v2902
        %v4601 = vunpack.c.l.b16 %v2903
        %v4602 = vunpack.c.h.b16 %v2903
        %v4603 = vunpack.c.l.b16 %v2904
        %v4604 = vunpack.c.h.b16 %v2904
        %v4605 = vunpack.c.l.b16 %v2905
        %v4606 = vunpack.c.h.b16 %v2905
        %v4607 = vunpack.c.l.b16 %v2906
        %v4608 = vunpack.c.h.b16 %v2906
        %v4609 = vunpack.c.l.b16 %v2907
        %v4610 = vunpack.c.h.b16 %v2907
        %v4611 = vunpack.c.l.b16 %v2908
        %v4612 = vunpack.c.h.b16 %v2908
        %v4613 = vunpack.c.l.b16 %v2909
        %v4614 = vunpack.c.h.b16 %v2909
        %v4615 = vunpack.c.l.b16 %v2910
        %v4616 = vunpack.c.h.b16 %v2910
        %v4617 = vunpack.c.l.b16 %v2911
        %v4618 = vunpack.c.h.b16 %v2911
        %v4619 = vunpack.c.l.b16 %v2912
        %v4620 = vunpack.c.h.b16 %v2912
        %v4621 = vunpack.c.l.b16 %v2913
        %v4622 = vunpack.c.h.b16 %v2913
        %v4623 = vunpack.c.l.b16 %v2914
        %v4624 = vunpack.c.h.b16 %v2914
        %v4625 = vunpack.c.l.b16 %v2915
        %v4626 = vunpack.c.h.b16 %v2915
        %v4627 = vunpack.c.l.b16 %v2916
        %v4628 = vunpack.c.h.b16 %v2916
        %v4629 = vunpack.c.l.b16 %v2917
        %v4630 = vunpack.c.h.b16 %v2917
        %v4631 = vunpack.c.l.b16 %v2918
        %v4632 = vunpack.c.h.b16 %v2918
        %v4633 = vunpack.c.l.b16 %v2919
        %v4634 = vunpack.c.h.b16 %v2919
        %v4635 = vunpack.c.l.b16 %v2920
        %v4636 = vunpack.c.h.b16 %v2920
        %v4637 = vunpack.c.l.b16 %v2921
        %v4638 = vunpack.c.h.b16 %v2921
        %v4639 = vunpack.c.l.b16 %v2922
        %v4640 = vunpack.c.h.b16 %v2922
        %v4641 = vunpack.c.l.b16 %v2923
        %v4642 = vunpack.c.h.b16 %v2923
        %v4643 = vunpack.c.l.b16 %v2924
        %v4644 = vunpack.c.h.b16 %v2924
        %v4645 = vunpack.c.l.b16 %v2925
        %v4646 = vunpack.c.h.b16 %v2925
        %v4647 = vunpack.c.l.b16 %v2926
        %v4648 = vunpack.c.h.b16 %v2926
        %v4649 = vunpack.c.l.b16 %v2927
        %v4650 = vunpack.c.h.b16 %v2927
        %v4651 = vunpack.c.l.b16 %v2928
        %v4652 = vunpack.c.h.b16 %v2928
        %v4653 = vunpack.c.l.b16 %v2929
        %v4654 = vunpack.c.h.b16 %v2929
        %v4655 = vunpack.c.l.b16 %v2930
        %v4656 = vunpack.c.h.b16 %v2930
        %v4657 = vunpack.c.l.b16 %v2931
        %v4658 = vunpack.c.h.b16 %v2931
        %v4659 = vunpack.c.l.b16 %v2932
        %v4660 = vunpack.c.h.b16 %v2932
        %v4661 = vpack.c.b16 %v3517, %v3509
        %v4662 = vpack.c.b16 %v3518, %v3510
        %v4663 = vpack.c.b16 %v3519, %v3511
        %v4664 = vpack.c.b16 %v3520, %v3512
        %v4665 = vpack.c.b16 %v3521, %v3513
        %v4666 = vpack.c.b16 %v3522, %v3514
        %v4667 = vpack.c.b16 %v3523, %v3515
        %v4668 = vpack.c.b16 %v3524, %v3516
        %v4669 = vpack.c.b16 %v3533, %v3525
        %v4670 = vpack.c.b16 %v3534, %v3526
        %v4671 = vpack.c.b16 %v3535, %v3527
        %v4672 = vpack.c.b16 %v3536, %v3528
        %v4673 = vpack.c.b16 %v3537, %v3529
        %v4674 = vpack.c.b16 %v3538, %v3530
        %v4675 = vpack.c.b16 %v3539, %v3531
        %v4676 = vpack.c.b16 %v3540, %v3532
        %v4677 = vpack.c.b16 %v3549, %v3541
        %v4678 = vpack.c.b16 %v3550, %v3542
        %v4679 = vpack.c.b16 %v3551, %v3543
        %v4680 = vpack.c.b16 %v3552, %v3544
        %v4681 = vpack.c.b16 %v3553, %v3545
        %v4682 = vpack.c.b16 %v3554, %v3546
        %v4683 = vpack.c.b16 %v3555, %v3547
        %v4684 = vpack.c.b16 %v3556, %v3548
        %v4685 = vpack.c.b16 %v3565, %v3557
        %v4686 = vpack.c.b16 %v3566, %v3558
        %v4687 = vpack.c.b16 %v3567, %v3559
        %v4688 = vpack.c.b16 %v3568, %v3560
        %v4689 = vpack.c.b16 %v3569, %v3561
        %v4690 = vpack.c.b16 %v3570, %v3562
        %v4691 = vpack.c.b16 %v3571, %v3563
        %v4692 = vpack.c.b16 %v3572, %v3564
        %v4693 = vpack.c.b16 %v3581, %v3573
        %v4694 = vpack.c.b16 %v3582, %v3574
        %v4695 = vpack.c.b16 %v3583, %v3575
        %v4696 = vpack.c.b16 %v3584, %v3576
        %v4697 = vpack.c.b16 %v3585, %v3577
        %v4698 = vpack.c.b16 %v3586, %v3578
        %v4699 = vpack.c.b16 %v3587, %v3579
        %v4700 = vpack.c.b16 %v3588, %v3580
        %v4701 = vpack.c.b16 %v3597, %v3589
        %v4702 = vpack.c.b16 %v3598, %v3590
        %v4703 = vpack.c.b16 %v3599, %v3591
        %v4704 = vpack.c.b16 %v3600, %v3592
        %v4705 = vpack.c.b16 %v3601, %v3593
        %v4706 = vpack.c.b16 %v3602, %v3594
        %v4707 = vpack.c.b16 %v3603, %v3595
        %v4708 = vpack.c.b16 %v3604, %v3596
        %v4709 = vpack.c.b16 %v3613, %v3605
        %v4710 = vpack.c.b16 %v3614, %v3606
        %v4711 = vpack.c.b16 %v3615, %v3607
        %v4712 = vpack.c.b16 %v3616, %v3608
        %v4713 = vpack.c.b16 %v3617, %v3609
        %v4714 = vpack.c.b16 %v3618, %v3610
        %v4715 = vpack.c.b16 %v3619, %v3611
        %v4716 = vpack.c.b16 %v3620, %v3612
        %v4717 = vpack.c.b16 %v3629, %v3621
        %v4718 = vpack.c.b16 %v3630, %v3622
        %v4719 = vpack.c.b16 %v3631, %v3623
        %v4720 = vpack.c.b16 %v3632, %v3624
        %v4721 = vpack.c.b16 %v3633, %v3625
        %v4722 = vpack.c.b16 %v3634, %v3626
        %v4723 = vpack.c.b16 %v3635, %v3627
        %v4724 = vpack.c.b16 %v3636, %v3628
        %v4725 = vpack.c.b16 %v3645, %v3637
        %v4726 = vpack.c.b16 %v3646, %v3638
        %v4727 = vpack.c.b16 %v3647, %v3639
        %v4728 = vpack.c.b16 %v3648, %v3640
        %v4729 = vpack.c.b16 %v3649, %v3641
        %v4730 = vpack.c.b16 %v3650, %v3642
        %v4731 = vpack.c.b16 %v3651, %v3643
        %v4732 = vpack.c.b16 %v3652, %v3644
        %v4733 = vpack.c.b16 %v3661, %v3653
        %v4734 = vpack.c.b16 %v3662, %v3654
        %v4735 = vpack.c.b16 %v3663, %v3655
        %v4736 = vpack.c.b16 %v3664, %v3656
        %v4737 = vpack.c.b16 %v3665, %v3657
        %v4738 = vpack.c.b16 %v3666, %v3658
        %v4739 = vpack.c.b16 %v3667, %v3659
        %v4740 = vpack.c.b16 %v3668, %v3660
        %v4741 = vpack.c.b16 %v3677, %v3669
        %v4742 = vpack.c.b16 %v3678, %v3670
        %v4743 = vpack.c.b16 %v3679, %v3671
        %v4744 = vpack.c.b16 %v3680, %v3672
        %v4745 = vpack.c.b16 %v3681, %v3673
        %v4746 = vpack.c.b16 %v3682, %v3674
        %v4747 = vpack.c.b16 %v3683, %v3675
        %v4748 = vpack.c.b16 %v3684, %v3676
        %v4749 = vpack.c.b16 %v3693, %v3685
        %v4750 = vpack.c.b16 %v3694, %v3686
        %v4751 = vpack.c.b16 %v3695, %v3687
        %v4752 = vpack.c.b16 %v3696, %v3688
        %v4753 = vpack.c.b16 %v3697, %v3689
        %v4754 = vpack.c.b16 %v3698, %v3690
        %v4755 = vpack.c.b16 %v3699, %v3691
        %v4756 = vpack.c.b16 %v3700, %v3692
        %v4757 = vpack.c.b16 %v3709, %v3701
        %v4758 = vpack.c.b16 %v3710, %v3702
        %v4759 = vpack.c.b16 %v3711, %v3703
        %v4760 = vpack.c.b16 %v3712, %v3704
        %v4761 = vpack.c.b16 %v3713, %v3705
        %v4762 = vpack.c.b16 %v3714, %v3706
        %v4763 = vpack.c.b16 %v3715, %v3707
        %v4764 = vpack.c.b16 %v3716, %v3708
        %v4765 = vpack.c.b16 %v3725, %v3717
        %v4766 = vpack.c.b16 %v3726, %v3718
        %v4767 = vpack.c.b16 %v3727, %v3719
        %v4768 = vpack.c.b16 %v3728, %v3720
        %v4769 = vpack.c.b16 %v3729, %v3721
        %v4770 = vpack.c.b16 %v3730, %v3722
        %v4771 = vpack.c.b16 %v3731, %v3723
        %v4772 = vpack.c.b16 %v3732, %v3724
        %v4773 = vpack.c.b16 %v3741, %v3733
        %v4774 = vpack.c.b16 %v3742, %v3734
        %v4775 = vpack.c.b16 %v3743, %v3735
        %v4776 = vpack.c.b16 %v3744, %v3736
        %v4777 = vpack.c.b16 %v3745, %v3737
        %v4778 = vpack.c.b16 %v3746, %v3738
        %v4779 = vpack.c.b16 %v3747, %v3739
        %v4780 = vpack.c.b16 %v3748, %v3740
        %v4781 = vpack.c.b16 %v3757, %v3749
        %v4782 = vpack.c.b16 %v3758, %v3750
        %v4783 = vpack.c.b16 %v3759, %v3751
        %v4784 = vpack.c.b16 %v3760, %v3752
        %v4785 = vpack.c.b16 %v3761, %v3753
        %v4786 = vpack.c.b16 %v3762, %v3754
        %v4787 = vpack.c.b16 %v3763, %v3755
        %v4788 = vpack.c.b16 %v3764, %v3756
        %v4789 = vpack.c.b16 %v3773, %v3765
        %v4790 = vpack.c.b16 %v3774, %v3766
        %v4791 = vpack.c.b16 %v3775, %v3767
        %v4792 = vpack.c.b16 %v3776, %v3768
        %v4793 = vpack.c.b16 %v3777, %v3769
        %v4794 = vpack.c.b16 %v3778, %v3770
        %v4795 = vpack.c.b16 %v3779, %v3771
        %v4796 = vpack.c.b16 %v3780, %v3772
        %v4797 = vpack.c.b16 %v3789, %v3781
        %v4798 = vpack.c.b16 %v3790, %v3782
        %v4799 = vpack.c.b16 %v3791, %v3783
        %v4800 = vpack.c.b16 %v3792, %v3784
        %v4801 = vpack.c.b16 %v3793, %v3785
        %v4802 = vpack.c.b16 %v3794, %v3786
        %v4803 = vpack.c.b16 %v3795, %v3787
        %v4804 = vpack.c.b16 %v3796, %v3788
        %v4805 = vpack.c.b16 %v3805, %v3797
        %v4806 = vpack.c.b16 %v3806, %v3798
        %v4807 = vpack.c.b16 %v3807, %v3799
        %v4808 = vpack.c.b16 %v3808, %v3800
        %v4809 = vpack.c.b16 %v3809, %v3801
        %v4810 = vpack.c.b16 %v3810, %v3802
        %v4811 = vpack.c.b16 %v3811, %v3803
        %v4812 = vpack.c.b16 %v3812, %v3804
        %v4813 = vpack.c.b16 %v3821, %v3813
        %v4814 = vpack.c.b16 %v3822, %v3814
        %v4815 = vpack.c.b16 %v3823, %v3815
        %v4816 = vpack.c.b16 %v3824, %v3816
        %v4817 = vpack.c.b16 %v3825, %v3817
        %v4818 = vpack.c.b16 %v3826, %v3818
        %v4819 = vpack.c.b16 %v3827, %v3819
        %v4820 = vpack.c.b16 %v3828, %v3820
        %v4821 = vpack.c.b16 %v3837, %v3829
        %v4822 = vpack.c.b16 %v3838, %v3830
        %v4823 = vpack.c.b16 %v3839, %v3831
        %v4824 = vpack.c.b16 %v3840, %v3832
        %v4825 = vpack.c.b16 %v3841, %v3833
        %v4826 = vpack.c.b16 %v3842, %v3834
        %v4827 = vpack.c.b16 %v3843, %v3835
        %v4828 = vpack.c.b16 %v3844, %v3836
        %v4829 = vpack.c.b16 %v3853, %v3845
        %v4830 = vpack.c.b16 %v3854, %v3846
        %v4831 = vpack.c.b16 %v3855, %v3847
        %v4832 = vpack.c.b16 %v3856, %v3848
        %v4833 = vpack.c.b16 %v3857, %v3849
        %v4834 = vpack.c.b16 %v3858, %v3850
        %v4835 = vpack.c.b16 %v3859, %v3851
        %v4836 = vpack.c.b16 %v3860, %v3852
        %v4837 = vpack.c.b16 %v3869, %v3861
        %v4838 = vpack.c.b16 %v3870, %v3862
        %v4839 = vpack.c.b16 %v3871, %v3863
        %v4840 = vpack.c.b16 %v3872, %v3864
        %v4841 = vpack.c.b16 %v3873, %v3865
        %v4842 = vpack.c.b16 %v3874, %v3866
        %v4843 = vpack.c.b16 %v3875, %v3867
        %v4844 = vpack.c.b16 %v3876, %v3868
        %v4845 = vpack.c.b16 %v3885, %v3877
        %v4846 = vpack.c.b16 %v3886, %v3878
        %v4847 = vpack.c.b16 %v3887, %v3879
        %v4848 = vpack.c.b16 %v3888, %v3880
        %v4849 = vpack.c.b16 %v3889, %v3881
        %v4850 = vpack.c.b16 %v3890, %v3882
        %v4851 = vpack.c.b16 %v3891, %v3883
        %v4852 = vpack.c.b16 %v3892, %v3884
        %v4853 = vpack.c.b16 %v3901, %v3893
        %v4854 = vpack.c.b16 %v3902, %v3894
        %v4855 = vpack.c.b16 %v3903, %v3895
        %v4856 = vpack.c.b16 %v3904, %v3896
        %v4857 = vpack.c.b16 %v3905, %v3897
        %v4858 = vpack.c.b16 %v3906, %v3898
        %v4859 = vpack.c.b16 %v3907, %v3899
        %v4860 = vpack.c.b16 %v3908, %v3900
        %v4861 = vpack.c.b16 %v3917, %v3909
        %v4862 = vpack.c.b16 %v3918, %v3910
        %v4863 = vpack.c.b16 %v3919, %v3911
        %v4864 = vpack.c.b16 %v3920, %v3912
        %v4865 = vpack.c.b16 %v3921, %v3913
        %v4866 = vpack.c.b16 %v3922, %v3914
        %v4867 = vpack.c.b16 %v3923, %v3915
        %v4868 = vpack.c.b16 %v3924, %v3916
        %v4869 = vpack.c.b16 %v3933, %v3925
        %v4870 = vpack.c.b16 %v3934, %v3926
        %v4871 = vpack.c.b16 %v3935, %v3927
        %v4872 = vpack.c.b16 %v3936, %v3928
        %v4873 = vpack.c.b16 %v3937, %v3929
        %v4874 = vpack.c.b16 %v3938, %v3930
        %v4875 = vpack.c.b16 %v3939, %v3931
        %v4876 = vpack.c.b16 %v3940, %v3932
        %v4877 = vpack.c.b16 %v3949, %v3941
        %v4878 = vpack.c.b16 %v3950, %v3942
        %v4879 = vpack.c.b16 %v3951, %v3943
        %v4880 = vpack.c.b16 %v3952, %v3944
        %v4881 = vpack.c.b16 %v3953, %v3945
        %v4882 = vpack.c.b16 %v3954, %v3946
        %v4883 = vpack.c.b16 %v3955, %v3947
        %v4884 = vpack.c.b16 %v3956, %v3948
        %v4885 = vpack.c.b16 %v3965, %v3957
        %v4886 = vpack.c.b16 %v3966, %v3958
        %v4887 = vpack.c.b16 %v3967, %v3959
        %v4888 = vpack.c.b16 %v3968, %v3960
        %v4889 = vpack.c.b16 %v3969, %v3961
        %v4890 = vpack.c.b16 %v3970, %v3962
        %v4891 = vpack.c.b16 %v3971, %v3963
        %v4892 = vpack.c.b16 %v3972, %v3964
        %v4893 = vpack.c.b16 %v3981, %v3973
        %v4894 = vpack.c.b16 %v3982, %v3974
        %v4895 = vpack.c.b16 %v3983, %v3975
        %v4896 = vpack.c.b16 %v3984, %v3976
        %v4897 = vpack.c.b16 %v3985, %v3977
        %v4898 = vpack.c.b16 %v3986, %v3978
        %v4899 = vpack.c.b16 %v3987, %v3979
        %v4900 = vpack.c.b16 %v3988, %v3980
        %v4901 = vpack.c.b16 %v3997, %v3989
        %v4902 = vpack.c.b16 %v3998, %v3990
        %v4903 = vpack.c.b16 %v3999, %v3991
        %v4904 = vpack.c.b16 %v4000, %v3992
        %v4905 = vpack.c.b16 %v4001, %v3993
        %v4906 = vpack.c.b16 %v4002, %v3994
        %v4907 = vpack.c.b16 %v4003, %v3995
        %v4908 = vpack.c.b16 %v4004, %v3996
        %v4909 = vpack.c.b16 %v4013, %v4005
        %v4910 = vpack.c.b16 %v4014, %v4006
        %v4911 = vpack.c.b16 %v4015, %v4007
        %v4912 = vpack.c.b16 %v4016, %v4008
        %v4913 = vpack.c.b16 %v4017, %v4009
        %v4914 = vpack.c.b16 %v4018, %v4010
        %v4915 = vpack.c.b16 %v4019, %v4011
        %v4916 = vpack.c.b16 %v4020, %v4012
        %v4917 = vpack.c.b16 %v4029, %v4021
        %v4918 = vpack.c.b16 %v4030, %v4022
        %v4919 = vpack.c.b16 %v4031, %v4023
        %v4920 = vpack.c.b16 %v4032, %v4024
        %v4921 = vpack.c.b16 %v4033, %v4025
        %v4922 = vpack.c.b16 %v4034, %v4026
        %v4923 = vpack.c.b16 %v4035, %v4027
        %v4924 = vpack.c.b16 %v4036, %v4028
        %v4925 = vpack.c.b16 %v4045, %v4037
        %v4926 = vpack.c.b16 %v4046, %v4038
        %v4927 = vpack.c.b16 %v4047, %v4039
        %v4928 = vpack.c.b16 %v4048, %v4040
        %v4929 = vpack.c.b16 %v4049, %v4041
        %v4930 = vpack.c.b16 %v4050, %v4042
        %v4931 = vpack.c.b16 %v4051, %v4043
        %v4932 = vpack.c.b16 %v4052, %v4044
        %v4933 = vpack.c.b16 %v4061, %v4053
        %v4934 = vpack.c.b16 %v4062, %v4054
        %v4935 = vpack.c.b16 %v4063, %v4055
        %v4936 = vpack.c.b16 %v4064, %v4056
        %v4937 = vpack.c.b16 %v4065, %v4057
        %v4938 = vpack.c.b16 %v4066, %v4058
        %v4939 = vpack.c.b16 %v4067, %v4059
        %v4940 = vpack.c.b16 %v4068, %v4060
        %v4941 = vpack.c.b16 %v4077, %v4069
        %v4942 = vpack.c.b16 %v4078, %v4070
        %v4943 = vpack.c.b16 %v4079, %v4071
        %v4944 = vpack.c.b16 %v4080, %v4072
        %v4945 = vpack.c.b16 %v4081, %v4073
        %v4946 = vpack.c.b16 %v4082, %v4074
        %v4947 = vpack.c.b16 %v4083, %v4075
        %v4948 = vpack.c.b16 %v4084, %v4076
        %v4949 = vpack.c.b16 %v4093, %v4085
        %v4950 = vpack.c.b16 %v4094, %v4086
        %v4951 = vpack.c.b16 %v4095, %v4087
        %v4952 = vpack.c.b16 %v4096, %v4088
        %v4953 = vpack.c.b16 %v4097, %v4089
        %v4954 = vpack.c.b16 %v4098, %v4090
        %v4955 = vpack.c.b16 %v4099, %v4091
        %v4956 = vpack.c.b16 %v4100, %v4092
        %v4957 = vpack.c.b16 %v4109, %v4101
        %v4958 = vpack.c.b16 %v4110, %v4102
        %v4959 = vpack.c.b16 %v4111, %v4103
        %v4960 = vpack.c.b16 %v4112, %v4104
        %v4961 = vpack.c.b16 %v4113, %v4105
        %v4962 = vpack.c.b16 %v4114, %v4106
        %v4963 = vpack.c.b16 %v4115, %v4107
        %v4964 = vpack.c.b16 %v4116, %v4108
        %v4965 = vpack.c.b16 %v4125, %v4117
        %v4966 = vpack.c.b16 %v4126, %v4118
        %v4967 = vpack.c.b16 %v4127, %v4119
        %v4968 = vpack.c.b16 %v4128, %v4120
        %v4969 = vpack.c.b16 %v4129, %v4121
        %v4970 = vpack.c.b16 %v4130, %v4122
        %v4971 = vpack.c.b16 %v4131, %v4123
        %v4972 = vpack.c.b16 %v4132, %v4124
        %v4973 = vpack.c.b16 %v4141, %v4133
        %v4974 = vpack.c.b16 %v4142, %v4134
        %v4975 = vpack.c.b16 %v4143, %v4135
        %v4976 = vpack.c.b16 %v4144, %v4136
        %v4977 = vpack.c.b16 %v4145, %v4137
        %v4978 = vpack.c.b16 %v4146, %v4138
        %v4979 = vpack.c.b16 %v4147, %v4139
        %v4980 = vpack.c.b16 %v4148, %v4140
        %v4981 = vpack.c.b16 %v4157, %v4149
        %v4982 = vpack.c.b16 %v4158, %v4150
        %v4983 = vpack.c.b16 %v4159, %v4151
        %v4984 = vpack.c.b16 %v4160, %v4152
        %v4985 = vpack.c.b16 %v4161, %v4153
        %v4986 = vpack.c.b16 %v4162, %v4154
        %v4987 = vpack.c.b16 %v4163, %v4155
        %v4988 = vpack.c.b16 %v4164, %v4156
        %v4989 = vpack.c.b16 %v4173, %v4165
        %v4990 = vpack.c.b16 %v4174, %v4166
        %v4991 = vpack.c.b16 %v4175, %v4167
        %v4992 = vpack.c.b16 %v4176, %v4168
        %v4993 = vpack.c.b16 %v4177, %v4169
        %v4994 = vpack.c.b16 %v4178, %v4170
        %v4995 = vpack.c.b16 %v4179, %v4171
        %v4996 = vpack.c.b16 %v4180, %v4172
        %v4997 = vpack.c.b16 %v4189, %v4181
        %v4998 = vpack.c.b16 %v4190, %v4182
        %v4999 = vpack.c.b16 %v4191, %v4183
        %v5000 = vpack.c.b16 %v4192, %v4184
        %v5001 = vpack.c.b16 %v4193, %v4185
        %v5002 = vpack.c.b16 %v4194, %v4186
        %v5003 = vpack.c.b16 %v4195, %v4187
        %v5004 = vpack.c.b16 %v4196, %v4188
        %v5005 = vpack.c.b16 %v4205, %v4197
        %v5006 = vpack.c.b16 %v4206, %v4198
        %v5007 = vpack.c.b16 %v4207, %v4199
        %v5008 = vpack.c.b16 %v4208, %v4200
        %v5009 = vpack.c.b16 %v4209, %v4201
        %v5010 = vpack.c.b16 %v4210, %v4202
        %v5011 = vpack.c.b16 %v4211, %v4203
        %v5012 = vpack.c.b16 %v4212, %v4204
        %v5013 = vpack.c.b16 %v4221, %v4213
        %v5014 = vpack.c.b16 %v4222, %v4214
        %v5015 = vpack.c.b16 %v4223, %v4215
        %v5016 = vpack.c.b16 %v4224, %v4216
        %v5017 = vpack.c.b16 %v4225, %v4217
        %v5018 = vpack.c.b16 %v4226, %v4218
        %v5019 = vpack.c.b16 %v4227, %v4219
        %v5020 = vpack.c.b16 %v4228, %v4220
        %v5021 = vpack.c.b16 %v4237, %v4229
        %v5022 = vpack.c.b16 %v4238, %v4230
        %v5023 = vpack.c.b16 %v4239, %v4231
        %v5024 = vpack.c.b16 %v4240, %v4232
        %v5025 = vpack.c.b16 %v4241, %v4233
        %v5026 = vpack.c.b16 %v4242, %v4234
        %v5027 = vpack.c.b16 %v4243, %v4235
        %v5028 = vpack.c.b16 %v4244, %v4236
        %v5029 = vpack.c.b16 %v4253, %v4245
        %v5030 = vpack.c.b16 %v4254, %v4246
        %v5031 = vpack.c.b16 %v4255, %v4247
        %v5032 = vpack.c.b16 %v4256, %v4248
        %v5033 = vpack.c.b16 %v4257, %v4249
        %v5034 = vpack.c.b16 %v4258, %v4250
        %v5035 = vpack.c.b16 %v4259, %v4251
        %v5036 = vpack.c.b16 %v4260, %v4252
        %v5037 = vpack.c.b16 %v4269, %v4261
        %v5038 = vpack.c.b16 %v4270, %v4262
        %v5039 = vpack.c.b16 %v4271, %v4263
        %v5040 = vpack.c.b16 %v4272, %v4264
        %v5041 = vpack.c.b16 %v4273, %v4265
        %v5042 = vpack.c.b16 %v4274, %v4266
        %v5043 = vpack.c.b16 %v4275, %v4267
        %v5044 = vpack.c.b16 %v4276, %v4268
        %v5045 = vpack.c.b16 %v4285, %v4277
        %v5046 = vpack.c.b16 %v4286, %v4278
        %v5047 = vpack.c.b16 %v4287, %v4279
        %v5048 = vpack.c.b16 %v4288, %v4280
        %v5049 = vpack.c.b16 %v4289, %v4281
        %v5050 = vpack.c.b16 %v4290, %v4282
        %v5051 = vpack.c.b16 %v4291, %v4283
        %v5052 = vpack.c.b16 %v4292, %v4284
        %v5053 = vpack.c.b16 %v4301, %v4293
        %v5054 = vpack.c.b16 %v4302, %v4294
        %v5055 = vpack.c.b16 %v4303, %v4295
        %v5056 = vpack.c.b16 %v4304, %v4296
        %v5057 = vpack.c.b16 %v4305, %v4297
        %v5058 = vpack.c.b16 %v4306, %v4298
        %v5059 = vpack.c.b16 %v4307, %v4299
        %v5060 = vpack.c.b16 %v4308, %v4300
        %v5061 = vpack.c.b16 %v4317, %v4309
        %v5062 = vpack.c.b16 %v4318, %v4310
        %v5063 = vpack.c.b16 %v4319, %v4311
        %v5064 = vpack.c.b16 %v4320, %v4312
        %v5065 = vpack.c.b16 %v4321, %v4313
        %v5066 = vpack.c.b16 %v4322, %v4314
        %v5067 = vpack.c.b16 %v4323, %v4315
        %v5068 = vpack.c.b16 %v4324, %v4316
        %v5069 = vpack.c.b16 %v4333, %v4325
        %v5070 = vpack.c.b16 %v4334, %v4326
        %v5071 = vpack.c.b16 %v4335, %v4327
        %v5072 = vpack.c.b16 %v4336, %v4328
        %v5073 = vpack.c.b16 %v4337, %v4329
        %v5074 = vpack.c.b16 %v4338, %v4330
        %v5075 = vpack.c.b16 %v4339, %v4331
        %v5076 = vpack.c.b16 %v4340, %v4332
        %v5077 = vpack.c.b16 %v4349, %v4341
        %v5078 = vpack.c.b16 %v4350, %v4342
        %v5079 = vpack.c.b16 %v4351, %v4343
        %v5080 = vpack.c.b16 %v4352, %v4344
        %v5081 = vpack.c.b16 %v4353, %v4345
        %v5082 = vpack.c.b16 %v4354, %v4346
        %v5083 = vpack.c.b16 %v4355, %v4347
        %v5084 = vpack.c.b16 %v4356, %v4348
        %v5085 = vpack.c.b16 %v4365, %v4357
        %v5086 = vpack.c.b16 %v4366, %v4358
        %v5087 = vpack.c.b16 %v4367, %v4359
        %v5088 = vpack.c.b16 %v4368, %v4360
        %v5089 = vpack.c.b16 %v4369, %v4361
        %v5090 = vpack.c.b16 %v4370, %v4362
        %v5091 = vpack.c.b16 %v4371, %v4363
        %v5092 = vpack.c.b16 %v4372, %v4364
        %v5093 = vpack.c.b16 %v4381, %v4373
        %v5094 = vpack.c.b16 %v4382, %v4374
        %v5095 = vpack.c.b16 %v4383, %v4375
        %v5096 = vpack.c.b16 %v4384, %v4376
        %v5097 = vpack.c.b16 %v4385, %v4377
        %v5098 = vpack.c.b16 %v4386, %v4378
        %v5099 = vpack.c.b16 %v4387, %v4379
        %v5100 = vpack.c.b16 %v4388, %v4380
        %v5101 = vpack.c.b16 %v4397, %v4389
        %v5102 = vpack.c.b16 %v4398, %v4390
        %v5103 = vpack.c.b16 %v4399, %v4391
        %v5104 = vpack.c.b16 %v4400, %v4392
        %v5105 = vpack.c.b16 %v4401, %v4393
        %v5106 = vpack.c.b16 %v4402, %v4394
        %v5107 = vpack.c.b16 %v4403, %v4395
        %v5108 = vpack.c.b16 %v4404, %v4396
        %v5109 = vpack.c.b16 %v4413, %v4405
        %v5110 = vpack.c.b16 %v4414, %v4406
        %v5111 = vpack.c.b16 %v4415, %v4407
        %v5112 = vpack.c.b16 %v4416, %v4408
        %v5113 = vpack.c.b16 %v4417, %v4409
        %v5114 = vpack.c.b16 %v4418, %v4410
        %v5115 = vpack.c.b16 %v4419, %v4411
        %v5116 = vpack.c.b16 %v4420, %v4412
        %v5117 = vpack.c.b16 %v4429, %v4421
        %v5118 = vpack.c.b16 %v4430, %v4422
        %v5119 = vpack.c.b16 %v4431, %v4423
        %v5120 = vpack.c.b16 %v4432, %v4424
        %v5121 = vpack.c.b16 %v4433, %v4425
        %v5122 = vpack.c.b16 %v4434, %v4426
        %v5123 = vpack.c.b16 %v4435, %v4427
        %v5124 = vpack.c.b16 %v4436, %v4428
        %v5125 = vpack.c.b16 %v4445, %v4437
        %v5126 = vpack.c.b16 %v4446, %v4438
        %v5127 = vpack.c.b16 %v4447, %v4439
        %v5128 = vpack.c.b16 %v4448, %v4440
        %v5129 = vpack.c.b16 %v4449, %v4441
        %v5130 = vpack.c.b16 %v4450, %v4442
        %v5131 = vpack.c.b16 %v4451, %v4443
        %v5132 = vpack.c.b16 %v4452, %v4444
        %v5133 = vpack.c.b16 %v4461, %v4453
        %v5134 = vpack.c.b16 %v4462, %v4454
        %v5135 = vpack.c.b16 %v4463, %v4455
        %v5136 = vpack.c.b16 %v4464, %v4456
        %v5137 = vpack.c.b16 %v4465, %v4457
        %v5138 = vpack.c.b16 %v4466, %v4458
        %v5139 = vpack.c.b16 %v4467, %v4459
        %v5140 = vpack.c.b16 %v4468, %v4460
        %v5141 = vpack.c.b16 %v4477, %v4469
        %v5142 = vpack.c.b16 %v4478, %v4470
        %v5143 = vpack.c.b16 %v4479, %v4471
        %v5144 = vpack.c.b16 %v4480, %v4472
        %v5145 = vpack.c.b16 %v4481, %v4473
        %v5146 = vpack.c.b16 %v4482, %v4474
        %v5147 = vpack.c.b16 %v4483, %v4475
        %v5148 = vpack.c.b16 %v4484, %v4476
        %v5149 = vpack.c.b16 %v4493, %v4485
        %v5150 = vpack.c.b16 %v4494, %v4486
        %v5151 = vpack.c.b16 %v4495, %v4487
        %v5152 = vpack.c.b16 %v4496, %v4488
        %v5153 = vpack.c.b16 %v4497, %v4489
        %v5154 = vpack.c.b16 %v4498, %v4490
        %v5155 = vpack.c.b16 %v4499, %v4491
        %v5156 = vpack.c.b16 %v4500, %v4492
        %v5157 = vpack.c.b16 %v4509, %v4501
        %v5158 = vpack.c.b16 %v4510, %v4502
        %v5159 = vpack.c.b16 %v4511, %v4503
        %v5160 = vpack.c.b16 %v4512, %v4504
        %v5161 = vpack.c.b16 %v4513, %v4505
        %v5162 = vpack.c.b16 %v4514, %v4506
        %v5163 = vpack.c.b16 %v4515, %v4507
        %v5164 = vpack.c.b16 %v4516, %v4508
        %v5165 = vpack.c.b16 %v4525, %v4517
        %v5166 = vpack.c.b16 %v4526, %v4518
        %v5167 = vpack.c.b16 %v4527, %v4519
        %v5168 = vpack.c.b16 %v4528, %v4520
        %v5169 = vpack.c.b16 %v4529, %v4521
        %v5170 = vpack.c.b16 %v4530, %v4522
        %v5171 = vpack.c.b16 %v4531, %v4523
        %v5172 = vpack.c.b16 %v4532, %v4524
        %v5173 = vpack.c.b16 %v4541, %v4533
        %v5174 = vpack.c.b16 %v4542, %v4534
        %v5175 = vpack.c.b16 %v4543, %v4535
        %v5176 = vpack.c.b16 %v4544, %v4536
        %v5177 = vpack.c.b16 %v4545, %v4537
        %v5178 = vpack.c.b16 %v4546, %v4538
        %v5179 = vpack.c.b16 %v4547, %v4539
        %v5180 = vpack.c.b16 %v4548, %v4540
        %v5181 = vpack.c.b16 %v4557, %v4549
        %v5182 = vpack.c.b16 %v4558, %v4550
        %v5183 = vpack.c.b16 %v4559, %v4551
        %v5184 = vpack.c.b16 %v4560, %v4552
        %v5185 = vpack.c.b16 %v4561, %v4553
        %v5186 = vpack.c.b16 %v4562, %v4554
        %v5187 = vpack.c.b16 %v4563, %v4555
        %v5188 = vpack.c.b16 %v4564, %v4556
        %v5189 = vpack.c.b16 %v4573, %v4565
        %v5190 = vpack.c.b16 %v4574, %v4566
        %v5191 = vpack.c.b16 %v4575, %v4567
        %v5192 = vpack.c.b16 %v4576, %v4568
        %v5193 = vpack.c.b16 %v4577, %v4569
        %v5194 = vpack.c.b16 %v4578, %v4570
        %v5195 = vpack.c.b16 %v4579, %v4571
        %v5196 = vpack.c.b16 %v4580, %v4572
        %v5197 = vpack.c.b16 %v4589, %v4581
        %v5198 = vpack.c.b16 %v4590, %v4582
        %v5199 = vpack.c.b16 %v4591, %v4583
        %v5200 = vpack.c.b16 %v4592, %v4584
        %v5201 = vpack.c.b16 %v4593, %v4585
        %v5202 = vpack.c.b16 %v4594, %v4586
        %v5203 = vpack.c.b16 %v4595, %v4587
        %v5204 = vpack.c.b16 %v4596, %v4588
        %v5205 = vpack.c.b16 %v4605, %v4597
        %v5206 = vpack.c.b16 %v4606, %v4598
        %v5207 = vpack.c.b16 %v4607, %v4599
        %v5208 = vpack.c.b16 %v4608, %v4600
        %v5209 = vpack.c.b16 %v4609, %v4601
        %v5210 = vpack.c.b16 %v4610, %v4602
        %v5211 = vpack.c.b16 %v4611, %v4603
        %v5212 = vpack.c.b16 %v4612, %v4604
        %v5213 = vpack.c.b16 %v4621, %v4613
        %v5214 = vpack.c.b16 %v4622, %v4614
        %v5215 = vpack.c.b16 %v4623, %v4615
        %v5216 = vpack.c.b16 %v4624, %v4616
        %v5217 = vpack.c.b16 %v4625, %v4617
        %v5218 = vpack.c.b16 %v4626, %v4618
        %v5219 = vpack.c.b16 %v4627, %v4619
        %v5220 = vpack.c.b16 %v4628, %v4620
        %v5221 = vpack.c.b16 %v4637, %v4629
        %v5222 = vpack.c.b16 %v4638, %v4630
        %v5223 = vpack.c.b16 %v4639, %v4631
        %v5224 = vpack.c.b16 %v4640, %v4632
        %v5225 = vpack.c.b16 %v4641, %v4633
        %v5226 = vpack.c.b16 %v4642, %v4634
        %v5227 = vpack.c.b16 %v4643, %v4635
        %v5228 = vpack.c.b16 %v4644, %v4636
        %v5229 = vpack.c.b16 %v4653, %v4645
        %v5230 = vpack.c.b16 %v4654, %v4646
        %v5231 = vpack.c.b16 %v4655, %v4647
        %v5232 = vpack.c.b16 %v4656, %v4648
        %v5233 = vpack.c.b16 %v4657, %v4649
        %v5234 = vpack.c.b16 %v4658, %v4650
        %v5235 = vpack.c.b16 %v4659, %v4651
        %v5236 = vpack.c.b16 %v4660, %v4652
        %5813 = vmatprep.subr.bf16.mxu0 %v4718
        %5814 = vmatpush1.bf16.msra.mxu0 %v4717
        %5815 = vmatprep.subr.bf16.mxu0 %v4710
        %5816 = vmatpush1.bf16.msra.mxu0 %v4709
        %5817 = vmatprep.subr.bf16.mxu0 %v4702
        %5818 = vmatpush1.bf16.msra.mxu0 %v4701
        %5819 = vmatprep.subr.bf16.mxu0 %v4694
        %5820 = vmatpush1.bf16.msra.mxu0 %v4693
        %5821 = vmatprep.subr.bf16.mxu0 %v4686
        %5822 = vmatpush1.bf16.msra.mxu0 %v4685
        %5823 = vmatprep.subr.bf16.mxu0 %v4678
        %5824 = vmatpush1.bf16.msra.mxu0 %v4677
        %5825 = vmatprep.subr.bf16.mxu0 %v4670
        %5826 = vmatpush1.bf16.msra.mxu0 %v4669
        %5827 = vmatprep.subr.bf16.mxu0 %v4662
        %5828 = vmatpush1.bf16.msra.mxu0 %v4661
        %5829 = vmatprep.subr.bf16.mxu0 %v4782
        %5830 = vmatpush2.bf16.msra.mxu0 %v4781
        %5831 = vmatprep.subr.bf16.mxu0 %v4774
        %5832 = vmatpush2.bf16.msra.mxu0 %v4773
        %5833 = vmatprep.subr.bf16.mxu0 %v4766
        %5834 = vmatpush2.bf16.msra.mxu0 %v4765
        %5835 = vmatprep.subr.bf16.mxu0 %v4758
        %5836 = vmatpush2.bf16.msra.mxu0 %v4757
        %5837 = vmatprep.subr.bf16.mxu0 %v4750
        %5838 = vmatpush2.bf16.msra.mxu0 %v4749
        %5839 = vmatprep.subr.bf16.mxu0 %v4742
        %5840 = vmatpush2.bf16.msra.mxu0 %v4741
        %5841 = vmatprep.subr.bf16.mxu0 %v4734
        %5842 = vmatpush2.bf16.msra.mxu0 %v4733
        %5843 = vmatprep.subr.bf16.mxu0 %v4726
        %5844 = vmatpush2.bf16.msra.mxu0 %v4725
        %5845 = vmatprep.mubr.bf16.mxu0 %v2349
        %5846 = vmatmul.mubr.bf16.gmra.mxu0 %v2348
        %v5847 = vpop.f32.mrf.mxu0
        %v5848 = vadd.f32 0.0, %v5847
        %v5849 = vpop.f32.mrf.mxu0
        %v5850 = vadd.f32 0.0, %v5849
        %v5851 = vpop.f32.mrf.mxu0
        %v5852 = vadd.f32 0.0, %v5851
        %v5853 = vpop.f32.mrf.mxu0
        %v5854 = vadd.f32 0.0, %v5853
        %5855 = vdwg.mxu0
        %5856 = vmatprep.subr.bf16.mxu0 %v4846
        %5857 = vmatpush1.bf16.msra.mxu0 %v4845
        %5858 = vmatprep.subr.bf16.mxu0 %v4838
        %5859 = vmatpush1.bf16.msra.mxu0 %v4837
        %5860 = vmatprep.subr.bf16.mxu0 %v4830
        %5861 = vmatpush1.bf16.msra.mxu0 %v4829
        %5862 = vmatprep.subr.bf16.mxu0 %v4822
        %5863 = vmatpush1.bf16.msra.mxu0 %v4821
        %5864 = vmatprep.subr.bf16.mxu0 %v4814
        %5865 = vmatpush1.bf16.msra.mxu0 %v4813
        %5866 = vmatprep.subr.bf16.mxu0 %v4806
        %5867 = vmatpush1.bf16.msra.mxu0 %v4805
        %5868 = vmatprep.subr.bf16.mxu0 %v4798
        %5869 = vmatpush1.bf16.msra.mxu0 %v4797
        %5870 = vmatprep.subr.bf16.mxu0 %v4790
        %5871 = vmatpush1.bf16.msra.mxu0 %v4789
        %5872 = vmatprep.subr.bf16.mxu0 %v4910
        %5873 = vmatpush2.bf16.msra.mxu0 %v4909
        %5874 = vmatprep.subr.bf16.mxu0 %v4902
        %5875 = vmatpush2.bf16.msra.mxu0 %v4901
        %5876 = vmatprep.subr.bf16.mxu0 %v4894
        %5877 = vmatpush2.bf16.msra.mxu0 %v4893
        %5878 = vmatprep.subr.bf16.mxu0 %v4886
        %5879 = vmatpush2.bf16.msra.mxu0 %v4885
        %5880 = vmatprep.subr.bf16.mxu0 %v4878
        %5881 = vmatpush2.bf16.msra.mxu0 %v4877
        %5882 = vmatprep.subr.bf16.mxu0 %v4870
        %5883 = vmatpush2.bf16.msra.mxu0 %v4869
        %5884 = vmatprep.subr.bf16.mxu0 %v4862
        %5885 = vmatpush2.bf16.msra.mxu0 %v4861
        %5886 = vmatprep.subr.bf16.mxu0 %v4854
        %5887 = vmatpush2.bf16.msra.mxu0 %v4853
        %5888 = vmatprep.mubr.bf16.mxu0 %v2351
        %5889 = vmatmul.mubr.bf16.gmra.mxu0 %v2350
        %v5890 = vpop.f32.mrf.mxu0
        %v5891 = vadd.f32 %v5848, %v5890
        %v5892 = vpop.f32.mrf.mxu0
        %v5893 = vadd.f32 %v5850, %v5892
        %v5894 = vpop.f32.mrf.mxu0
        %v5895 = vadd.f32 %v5852, %v5894
        %v5896 = vpop.f32.mrf.mxu0
        %v5897 = vadd.f32 %v5854, %v5896
        %5898 = vdwg.mxu0
        %5899 = vmatprep.subr.bf16.mxu0 %v4974
        %5900 = vmatpush1.bf16.msra.mxu0 %v4973
        %5901 = vmatprep.subr.bf16.mxu0 %v4966
        %5902 = vmatpush1.bf16.msra.mxu0 %v4965
        %5903 = vmatprep.subr.bf16.mxu0 %v4958
        %5904 = vmatpush1.bf16.msra.mxu0 %v4957
        %5905 = vmatprep.subr.bf16.mxu0 %v4950
        %5906 = vmatpush1.bf16.msra.mxu0 %v4949
        %5907 = vmatprep.subr.bf16.mxu0 %v4942
        %5908 = vmatpush1.bf16.msra.mxu0 %v4941
        %5909 = vmatprep.subr.bf16.mxu0 %v4934
        %5910 = vmatpush1.bf16.msra.mxu0 %v4933
        %5911 = vmatprep.subr.bf16.mxu0 %v4926
        %5912 = vmatpush1.bf16.msra.mxu0 %v4925
        %5913 = vmatprep.subr.bf16.mxu0 %v4918
        %5914 = vmatpush1.bf16.msra.mxu0 %v4917
        %5915 = vmatprep.subr.bf16.mxu0 %v5038
        %5916 = vmatpush2.bf16.msra.mxu0 %v5037
        %5917 = vmatprep.subr.bf16.mxu0 %v5030
        %5918 = vmatpush2.bf16.msra.mxu0 %v5029
        %5919 = vmatprep.subr.bf16.mxu0 %v5022
        %5920 = vmatpush2.bf16.msra.mxu0 %v5021
        %5921 = vmatprep.subr.bf16.mxu0 %v5014
        %5922 = vmatpush2.bf16.msra.mxu0 %v5013
        %5923 = vmatprep.subr.bf16.mxu0 %v5006
        %5924 = vmatpush2.bf16.msra.mxu0 %v5005
        %5925 = vmatprep.subr.bf16.mxu0 %v4998
        %5926 = vmatpush2.bf16.msra.mxu0 %v4997
        %5927 = vmatprep.subr.bf16.mxu0 %v4990
        %5928 = vmatpush2.bf16.msra.mxu0 %v4989
        %5929 = vmatprep.subr.bf16.mxu0 %v4982
        %5930 = vmatpush2.bf16.msra.mxu0 %v4981
        %5931 = vmatprep.mubr.bf16.mxu0 %v2353
        %5932 = vmatmul.mubr.bf16.gmra.mxu0 %v2352
        %v5933 = vpop.f32.mrf.mxu0
        %v5934 = vadd.f32 %v5891, %v5933
        %v5935 = vpop.f32.mrf.mxu0
        %v5936 = vadd.f32 %v5893, %v5935
        %v5937 = vpop.f32.mrf.mxu0
        %v5938 = vadd.f32 %v5895, %v5937
        %v5939 = vpop.f32.mrf.mxu0
        %v5940 = vadd.f32 %v5897, %v5939
        %5941 = vdwg.mxu0
        %5942 = vmatprep.subr.bf16.mxu0 %v5102
        %5943 = vmatpush1.bf16.msra.mxu0 %v5101
        %5944 = vmatprep.subr.bf16.mxu0 %v5094
        %5945 = vmatpush1.bf16.msra.mxu0 %v5093
        %5946 = vmatprep.subr.bf16.mxu0 %v5086
        %5947 = vmatpush1.bf16.msra.mxu0 %v5085
        %5948 = vmatprep.subr.bf16.mxu0 %v5078
        %5949 = vmatpush1.bf16.msra.mxu0 %v5077
        %5950 = vmatprep.subr.bf16.mxu0 %v5070
        %5951 = vmatpush1.bf16.msra.mxu0 %v5069
        %5952 = vmatprep.subr.bf16.mxu0 %v5062
        %5953 = vmatpush1.bf16.msra.mxu0 %v5061
        %5954 = vmatprep.subr.bf16.mxu0 %v5054
        %5955 = vmatpush1.bf16.msra.mxu0 %v5053
        %5956 = vmatprep.subr.bf16.mxu0 %v5046
        %5957 = vmatpush1.bf16.msra.mxu0 %v5045
        %5958 = vmatprep.subr.bf16.mxu0 %v5166
        %5959 = vmatpush2.bf16.msra.mxu0 %v5165
        %5960 = vmatprep.subr.bf16.mxu0 %v5158
        %5961 = vmatpush2.bf16.msra.mxu0 %v5157
        %5962 = vmatprep.subr.bf16.mxu0 %v5150
        %5963 = vmatpush2.bf16.msra.mxu0 %v5149
        %5964 = vmatprep.subr.bf16.mxu0 %v5142
        %5965 = vmatpush2.bf16.msra.mxu0 %v5141
        %5966 = vmatprep.subr.bf16.mxu0 %v5134
        %5967 = vmatpush2.bf16.msra.mxu0 %v5133
        %5968 = vmatprep.subr.bf16.mxu0 %v5126
        %5969 = vmatpush2.bf16.msra.mxu0 %v5125
        %5970 = vmatprep.subr.bf16.mxu0 %v5118
        %5971 = vmatpush2.bf16.msra.mxu0 %v5117
        %5972 = vmatprep.subr.bf16.mxu0 %v5110
        %5973 = vmatpush2.bf16.msra.mxu0 %v5109
        %5974 = vmatprep.mubr.bf16.mxu0 %v2355
        %5975 = vmatmul.mubr.bf16.gmra.mxu0 %v2354
        %v5976 = vpop.f32.mrf.mxu0
        %v5977 = vadd.f32 %v5934, %v5976
        %v5978 = vpop.f32.mrf.mxu0
        %v5979 = vadd.f32 %v5936, %v5978
        %v5980 = vpop.f32.mrf.mxu0
        %v5981 = vadd.f32 %v5938, %v5980
        %v5982 = vpop.f32.mrf.mxu0
        %v5983 = vadd.f32 %v5940, %v5982
        %5984 = vdwg.mxu0
        %5985 = vmatprep.subr.bf16.mxu0 %v5230
        %5986 = vmatpush1.bf16.msra.mxu0 %v5229
        %5987 = vmatprep.subr.bf16.mxu0 %v5222
        %5988 = vmatpush1.bf16.msra.mxu0 %v5221
        %5989 = vmatprep.subr.bf16.mxu0 %v5214
        %5990 = vmatpush1.bf16.msra.mxu0 %v5213
        %5991 = vmatprep.subr.bf16.mxu0 %v5206
        %5992 = vmatpush1.bf16.msra.mxu0 %v5205
        %5993 = vmatprep.subr.bf16.mxu0 %v5198
        %5994 = vmatpush1.bf16.msra.mxu0 %v5197
        %5995 = vmatprep.subr.bf16.mxu0 %v5190
        %5996 = vmatpush1.bf16.msra.mxu0 %v5189
        %5997 = vmatprep.subr.bf16.mxu0 %v5182
        %5998 = vmatpush1.bf16.msra.mxu0 %v5181
        %5999 = vmatprep.subr.bf16.mxu0 %v5174
        %6000 = vmatpush1.bf16.msra.mxu0 %v5173
        %6001 = vmatprep.subr.bf16.mxu0 0
        %6002 = vmatpush2.bf16.msra.mxu0 0
        %6003 = vmatprep.subr.bf16.mxu0 0
        %6004 = vmatpush2.bf16.msra.mxu0 0
        %6005 = vmatprep.subr.bf16.mxu0 0
        %6006 = vmatpush2.bf16.msra.mxu0 0
        %6007 = vmatprep.subr.bf16.mxu0 0
        %6008 = vmatpush2.bf16.msra.mxu0 0
        %6009 = vmatprep.subr.bf16.mxu0 0
        %6010 = vmatpush2.bf16.msra.mxu0 0
        %6011 = vmatprep.subr.bf16.mxu0 0
        %6012 = vmatpush2.bf16.msra.mxu0 0
        %6013 = vmatprep.subr.bf16.mxu0 0
        %6014 = vmatpush2.bf16.msra.mxu0 0
        %6015 = vmatprep.subr.bf16.mxu0 0
        %6016 = vmatpush2.bf16.msra.mxu0 0
        %6017 = vmatprep.mubr.bf16.mxu0 0
        %6018 = vmatmul.mubr.bf16.gmra.mxu0 %v2356
        %v6019 = vpop.f32.mrf.mxu0
        %v6020 = vadd.f32 %v5977, %v6019
        %v6021 = vpop.f32.mrf.mxu0
        %v6022 = vadd.f32 %v5979, %v6021
        %v6023 = vpop.f32.mrf.mxu0
        %v6024 = vadd.f32 %v5981, %v6023
        %v6025 = vpop.f32.mrf.mxu0
        %v6026 = vadd.f32 %v5983, %v6025
        %6027 = vdwg.mxu0
        %6028 = vmatprep.subr.bf16.mxu0 %v4720
        %6029 = vmatpush1.bf16.msra.mxu0 %v4719
        %6030 = vmatprep.subr.bf16.mxu0 %v4712
        %6031 = vmatpush1.bf16.msra.mxu0 %v4711
        %6032 = vmatprep.subr.bf16.mxu0 %v4704
        %6033 = vmatpush1.bf16.msra.mxu0 %v4703
        %6034 = vmatprep.subr.bf16.mxu0 %v4696
        %6035 = vmatpush1.bf16.msra.mxu0 %v4695
        %6036 = vmatprep.subr.bf16.mxu0 %v4688
        %6037 = vmatpush1.bf16.msra.mxu0 %v4687
        %6038 = vmatprep.subr.bf16.mxu0 %v4680
        %6039 = vmatpush1.bf16.msra.mxu0 %v4679
        %6040 = vmatprep.subr.bf16.mxu0 %v4672
        %6041 = vmatpush1.bf16.msra.mxu0 %v4671
        %6042 = vmatprep.subr.bf16.mxu0 %v4664
        %6043 = vmatpush1.bf16.msra.mxu0 %v4663
        %6044 = vmatprep.subr.bf16.mxu0 %v4784
        %6045 = vmatpush2.bf16.msra.mxu0 %v4783
        %6046 = vmatprep.subr.bf16.mxu0 %v4776
        %6047 = vmatpush2.bf16.msra.mxu0 %v4775
        %6048 = vmatprep.subr.bf16.mxu0 %v4768
        %6049 = vmatpush2.bf16.msra.mxu0 %v4767
        %6050 = vmatprep.subr.bf16.mxu0 %v4760
        %6051 = vmatpush2.bf16.msra.mxu0 %v4759
        %6052 = vmatprep.subr.bf16.mxu0 %v4752
        %6053 = vmatpush2.bf16.msra.mxu0 %v4751
        %6054 = vmatprep.subr.bf16.mxu0 %v4744
        %6055 = vmatpush2.bf16.msra.mxu0 %v4743
        %6056 = vmatprep.subr.bf16.mxu0 %v4736
        %6057 = vmatpush2.bf16.msra.mxu0 %v4735
        %6058 = vmatprep.subr.bf16.mxu0 %v4728
        %6059 = vmatpush2.bf16.msra.mxu0 %v4727
        %6060 = vmatprep.mubr.bf16.mxu0 %v2349
        %6061 = vmatmul.mubr.bf16.gmra.mxu0 %v2348
        %v6062 = vpop.f32.mrf.mxu0
        %v6063 = vadd.f32 0.0, %v6062
        %v6064 = vpop.f32.mrf.mxu0
        %v6065 = vadd.f32 0.0, %v6064
        %v6066 = vpop.f32.mrf.mxu0
        %v6067 = vadd.f32 0.0, %v6066
        %v6068 = vpop.f32.mrf.mxu0
        %v6069 = vadd.f32 0.0, %v6068
        %6070 = vdwg.mxu0
        %6071 = vmatprep.subr.bf16.mxu0 %v4848
        %6072 = vmatpush1.bf16.msra.mxu0 %v4847
        %6073 = vmatprep.subr.bf16.mxu0 %v4840
        %6074 = vmatpush1.bf16.msra.mxu0 %v4839
        %6075 = vmatprep.subr.bf16.mxu0 %v4832
        %6076 = vmatpush1.bf16.msra.mxu0 %v4831
        %6077 = vmatprep.subr.bf16.mxu0 %v4824
        %6078 = vmatpush1.bf16.msra.mxu0 %v4823
        %6079 = vmatprep.subr.bf16.mxu0 %v4816
        %6080 = vmatpush1.bf16.msra.mxu0 %v4815
        %6081 = vmatprep.subr.bf16.mxu0 %v4808
        %6082 = vmatpush1.bf16.msra.mxu0 %v4807
        %6083 = vmatprep.subr.bf16.mxu0 %v4800
        %6084 = vmatpush1.bf16.msra.mxu0 %v4799
        %6085 = vmatprep.subr.bf16.mxu0 %v4792
        %6086 = vmatpush1.bf16.msra.mxu0 %v4791
        %6087 = vmatprep.subr.bf16.mxu0 %v4912
        %6088 = vmatpush2.bf16.msra.mxu0 %v4911
        %6089 = vmatprep.subr.bf16.mxu0 %v4904
        %6090 = vmatpush2.bf16.msra.mxu0 %v4903
        %6091 = vmatprep.subr.bf16.mxu0 %v4896
        %6092 = vmatpush2.bf16.msra.mxu0 %v4895
        %6093 = vmatprep.subr.bf16.mxu0 %v4888
        %6094 = vmatpush2.bf16.msra.mxu0 %v4887
        %6095 = vmatprep.subr.bf16.mxu0 %v4880
        %6096 = vmatpush2.bf16.msra.mxu0 %v4879
        %6097 = vmatprep.subr.bf16.mxu0 %v4872
        %6098 = vmatpush2.bf16.msra.mxu0 %v4871
        %6099 = vmatprep.subr.bf16.mxu0 %v4864
        %6100 = vmatpush2.bf16.msra.mxu0 %v4863
        %6101 = vmatprep.subr.bf16.mxu0 %v4856
        %6102 = vmatpush2.bf16.msra.mxu0 %v4855
        %6103 = vmatprep.mubr.bf16.mxu0 %v2351
        %6104 = vmatmul.mubr.bf16.gmra.mxu0 %v2350
        %v6105 = vpop.f32.mrf.mxu0
        %v6106 = vadd.f32 %v6063, %v6105
        %v6107 = vpop.f32.mrf.mxu0
        %v6108 = vadd.f32 %v6065, %v6107
        %v6109 = vpop.f32.mrf.mxu0
        %v6110 = vadd.f32 %v6067, %v6109
        %v6111 = vpop.f32.mrf.mxu0
        %v6112 = vadd.f32 %v6069, %v6111
        %6113 = vdwg.mxu0
        %6114 = vmatprep.subr.bf16.mxu0 %v4976
        %6115 = vmatpush1.bf16.msra.mxu0 %v4975
        %6116 = vmatprep.subr.bf16.mxu0 %v4968
        %6117 = vmatpush1.bf16.msra.mxu0 %v4967
        %6118 = vmatprep.subr.bf16.mxu0 %v4960
        %6119 = vmatpush1.bf16.msra.mxu0 %v4959
        %6120 = vmatprep.subr.bf16.mxu0 %v4952
        %6121 = vmatpush1.bf16.msra.mxu0 %v4951
        %6122 = vmatprep.subr.bf16.mxu0 %v4944
        %6123 = vmatpush1.bf16.msra.mxu0 %v4943
        %6124 = vmatprep.subr.bf16.mxu0 %v4936
        %6125 = vmatpush1.bf16.msra.mxu0 %v4935
        %6126 = vmatprep.subr.bf16.mxu0 %v4928
        %6127 = vmatpush1.bf16.msra.mxu0 %v4927
        %6128 = vmatprep.subr.bf16.mxu0 %v4920
        %6129 = vmatpush1.bf16.msra.mxu0 %v4919
        %6130 = vmatprep.subr.bf16.mxu0 %v5040
        %6131 = vmatpush2.bf16.msra.mxu0 %v5039
        %6132 = vmatprep.subr.bf16.mxu0 %v5032
        %6133 = vmatpush2.bf16.msra.mxu0 %v5031
        %6134 = vmatprep.subr.bf16.mxu0 %v5024
        %6135 = vmatpush2.bf16.msra.mxu0 %v5023
        %6136 = vmatprep.subr.bf16.mxu0 %v5016
        %6137 = vmatpush2.bf16.msra.mxu0 %v5015
        %6138 = vmatprep.subr.bf16.mxu0 %v5008
        %6139 = vmatpush2.bf16.msra.mxu0 %v5007
        %6140 = vmatprep.subr.bf16.mxu0 %v5000
        %6141 = vmatpush2.bf16.msra.mxu0 %v4999
        %6142 = vmatprep.subr.bf16.mxu0 %v4992
        %6143 = vmatpush2.bf16.msra.mxu0 %v4991
        %6144 = vmatprep.subr.bf16.mxu0 %v4984
        %6145 = vmatpush2.bf16.msra.mxu0 %v4983
        %6146 = vmatprep.mubr.bf16.mxu0 %v2353
        %6147 = vmatmul.mubr.bf16.gmra.mxu0 %v2352
        %v6148 = vpop.f32.mrf.mxu0
        %v6149 = vadd.f32 %v6106, %v6148
        %v6150 = vpop.f32.mrf.mxu0
        %v6151 = vadd.f32 %v6108, %v6150
        %v6152 = vpop.f32.mrf.mxu0
        %v6153 = vadd.f32 %v6110, %v6152
        %v6154 = vpop.f32.mrf.mxu0
        %v6155 = vadd.f32 %v6112, %v6154
        %6156 = vdwg.mxu0
        %6157 = vmatprep.subr.bf16.mxu0 %v5104
        %6158 = vmatpush1.bf16.msra.mxu0 %v5103
        %6159 = vmatprep.subr.bf16.mxu0 %v5096
        %6160 = vmatpush1.bf16.msra.mxu0 %v5095
        %6161 = vmatprep.subr.bf16.mxu0 %v5088
        %6162 = vmatpush1.bf16.msra.mxu0 %v5087
        %6163 = vmatprep.subr.bf16.mxu0 %v5080
        %6164 = vmatpush1.bf16.msra.mxu0 %v5079
        %6165 = vmatprep.subr.bf16.mxu0 %v5072
        %6166 = vmatpush1.bf16.msra.mxu0 %v5071
        %6167 = vmatprep.subr.bf16.mxu0 %v5064
        %6168 = vmatpush1.bf16.msra.mxu0 %v5063
        %6169 = vmatprep.subr.bf16.mxu0 %v5056
        %6170 = vmatpush1.bf16.msra.mxu0 %v5055
        %6171 = vmatprep.subr.bf16.mxu0 %v5048
        %6172 = vmatpush1.bf16.msra.mxu0 %v5047
        %6173 = vmatprep.subr.bf16.mxu0 %v5168
        %6174 = vmatpush2.bf16.msra.mxu0 %v5167
        %6175 = vmatprep.subr.bf16.mxu0 %v5160
        %6176 = vmatpush2.bf16.msra.mxu0 %v5159
        %6177 = vmatprep.subr.bf16.mxu0 %v5152
        %6178 = vmatpush2.bf16.msra.mxu0 %v5151
        %6179 = vmatprep.subr.bf16.mxu0 %v5144
        %6180 = vmatpush2.bf16.msra.mxu0 %v5143
        %6181 = vmatprep.subr.bf16.mxu0 %v5136
        %6182 = vmatpush2.bf16.msra.mxu0 %v5135
        %6183 = vmatprep.subr.bf16.mxu0 %v5128
        %6184 = vmatpush2.bf16.msra.mxu0 %v5127
        %6185 = vmatprep.subr.bf16.mxu0 %v5120
        %6186 = vmatpush2.bf16.msra.mxu0 %v5119
        %6187 = vmatprep.subr.bf16.mxu0 %v5112
        %6188 = vmatpush2.bf16.msra.mxu0 %v5111
        %6189 = vmatprep.mubr.bf16.mxu0 %v2355
        %6190 = vmatmul.mubr.bf16.gmra.mxu0 %v2354
        %v6191 = vpop.f32.mrf.mxu0
        %v6192 = vadd.f32 %v6149, %v6191
        %v6193 = vpop.f32.mrf.mxu0
        %v6194 = vadd.f32 %v6151, %v6193
        %v6195 = vpop.f32.mrf.mxu0
        %v6196 = vadd.f32 %v6153, %v6195
        %v6197 = vpop.f32.mrf.mxu0
        %v6198 = vadd.f32 %v6155, %v6197
        %6199 = vdwg.mxu0
        %6200 = vmatprep.subr.bf16.mxu0 %v5232
        %6201 = vmatpush1.bf16.msra.mxu0 %v5231
        %6202 = vmatprep.subr.bf16.mxu0 %v5224
        %6203 = vmatpush1.bf16.msra.mxu0 %v5223
        %6204 = vmatprep.subr.bf16.mxu0 %v5216
        %6205 = vmatpush1.bf16.msra.mxu0 %v5215
        %6206 = vmatprep.subr.bf16.mxu0 %v5208
        %6207 = vmatpush1.bf16.msra.mxu0 %v5207
        %6208 = vmatprep.subr.bf16.mxu0 %v5200
        %6209 = vmatpush1.bf16.msra.mxu0 %v5199
        %6210 = vmatprep.subr.bf16.mxu0 %v5192
        %6211 = vmatpush1.bf16.msra.mxu0 %v5191
        %6212 = vmatprep.subr.bf16.mxu0 %v5184
        %6213 = vmatpush1.bf16.msra.mxu0 %v5183
        %6214 = vmatprep.subr.bf16.mxu0 %v5176
        %6215 = vmatpush1.bf16.msra.mxu0 %v5175
        %6216 = vmatprep.subr.bf16.mxu0 0
        %6217 = vmatpush2.bf16.msra.mxu0 0
        %6218 = vmatprep.subr.bf16.mxu0 0
        %6219 = vmatpush2.bf16.msra.mxu0 0
        %6220 = vmatprep.subr.bf16.mxu0 0
        %6221 = vmatpush2.bf16.msra.mxu0 0
        %6222 = vmatprep.subr.bf16.mxu0 0
        %6223 = vmatpush2.bf16.msra.mxu0 0
        %6224 = vmatprep.subr.bf16.mxu0 0
        %6225 = vmatpush2.bf16.msra.mxu0 0
        %6226 = vmatprep.subr.bf16.mxu0 0
        %6227 = vmatpush2.bf16.msra.mxu0 0
        %6228 = vmatprep.subr.bf16.mxu0 0
        %6229 = vmatpush2.bf16.msra.mxu0 0
        %6230 = vmatprep.subr.bf16.mxu0 0
        %6231 = vmatpush2.bf16.msra.mxu0 0
        %6232 = vmatprep.mubr.bf16.mxu0 0
        %6233 = vmatmul.mubr.bf16.gmra.mxu0 %v2356
        %v6234 = vpop.f32.mrf.mxu0
        %v6235 = vadd.f32 %v6192, %v6234
        %v6236 = vpop.f32.mrf.mxu0
        %v6237 = vadd.f32 %v6194, %v6236
        %v6238 = vpop.f32.mrf.mxu0
        %v6239 = vadd.f32 %v6196, %v6238
        %v6240 = vpop.f32.mrf.mxu0
        %v6241 = vadd.f32 %v6198, %v6240
        %6242 = vdwg.mxu0
        %6243 = vmatprep.subr.bf16.mxu0 %v4722
        %6244 = vmatpush1.bf16.msra.mxu0 %v4721
        %6245 = vmatprep.subr.bf16.mxu0 %v4714
        %6246 = vmatpush1.bf16.msra.mxu0 %v4713
        %6247 = vmatprep.subr.bf16.mxu0 %v4706
        %6248 = vmatpush1.bf16.msra.mxu0 %v4705
        %6249 = vmatprep.subr.bf16.mxu0 %v4698
        %6250 = vmatpush1.bf16.msra.mxu0 %v4697
        %6251 = vmatprep.subr.bf16.mxu0 %v4690
        %6252 = vmatpush1.bf16.msra.mxu0 %v4689
        %6253 = vmatprep.subr.bf16.mxu0 %v4682
        %6254 = vmatpush1.bf16.msra.mxu0 %v4681
        %6255 = vmatprep.subr.bf16.mxu0 %v4674
        %6256 = vmatpush1.bf16.msra.mxu0 %v4673
        %6257 = vmatprep.subr.bf16.mxu0 %v4666
        %6258 = vmatpush1.bf16.msra.mxu0 %v4665
        %6259 = vmatprep.subr.bf16.mxu0 %v4786
        %6260 = vmatpush2.bf16.msra.mxu0 %v4785
        %6261 = vmatprep.subr.bf16.mxu0 %v4778
        %6262 = vmatpush2.bf16.msra.mxu0 %v4777
        %6263 = vmatprep.subr.bf16.mxu0 %v4770
        %6264 = vmatpush2.bf16.msra.mxu0 %v4769
        %6265 = vmatprep.subr.bf16.mxu0 %v4762
        %6266 = vmatpush2.bf16.msra.mxu0 %v4761
        %6267 = vmatprep.subr.bf16.mxu0 %v4754
        %6268 = vmatpush2.bf16.msra.mxu0 %v4753
        %6269 = vmatprep.subr.bf16.mxu0 %v4746
        %6270 = vmatpush2.bf16.msra.mxu0 %v4745
        %6271 = vmatprep.subr.bf16.mxu0 %v4738
        %6272 = vmatpush2.bf16.msra.mxu0 %v4737
        %6273 = vmatprep.subr.bf16.mxu0 %v4730
        %6274 = vmatpush2.bf16.msra.mxu0 %v4729
        %6275 = vmatprep.mubr.bf16.mxu0 %v2349
        %6276 = vmatmul.mubr.bf16.gmra.mxu0 %v2348
        %v6277 = vpop.f32.mrf.mxu0
        %v6278 = vadd.f32 0.0, %v6277
        %v6279 = vpop.f32.mrf.mxu0
        %v6280 = vadd.f32 0.0, %v6279
        %v6281 = vpop.f32.mrf.mxu0
        %v6282 = vadd.f32 0.0, %v6281
        %v6283 = vpop.f32.mrf.mxu0
        %v6284 = vadd.f32 0.0, %v6283
        %6285 = vdwg.mxu0
        %6286 = vmatprep.subr.bf16.mxu0 %v4850
        %6287 = vmatpush1.bf16.msra.mxu0 %v4849
        %6288 = vmatprep.subr.bf16.mxu0 %v4842
        %6289 = vmatpush1.bf16.msra.mxu0 %v4841
        %6290 = vmatprep.subr.bf16.mxu0 %v4834
        %6291 = vmatpush1.bf16.msra.mxu0 %v4833
        %6292 = vmatprep.subr.bf16.mxu0 %v4826
        %6293 = vmatpush1.bf16.msra.mxu0 %v4825
        %6294 = vmatprep.subr.bf16.mxu0 %v4818
        %6295 = vmatpush1.bf16.msra.mxu0 %v4817
        %6296 = vmatprep.subr.bf16.mxu0 %v4810
        %6297 = vmatpush1.bf16.msra.mxu0 %v4809
        %6298 = vmatprep.subr.bf16.mxu0 %v4802
        %6299 = vmatpush1.bf16.msra.mxu0 %v4801
        %6300 = vmatprep.subr.bf16.mxu0 %v4794
        %6301 = vmatpush1.bf16.msra.mxu0 %v4793
        %6302 = vmatprep.subr.bf16.mxu0 %v4914
        %6303 = vmatpush2.bf16.msra.mxu0 %v4913
        %6304 = vmatprep.subr.bf16.mxu0 %v4906
        %6305 = vmatpush2.bf16.msra.mxu0 %v4905
        %6306 = vmatprep.subr.bf16.mxu0 %v4898
        %6307 = vmatpush2.bf16.msra.mxu0 %v4897
        %6308 = vmatprep.subr.bf16.mxu0 %v4890
        %6309 = vmatpush2.bf16.msra.mxu0 %v4889
        %6310 = vmatprep.subr.bf16.mxu0 %v4882
        %6311 = vmatpush2.bf16.msra.mxu0 %v4881
        %6312 = vmatprep.subr.bf16.mxu0 %v4874
        %6313 = vmatpush2.bf16.msra.mxu0 %v4873
        %6314 = vmatprep.subr.bf16.mxu0 %v4866
        %6315 = vmatpush2.bf16.msra.mxu0 %v4865
        %6316 = vmatprep.subr.bf16.mxu0 %v4858
        %6317 = vmatpush2.bf16.msra.mxu0 %v4857
        %6318 = vmatprep.mubr.bf16.mxu0 %v2351
        %6319 = vmatmul.mubr.bf16.gmra.mxu0 %v2350
        %v6320 = vpop.f32.mrf.mxu0
        %v6321 = vadd.f32 %v6278, %v6320
        %v6322 = vpop.f32.mrf.mxu0
        %v6323 = vadd.f32 %v6280, %v6322
        %v6324 = vpop.f32.mrf.mxu0
        %v6325 = vadd.f32 %v6282, %v6324
        %v6326 = vpop.f32.mrf.mxu0
        %v6327 = vadd.f32 %v6284, %v6326
        %6328 = vdwg.mxu0
        %6329 = vmatprep.subr.bf16.mxu0 %v4978
        %6330 = vmatpush1.bf16.msra.mxu0 %v4977
        %6331 = vmatprep.subr.bf16.mxu0 %v4970
        %6332 = vmatpush1.bf16.msra.mxu0 %v4969
        %6333 = vmatprep.subr.bf16.mxu0 %v4962
        %6334 = vmatpush1.bf16.msra.mxu0 %v4961
        %6335 = vmatprep.subr.bf16.mxu0 %v4954
        %6336 = vmatpush1.bf16.msra.mxu0 %v4953
        %6337 = vmatprep.subr.bf16.mxu0 %v4946
        %6338 = vmatpush1.bf16.msra.mxu0 %v4945
        %6339 = vmatprep.subr.bf16.mxu0 %v4938
        %6340 = vmatpush1.bf16.msra.mxu0 %v4937
        %6341 = vmatprep.subr.bf16.mxu0 %v4930
        %6342 = vmatpush1.bf16.msra.mxu0 %v4929
        %6343 = vmatprep.subr.bf16.mxu0 %v4922
        %6344 = vmatpush1.bf16.msra.mxu0 %v4921
        %6345 = vmatprep.subr.bf16.mxu0 %v5042
        %6346 = vmatpush2.bf16.msra.mxu0 %v5041
        %6347 = vmatprep.subr.bf16.mxu0 %v5034
        %6348 = vmatpush2.bf16.msra.mxu0 %v5033
        %6349 = vmatprep.subr.bf16.mxu0 %v5026
        %6350 = vmatpush2.bf16.msra.mxu0 %v5025
        %6351 = vmatprep.subr.bf16.mxu0 %v5018
        %6352 = vmatpush2.bf16.msra.mxu0 %v5017
        %6353 = vmatprep.subr.bf16.mxu0 %v5010
        %6354 = vmatpush2.bf16.msra.mxu0 %v5009
        %6355 = vmatprep.subr.bf16.mxu0 %v5002
        %6356 = vmatpush2.bf16.msra.mxu0 %v5001
        %6357 = vmatprep.subr.bf16.mxu0 %v4994
        %6358 = vmatpush2.bf16.msra.mxu0 %v4993
        %6359 = vmatprep.subr.bf16.mxu0 %v4986
        %6360 = vmatpush2.bf16.msra.mxu0 %v4985
        %6361 = vmatprep.mubr.bf16.mxu0 %v2353
        %6362 = vmatmul.mubr.bf16.gmra.mxu0 %v2352
        %v6363 = vpop.f32.mrf.mxu0
        %v6364 = vadd.f32 %v6321, %v6363
        %v6365 = vpop.f32.mrf.mxu0
        %v6366 = vadd.f32 %v6323, %v6365
        %v6367 = vpop.f32.mrf.mxu0
        %v6368 = vadd.f32 %v6325, %v6367
        %v6369 = vpop.f32.mrf.mxu0
        %v6370 = vadd.f32 %v6327, %v6369
        %6371 = vdwg.mxu0
        %6372 = vmatprep.subr.bf16.mxu0 %v5106
        %6373 = vmatpush1.bf16.msra.mxu0 %v5105
        %6374 = vmatprep.subr.bf16.mxu0 %v5098
        %6375 = vmatpush1.bf16.msra.mxu0 %v5097
        %6376 = vmatprep.subr.bf16.mxu0 %v5090
        %6377 = vmatpush1.bf16.msra.mxu0 %v5089
        %6378 = vmatprep.subr.bf16.mxu0 %v5082
        %6379 = vmatpush1.bf16.msra.mxu0 %v5081
        %6380 = vmatprep.subr.bf16.mxu0 %v5074
        %6381 = vmatpush1.bf16.msra.mxu0 %v5073
        %6382 = vmatprep.subr.bf16.mxu0 %v5066
        %6383 = vmatpush1.bf16.msra.mxu0 %v5065
        %6384 = vmatprep.subr.bf16.mxu0 %v5058
        %6385 = vmatpush1.bf16.msra.mxu0 %v5057
        %6386 = vmatprep.subr.bf16.mxu0 %v5050
        %6387 = vmatpush1.bf16.msra.mxu0 %v5049
        %6388 = vmatprep.subr.bf16.mxu0 %v5170
        %6389 = vmatpush2.bf16.msra.mxu0 %v5169
        %6390 = vmatprep.subr.bf16.mxu0 %v5162
        %6391 = vmatpush2.bf16.msra.mxu0 %v5161
        %6392 = vmatprep.subr.bf16.mxu0 %v5154
        %6393 = vmatpush2.bf16.msra.mxu0 %v5153
        %6394 = vmatprep.subr.bf16.mxu0 %v5146
        %6395 = vmatpush2.bf16.msra.mxu0 %v5145
        %6396 = vmatprep.subr.bf16.mxu0 %v5138
        %6397 = vmatpush2.bf16.msra.mxu0 %v5137
        %6398 = vmatprep.subr.bf16.mxu0 %v5130
        %6399 = vmatpush2.bf16.msra.mxu0 %v5129
        %6400 = vmatprep.subr.bf16.mxu0 %v5122
        %6401 = vmatpush2.bf16.msra.mxu0 %v5121
        %6402 = vmatprep.subr.bf16.mxu0 %v5114
        %6403 = vmatpush2.bf16.msra.mxu0 %v5113
        %6404 = vmatprep.mubr.bf16.mxu0 %v2355
        %6405 = vmatmul.mubr.bf16.gmra.mxu0 %v2354
        %v6406 = vpop.f32.mrf.mxu0
        %v6407 = vadd.f32 %v6364, %v6406
        %v6408 = vpop.f32.mrf.mxu0
        %v6409 = vadd.f32 %v6366, %v6408
        %v6410 = vpop.f32.mrf.mxu0
        %v6411 = vadd.f32 %v6368, %v6410
        %v6412 = vpop.f32.mrf.mxu0
        %v6413 = vadd.f32 %v6370, %v6412
        %6414 = vdwg.mxu0
        %6415 = vmatprep.subr.bf16.mxu0 %v5234
        %6416 = vmatpush1.bf16.msra.mxu0 %v5233
        %6417 = vmatprep.subr.bf16.mxu0 %v5226
        %6418 = vmatpush1.bf16.msra.mxu0 %v5225
        %6419 = vmatprep.subr.bf16.mxu0 %v5218
        %6420 = vmatpush1.bf16.msra.mxu0 %v5217
        %6421 = vmatprep.subr.bf16.mxu0 %v5210
        %6422 = vmatpush1.bf16.msra.mxu0 %v5209
        %6423 = vmatprep.subr.bf16.mxu0 %v5202
        %6424 = vmatpush1.bf16.msra.mxu0 %v5201
        %6425 = vmatprep.subr.bf16.mxu0 %v5194
        %6426 = vmatpush1.bf16.msra.mxu0 %v5193
        %6427 = vmatprep.subr.bf16.mxu0 %v5186
        %6428 = vmatpush1.bf16.msra.mxu0 %v5185
        %6429 = vmatprep.subr.bf16.mxu0 %v5178
        %6430 = vmatpush1.bf16.msra.mxu0 %v5177
        %6431 = vmatprep.subr.bf16.mxu0 0
        %6432 = vmatpush2.bf16.msra.mxu0 0
        %6433 = vmatprep.subr.bf16.mxu0 0
        %6434 = vmatpush2.bf16.msra.mxu0 0
        %6435 = vmatprep.subr.bf16.mxu0 0
        %6436 = vmatpush2.bf16.msra.mxu0 0
        %6437 = vmatprep.subr.bf16.mxu0 0
        %6438 = vmatpush2.bf16.msra.mxu0 0
        %6439 = vmatprep.subr.bf16.mxu0 0
        %6440 = vmatpush2.bf16.msra.mxu0 0
        %6441 = vmatprep.subr.bf16.mxu0 0
        %6442 = vmatpush2.bf16.msra.mxu0 0
        %6443 = vmatprep.subr.bf16.mxu0 0
        %6444 = vmatpush2.bf16.msra.mxu0 0
        %6445 = vmatprep.subr.bf16.mxu0 0
        %6446 = vmatpush2.bf16.msra.mxu0 0
        %6447 = vmatprep.mubr.bf16.mxu0 0
        %6448 = vmatmul.mubr.bf16.gmra.mxu0 %v2356
        %v6449 = vpop.f32.mrf.mxu0
        %v6450 = vadd.f32 %v6407, %v6449
        %v6451 = vpop.f32.mrf.mxu0
        %v6452 = vadd.f32 %v6409, %v6451
        %v6453 = vpop.f32.mrf.mxu0
        %v6454 = vadd.f32 %v6411, %v6453
        %v6455 = vpop.f32.mrf.mxu0
        %v6456 = vadd.f32 %v6413, %v6455
        %6457 = vdwg.mxu0
        %6458 = vmatprep.subr.bf16.mxu0 %v4724
        %6459 = vmatpush1.bf16.msra.mxu0 %v4723
        %6460 = vmatprep.subr.bf16.mxu0 %v4716
        %6461 = vmatpush1.bf16.msra.mxu0 %v4715
        %6462 = vmatprep.subr.bf16.mxu0 %v4708
        %6463 = vmatpush1.bf16.msra.mxu0 %v4707
        %6464 = vmatprep.subr.bf16.mxu0 %v4700
        %6465 = vmatpush1.bf16.msra.mxu0 %v4699
        %6466 = vmatprep.subr.bf16.mxu0 %v4692
        %6467 = vmatpush1.bf16.msra.mxu0 %v4691
        %6468 = vmatprep.subr.bf16.mxu0 %v4684
        %6469 = vmatpush1.bf16.msra.mxu0 %v4683
        %6470 = vmatprep.subr.bf16.mxu0 %v4676
        %6471 = vmatpush1.bf16.msra.mxu0 %v4675
        %6472 = vmatprep.subr.bf16.mxu0 %v4668
        %6473 = vmatpush1.bf16.msra.mxu0 %v4667
        %6474 = vmatprep.subr.bf16.mxu0 %v4788
        %6475 = vmatpush2.bf16.msra.mxu0 %v4787
        %6476 = vmatprep.subr.bf16.mxu0 %v4780
        %6477 = vmatpush2.bf16.msra.mxu0 %v4779
        %6478 = vmatprep.subr.bf16.mxu0 %v4772
        %6479 = vmatpush2.bf16.msra.mxu0 %v4771
        %6480 = vmatprep.subr.bf16.mxu0 %v4764
        %6481 = vmatpush2.bf16.msra.mxu0 %v4763
        %6482 = vmatprep.subr.bf16.mxu0 %v4756
        %6483 = vmatpush2.bf16.msra.mxu0 %v4755
        %6484 = vmatprep.subr.bf16.mxu0 %v4748
        %6485 = vmatpush2.bf16.msra.mxu0 %v4747
        %6486 = vmatprep.subr.bf16.mxu0 %v4740
        %6487 = vmatpush2.bf16.msra.mxu0 %v4739
        %6488 = vmatprep.subr.bf16.mxu0 %v4732
        %6489 = vmatpush2.bf16.msra.mxu0 %v4731
        %6490 = vmatprep.mubr.bf16.mxu0 %v2349
        %6491 = vmatmul.mubr.bf16.gmra.mxu0 %v2348
        %v6492 = vpop.f32.mrf.mxu0
        %v6493 = vadd.f32 0.0, %v6492
        %v6494 = vpop.f32.mrf.mxu0
        %v6495 = vadd.f32 0.0, %v6494
        %v6496 = vpop.f32.mrf.mxu0
        %v6497 = vadd.f32 0.0, %v6496
        %v6498 = vpop.f32.mrf.mxu0
        %v6499 = vadd.f32 0.0, %v6498
        %6500 = vdwg.mxu0
        %6501 = vmatprep.subr.bf16.mxu0 %v4852
        %6502 = vmatpush1.bf16.msra.mxu0 %v4851
        %6503 = vmatprep.subr.bf16.mxu0 %v4844
        %6504 = vmatpush1.bf16.msra.mxu0 %v4843
        %6505 = vmatprep.subr.bf16.mxu0 %v4836
        %6506 = vmatpush1.bf16.msra.mxu0 %v4835
        %6507 = vmatprep.subr.bf16.mxu0 %v4828
        %6508 = vmatpush1.bf16.msra.mxu0 %v4827
        %6509 = vmatprep.subr.bf16.mxu0 %v4820
        %6510 = vmatpush1.bf16.msra.mxu0 %v4819
        %6511 = vmatprep.subr.bf16.mxu0 %v4812
        %6512 = vmatpush1.bf16.msra.mxu0 %v4811
        %6513 = vmatprep.subr.bf16.mxu0 %v4804
        %6514 = vmatpush1.bf16.msra.mxu0 %v4803
        %6515 = vmatprep.subr.bf16.mxu0 %v4796
        %6516 = vmatpush1.bf16.msra.mxu0 %v4795
        %6517 = vmatprep.subr.bf16.mxu0 %v4916
        %6518 = vmatpush2.bf16.msra.mxu0 %v4915
        %6519 = vmatprep.subr.bf16.mxu0 %v4908
        %6520 = vmatpush2.bf16.msra.mxu0 %v4907
        %6521 = vmatprep.subr.bf16.mxu0 %v4900
        %6522 = vmatpush2.bf16.msra.mxu0 %v4899
        %6523 = vmatprep.subr.bf16.mxu0 %v4892
        %6524 = vmatpush2.bf16.msra.mxu0 %v4891
        %6525 = vmatprep.subr.bf16.mxu0 %v4884
        %6526 = vmatpush2.bf16.msra.mxu0 %v4883
        %6527 = vmatprep.subr.bf16.mxu0 %v4876
        %6528 = vmatpush2.bf16.msra.mxu0 %v4875
        %6529 = vmatprep.subr.bf16.mxu0 %v4868
        %6530 = vmatpush2.bf16.msra.mxu0 %v4867
        %6531 = vmatprep.subr.bf16.mxu0 %v4860
        %6532 = vmatpush2.bf16.msra.mxu0 %v4859
        %6533 = vmatprep.mubr.bf16.mxu0 %v2351
        %6534 = vmatmul.mubr.bf16.gmra.mxu0 %v2350
        %v6535 = vpop.f32.mrf.mxu0
        %v6536 = vadd.f32 %v6493, %v6535
        %v6537 = vpop.f32.mrf.mxu0
        %v6538 = vadd.f32 %v6495, %v6537
        %v6539 = vpop.f32.mrf.mxu0
        %v6540 = vadd.f32 %v6497, %v6539
        %v6541 = vpop.f32.mrf.mxu0
        %v6542 = vadd.f32 %v6499, %v6541
        %6543 = vdwg.mxu0
        %6544 = vmatprep.subr.bf16.mxu0 %v4980
        %6545 = vmatpush1.bf16.msra.mxu0 %v4979
        %6546 = vmatprep.subr.bf16.mxu0 %v4972
        %6547 = vmatpush1.bf16.msra.mxu0 %v4971
        %6548 = vmatprep.subr.bf16.mxu0 %v4964
        %6549 = vmatpush1.bf16.msra.mxu0 %v4963
        %6550 = vmatprep.subr.bf16.mxu0 %v4956
        %6551 = vmatpush1.bf16.msra.mxu0 %v4955
        %6552 = vmatprep.subr.bf16.mxu0 %v4948
        %6553 = vmatpush1.bf16.msra.mxu0 %v4947
        %6554 = vmatprep.subr.bf16.mxu0 %v4940
        %6555 = vmatpush1.bf16.msra.mxu0 %v4939
        %6556 = vmatprep.subr.bf16.mxu0 %v4932
        %6557 = vmatpush1.bf16.msra.mxu0 %v4931
        %6558 = vmatprep.subr.bf16.mxu0 %v4924
        %6559 = vmatpush1.bf16.msra.mxu0 %v4923
        %6560 = vmatprep.subr.bf16.mxu0 %v5044
        %6561 = vmatpush2.bf16.msra.mxu0 %v5043
        %6562 = vmatprep.subr.bf16.mxu0 %v5036
        %6563 = vmatpush2.bf16.msra.mxu0 %v5035
        %6564 = vmatprep.subr.bf16.mxu0 %v5028
        %6565 = vmatpush2.bf16.msra.mxu0 %v5027
        %6566 = vmatprep.subr.bf16.mxu0 %v5020
        %6567 = vmatpush2.bf16.msra.mxu0 %v5019
        %6568 = vmatprep.subr.bf16.mxu0 %v5012
        %6569 = vmatpush2.bf16.msra.mxu0 %v5011
        %6570 = vmatprep.subr.bf16.mxu0 %v5004
        %6571 = vmatpush2.bf16.msra.mxu0 %v5003
        %6572 = vmatprep.subr.bf16.mxu0 %v4996
        %6573 = vmatpush2.bf16.msra.mxu0 %v4995
        %6574 = vmatprep.subr.bf16.mxu0 %v4988
        %6575 = vmatpush2.bf16.msra.mxu0 %v4987
        %6576 = vmatprep.mubr.bf16.mxu0 %v2353
        %6577 = vmatmul.mubr.bf16.gmra.mxu0 %v2352
        %v6578 = vpop.f32.mrf.mxu0
        %v6579 = vadd.f32 %v6536, %v6578
        %v6580 = vpop.f32.mrf.mxu0
        %v6581 = vadd.f32 %v6538, %v6580
        %v6582 = vpop.f32.mrf.mxu0
        %v6583 = vadd.f32 %v6540, %v6582
        %v6584 = vpop.f32.mrf.mxu0
        %v6585 = vadd.f32 %v6542, %v6584
        %6586 = vdwg.mxu0
        %6587 = vmatprep.subr.bf16.mxu0 %v5108
        %6588 = vmatpush1.bf16.msra.mxu0 %v5107
        %6589 = vmatprep.subr.bf16.mxu0 %v5100
        %6590 = vmatpush1.bf16.msra.mxu0 %v5099
        %6591 = vmatprep.subr.bf16.mxu0 %v5092
        %6592 = vmatpush1.bf16.msra.mxu0 %v5091
        %6593 = vmatprep.subr.bf16.mxu0 %v5084
        %6594 = vmatpush1.bf16.msra.mxu0 %v5083
        %6595 = vmatprep.subr.bf16.mxu0 %v5076
        %6596 = vmatpush1.bf16.msra.mxu0 %v5075
        %6597 = vmatprep.subr.bf16.mxu0 %v5068
        %6598 = vmatpush1.bf16.msra.mxu0 %v5067
        %6599 = vmatprep.subr.bf16.mxu0 %v5060
        %6600 = vmatpush1.bf16.msra.mxu0 %v5059
        %6601 = vmatprep.subr.bf16.mxu0 %v5052
        %6602 = vmatpush1.bf16.msra.mxu0 %v5051
        %6603 = vmatprep.subr.bf16.mxu0 %v5172
        %6604 = vmatpush2.bf16.msra.mxu0 %v5171
        %6605 = vmatprep.subr.bf16.mxu0 %v5164
        %6606 = vmatpush2.bf16.msra.mxu0 %v5163
        %6607 = vmatprep.subr.bf16.mxu0 %v5156
        %6608 = vmatpush2.bf16.msra.mxu0 %v5155
        %6609 = vmatprep.subr.bf16.mxu0 %v5148
        %6610 = vmatpush2.bf16.msra.mxu0 %v5147
        %6611 = vmatprep.subr.bf16.mxu0 %v5140
        %6612 = vmatpush2.bf16.msra.mxu0 %v5139
        %6613 = vmatprep.subr.bf16.mxu0 %v5132
        %6614 = vmatpush2.bf16.msra.mxu0 %v5131
        %6615 = vmatprep.subr.bf16.mxu0 %v5124
        %6616 = vmatpush2.bf16.msra.mxu0 %v5123
        %6617 = vmatprep.subr.bf16.mxu0 %v5116
        %6618 = vmatpush2.bf16.msra.mxu0 %v5115
        %6619 = vmatprep.mubr.bf16.mxu0 %v2355
        %6620 = vmatmul.mubr.bf16.gmra.mxu0 %v2354
        %v6621 = vpop.f32.mrf.mxu0
        %v6622 = vadd.f32 %v6579, %v6621
        %v6623 = vpop.f32.mrf.mxu0
        %v6624 = vadd.f32 %v6581, %v6623
        %v6625 = vpop.f32.mrf.mxu0
        %v6626 = vadd.f32 %v6583, %v6625
        %v6627 = vpop.f32.mrf.mxu0
        %v6628 = vadd.f32 %v6585, %v6627
        %6629 = vdwg.mxu0
        %6630 = vmatprep.subr.bf16.mxu0 %v5236
        %6631 = vmatpush1.bf16.msra.mxu0 %v5235
        %6632 = vmatprep.subr.bf16.mxu0 %v5228
        %6633 = vmatpush1.bf16.msra.mxu0 %v5227
        %6634 = vmatprep.subr.bf16.mxu0 %v5220
        %6635 = vmatpush1.bf16.msra.mxu0 %v5219
        %6636 = vmatprep.subr.bf16.mxu0 %v5212
        %6637 = vmatpush1.bf16.msra.mxu0 %v5211
        %6638 = vmatprep.subr.bf16.mxu0 %v5204
        %6639 = vmatpush1.bf16.msra.mxu0 %v5203
        %6640 = vmatprep.subr.bf16.mxu0 %v5196
        %6641 = vmatpush1.bf16.msra.mxu0 %v5195
        %6642 = vmatprep.subr.bf16.mxu0 %v5188
        %6643 = vmatpush1.bf16.msra.mxu0 %v5187
        %6644 = vmatprep.subr.bf16.mxu0 %v5180
        %6645 = vmatpush1.bf16.msra.mxu0 %v5179
        %6646 = vmatprep.subr.bf16.mxu0 0
        %6647 = vmatpush2.bf16.msra.mxu0 0
        %6648 = vmatprep.subr.bf16.mxu0 0
        %6649 = vmatpush2.bf16.msra.mxu0 0
        %6650 = vmatprep.subr.bf16.mxu0 0
        %6651 = vmatpush2.bf16.msra.mxu0 0
        %6652 = vmatprep.subr.bf16.mxu0 0
        %6653 = vmatpush2.bf16.msra.mxu0 0
        %6654 = vmatprep.subr.bf16.mxu0 0
        %6655 = vmatpush2.bf16.msra.mxu0 0
        %6656 = vmatprep.subr.bf16.mxu0 0
        %6657 = vmatpush2.bf16.msra.mxu0 0
        %6658 = vmatprep.subr.bf16.mxu0 0
        %6659 = vmatpush2.bf16.msra.mxu0 0
        %6660 = vmatprep.subr.bf16.mxu0 0
        %6661 = vmatpush2.bf16.msra.mxu0 0
        %6662 = vmatprep.mubr.bf16.mxu0 0
        %6663 = vmatmul.mubr.bf16.gmra.mxu0 %v2356
        %v6664 = vpop.f32.mrf.mxu0
        %v6665 = vadd.f32 %v6622, %v6664
        %v6666 = vpop.f32.mrf.mxu0
        %v6667 = vadd.f32 %v6624, %v6666
        %v6668 = vpop.f32.mrf.mxu0
        %v6669 = vadd.f32 %v6626, %v6668
        %v6670 = vpop.f32.mrf.mxu0
        %v6671 = vadd.f32 %v6628, %v6670
        %6672 = vdwg.mxu0
        %v6673 = vadd.f32 %v2332, %v6020
        %v6674 = vadd.f32 %v2333, %v6022
        %v6675 = vadd.f32 %v2334, %v6235
        %v6676 = vadd.f32 %v2335, %v6237
        %v6677 = vadd.f32 %v2336, %v6450
        %v6678 = vadd.f32 %v2337, %v6452
        %v6679 = vadd.f32 %v2338, %v6665
        %v6680 = vadd.f32 %v2339, %v6667
        %v6681 = vadd.f32 %v2340, %v6024
        %v6682 = vadd.f32 %v2341, %v6026
        %v6683 = vadd.f32 %v2342, %v6239
        %v6684 = vadd.f32 %v2343, %v6241
        %v6685 = vadd.f32 %v2344, %v6454
        %v6686 = vadd.f32 %v2345, %v6456
        %v6687 = vadd.f32 %v2346, %v6669
        %v6688 = vadd.f32 %v2347, %v6671
        %6689 = vst [vmem:[#allocation2] sm:$0xff] %v6673
        %6690 = vst [vmem:[#allocation2 + $0x8] sm:$0xff] %v6674
        %6691 = vst [vmem:[#allocation2 + $0x10] sm:$0xff] %v6675
        %6692 = vst [vmem:[#allocation2 + $0x18] sm:$0xff] %v6676
        %6693 = vst [vmem:[#allocation2 + $0x20] sm:$0xff] %v6677
        %6694 = vst [vmem:[#allocation2 + $0x28] sm:$0xff] %v6678
        %6695 = vst [vmem:[#allocation2 + $0x30] sm:$0xff] %v6679
        %6696 = vst [vmem:[#allocation2 + $0x38] sm:$0xff] %v6680
        %6697 = vst [vmem:[#allocation2 + $0x40] sm:$0xff] %v6681
        %6698 = vst [vmem:[#allocation2 + $0x48] sm:$0xff] %v6682
        %6699 = vst [vmem:[#allocation2 + $0x50] sm:$0xff] %v6683
        %6700 = vst [vmem:[#allocation2 + $0x58] sm:$0xff] %v6684
        %6701 = vst [vmem:[#allocation2 + $0x60] sm:$0xff] %v6685
        %6702 = vst [vmem:[#allocation2 + $0x68] sm:$0xff] %v6686
        %6703 = vst [vmem:[#allocation2 + $0x70] sm:$0xff] %v6687
        %6704 = vst [vmem:[#allocation2 + $0x78] sm:$0xff] %v6688
        %p6705 = scmp.eq.s32.totalorder %s26, 1
        // Predicated region
        $region95: #{_device_forward.1} parent=85 // pred_check
          %p6706 = pneg %p6705
        $region96: #{_device_forward.1} parent=85 // pred_check_branch
          %6708 = sbr.rel (%p6706) target = $region98
        $region97: #{_device_forward.1} parent=85 // pred_region
          %v6709 = vld [vmem:[#allocation2] sm:$0xff]
          %v6710 = vld [vmem:[#allocation2 + $0x8] sm:$0xff]
          %v6711 = vld [vmem:[#allocation2 + $0x10] sm:$0xff]
          %v6712 = vld [vmem:[#allocation2 + $0x18] sm:$0xff]
          %v6713 = vld [vmem:[#allocation2 + $0x20] sm:$0xff]
          %v6714 = vld [vmem:[#allocation2 + $0x28] sm:$0xff]
          %v6715 = vld [vmem:[#allocation2 + $0x30] sm:$0xff]
          %v6716 = vld [vmem:[#allocation2 + $0x38] sm:$0xff]
          %v6717 = vld [vmem:[#allocation2 + $0x40] sm:$0xff]
          %v6718 = vld [vmem:[#allocation2 + $0x48] sm:$0xff]
          %v6719 = vld [vmem:[#allocation2 + $0x50] sm:$0xff]
          %v6720 = vld [vmem:[#allocation2 + $0x58] sm:$0xff]
          %v6721 = vld [vmem:[#allocation2 + $0x60] sm:$0xff]
          %v6722 = vld [vmem:[#allocation2 + $0x68] sm:$0xff]
          %v6723 = vld [vmem:[#allocation2 + $0x70] sm:$0xff]
          %v6724 = vld [vmem:[#allocation2 + $0x78] sm:$0xff]
          %v6725 = vld [vmem:[%s4] sm:$0xff]
          %v6727 = vlaneseq
          %v6728 = vshrl.u32 %v6727, 7
          %v6729 = vsub.s32 0, %v6728
          %v6730 = vrot.slane %v6725, %v6729
          %v6731 = vlaneseq
          %v6732 = vshrl.u32 %v6731, 7
          %v6733 = vsub.s32 1, %v6732
          %v6734 = vrot.slane %v6725, %v6733
          %v6735 = vlaneseq
          %v6736 = vshrl.u32 %v6735, 7
          %v6737 = vsub.s32 2, %v6736
          %v6738 = vrot.slane %v6725, %v6737
          %v6739 = vlaneseq
          %v6740 = vshrl.u32 %v6739, 7
          %v6741 = vsub.s32 3, %v6740
          %v6742 = vrot.slane %v6725, %v6741
          %v6743 = vlaneseq
          %v6744 = vshrl.u32 %v6743, 7
          %v6745 = vsub.s32 4, %v6744
          %v6746 = vrot.slane %v6725, %v6745
          %v6747 = vlaneseq
          %v6748 = vshrl.u32 %v6747, 7
          %v6749 = vsub.s32 5, %v6748
          %v6750 = vrot.slane %v6725, %v6749
          %v6751 = vlaneseq
          %v6752 = vshrl.u32 %v6751, 7
          %v6753 = vsub.s32 6, %v6752
          %v6754 = vrot.slane %v6725, %v6753
          %v6755 = vlaneseq
          %v6756 = vshrl.u32 %v6755, 7
          %v6757 = vsub.s32 7, %v6756
          %v6758 = vrot.slane %v6725, %v6757
          %v6767 = vadd.f32 %v6709, %v6730
          %v6768 = vadd.f32 %v6710, %v6734
          %v6769 = vadd.f32 %v6711, %v6738
          %v6770 = vadd.f32 %v6712, %v6742
          %v6771 = vadd.f32 %v6713, %v6746
          %v6772 = vadd.f32 %v6714, %v6750
          %v6773 = vadd.f32 %v6715, %v6754
          %v6774 = vadd.f32 %v6716, %v6758
          %v6775 = vadd.f32 %v6717, %v6730
          %v6776 = vadd.f32 %v6718, %v6734
          %v6777 = vadd.f32 %v6719, %v6738
          %v6778 = vadd.f32 %v6720, %v6742
          %v6779 = vadd.f32 %v6721, %v6746
          %v6780 = vadd.f32 %v6722, %v6750
          %v6781 = vadd.f32 %v6723, %v6754
          %v6782 = vadd.f32 %v6724, %v6758
          %v6783 = vmax.f32 %v6767, 0.0
          %v6784 = vmax.f32 %v6768, 0.0
          %v6785 = vmax.f32 %v6769, 0.0
          %v6786 = vmax.f32 %v6770, 0.0
          %v6787 = vmax.f32 %v6771, 0.0
          %v6788 = vmax.f32 %v6772, 0.0
          %v6789 = vmax.f32 %v6773, 0.0
          %v6790 = vmax.f32 %v6774, 0.0
          %v6791 = vmax.f32 %v6775, 0.0
          %v6792 = vmax.f32 %v6776, 0.0
          %v6793 = vmax.f32 %v6777, 0.0
          %v6794 = vmax.f32 %v6778, 0.0
          %v6795 = vmax.f32 %v6779, 0.0
          %v6796 = vmax.f32 %v6780, 0.0
          %v6797 = vmax.f32 %v6781, 0.0
          %v6798 = vmax.f32 %v6782, 0.0
          %v6799 = vpack.c.bf16 %v6791, %v6783
          %v6800 = vpack.c.bf16 %v6792, %v6784
          %v6801 = vpack.c.bf16 %v6793, %v6785
          %v6802 = vpack.c.bf16 %v6794, %v6786
          %v6803 = vpack.c.bf16 %v6795, %v6787
          %v6804 = vpack.c.bf16 %v6796, %v6788
          %v6805 = vpack.c.bf16 %v6797, %v6789
          %v6806 = vpack.c.bf16 %v6798, %v6790
          %v6807 = vld [vmem:[%s5] sm:$0xff]
          %v6808 = vld [vmem:[%s5 + $0x8] sm:$0xff]
          %v6809 = vld [vmem:[%s5 + $0x10] sm:$0xff]
          %v6810 = vld [vmem:[%s5 + $0x18] sm:$0xff]
          %v6811 = vld [vmem:[%s5 + $0x20] sm:$0xff]
          %v6812 = vld [vmem:[%s5 + $0x28] sm:$0xff]
          %v6813 = vld [vmem:[%s5 + $0x30] sm:$0xff]
          %v6814 = vld [vmem:[%s5 + $0x38] sm:$0xff]
          %v6815 = vld [vmem:[%s5 + $0x40] sm:$0xff]
          %v6816 = vld [vmem:[%s5 + $0x48] sm:$0xff]
          %v6817 = vld [vmem:[%s5 + $0x50] sm:$0xff]
          %v6818 = vld [vmem:[%s5 + $0x58] sm:$0xff]
          %v6819 = vld [vmem:[%s5 + $0x60] sm:$0xff]
          %v6820 = vld [vmem:[%s5 + $0x68] sm:$0xff]
          %v6821 = vld [vmem:[%s5 + $0x70] sm:$0xff]
          %v6822 = vld [vmem:[%s5 + $0x78] sm:$0xff]
          %v6823 = vld [vmem:[%s5 + $0x80] sm:$0xff]
          %v6824 = vld [vmem:[%s5 + $0x88] sm:$0xff]
          %v6825 = vld [vmem:[%s5 + $0x90] sm:$0xff]
          %v6826 = vld [vmem:[%s5 + $0x98] sm:$0xff]
          %v6827 = vld [vmem:[%s5 + $0xa0] sm:$0xff]
          %v6828 = vld [vmem:[%s5 + $0xa8] sm:$0xff]
          %v6829 = vld [vmem:[%s5 + $0xb0] sm:$0xff]
          %v6830 = vld [vmem:[%s5 + $0xb8] sm:$0xff]
          %v6831 = vld [vmem:[%s5 + $0xc0] sm:$0xff]
          %v6832 = vld [vmem:[%s5 + $0xc8] sm:$0xff]
          %v6833 = vld [vmem:[%s5 + $0xd0] sm:$0xff]
          %v6834 = vld [vmem:[%s5 + $0xd8] sm:$0xff]
          %v6835 = vld [vmem:[%s5 + $0xe0] sm:$0xff]
          %v6836 = vld [vmem:[%s5 + $0xe8] sm:$0xff]
          %v6837 = vld [vmem:[%s5 + $0xf0] sm:$0xff]
          %v6838 = vld [vmem:[%s5 + $0xf8] sm:$0xff]
          %v6839 = vld [vmem:[%s5 + $0x100] sm:$0xff]
          %v6840 = vld [vmem:[%s5 + $0x108] sm:$0xff]
          %v6841 = vld [vmem:[%s5 + $0x110] sm:$0xff]
          %v6842 = vld [vmem:[%s5 + $0x118] sm:$0xff]
          %v6843 = vld [vmem:[%s5 + $0x120] sm:$0xff]
          %v6844 = vld [vmem:[%s5 + $0x128] sm:$0xff]
          %v6845 = vld [vmem:[%s5 + $0x130] sm:$0xff]
          %v6846 = vld [vmem:[%s5 + $0x138] sm:$0xff]
          %v6847 = vld [vmem:[%s5 + $0x140] sm:$0xff]
          %v6848 = vld [vmem:[%s5 + $0x148] sm:$0xff]
          %v6849 = vld [vmem:[%s5 + $0x150] sm:$0xff]
          %v6850 = vld [vmem:[%s5 + $0x158] sm:$0xff]
          %v6851 = vld [vmem:[%s5 + $0x160] sm:$0xff]
          %v6852 = vld [vmem:[%s5 + $0x168] sm:$0xff]
          %v6853 = vld [vmem:[%s5 + $0x170] sm:$0xff]
          %v6854 = vld [vmem:[%s5 + $0x178] sm:$0xff]
          %v6855 = vld [vmem:[%s5 + $0x180] sm:$0xff]
          %v6856 = vld [vmem:[%s5 + $0x188] sm:$0xff]
          %v6857 = vld [vmem:[%s5 + $0x190] sm:$0xff]
          %v6858 = vld [vmem:[%s5 + $0x198] sm:$0xff]
          %v6859 = vld [vmem:[%s5 + $0x1a0] sm:$0xff]
          %v6860 = vld [vmem:[%s5 + $0x1a8] sm:$0xff]
          %v6861 = vld [vmem:[%s5 + $0x1b0] sm:$0xff]
          %v6862 = vld [vmem:[%s5 + $0x1b8] sm:$0xff]
          %v6863 = vld [vmem:[%s5 + $0x1c0] sm:$0xff]
          %v6864 = vld [vmem:[%s5 + $0x1c8] sm:$0xff]
          %v6865 = vld [vmem:[%s5 + $0x1d0] sm:$0xff]
          %v6866 = vld [vmem:[%s5 + $0x1d8] sm:$0xff]
          %v6867 = vld [vmem:[%s5 + $0x1e0] sm:$0xff]
          %v6868 = vld [vmem:[%s5 + $0x1e8] sm:$0xff]
          %v6869 = vld [vmem:[%s5 + $0x1f0] sm:$0xff]
          %v6870 = vld [vmem:[%s5 + $0x1f8] sm:$0xff]
          %v6871 = vld [vmem:[%s5 + $0x200] sm:$0xff]
          %v6872 = vld [vmem:[%s5 + $0x208] sm:$0xff]
          %v6873 = vld [vmem:[%s5 + $0x210] sm:$0xff]
          %v6874 = vld [vmem:[%s5 + $0x218] sm:$0xff]
          %v6875 = vld [vmem:[%s5 + $0x220] sm:$0xff]
          %v6876 = vld [vmem:[%s5 + $0x228] sm:$0xff]
          %v6877 = vld [vmem:[%s5 + $0x230] sm:$0xff]
          %v6878 = vld [vmem:[%s5 + $0x238] sm:$0xff]
          %v6879 = vld [vmem:[%s5 + $0x240] sm:$0xff]
          %v6880 = vld [vmem:[%s5 + $0x248] sm:$0xff]
          %v6881 = vld [vmem:[%s5 + $0x250] sm:$0xff]
          %v6882 = vld [vmem:[%s5 + $0x258] sm:$0xff]
          %v6883 = vld [vmem:[%s5 + $0x260] sm:$0xff]
          %v6884 = vld [vmem:[%s5 + $0x268] sm:$0xff]
          %v6885 = vld [vmem:[%s5 + $0x270] sm:$0xff]
          %v6886 = vld [vmem:[%s5 + $0x278] sm:$0xff]
          %v6887 = vld [vmem:[%s5 + $0x280] sm:$0xff]
          %v6888 = vld [vmem:[%s5 + $0x288] sm:$0xff]
          %v6889 = vld [vmem:[%s5 + $0x290] sm:$0xff]
          %v6890 = vld [vmem:[%s5 + $0x298] sm:$0xff]
          %v6891 = vld [vmem:[%s5 + $0x2a0] sm:$0xff]
          %v6892 = vld [vmem:[%s5 + $0x2a8] sm:$0xff]
          %v6893 = vld [vmem:[%s5 + $0x2b0] sm:$0xff]
          %v6894 = vld [vmem:[%s5 + $0x2b8] sm:$0xff]
          %v6895 = vld [vmem:[%s5 + $0x2c0] sm:$0xff]
          %v6896 = vld [vmem:[%s5 + $0x2c8] sm:$0xff]
          %v6897 = vld [vmem:[%s5 + $0x2d0] sm:$0xff]
          %v6898 = vld [vmem:[%s5 + $0x2d8] sm:$0xff]
          %v6899 = vld [vmem:[%s5 + $0x2e0] sm:$0xff]
          %v6900 = vld [vmem:[%s5 + $0x2e8] sm:$0xff]
          %v6901 = vld [vmem:[%s5 + $0x2f0] sm:$0xff]
          %v6902 = vld [vmem:[%s5 + $0x2f8] sm:$0xff]
          %v6903 = vld [vmem:[%s5 + $0x300] sm:$0xff]
          %v6904 = vld [vmem:[%s5 + $0x308] sm:$0xff]
          %v6905 = vld [vmem:[%s5 + $0x310] sm:$0xff]
          %v6906 = vld [vmem:[%s5 + $0x318] sm:$0xff]
          %v6907 = vld [vmem:[%s5 + $0x320] sm:$0xff]
          %v6908 = vld [vmem:[%s5 + $0x328] sm:$0xff]
          %v6909 = vld [vmem:[%s5 + $0x330] sm:$0xff]
          %v6910 = vld [vmem:[%s5 + $0x338] sm:$0xff]
          %v6911 = vld [vmem:[%s5 + $0x340] sm:$0xff]
          %v6912 = vld [vmem:[%s5 + $0x348] sm:$0xff]
          %v6913 = vld [vmem:[%s5 + $0x350] sm:$0xff]
          %v6914 = vld [vmem:[%s5 + $0x358] sm:$0xff]
          %v6915 = vld [vmem:[%s5 + $0x360] sm:$0xff]
          %v6916 = vld [vmem:[%s5 + $0x368] sm:$0xff]
          %v6917 = vld [vmem:[%s5 + $0x370] sm:$0xff]
          %v6918 = vld [vmem:[%s5 + $0x378] sm:$0xff]
          %v6919 = vld [vmem:[%s5 + $0x380] sm:$0xff]
          %v6920 = vld [vmem:[%s5 + $0x388] sm:$0xff]
          %v6921 = vld [vmem:[%s5 + $0x390] sm:$0xff]
          %v6922 = vld [vmem:[%s5 + $0x398] sm:$0xff]
          %v6923 = vld [vmem:[%s5 + $0x3a0] sm:$0xff]
          %v6924 = vld [vmem:[%s5 + $0x3a8] sm:$0xff]
          %v6925 = vld [vmem:[%s5 + $0x3b0] sm:$0xff]
          %v6926 = vld [vmem:[%s5 + $0x3b8] sm:$0xff]
          %v6927 = vld [vmem:[%s5 + $0x3c0] sm:$0xff]
          %v6928 = vld [vmem:[%s5 + $0x3c8] sm:$0xff]
          %v6929 = vld [vmem:[%s5 + $0x3d0] sm:$0xff]
          %v6930 = vld [vmem:[%s5 + $0x3d8] sm:$0xff]
          %v6931 = vld [vmem:[%s5 + $0x3e0] sm:$0xff]
          %v6932 = vld [vmem:[%s5 + $0x3e8] sm:$0xff]
          %v6933 = vld [vmem:[%s5 + $0x3f0] sm:$0xff]
          %v6934 = vld [vmem:[%s5 + $0x3f8] sm:$0xff]
          %v6935 = vld [vmem:[%s5 + $0x400] sm:$0xff]
          %v6936 = vld [vmem:[%s5 + $0x408] sm:$0xff]
          %v6937 = vld [vmem:[%s5 + $0x410] sm:$0xff]
          %v6938 = vld [vmem:[%s5 + $0x418] sm:$0xff]
          %v6939 = vld [vmem:[%s5 + $0x420] sm:$0xff]
          %v6940 = vld [vmem:[%s5 + $0x428] sm:$0xff]
          %v6941 = vld [vmem:[%s5 + $0x430] sm:$0xff]
          %v6942 = vld [vmem:[%s5 + $0x438] sm:$0xff]
          %v6943 = vld [vmem:[%s5 + $0x440] sm:$0xff]
          %v6944 = vld [vmem:[%s5 + $0x448] sm:$0xff]
          %v6945 = vld [vmem:[%s5 + $0x450] sm:$0xff]
          %v6946 = vld [vmem:[%s5 + $0x458] sm:$0xff]
          %v6947 = vld [vmem:[%s5 + $0x460] sm:$0xff]
          %v6948 = vld [vmem:[%s5 + $0x468] sm:$0xff]
          %v6949 = vld [vmem:[%s5 + $0x470] sm:$0xff]
          %v6950 = vld [vmem:[%s5 + $0x478] sm:$0xff]
          %v6951 = vld [vmem:[%s5 + $0x480] sm:$0xff]
          %v6952 = vld [vmem:[%s5 + $0x488] sm:$0xff]
          %v6953 = vld [vmem:[%s5 + $0x490] sm:$0xff]
          %v6954 = vld [vmem:[%s5 + $0x498] sm:$0xff]
          %v6955 = vld [vmem:[%s5 + $0x4a0] sm:$0xff]
          %v6956 = vld [vmem:[%s5 + $0x4a8] sm:$0xff]
          %v6957 = vld [vmem:[%s5 + $0x4b0] sm:$0xff]
          %v6958 = vld [vmem:[%s5 + $0x4b8] sm:$0xff]
          %v6959 = vld [vmem:[%s5 + $0x4c0] sm:$0xff]
          %v6960 = vld [vmem:[%s5 + $0x4c8] sm:$0xff]
          %v6961 = vld [vmem:[%s5 + $0x4d0] sm:$0xff]
          %v6962 = vld [vmem:[%s5 + $0x4d8] sm:$0xff]
          %v6963 = vld [vmem:[%s5 + $0x4e0] sm:$0xff]
          %v6964 = vld [vmem:[%s5 + $0x4e8] sm:$0xff]
          %v6965 = vld [vmem:[%s5 + $0x4f0] sm:$0xff]
          %v6966 = vld [vmem:[%s5 + $0x4f8] sm:$0xff]
          %v6967 = vld [vmem:[%s5 + $0x500] sm:$0xff]
          %v6968 = vld [vmem:[%s5 + $0x508] sm:$0xff]
          %v6969 = vld [vmem:[%s5 + $0x510] sm:$0xff]
          %v6970 = vld [vmem:[%s5 + $0x518] sm:$0xff]
          %v6971 = vld [vmem:[%s5 + $0x520] sm:$0xff]
          %v6972 = vld [vmem:[%s5 + $0x528] sm:$0xff]
          %v6973 = vld [vmem:[%s5 + $0x530] sm:$0xff]
          %v6974 = vld [vmem:[%s5 + $0x538] sm:$0xff]
          %v6975 = vld [vmem:[%s5 + $0x540] sm:$0xff]
          %v6976 = vld [vmem:[%s5 + $0x548] sm:$0xff]
          %v6977 = vld [vmem:[%s5 + $0x550] sm:$0xff]
          %v6978 = vld [vmem:[%s5 + $0x558] sm:$0xff]
          %v6979 = vld [vmem:[%s5 + $0x560] sm:$0xff]
          %v6980 = vld [vmem:[%s5 + $0x568] sm:$0xff]
          %v6981 = vld [vmem:[%s5 + $0x570] sm:$0xff]
          %v6982 = vld [vmem:[%s5 + $0x578] sm:$0xff]
          %v6983 = vld [vmem:[%s5 + $0x580] sm:$0xff]
          %v6984 = vld [vmem:[%s5 + $0x588] sm:$0xff]
          %v6985 = vld [vmem:[%s5 + $0x590] sm:$0xff]
          %v6986 = vld [vmem:[%s5 + $0x598] sm:$0xff]
          %v6987 = vld [vmem:[%s5 + $0x5a0] sm:$0xff]
          %v6988 = vld [vmem:[%s5 + $0x5a8] sm:$0xff]
          %v6989 = vld [vmem:[%s5 + $0x5b0] sm:$0xff]
          %v6990 = vld [vmem:[%s5 + $0x5b8] sm:$0xff]
          %v6991 = vld [vmem:[%s5 + $0x5c0] sm:$0xff]
          %v6992 = vld [vmem:[%s5 + $0x5c8] sm:$0xff]
          %v6993 = vld [vmem:[%s5 + $0x5d0] sm:$0xff]
          %v6994 = vld [vmem:[%s5 + $0x5d8] sm:$0xff]
          %v6995 = vld [vmem:[%s5 + $0x5e0] sm:$0xff]
          %v6996 = vld [vmem:[%s5 + $0x5e8] sm:$0xff]
          %v6997 = vld [vmem:[%s5 + $0x5f0] sm:$0xff]
          %v6998 = vld [vmem:[%s5 + $0x5f8] sm:$0xff]
          %v6999 = vld [vmem:[%s5 + $0x600] sm:$0xff]
          %v7000 = vld [vmem:[%s5 + $0x608] sm:$0xff]
          %v7001 = vld [vmem:[%s5 + $0x610] sm:$0xff]
          %v7002 = vld [vmem:[%s5 + $0x618] sm:$0xff]
          %v7003 = vld [vmem:[%s5 + $0x620] sm:$0xff]
          %v7004 = vld [vmem:[%s5 + $0x628] sm:$0xff]
          %v7005 = vld [vmem:[%s5 + $0x630] sm:$0xff]
          %v7006 = vld [vmem:[%s5 + $0x638] sm:$0xff]
          %v7007 = vld [vmem:[%s5 + $0x640] sm:$0xff]
          %v7008 = vld [vmem:[%s5 + $0x648] sm:$0xff]
          %v7009 = vld [vmem:[%s5 + $0x650] sm:$0xff]
          %v7010 = vld [vmem:[%s5 + $0x658] sm:$0xff]
          %v7011 = vld [vmem:[%s5 + $0x660] sm:$0xff]
          %v7012 = vld [vmem:[%s5 + $0x668] sm:$0xff]
          %v7013 = vld [vmem:[%s5 + $0x670] sm:$0xff]
          %v7014 = vld [vmem:[%s5 + $0x678] sm:$0xff]
          %v7015 = vld [vmem:[%s5 + $0x680] sm:$0xff]
          %v7016 = vld [vmem:[%s5 + $0x688] sm:$0xff]
          %v7017 = vld [vmem:[%s5 + $0x690] sm:$0xff]
          %v7018 = vld [vmem:[%s5 + $0x698] sm:$0xff]
          %v7019 = vld [vmem:[%s5 + $0x6a0] sm:$0xff]
          %v7020 = vld [vmem:[%s5 + $0x6a8] sm:$0xff]
          %v7021 = vld [vmem:[%s5 + $0x6b0] sm:$0xff]
          %v7022 = vld [vmem:[%s5 + $0x6b8] sm:$0xff]
          %v7023 = vld [vmem:[%s5 + $0x6c0] sm:$0xff]
          %v7024 = vld [vmem:[%s5 + $0x6c8] sm:$0xff]
          %v7025 = vld [vmem:[%s5 + $0x6d0] sm:$0xff]
          %v7026 = vld [vmem:[%s5 + $0x6d8] sm:$0xff]
          %v7027 = vld [vmem:[%s5 + $0x6e0] sm:$0xff]
          %v7028 = vld [vmem:[%s5 + $0x6e8] sm:$0xff]
          %v7029 = vld [vmem:[%s5 + $0x6f0] sm:$0xff]
          %v7030 = vld [vmem:[%s5 + $0x6f8] sm:$0xff]
          %v7031 = vld [vmem:[%s5 + $0x700] sm:$0xff]
          %v7032 = vld [vmem:[%s5 + $0x708] sm:$0xff]
          %v7033 = vld [vmem:[%s5 + $0x710] sm:$0xff]
          %v7034 = vld [vmem:[%s5 + $0x718] sm:$0xff]
          %v7035 = vld [vmem:[%s5 + $0x720] sm:$0xff]
          %v7036 = vld [vmem:[%s5 + $0x728] sm:$0xff]
          %v7037 = vld [vmem:[%s5 + $0x730] sm:$0xff]
          %v7038 = vld [vmem:[%s5 + $0x738] sm:$0xff]
          %v7039 = vld [vmem:[%s5 + $0x740] sm:$0xff]
          %v7040 = vld [vmem:[%s5 + $0x748] sm:$0xff]
          %v7041 = vld [vmem:[%s5 + $0x750] sm:$0xff]
          %v7042 = vld [vmem:[%s5 + $0x758] sm:$0xff]
          %v7043 = vld [vmem:[%s5 + $0x760] sm:$0xff]
          %v7044 = vld [vmem:[%s5 + $0x768] sm:$0xff]
          %v7045 = vld [vmem:[%s5 + $0x770] sm:$0xff]
          %v7046 = vld [vmem:[%s5 + $0x778] sm:$0xff]
          %v7047 = vld [vmem:[%s5 + $0x780] sm:$0xff]
          %v7048 = vld [vmem:[%s5 + $0x788] sm:$0xff]
          %v7049 = vld [vmem:[%s5 + $0x790] sm:$0xff]
          %v7050 = vld [vmem:[%s5 + $0x798] sm:$0xff]
          %v7051 = vld [vmem:[%s5 + $0x7a0] sm:$0xff]
          %v7052 = vld [vmem:[%s5 + $0x7a8] sm:$0xff]
          %v7053 = vld [vmem:[%s5 + $0x7b0] sm:$0xff]
          %v7054 = vld [vmem:[%s5 + $0x7b8] sm:$0xff]
          %v7055 = vld [vmem:[%s5 + $0x7c0] sm:$0xff]
          %v7056 = vld [vmem:[%s5 + $0x7c8] sm:$0xff]
          %v7057 = vld [vmem:[%s5 + $0x7d0] sm:$0xff]
          %v7058 = vld [vmem:[%s5 + $0x7d8] sm:$0xff]
          %v7059 = vld [vmem:[%s5 + $0x7e0] sm:$0xff]
          %v7060 = vld [vmem:[%s5 + $0x7e8] sm:$0xff]
          %v7061 = vld [vmem:[%s5 + $0x7f0] sm:$0xff]
          %v7062 = vld [vmem:[%s5 + $0x7f8] sm:$0xff]
          %v7063 = vld [vmem:[%s5 + $0x800] sm:$0xff]
          %v7064 = vld [vmem:[%s5 + $0x808] sm:$0xff]
          %v7065 = vld [vmem:[%s5 + $0x810] sm:$0xff]
          %v7066 = vld [vmem:[%s5 + $0x818] sm:$0xff]
          %v7067 = vld [vmem:[%s5 + $0x820] sm:$0xff]
          %v7068 = vld [vmem:[%s5 + $0x828] sm:$0xff]
          %v7069 = vld [vmem:[%s5 + $0x830] sm:$0xff]
          %v7070 = vld [vmem:[%s5 + $0x838] sm:$0xff]
          %v7071 = vld [vmem:[%s5 + $0x840] sm:$0xff]
          %v7072 = vld [vmem:[%s5 + $0x848] sm:$0xff]
          %v7073 = vld [vmem:[%s5 + $0x850] sm:$0xff]
          %v7074 = vld [vmem:[%s5 + $0x858] sm:$0xff]
          %v7075 = vld [vmem:[%s5 + $0x860] sm:$0xff]
          %v7076 = vld [vmem:[%s5 + $0x868] sm:$0xff]
          %v7077 = vld [vmem:[%s5 + $0x870] sm:$0xff]
          %v7078 = vld [vmem:[%s5 + $0x878] sm:$0xff]
          %v7079 = vld [vmem:[%s5 + $0x880] sm:$0xff]
          %v7080 = vld [vmem:[%s5 + $0x888] sm:$0xff]
          %v7081 = vld [vmem:[%s5 + $0x890] sm:$0xff]
          %v7082 = vld [vmem:[%s5 + $0x898] sm:$0xff]
          %v7083 = vld [vmem:[%s5 + $0x8a0] sm:$0xff]
          %v7084 = vld [vmem:[%s5 + $0x8a8] sm:$0xff]
          %v7085 = vld [vmem:[%s5 + $0x8b0] sm:$0xff]
          %v7086 = vld [vmem:[%s5 + $0x8b8] sm:$0xff]
          %v7087 = vld [vmem:[%s5 + $0x8c0] sm:$0xff]
          %v7088 = vld [vmem:[%s5 + $0x8c8] sm:$0xff]
          %v7089 = vld [vmem:[%s5 + $0x8d0] sm:$0xff]
          %v7090 = vld [vmem:[%s5 + $0x8d8] sm:$0xff]
          %v7091 = vld [vmem:[%s5 + $0x8e0] sm:$0xff]
          %v7092 = vld [vmem:[%s5 + $0x8e8] sm:$0xff]
          %v7093 = vld [vmem:[%s5 + $0x8f0] sm:$0xff]
          %v7094 = vld [vmem:[%s5 + $0x8f8] sm:$0xff]
          %v7095 = vld [vmem:[%s5 + $0x900] sm:$0xff]
          %v7096 = vld [vmem:[%s5 + $0x908] sm:$0xff]
          %v7097 = vld [vmem:[%s5 + $0x910] sm:$0xff]
          %v7098 = vld [vmem:[%s5 + $0x918] sm:$0xff]
          %v7099 = vld [vmem:[%s5 + $0x920] sm:$0xff]
          %v7100 = vld [vmem:[%s5 + $0x928] sm:$0xff]
          %v7101 = vld [vmem:[%s5 + $0x930] sm:$0xff]
          %v7102 = vld [vmem:[%s5 + $0x938] sm:$0xff]
          %v7103 = vld [vmem:[%s5 + $0x940] sm:$0xff]
          %v7104 = vld [vmem:[%s5 + $0x948] sm:$0xff]
          %v7105 = vld [vmem:[%s5 + $0x950] sm:$0xff]
          %v7106 = vld [vmem:[%s5 + $0x958] sm:$0xff]
          %v7107 = vld [vmem:[%s5 + $0x960] sm:$0xff]
          %v7108 = vld [vmem:[%s5 + $0x968] sm:$0xff]
          %v7109 = vld [vmem:[%s5 + $0x970] sm:$0xff]
          %v7110 = vld [vmem:[%s5 + $0x978] sm:$0xff]
          %v7111 = vld [vmem:[%s5 + $0x980] sm:$0xff]
          %v7112 = vld [vmem:[%s5 + $0x988] sm:$0xff]
          %v7113 = vld [vmem:[%s5 + $0x990] sm:$0xff]
          %v7114 = vld [vmem:[%s5 + $0x998] sm:$0xff]
          %v7115 = vld [vmem:[%s5 + $0x9a0] sm:$0xff]
          %v7116 = vld [vmem:[%s5 + $0x9a8] sm:$0xff]
          %v7117 = vld [vmem:[%s5 + $0x9b0] sm:$0xff]
          %v7118 = vld [vmem:[%s5 + $0x9b8] sm:$0xff]
          %v7119 = vld [vmem:[%s5 + $0x9c0] sm:$0xff]
          %v7120 = vld [vmem:[%s5 + $0x9c8] sm:$0xff]
          %v7121 = vld [vmem:[%s5 + $0x9d0] sm:$0xff]
          %v7122 = vld [vmem:[%s5 + $0x9d8] sm:$0xff]
          %v7123 = vld [vmem:[%s5 + $0x9e0] sm:$0xff]
          %v7124 = vld [vmem:[%s5 + $0x9e8] sm:$0xff]
          %v7125 = vld [vmem:[%s5 + $0x9f0] sm:$0xff]
          %v7126 = vld [vmem:[%s5 + $0x9f8] sm:$0xff]
          %v7127 = vld [vmem:[%s5 + $0xa00] sm:$0xff]
          %v7128 = vld [vmem:[%s5 + $0xa08] sm:$0xff]
          %v7129 = vld [vmem:[%s5 + $0xa10] sm:$0xff]
          %v7130 = vld [vmem:[%s5 + $0xa18] sm:$0xff]
          %v7131 = vld [vmem:[%s5 + $0xa20] sm:$0xff]
          %v7132 = vld [vmem:[%s5 + $0xa28] sm:$0xff]
          %v7133 = vld [vmem:[%s5 + $0xa30] sm:$0xff]
          %v7134 = vld [vmem:[%s5 + $0xa38] sm:$0xff]
          %v7135 = vld [vmem:[%s5 + $0xa40] sm:$0xff]
          %v7136 = vld [vmem:[%s5 + $0xa48] sm:$0xff]
          %v7137 = vld [vmem:[%s5 + $0xa50] sm:$0xff]
          %v7138 = vld [vmem:[%s5 + $0xa58] sm:$0xff]
          %v7139 = vld [vmem:[%s5 + $0xa60] sm:$0xff]
          %v7140 = vld [vmem:[%s5 + $0xa68] sm:$0xff]
          %v7141 = vld [vmem:[%s5 + $0xa70] sm:$0xff]
          %v7142 = vld [vmem:[%s5 + $0xa78] sm:$0xff]
          %v7143 = vld [vmem:[%s5 + $0xa80] sm:$0xff]
          %v7144 = vld [vmem:[%s5 + $0xa88] sm:$0xff]
          %v7145 = vld [vmem:[%s5 + $0xa90] sm:$0xff]
          %v7146 = vld [vmem:[%s5 + $0xa98] sm:$0xff]
          %v7147 = vld [vmem:[%s5 + $0xaa0] sm:$0xff]
          %v7148 = vld [vmem:[%s5 + $0xaa8] sm:$0xff]
          %v7149 = vld [vmem:[%s5 + $0xab0] sm:$0xff]
          %v7150 = vld [vmem:[%s5 + $0xab8] sm:$0xff]
          %v7151 = vld [vmem:[%s5 + $0xac0] sm:$0xff]
          %v7152 = vld [vmem:[%s5 + $0xac8] sm:$0xff]
          %v7153 = vld [vmem:[%s5 + $0xad0] sm:$0xff]
          %v7154 = vld [vmem:[%s5 + $0xad8] sm:$0xff]
          %v7155 = vld [vmem:[%s5 + $0xae0] sm:$0xff]
          %v7156 = vld [vmem:[%s5 + $0xae8] sm:$0xff]
          %v7157 = vld [vmem:[%s5 + $0xaf0] sm:$0xff]
          %v7158 = vld [vmem:[%s5 + $0xaf8] sm:$0xff]
          %v7159 = vld [vmem:[%s5 + $0xb00] sm:$0xff]
          %v7160 = vld [vmem:[%s5 + $0xb08] sm:$0xff]
          %v7161 = vld [vmem:[%s5 + $0xb10] sm:$0xff]
          %v7162 = vld [vmem:[%s5 + $0xb18] sm:$0xff]
          %v7163 = vld [vmem:[%s5 + $0xb20] sm:$0xff]
          %v7164 = vld [vmem:[%s5 + $0xb28] sm:$0xff]
          %v7165 = vld [vmem:[%s5 + $0xb30] sm:$0xff]
          %v7166 = vld [vmem:[%s5 + $0xb38] sm:$0xff]
          %v7167 = vld [vmem:[%s5 + $0xb40] sm:$0xff]
          %v7168 = vld [vmem:[%s5 + $0xb48] sm:$0xff]
          %v7169 = vld [vmem:[%s5 + $0xb50] sm:$0xff]
          %v7170 = vld [vmem:[%s5 + $0xb58] sm:$0xff]
          %v7171 = vld [vmem:[%s5 + $0xb60] sm:$0xff]
          %v7172 = vld [vmem:[%s5 + $0xb68] sm:$0xff]
          %v7173 = vld [vmem:[%s5 + $0xb70] sm:$0xff]
          %v7174 = vld [vmem:[%s5 + $0xb78] sm:$0xff]
          %v7175 = vld [vmem:[%s5 + $0xb80] sm:$0xff]
          %v7176 = vld [vmem:[%s5 + $0xb88] sm:$0xff]
          %v7177 = vld [vmem:[%s5 + $0xb90] sm:$0xff]
          %v7178 = vld [vmem:[%s5 + $0xb98] sm:$0xff]
          %v7179 = vld [vmem:[%s5 + $0xba0] sm:$0xff]
          %v7180 = vld [vmem:[%s5 + $0xba8] sm:$0xff]
          %v7181 = vld [vmem:[%s5 + $0xbb0] sm:$0xff]
          %v7182 = vld [vmem:[%s5 + $0xbb8] sm:$0xff]
          %v7183 = vld [vmem:[%s5 + $0xbc0] sm:$0xff]
          %v7184 = vld [vmem:[%s5 + $0xbc8] sm:$0xff]
          %v7185 = vld [vmem:[%s5 + $0xbd0] sm:$0xff]
          %v7186 = vld [vmem:[%s5 + $0xbd8] sm:$0xff]
          %v7187 = vld [vmem:[%s5 + $0xbe0] sm:$0xff]
          %v7188 = vld [vmem:[%s5 + $0xbe8] sm:$0xff]
          %v7189 = vld [vmem:[%s5 + $0xbf0] sm:$0xff]
          %v7190 = vld [vmem:[%s5 + $0xbf8] sm:$0xff]
          %v7191 = vld [vmem:[%s5 + $0xc00] sm:$0xff]
          %v7192 = vld [vmem:[%s5 + $0xc08] sm:$0xff]
          %v7193 = vld [vmem:[%s5 + $0xc10] sm:$0xff]
          %v7194 = vld [vmem:[%s5 + $0xc18] sm:$0xff]
          %v7195 = vld [vmem:[%s5 + $0xc20] sm:$0xff]
          %v7196 = vld [vmem:[%s5 + $0xc28] sm:$0xff]
          %v7197 = vld [vmem:[%s5 + $0xc30] sm:$0xff]
          %v7198 = vld [vmem:[%s5 + $0xc38] sm:$0xff]
          %v7199 = vld [vmem:[%s5 + $0xc40] sm:$0xff]
          %v7200 = vld [vmem:[%s5 + $0xc48] sm:$0xff]
          %v7201 = vld [vmem:[%s5 + $0xc50] sm:$0xff]
          %v7202 = vld [vmem:[%s5 + $0xc58] sm:$0xff]
          %v7203 = vld [vmem:[%s5 + $0xc60] sm:$0xff]
          %v7204 = vld [vmem:[%s5 + $0xc68] sm:$0xff]
          %v7205 = vld [vmem:[%s5 + $0xc70] sm:$0xff]
          %v7206 = vld [vmem:[%s5 + $0xc78] sm:$0xff]
          %v7207 = vld [vmem:[%s5 + $0xc80] sm:$0xff]
          %v7208 = vld [vmem:[%s5 + $0xc88] sm:$0xff]
          %v7209 = vld [vmem:[%s5 + $0xc90] sm:$0xff]
          %v7210 = vld [vmem:[%s5 + $0xc98] sm:$0xff]
          %v7211 = vld [vmem:[%s5 + $0xca0] sm:$0xff]
          %v7212 = vld [vmem:[%s5 + $0xca8] sm:$0xff]
          %v7213 = vld [vmem:[%s5 + $0xcb0] sm:$0xff]
          %v7214 = vld [vmem:[%s5 + $0xcb8] sm:$0xff]
          %v7215 = vld [vmem:[%s5 + $0xcc0] sm:$0xff]
          %v7216 = vld [vmem:[%s5 + $0xcc8] sm:$0xff]
          %v7217 = vld [vmem:[%s5 + $0xcd0] sm:$0xff]
          %v7218 = vld [vmem:[%s5 + $0xcd8] sm:$0xff]
          %v7219 = vld [vmem:[%s5 + $0xce0] sm:$0xff]
          %v7220 = vld [vmem:[%s5 + $0xce8] sm:$0xff]
          %v7221 = vld [vmem:[%s5 + $0xcf0] sm:$0xff]
          %v7222 = vld [vmem:[%s5 + $0xcf8] sm:$0xff]
          %v7223 = vld [vmem:[%s5 + $0xd00] sm:$0xff]
          %v7224 = vld [vmem:[%s5 + $0xd08] sm:$0xff]
          %v7225 = vld [vmem:[%s5 + $0xd10] sm:$0xff]
          %v7226 = vld [vmem:[%s5 + $0xd18] sm:$0xff]
          %v7227 = vld [vmem:[%s5 + $0xd20] sm:$0xff]
          %v7228 = vld [vmem:[%s5 + $0xd28] sm:$0xff]
          %v7229 = vld [vmem:[%s5 + $0xd30] sm:$0xff]
          %v7230 = vld [vmem:[%s5 + $0xd38] sm:$0xff]
          %v7231 = vld [vmem:[%s5 + $0xd40] sm:$0xff]
          %v7232 = vld [vmem:[%s5 + $0xd48] sm:$0xff]
          %v7233 = vld [vmem:[%s5 + $0xd50] sm:$0xff]
          %v7234 = vld [vmem:[%s5 + $0xd58] sm:$0xff]
          %v7235 = vld [vmem:[%s5 + $0xd60] sm:$0xff]
          %v7236 = vld [vmem:[%s5 + $0xd68] sm:$0xff]
          %v7237 = vld [vmem:[%s5 + $0xd70] sm:$0xff]
          %v7238 = vld [vmem:[%s5 + $0xd78] sm:$0xff]
          %v7239 = vld [vmem:[%s5 + $0xd80] sm:$0xff]
          %v7240 = vld [vmem:[%s5 + $0xd88] sm:$0xff]
          %v7241 = vld [vmem:[%s5 + $0xd90] sm:$0xff]
          %v7242 = vld [vmem:[%s5 + $0xd98] sm:$0xff]
          %v7243 = vld [vmem:[%s5 + $0xda0] sm:$0xff]
          %v7244 = vld [vmem:[%s5 + $0xda8] sm:$0xff]
          %v7245 = vld [vmem:[%s5 + $0xdb0] sm:$0xff]
          %v7246 = vld [vmem:[%s5 + $0xdb8] sm:$0xff]
          %v7247 = vld [vmem:[%s5 + $0xdc0] sm:$0xff]
          %v7248 = vld [vmem:[%s5 + $0xdc8] sm:$0xff]
          %v7249 = vld [vmem:[%s5 + $0xdd0] sm:$0xff]
          %v7250 = vld [vmem:[%s5 + $0xdd8] sm:$0xff]
          %v7251 = vld [vmem:[%s5 + $0xde0] sm:$0xff]
          %v7252 = vld [vmem:[%s5 + $0xde8] sm:$0xff]
          %v7253 = vld [vmem:[%s5 + $0xdf0] sm:$0xff]
          %v7254 = vld [vmem:[%s5 + $0xdf8] sm:$0xff]
          %v7255 = vld [vmem:[%s5 + $0xe00] sm:$0xff]
          %v7256 = vld [vmem:[%s5 + $0xe08] sm:$0xff]
          %v7257 = vld [vmem:[%s5 + $0xe10] sm:$0xff]
          %v7258 = vld [vmem:[%s5 + $0xe18] sm:$0xff]
          %v7259 = vld [vmem:[%s5 + $0xe20] sm:$0xff]
          %v7260 = vld [vmem:[%s5 + $0xe28] sm:$0xff]
          %v7261 = vld [vmem:[%s5 + $0xe30] sm:$0xff]
          %v7262 = vld [vmem:[%s5 + $0xe38] sm:$0xff]
          %v7263 = vld [vmem:[%s5 + $0xe40] sm:$0xff]
          %v7264 = vld [vmem:[%s5 + $0xe48] sm:$0xff]
          %v7265 = vld [vmem:[%s5 + $0xe50] sm:$0xff]
          %v7266 = vld [vmem:[%s5 + $0xe58] sm:$0xff]
          %v7267 = vld [vmem:[%s5 + $0xe60] sm:$0xff]
          %v7268 = vld [vmem:[%s5 + $0xe68] sm:$0xff]
          %v7269 = vld [vmem:[%s5 + $0xe70] sm:$0xff]
          %v7270 = vld [vmem:[%s5 + $0xe78] sm:$0xff]
          %v7271 = vld [vmem:[%s5 + $0xe80] sm:$0xff]
          %v7272 = vld [vmem:[%s5 + $0xe88] sm:$0xff]
          %v7273 = vld [vmem:[%s5 + $0xe90] sm:$0xff]
          %v7274 = vld [vmem:[%s5 + $0xe98] sm:$0xff]
          %v7275 = vld [vmem:[%s5 + $0xea0] sm:$0xff]
          %v7276 = vld [vmem:[%s5 + $0xea8] sm:$0xff]
          %v7277 = vld [vmem:[%s5 + $0xeb0] sm:$0xff]
          %v7278 = vld [vmem:[%s5 + $0xeb8] sm:$0xff]
          %v7279 = vld [vmem:[%s5 + $0xec0] sm:$0xff]
          %v7280 = vld [vmem:[%s5 + $0xec8] sm:$0xff]
          %v7281 = vld [vmem:[%s5 + $0xed0] sm:$0xff]
          %v7282 = vld [vmem:[%s5 + $0xed8] sm:$0xff]
          %v7283 = vld [vmem:[%s5 + $0xee0] sm:$0xff]
          %v7284 = vld [vmem:[%s5 + $0xee8] sm:$0xff]
          %v7285 = vld [vmem:[%s5 + $0xef0] sm:$0xff]
          %v7286 = vld [vmem:[%s5 + $0xef8] sm:$0xff]
          %v7287 = vld [vmem:[%s5 + $0xf00] sm:$0xff]
          %v7288 = vld [vmem:[%s5 + $0xf08] sm:$0xff]
          %v7289 = vld [vmem:[%s5 + $0xf10] sm:$0xff]
          %v7290 = vld [vmem:[%s5 + $0xf18] sm:$0xff]
          %v7291 = vld [vmem:[%s5 + $0xf20] sm:$0xff]
          %v7292 = vld [vmem:[%s5 + $0xf28] sm:$0xff]
          %v7293 = vld [vmem:[%s5 + $0xf30] sm:$0xff]
          %v7294 = vld [vmem:[%s5 + $0xf38] sm:$0xff]
          %v7295 = vld [vmem:[%s5 + $0xf40] sm:$0xff]
          %v7296 = vld [vmem:[%s5 + $0xf48] sm:$0xff]
          %v7297 = vld [vmem:[%s5 + $0xf50] sm:$0xff]
          %v7298 = vld [vmem:[%s5 + $0xf58] sm:$0xff]
          %v7299 = vld [vmem:[%s5 + $0xf60] sm:$0xff]
          %v7300 = vld [vmem:[%s5 + $0xf68] sm:$0xff]
          %v7301 = vld [vmem:[%s5 + $0xf70] sm:$0xff]
          %v7302 = vld [vmem:[%s5 + $0xf78] sm:$0xff]
          %v7303 = vld [vmem:[%s5 + $0xf80] sm:$0xff]
          %v7304 = vld [vmem:[%s5 + $0xf88] sm:$0xff]
          %v7305 = vld [vmem:[%s5 + $0xf90] sm:$0xff]
          %v7306 = vld [vmem:[%s5 + $0xf98] sm:$0xff]
          %v7307 = vld [vmem:[%s5 + $0xfa0] sm:$0xff]
          %v7308 = vld [vmem:[%s5 + $0xfa8] sm:$0xff]
          %v7309 = vld [vmem:[%s5 + $0xfb0] sm:$0xff]
          %v7310 = vld [vmem:[%s5 + $0xfb8] sm:$0xff]
          %v7311 = vld [vmem:[%s5 + $0xfc0] sm:$0xff]
          %v7312 = vld [vmem:[%s5 + $0xfc8] sm:$0xff]
          %v7313 = vld [vmem:[%s5 + $0xfd0] sm:$0xff]
          %v7314 = vld [vmem:[%s5 + $0xfd8] sm:$0xff]
          %v7315 = vld [vmem:[%s5 + $0xfe0] sm:$0xff]
          %v7316 = vld [vmem:[%s5 + $0xfe8] sm:$0xff]
          %v7317 = vld [vmem:[%s5 + $0xff0] sm:$0xff]
          %v7318 = vld [vmem:[%s5 + $0xff8] sm:$0xff]
          %v7319 = vld [vmem:[%s6] sm:$0xff]
          %v7321 = vlaneseq
          %v7322 = vshrl.u32 %v7321, 7
          %v7323 = vsub.s32 0, %v7322
          %v7324 = vrot.slane %v7319, %v7323
          %v7325 = vlaneseq
          %v7326 = vshrl.u32 %v7325, 7
          %v7327 = vsub.s32 1, %v7326
          %v7328 = vrot.slane %v7319, %v7327
          %v7329 = vlaneseq
          %v7330 = vshrl.u32 %v7329, 7
          %v7331 = vsub.s32 2, %v7330
          %v7332 = vrot.slane %v7319, %v7331
          %v7333 = vlaneseq
          %v7334 = vshrl.u32 %v7333, 7
          %v7335 = vsub.s32 3, %v7334
          %v7336 = vrot.slane %v7319, %v7335
          %v7337 = vlaneseq
          %v7338 = vshrl.u32 %v7337, 7
          %v7339 = vsub.s32 4, %v7338
          %v7340 = vrot.slane %v7319, %v7339
          %v7341 = vlaneseq
          %v7342 = vshrl.u32 %v7341, 7
          %v7343 = vsub.s32 5, %v7342
          %v7344 = vrot.slane %v7319, %v7343
          %v7345 = vlaneseq
          %v7346 = vshrl.u32 %v7345, 7
          %v7347 = vsub.s32 6, %v7346
          %v7348 = vrot.slane %v7319, %v7347
          %v7349 = vlaneseq
          %v7350 = vshrl.u32 %v7349, 7
          %v7351 = vsub.s32 7, %v7350
          %v7352 = vrot.slane %v7319, %v7351
          %v7873 = vunpack.c.l.b16 %v6807
          %v7874 = vunpack.c.h.b16 %v6807
          %v7875 = vunpack.c.l.b16 %v6808
          %v7876 = vunpack.c.h.b16 %v6808
          %v7877 = vunpack.c.l.b16 %v6809
          %v7878 = vunpack.c.h.b16 %v6809
          %v7879 = vunpack.c.l.b16 %v6810
          %v7880 = vunpack.c.h.b16 %v6810
          %v7881 = vunpack.c.l.b16 %v6811
          %v7882 = vunpack.c.h.b16 %v6811
          %v7883 = vunpack.c.l.b16 %v6812
          %v7884 = vunpack.c.h.b16 %v6812
          %v7885 = vunpack.c.l.b16 %v6813
          %v7886 = vunpack.c.h.b16 %v6813
          %v7887 = vunpack.c.l.b16 %v6814
          %v7888 = vunpack.c.h.b16 %v6814
          %v7889 = vunpack.c.l.b16 %v6815
          %v7890 = vunpack.c.h.b16 %v6815
          %v7891 = vunpack.c.l.b16 %v6816
          %v7892 = vunpack.c.h.b16 %v6816
          %v7893 = vunpack.c.l.b16 %v6817
          %v7894 = vunpack.c.h.b16 %v6817
          %v7895 = vunpack.c.l.b16 %v6818
          %v7896 = vunpack.c.h.b16 %v6818
          %v7897 = vunpack.c.l.b16 %v6819
          %v7898 = vunpack.c.h.b16 %v6819
          %v7899 = vunpack.c.l.b16 %v6820
          %v7900 = vunpack.c.h.b16 %v6820
          %v7901 = vunpack.c.l.b16 %v6821
          %v7902 = vunpack.c.h.b16 %v6821
          %v7903 = vunpack.c.l.b16 %v6822
          %v7904 = vunpack.c.h.b16 %v6822
          %v7905 = vunpack.c.l.b16 %v6823
          %v7906 = vunpack.c.h.b16 %v6823
          %v7907 = vunpack.c.l.b16 %v6824
          %v7908 = vunpack.c.h.b16 %v6824
          %v7909 = vunpack.c.l.b16 %v6825
          %v7910 = vunpack.c.h.b16 %v6825
          %v7911 = vunpack.c.l.b16 %v6826
          %v7912 = vunpack.c.h.b16 %v6826
          %v7913 = vunpack.c.l.b16 %v6827
          %v7914 = vunpack.c.h.b16 %v6827
          %v7915 = vunpack.c.l.b16 %v6828
          %v7916 = vunpack.c.h.b16 %v6828
          %v7917 = vunpack.c.l.b16 %v6829
          %v7918 = vunpack.c.h.b16 %v6829
          %v7919 = vunpack.c.l.b16 %v6830
          %v7920 = vunpack.c.h.b16 %v6830
          %v7921 = vunpack.c.l.b16 %v6831
          %v7922 = vunpack.c.h.b16 %v6831
          %v7923 = vunpack.c.l.b16 %v6832
          %v7924 = vunpack.c.h.b16 %v6832
          %v7925 = vunpack.c.l.b16 %v6833
          %v7926 = vunpack.c.h.b16 %v6833
          %v7927 = vunpack.c.l.b16 %v6834
          %v7928 = vunpack.c.h.b16 %v6834
          %v7929 = vunpack.c.l.b16 %v6835
          %v7930 = vunpack.c.h.b16 %v6835
          %v7931 = vunpack.c.l.b16 %v6836
          %v7932 = vunpack.c.h.b16 %v6836
          %v7933 = vunpack.c.l.b16 %v6837
          %v7934 = vunpack.c.h.b16 %v6837
          %v7935 = vunpack.c.l.b16 %v6838
          %v7936 = vunpack.c.h.b16 %v6838
          %v7937 = vunpack.c.l.b16 %v6839
          %v7938 = vunpack.c.h.b16 %v6839
          %v7939 = vunpack.c.l.b16 %v6840
          %v7940 = vunpack.c.h.b16 %v6840
          %v7941 = vunpack.c.l.b16 %v6841
          %v7942 = vunpack.c.h.b16 %v6841
          %v7943 = vunpack.c.l.b16 %v6842
          %v7944 = vunpack.c.h.b16 %v6842
          %v7945 = vunpack.c.l.b16 %v6843
          %v7946 = vunpack.c.h.b16 %v6843
          %v7947 = vunpack.c.l.b16 %v6844
          %v7948 = vunpack.c.h.b16 %v6844
          %v7949 = vunpack.c.l.b16 %v6845
          %v7950 = vunpack.c.h.b16 %v6845
          %v7951 = vunpack.c.l.b16 %v6846
          %v7952 = vunpack.c.h.b16 %v6846
          %v7953 = vunpack.c.l.b16 %v6847
          %v7954 = vunpack.c.h.b16 %v6847
          %v7955 = vunpack.c.l.b16 %v6848
          %v7956 = vunpack.c.h.b16 %v6848
          %v7957 = vunpack.c.l.b16 %v6849
          %v7958 = vunpack.c.h.b16 %v6849
          %v7959 = vunpack.c.l.b16 %v6850
          %v7960 = vunpack.c.h.b16 %v6850
          %v7961 = vunpack.c.l.b16 %v6851
          %v7962 = vunpack.c.h.b16 %v6851
          %v7963 = vunpack.c.l.b16 %v6852
          %v7964 = vunpack.c.h.b16 %v6852
          %v7965 = vunpack.c.l.b16 %v6853
          %v7966 = vunpack.c.h.b16 %v6853
          %v7967 = vunpack.c.l.b16 %v6854
          %v7968 = vunpack.c.h.b16 %v6854
          %v7969 = vunpack.c.l.b16 %v6855
          %v7970 = vunpack.c.h.b16 %v6855
          %v7971 = vunpack.c.l.b16 %v6856
          %v7972 = vunpack.c.h.b16 %v6856
          %v7973 = vunpack.c.l.b16 %v6857
          %v7974 = vunpack.c.h.b16 %v6857
          %v7975 = vunpack.c.l.b16 %v6858
          %v7976 = vunpack.c.h.b16 %v6858
          %v7977 = vunpack.c.l.b16 %v6859
          %v7978 = vunpack.c.h.b16 %v6859
          %v7979 = vunpack.c.l.b16 %v6860
          %v7980 = vunpack.c.h.b16 %v6860
          %v7981 = vunpack.c.l.b16 %v6861
          %v7982 = vunpack.c.h.b16 %v6861
          %v7983 = vunpack.c.l.b16 %v6862
          %v7984 = vunpack.c.h.b16 %v6862
          %v7985 = vunpack.c.l.b16 %v6863
          %v7986 = vunpack.c.h.b16 %v6863
          %v7987 = vunpack.c.l.b16 %v6864
          %v7988 = vunpack.c.h.b16 %v6864
          %v7989 = vunpack.c.l.b16 %v6865
          %v7990 = vunpack.c.h.b16 %v6865
          %v7991 = vunpack.c.l.b16 %v6866
          %v7992 = vunpack.c.h.b16 %v6866
          %v7993 = vunpack.c.l.b16 %v6867
          %v7994 = vunpack.c.h.b16 %v6867
          %v7995 = vunpack.c.l.b16 %v6868
          %v7996 = vunpack.c.h.b16 %v6868
          %v7997 = vunpack.c.l.b16 %v6869
          %v7998 = vunpack.c.h.b16 %v6869
          %v7999 = vunpack.c.l.b16 %v6870
          %v8000 = vunpack.c.h.b16 %v6870
          %v8001 = vunpack.c.l.b16 %v6871
          %v8002 = vunpack.c.h.b16 %v6871
          %v8003 = vunpack.c.l.b16 %v6872
          %v8004 = vunpack.c.h.b16 %v6872
          %v8005 = vunpack.c.l.b16 %v6873
          %v8006 = vunpack.c.h.b16 %v6873
          %v8007 = vunpack.c.l.b16 %v6874
          %v8008 = vunpack.c.h.b16 %v6874
          %v8009 = vunpack.c.l.b16 %v6875
          %v8010 = vunpack.c.h.b16 %v6875
          %v8011 = vunpack.c.l.b16 %v6876
          %v8012 = vunpack.c.h.b16 %v6876
          %v8013 = vunpack.c.l.b16 %v6877
          %v8014 = vunpack.c.h.b16 %v6877
          %v8015 = vunpack.c.l.b16 %v6878
          %v8016 = vunpack.c.h.b16 %v6878
          %v8017 = vunpack.c.l.b16 %v6879
          %v8018 = vunpack.c.h.b16 %v6879
          %v8019 = vunpack.c.l.b16 %v6880
          %v8020 = vunpack.c.h.b16 %v6880
          %v8021 = vunpack.c.l.b16 %v6881
          %v8022 = vunpack.c.h.b16 %v6881
          %v8023 = vunpack.c.l.b16 %v6882
          %v8024 = vunpack.c.h.b16 %v6882
          %v8025 = vunpack.c.l.b16 %v6883
          %v8026 = vunpack.c.h.b16 %v6883
          %v8027 = vunpack.c.l.b16 %v6884
          %v8028 = vunpack.c.h.b16 %v6884
          %v8029 = vunpack.c.l.b16 %v6885
          %v8030 = vunpack.c.h.b16 %v6885
          %v8031 = vunpack.c.l.b16 %v6886
          %v8032 = vunpack.c.h.b16 %v6886
          %v8033 = vunpack.c.l.b16 %v6887
          %v8034 = vunpack.c.h.b16 %v6887
          %v8035 = vunpack.c.l.b16 %v6888
          %v8036 = vunpack.c.h.b16 %v6888
          %v8037 = vunpack.c.l.b16 %v6889
          %v8038 = vunpack.c.h.b16 %v6889
          %v8039 = vunpack.c.l.b16 %v6890
          %v8040 = vunpack.c.h.b16 %v6890
          %v8041 = vunpack.c.l.b16 %v6891
          %v8042 = vunpack.c.h.b16 %v6891
          %v8043 = vunpack.c.l.b16 %v6892
          %v8044 = vunpack.c.h.b16 %v6892
          %v8045 = vunpack.c.l.b16 %v6893
          %v8046 = vunpack.c.h.b16 %v6893
          %v8047 = vunpack.c.l.b16 %v6894
          %v8048 = vunpack.c.h.b16 %v6894
          %v8049 = vunpack.c.l.b16 %v6895
          %v8050 = vunpack.c.h.b16 %v6895
          %v8051 = vunpack.c.l.b16 %v6896
          %v8052 = vunpack.c.h.b16 %v6896
          %v8053 = vunpack.c.l.b16 %v6897
          %v8054 = vunpack.c.h.b16 %v6897
          %v8055 = vunpack.c.l.b16 %v6898
          %v8056 = vunpack.c.h.b16 %v6898
          %v8057 = vunpack.c.l.b16 %v6899
          %v8058 = vunpack.c.h.b16 %v6899
          %v8059 = vunpack.c.l.b16 %v6900
          %v8060 = vunpack.c.h.b16 %v6900
          %v8061 = vunpack.c.l.b16 %v6901
          %v8062 = vunpack.c.h.b16 %v6901
          %v8063 = vunpack.c.l.b16 %v6902
          %v8064 = vunpack.c.h.b16 %v6902
          %v8065 = vunpack.c.l.b16 %v6903
          %v8066 = vunpack.c.h.b16 %v6903
          %v8067 = vunpack.c.l.b16 %v6904
          %v8068 = vunpack.c.h.b16 %v6904
          %v8069 = vunpack.c.l.b16 %v6905
          %v8070 = vunpack.c.h.b16 %v6905
          %v8071 = vunpack.c.l.b16 %v6906
          %v8072 = vunpack.c.h.b16 %v6906
          %v8073 = vunpack.c.l.b16 %v6907
          %v8074 = vunpack.c.h.b16 %v6907
          %v8075 = vunpack.c.l.b16 %v6908
          %v8076 = vunpack.c.h.b16 %v6908
          %v8077 = vunpack.c.l.b16 %v6909
          %v8078 = vunpack.c.h.b16 %v6909
          %v8079 = vunpack.c.l.b16 %v6910
          %v8080 = vunpack.c.h.b16 %v6910
          %v8081 = vunpack.c.l.b16 %v6911
          %v8082 = vunpack.c.h.b16 %v6911
          %v8083 = vunpack.c.l.b16 %v6912
          %v8084 = vunpack.c.h.b16 %v6912
          %v8085 = vunpack.c.l.b16 %v6913
          %v8086 = vunpack.c.h.b16 %v6913
          %v8087 = vunpack.c.l.b16 %v6914
          %v8088 = vunpack.c.h.b16 %v6914
          %v8089 = vunpack.c.l.b16 %v6915
          %v8090 = vunpack.c.h.b16 %v6915
          %v8091 = vunpack.c.l.b16 %v6916
          %v8092 = vunpack.c.h.b16 %v6916
          %v8093 = vunpack.c.l.b16 %v6917
          %v8094 = vunpack.c.h.b16 %v6917
          %v8095 = vunpack.c.l.b16 %v6918
          %v8096 = vunpack.c.h.b16 %v6918
          %v8097 = vunpack.c.l.b16 %v6919
          %v8098 = vunpack.c.h.b16 %v6919
          %v8099 = vunpack.c.l.b16 %v6920
          %v8100 = vunpack.c.h.b16 %v6920
          %v8101 = vunpack.c.l.b16 %v6921
          %v8102 = vunpack.c.h.b16 %v6921
          %v8103 = vunpack.c.l.b16 %v6922
          %v8104 = vunpack.c.h.b16 %v6922
          %v8105 = vunpack.c.l.b16 %v6923
          %v8106 = vunpack.c.h.b16 %v6923
          %v8107 = vunpack.c.l.b16 %v6924
          %v8108 = vunpack.c.h.b16 %v6924
          %v8109 = vunpack.c.l.b16 %v6925
          %v8110 = vunpack.c.h.b16 %v6925
          %v8111 = vunpack.c.l.b16 %v6926
          %v8112 = vunpack.c.h.b16 %v6926
          %v8113 = vunpack.c.l.b16 %v6927
          %v8114 = vunpack.c.h.b16 %v6927
          %v8115 = vunpack.c.l.b16 %v6928
          %v8116 = vunpack.c.h.b16 %v6928
          %v8117 = vunpack.c.l.b16 %v6929
          %v8118 = vunpack.c.h.b16 %v6929
          %v8119 = vunpack.c.l.b16 %v6930
          %v8120 = vunpack.c.h.b16 %v6930
          %v8121 = vunpack.c.l.b16 %v6931
          %v8122 = vunpack.c.h.b16 %v6931
          %v8123 = vunpack.c.l.b16 %v6932
          %v8124 = vunpack.c.h.b16 %v6932
          %v8125 = vunpack.c.l.b16 %v6933
          %v8126 = vunpack.c.h.b16 %v6933
          %v8127 = vunpack.c.l.b16 %v6934
          %v8128 = vunpack.c.h.b16 %v6934
          %v8129 = vunpack.c.l.b16 %v6935
          %v8130 = vunpack.c.h.b16 %v6935
          %v8131 = vunpack.c.l.b16 %v6936
          %v8132 = vunpack.c.h.b16 %v6936
          %v8133 = vunpack.c.l.b16 %v6937
          %v8134 = vunpack.c.h.b16 %v6937
          %v8135 = vunpack.c.l.b16 %v6938
          %v8136 = vunpack.c.h.b16 %v6938
          %v8137 = vunpack.c.l.b16 %v6939
          %v8138 = vunpack.c.h.b16 %v6939
          %v8139 = vunpack.c.l.b16 %v6940
          %v8140 = vunpack.c.h.b16 %v6940
          %v8141 = vunpack.c.l.b16 %v6941
          %v8142 = vunpack.c.h.b16 %v6941
          %v8143 = vunpack.c.l.b16 %v6942
          %v8144 = vunpack.c.h.b16 %v6942
          %v8145 = vunpack.c.l.b16 %v6943
          %v8146 = vunpack.c.h.b16 %v6943
          %v8147 = vunpack.c.l.b16 %v6944
          %v8148 = vunpack.c.h.b16 %v6944
          %v8149 = vunpack.c.l.b16 %v6945
          %v8150 = vunpack.c.h.b16 %v6945
          %v8151 = vunpack.c.l.b16 %v6946
          %v8152 = vunpack.c.h.b16 %v6946
          %v8153 = vunpack.c.l.b16 %v6947
          %v8154 = vunpack.c.h.b16 %v6947
          %v8155 = vunpack.c.l.b16 %v6948
          %v8156 = vunpack.c.h.b16 %v6948
          %v8157 = vunpack.c.l.b16 %v6949
          %v8158 = vunpack.c.h.b16 %v6949
          %v8159 = vunpack.c.l.b16 %v6950
          %v8160 = vunpack.c.h.b16 %v6950
          %v8161 = vunpack.c.l.b16 %v6951
          %v8162 = vunpack.c.h.b16 %v6951
          %v8163 = vunpack.c.l.b16 %v6952
          %v8164 = vunpack.c.h.b16 %v6952
          %v8165 = vunpack.c.l.b16 %v6953
          %v8166 = vunpack.c.h.b16 %v6953
          %v8167 = vunpack.c.l.b16 %v6954
          %v8168 = vunpack.c.h.b16 %v6954
          %v8169 = vunpack.c.l.b16 %v6955
          %v8170 = vunpack.c.h.b16 %v6955
          %v8171 = vunpack.c.l.b16 %v6956
          %v8172 = vunpack.c.h.b16 %v6956
          %v8173 = vunpack.c.l.b16 %v6957
          %v8174 = vunpack.c.h.b16 %v6957
          %v8175 = vunpack.c.l.b16 %v6958
          %v8176 = vunpack.c.h.b16 %v6958
          %v8177 = vunpack.c.l.b16 %v6959
          %v8178 = vunpack.c.h.b16 %v6959
          %v8179 = vunpack.c.l.b16 %v6960
          %v8180 = vunpack.c.h.b16 %v6960
          %v8181 = vunpack.c.l.b16 %v6961
          %v8182 = vunpack.c.h.b16 %v6961
          %v8183 = vunpack.c.l.b16 %v6962
          %v8184 = vunpack.c.h.b16 %v6962
          %v8185 = vunpack.c.l.b16 %v6963
          %v8186 = vunpack.c.h.b16 %v6963
          %v8187 = vunpack.c.l.b16 %v6964
          %v8188 = vunpack.c.h.b16 %v6964
          %v8189 = vunpack.c.l.b16 %v6965
          %v8190 = vunpack.c.h.b16 %v6965
          %v8191 = vunpack.c.l.b16 %v6966
          %v8192 = vunpack.c.h.b16 %v6966
          %v8193 = vunpack.c.l.b16 %v6967
          %v8194 = vunpack.c.h.b16 %v6967
          %v8195 = vunpack.c.l.b16 %v6968
          %v8196 = vunpack.c.h.b16 %v6968
          %v8197 = vunpack.c.l.b16 %v6969
          %v8198 = vunpack.c.h.b16 %v6969
          %v8199 = vunpack.c.l.b16 %v6970
          %v8200 = vunpack.c.h.b16 %v6970
          %v8201 = vunpack.c.l.b16 %v6971
          %v8202 = vunpack.c.h.b16 %v6971
          %v8203 = vunpack.c.l.b16 %v6972
          %v8204 = vunpack.c.h.b16 %v6972
          %v8205 = vunpack.c.l.b16 %v6973
          %v8206 = vunpack.c.h.b16 %v6973
          %v8207 = vunpack.c.l.b16 %v6974
          %v8208 = vunpack.c.h.b16 %v6974
          %v8209 = vunpack.c.l.b16 %v6975
          %v8210 = vunpack.c.h.b16 %v6975
          %v8211 = vunpack.c.l.b16 %v6976
          %v8212 = vunpack.c.h.b16 %v6976
          %v8213 = vunpack.c.l.b16 %v6977
          %v8214 = vunpack.c.h.b16 %v6977
          %v8215 = vunpack.c.l.b16 %v6978
          %v8216 = vunpack.c.h.b16 %v6978
          %v8217 = vunpack.c.l.b16 %v6979
          %v8218 = vunpack.c.h.b16 %v6979
          %v8219 = vunpack.c.l.b16 %v6980
          %v8220 = vunpack.c.h.b16 %v6980
          %v8221 = vunpack.c.l.b16 %v6981
          %v8222 = vunpack.c.h.b16 %v6981
          %v8223 = vunpack.c.l.b16 %v6982
          %v8224 = vunpack.c.h.b16 %v6982
          %v8225 = vunpack.c.l.b16 %v6983
          %v8226 = vunpack.c.h.b16 %v6983
          %v8227 = vunpack.c.l.b16 %v6984
          %v8228 = vunpack.c.h.b16 %v6984
          %v8229 = vunpack.c.l.b16 %v6985
          %v8230 = vunpack.c.h.b16 %v6985
          %v8231 = vunpack.c.l.b16 %v6986
          %v8232 = vunpack.c.h.b16 %v6986
          %v8233 = vunpack.c.l.b16 %v6987
          %v8234 = vunpack.c.h.b16 %v6987
          %v8235 = vunpack.c.l.b16 %v6988
          %v8236 = vunpack.c.h.b16 %v6988
          %v8237 = vunpack.c.l.b16 %v6989
          %v8238 = vunpack.c.h.b16 %v6989
          %v8239 = vunpack.c.l.b16 %v6990
          %v8240 = vunpack.c.h.b16 %v6990
          %v8241 = vunpack.c.l.b16 %v6991
          %v8242 = vunpack.c.h.b16 %v6991
          %v8243 = vunpack.c.l.b16 %v6992
          %v8244 = vunpack.c.h.b16 %v6992
          %v8245 = vunpack.c.l.b16 %v6993
          %v8246 = vunpack.c.h.b16 %v6993
          %v8247 = vunpack.c.l.b16 %v6994
          %v8248 = vunpack.c.h.b16 %v6994
          %v8249 = vunpack.c.l.b16 %v6995
          %v8250 = vunpack.c.h.b16 %v6995
          %v8251 = vunpack.c.l.b16 %v6996
          %v8252 = vunpack.c.h.b16 %v6996
          %v8253 = vunpack.c.l.b16 %v6997
          %v8254 = vunpack.c.h.b16 %v6997
          %v8255 = vunpack.c.l.b16 %v6998
          %v8256 = vunpack.c.h.b16 %v6998
          %v8257 = vunpack.c.l.b16 %v6999
          %v8258 = vunpack.c.h.b16 %v6999
          %v8259 = vunpack.c.l.b16 %v7000
          %v8260 = vunpack.c.h.b16 %v7000
          %v8261 = vunpack.c.l.b16 %v7001
          %v8262 = vunpack.c.h.b16 %v7001
          %v8263 = vunpack.c.l.b16 %v7002
          %v8264 = vunpack.c.h.b16 %v7002
          %v8265 = vunpack.c.l.b16 %v7003
          %v8266 = vunpack.c.h.b16 %v7003
          %v8267 = vunpack.c.l.b16 %v7004
          %v8268 = vunpack.c.h.b16 %v7004
          %v8269 = vunpack.c.l.b16 %v7005
          %v8270 = vunpack.c.h.b16 %v7005
          %v8271 = vunpack.c.l.b16 %v7006
          %v8272 = vunpack.c.h.b16 %v7006
          %v8273 = vunpack.c.l.b16 %v7007
          %v8274 = vunpack.c.h.b16 %v7007
          %v8275 = vunpack.c.l.b16 %v7008
          %v8276 = vunpack.c.h.b16 %v7008
          %v8277 = vunpack.c.l.b16 %v7009
          %v8278 = vunpack.c.h.b16 %v7009
          %v8279 = vunpack.c.l.b16 %v7010
          %v8280 = vunpack.c.h.b16 %v7010
          %v8281 = vunpack.c.l.b16 %v7011
          %v8282 = vunpack.c.h.b16 %v7011
          %v8283 = vunpack.c.l.b16 %v7012
          %v8284 = vunpack.c.h.b16 %v7012
          %v8285 = vunpack.c.l.b16 %v7013
          %v8286 = vunpack.c.h.b16 %v7013
          %v8287 = vunpack.c.l.b16 %v7014
          %v8288 = vunpack.c.h.b16 %v7014
          %v8289 = vunpack.c.l.b16 %v7015
          %v8290 = vunpack.c.h.b16 %v7015
          %v8291 = vunpack.c.l.b16 %v7016
          %v8292 = vunpack.c.h.b16 %v7016
          %v8293 = vunpack.c.l.b16 %v7017
          %v8294 = vunpack.c.h.b16 %v7017
          %v8295 = vunpack.c.l.b16 %v7018
          %v8296 = vunpack.c.h.b16 %v7018
          %v8297 = vunpack.c.l.b16 %v7019
          %v8298 = vunpack.c.h.b16 %v7019
          %v8299 = vunpack.c.l.b16 %v7020
          %v8300 = vunpack.c.h.b16 %v7020
          %v8301 = vunpack.c.l.b16 %v7021
          %v8302 = vunpack.c.h.b16 %v7021
          %v8303 = vunpack.c.l.b16 %v7022
          %v8304 = vunpack.c.h.b16 %v7022
          %v8305 = vunpack.c.l.b16 %v7023
          %v8306 = vunpack.c.h.b16 %v7023
          %v8307 = vunpack.c.l.b16 %v7024
          %v8308 = vunpack.c.h.b16 %v7024
          %v8309 = vunpack.c.l.b16 %v7025
          %v8310 = vunpack.c.h.b16 %v7025
          %v8311 = vunpack.c.l.b16 %v7026
          %v8312 = vunpack.c.h.b16 %v7026
          %v8313 = vunpack.c.l.b16 %v7027
          %v8314 = vunpack.c.h.b16 %v7027
          %v8315 = vunpack.c.l.b16 %v7028
          %v8316 = vunpack.c.h.b16 %v7028
          %v8317 = vunpack.c.l.b16 %v7029
          %v8318 = vunpack.c.h.b16 %v7029
          %v8319 = vunpack.c.l.b16 %v7030
          %v8320 = vunpack.c.h.b16 %v7030
          %v8321 = vunpack.c.l.b16 %v7031
          %v8322 = vunpack.c.h.b16 %v7031
          %v8323 = vunpack.c.l.b16 %v7032
          %v8324 = vunpack.c.h.b16 %v7032
          %v8325 = vunpack.c.l.b16 %v7033
          %v8326 = vunpack.c.h.b16 %v7033
          %v8327 = vunpack.c.l.b16 %v7034
          %v8328 = vunpack.c.h.b16 %v7034
          %v8329 = vunpack.c.l.b16 %v7035
          %v8330 = vunpack.c.h.b16 %v7035
          %v8331 = vunpack.c.l.b16 %v7036
          %v8332 = vunpack.c.h.b16 %v7036
          %v8333 = vunpack.c.l.b16 %v7037
          %v8334 = vunpack.c.h.b16 %v7037
          %v8335 = vunpack.c.l.b16 %v7038
          %v8336 = vunpack.c.h.b16 %v7038
          %v8337 = vunpack.c.l.b16 %v7039
          %v8338 = vunpack.c.h.b16 %v7039
          %v8339 = vunpack.c.l.b16 %v7040
          %v8340 = vunpack.c.h.b16 %v7040
          %v8341 = vunpack.c.l.b16 %v7041
          %v8342 = vunpack.c.h.b16 %v7041
          %v8343 = vunpack.c.l.b16 %v7042
          %v8344 = vunpack.c.h.b16 %v7042
          %v8345 = vunpack.c.l.b16 %v7043
          %v8346 = vunpack.c.h.b16 %v7043
          %v8347 = vunpack.c.l.b16 %v7044
          %v8348 = vunpack.c.h.b16 %v7044
          %v8349 = vunpack.c.l.b16 %v7045
          %v8350 = vunpack.c.h.b16 %v7045
          %v8351 = vunpack.c.l.b16 %v7046
          %v8352 = vunpack.c.h.b16 %v7046
          %v8353 = vunpack.c.l.b16 %v7047
          %v8354 = vunpack.c.h.b16 %v7047
          %v8355 = vunpack.c.l.b16 %v7048
          %v8356 = vunpack.c.h.b16 %v7048
          %v8357 = vunpack.c.l.b16 %v7049
          %v8358 = vunpack.c.h.b16 %v7049
          %v8359 = vunpack.c.l.b16 %v7050
          %v8360 = vunpack.c.h.b16 %v7050
          %v8361 = vunpack.c.l.b16 %v7051
          %v8362 = vunpack.c.h.b16 %v7051
          %v8363 = vunpack.c.l.b16 %v7052
          %v8364 = vunpack.c.h.b16 %v7052
          %v8365 = vunpack.c.l.b16 %v7053
          %v8366 = vunpack.c.h.b16 %v7053
          %v8367 = vunpack.c.l.b16 %v7054
          %v8368 = vunpack.c.h.b16 %v7054
          %v8369 = vunpack.c.l.b16 %v7055
          %v8370 = vunpack.c.h.b16 %v7055
          %v8371 = vunpack.c.l.b16 %v7056
          %v8372 = vunpack.c.h.b16 %v7056
          %v8373 = vunpack.c.l.b16 %v7057
          %v8374 = vunpack.c.h.b16 %v7057
          %v8375 = vunpack.c.l.b16 %v7058
          %v8376 = vunpack.c.h.b16 %v7058
          %v8377 = vunpack.c.l.b16 %v7059
          %v8378 = vunpack.c.h.b16 %v7059
          %v8379 = vunpack.c.l.b16 %v7060
          %v8380 = vunpack.c.h.b16 %v7060
          %v8381 = vunpack.c.l.b16 %v7061
          %v8382 = vunpack.c.h.b16 %v7061
          %v8383 = vunpack.c.l.b16 %v7062
          %v8384 = vunpack.c.h.b16 %v7062
          %v8385 = vunpack.c.l.b16 %v7063
          %v8386 = vunpack.c.h.b16 %v7063
          %v8387 = vunpack.c.l.b16 %v7064
          %v8388 = vunpack.c.h.b16 %v7064
          %v8389 = vunpack.c.l.b16 %v7065
          %v8390 = vunpack.c.h.b16 %v7065
          %v8391 = vunpack.c.l.b16 %v7066
          %v8392 = vunpack.c.h.b16 %v7066
          %v8393 = vunpack.c.l.b16 %v7067
          %v8394 = vunpack.c.h.b16 %v7067
          %v8395 = vunpack.c.l.b16 %v7068
          %v8396 = vunpack.c.h.b16 %v7068
          %v8397 = vunpack.c.l.b16 %v7069
          %v8398 = vunpack.c.h.b16 %v7069
          %v8399 = vunpack.c.l.b16 %v7070
          %v8400 = vunpack.c.h.b16 %v7070
          %v8401 = vunpack.c.l.b16 %v7071
          %v8402 = vunpack.c.h.b16 %v7071
          %v8403 = vunpack.c.l.b16 %v7072
          %v8404 = vunpack.c.h.b16 %v7072
          %v8405 = vunpack.c.l.b16 %v7073
          %v8406 = vunpack.c.h.b16 %v7073
          %v8407 = vunpack.c.l.b16 %v7074
          %v8408 = vunpack.c.h.b16 %v7074
          %v8409 = vunpack.c.l.b16 %v7075
          %v8410 = vunpack.c.h.b16 %v7075
          %v8411 = vunpack.c.l.b16 %v7076
          %v8412 = vunpack.c.h.b16 %v7076
          %v8413 = vunpack.c.l.b16 %v7077
          %v8414 = vunpack.c.h.b16 %v7077
          %v8415 = vunpack.c.l.b16 %v7078
          %v8416 = vunpack.c.h.b16 %v7078
          %v8417 = vunpack.c.l.b16 %v7079
          %v8418 = vunpack.c.h.b16 %v7079
          %v8419 = vunpack.c.l.b16 %v7080
          %v8420 = vunpack.c.h.b16 %v7080
          %v8421 = vunpack.c.l.b16 %v7081
          %v8422 = vunpack.c.h.b16 %v7081
          %v8423 = vunpack.c.l.b16 %v7082
          %v8424 = vunpack.c.h.b16 %v7082
          %v8425 = vunpack.c.l.b16 %v7083
          %v8426 = vunpack.c.h.b16 %v7083
          %v8427 = vunpack.c.l.b16 %v7084
          %v8428 = vunpack.c.h.b16 %v7084
          %v8429 = vunpack.c.l.b16 %v7085
          %v8430 = vunpack.c.h.b16 %v7085
          %v8431 = vunpack.c.l.b16 %v7086
          %v8432 = vunpack.c.h.b16 %v7086
          %v8433 = vunpack.c.l.b16 %v7087
          %v8434 = vunpack.c.h.b16 %v7087
          %v8435 = vunpack.c.l.b16 %v7088
          %v8436 = vunpack.c.h.b16 %v7088
          %v8437 = vunpack.c.l.b16 %v7089
          %v8438 = vunpack.c.h.b16 %v7089
          %v8439 = vunpack.c.l.b16 %v7090
          %v8440 = vunpack.c.h.b16 %v7090
          %v8441 = vunpack.c.l.b16 %v7091
          %v8442 = vunpack.c.h.b16 %v7091
          %v8443 = vunpack.c.l.b16 %v7092
          %v8444 = vunpack.c.h.b16 %v7092
          %v8445 = vunpack.c.l.b16 %v7093
          %v8446 = vunpack.c.h.b16 %v7093
          %v8447 = vunpack.c.l.b16 %v7094
          %v8448 = vunpack.c.h.b16 %v7094
          %v8449 = vunpack.c.l.b16 %v7095
          %v8450 = vunpack.c.h.b16 %v7095
          %v8451 = vunpack.c.l.b16 %v7096
          %v8452 = vunpack.c.h.b16 %v7096
          %v8453 = vunpack.c.l.b16 %v7097
          %v8454 = vunpack.c.h.b16 %v7097
          %v8455 = vunpack.c.l.b16 %v7098
          %v8456 = vunpack.c.h.b16 %v7098
          %v8457 = vunpack.c.l.b16 %v7099
          %v8458 = vunpack.c.h.b16 %v7099
          %v8459 = vunpack.c.l.b16 %v7100
          %v8460 = vunpack.c.h.b16 %v7100
          %v8461 = vunpack.c.l.b16 %v7101
          %v8462 = vunpack.c.h.b16 %v7101
          %v8463 = vunpack.c.l.b16 %v7102
          %v8464 = vunpack.c.h.b16 %v7102
          %v8465 = vunpack.c.l.b16 %v7103
          %v8466 = vunpack.c.h.b16 %v7103
          %v8467 = vunpack.c.l.b16 %v7104
          %v8468 = vunpack.c.h.b16 %v7104
          %v8469 = vunpack.c.l.b16 %v7105
          %v8470 = vunpack.c.h.b16 %v7105
          %v8471 = vunpack.c.l.b16 %v7106
          %v8472 = vunpack.c.h.b16 %v7106
          %v8473 = vunpack.c.l.b16 %v7107
          %v8474 = vunpack.c.h.b16 %v7107
          %v8475 = vunpack.c.l.b16 %v7108
          %v8476 = vunpack.c.h.b16 %v7108
          %v8477 = vunpack.c.l.b16 %v7109
          %v8478 = vunpack.c.h.b16 %v7109
          %v8479 = vunpack.c.l.b16 %v7110
          %v8480 = vunpack.c.h.b16 %v7110
          %v8481 = vunpack.c.l.b16 %v7111
          %v8482 = vunpack.c.h.b16 %v7111
          %v8483 = vunpack.c.l.b16 %v7112
          %v8484 = vunpack.c.h.b16 %v7112
          %v8485 = vunpack.c.l.b16 %v7113
          %v8486 = vunpack.c.h.b16 %v7113
          %v8487 = vunpack.c.l.b16 %v7114
          %v8488 = vunpack.c.h.b16 %v7114
          %v8489 = vunpack.c.l.b16 %v7115
          %v8490 = vunpack.c.h.b16 %v7115
          %v8491 = vunpack.c.l.b16 %v7116
          %v8492 = vunpack.c.h.b16 %v7116
          %v8493 = vunpack.c.l.b16 %v7117
          %v8494 = vunpack.c.h.b16 %v7117
          %v8495 = vunpack.c.l.b16 %v7118
          %v8496 = vunpack.c.h.b16 %v7118
          %v8497 = vunpack.c.l.b16 %v7119
          %v8498 = vunpack.c.h.b16 %v7119
          %v8499 = vunpack.c.l.b16 %v7120
          %v8500 = vunpack.c.h.b16 %v7120
          %v8501 = vunpack.c.l.b16 %v7121
          %v8502 = vunpack.c.h.b16 %v7121
          %v8503 = vunpack.c.l.b16 %v7122
          %v8504 = vunpack.c.h.b16 %v7122
          %v8505 = vunpack.c.l.b16 %v7123
          %v8506 = vunpack.c.h.b16 %v7123
          %v8507 = vunpack.c.l.b16 %v7124
          %v8508 = vunpack.c.h.b16 %v7124
          %v8509 = vunpack.c.l.b16 %v7125
          %v8510 = vunpack.c.h.b16 %v7125
          %v8511 = vunpack.c.l.b16 %v7126
          %v8512 = vunpack.c.h.b16 %v7126
          %v8513 = vunpack.c.l.b16 %v7127
          %v8514 = vunpack.c.h.b16 %v7127
          %v8515 = vunpack.c.l.b16 %v7128
          %v8516 = vunpack.c.h.b16 %v7128
          %v8517 = vunpack.c.l.b16 %v7129
          %v8518 = vunpack.c.h.b16 %v7129
          %v8519 = vunpack.c.l.b16 %v7130
          %v8520 = vunpack.c.h.b16 %v7130
          %v8521 = vunpack.c.l.b16 %v7131
          %v8522 = vunpack.c.h.b16 %v7131
          %v8523 = vunpack.c.l.b16 %v7132
          %v8524 = vunpack.c.h.b16 %v7132
          %v8525 = vunpack.c.l.b16 %v7133
          %v8526 = vunpack.c.h.b16 %v7133
          %v8527 = vunpack.c.l.b16 %v7134
          %v8528 = vunpack.c.h.b16 %v7134
          %v8529 = vunpack.c.l.b16 %v7135
          %v8530 = vunpack.c.h.b16 %v7135
          %v8531 = vunpack.c.l.b16 %v7136
          %v8532 = vunpack.c.h.b16 %v7136
          %v8533 = vunpack.c.l.b16 %v7137
          %v8534 = vunpack.c.h.b16 %v7137
          %v8535 = vunpack.c.l.b16 %v7138
          %v8536 = vunpack.c.h.b16 %v7138
          %v8537 = vunpack.c.l.b16 %v7139
          %v8538 = vunpack.c.h.b16 %v7139
          %v8539 = vunpack.c.l.b16 %v7140
          %v8540 = vunpack.c.h.b16 %v7140
          %v8541 = vunpack.c.l.b16 %v7141
          %v8542 = vunpack.c.h.b16 %v7141
          %v8543 = vunpack.c.l.b16 %v7142
          %v8544 = vunpack.c.h.b16 %v7142
          %v8545 = vunpack.c.l.b16 %v7143
          %v8546 = vunpack.c.h.b16 %v7143
          %v8547 = vunpack.c.l.b16 %v7144
          %v8548 = vunpack.c.h.b16 %v7144
          %v8549 = vunpack.c.l.b16 %v7145
          %v8550 = vunpack.c.h.b16 %v7145
          %v8551 = vunpack.c.l.b16 %v7146
          %v8552 = vunpack.c.h.b16 %v7146
          %v8553 = vunpack.c.l.b16 %v7147
          %v8554 = vunpack.c.h.b16 %v7147
          %v8555 = vunpack.c.l.b16 %v7148
          %v8556 = vunpack.c.h.b16 %v7148
          %v8557 = vunpack.c.l.b16 %v7149
          %v8558 = vunpack.c.h.b16 %v7149
          %v8559 = vunpack.c.l.b16 %v7150
          %v8560 = vunpack.c.h.b16 %v7150
          %v8561 = vunpack.c.l.b16 %v7151
          %v8562 = vunpack.c.h.b16 %v7151
          %v8563 = vunpack.c.l.b16 %v7152
          %v8564 = vunpack.c.h.b16 %v7152
          %v8565 = vunpack.c.l.b16 %v7153
          %v8566 = vunpack.c.h.b16 %v7153
          %v8567 = vunpack.c.l.b16 %v7154
          %v8568 = vunpack.c.h.b16 %v7154
          %v8569 = vunpack.c.l.b16 %v7155
          %v8570 = vunpack.c.h.b16 %v7155
          %v8571 = vunpack.c.l.b16 %v7156
          %v8572 = vunpack.c.h.b16 %v7156
          %v8573 = vunpack.c.l.b16 %v7157
          %v8574 = vunpack.c.h.b16 %v7157
          %v8575 = vunpack.c.l.b16 %v7158
          %v8576 = vunpack.c.h.b16 %v7158
          %v8577 = vunpack.c.l.b16 %v7159
          %v8578 = vunpack.c.h.b16 %v7159
          %v8579 = vunpack.c.l.b16 %v7160
          %v8580 = vunpack.c.h.b16 %v7160
          %v8581 = vunpack.c.l.b16 %v7161
          %v8582 = vunpack.c.h.b16 %v7161
          %v8583 = vunpack.c.l.b16 %v7162
          %v8584 = vunpack.c.h.b16 %v7162
          %v8585 = vunpack.c.l.b16 %v7163
          %v8586 = vunpack.c.h.b16 %v7163
          %v8587 = vunpack.c.l.b16 %v7164
          %v8588 = vunpack.c.h.b16 %v7164
          %v8589 = vunpack.c.l.b16 %v7165
          %v8590 = vunpack.c.h.b16 %v7165
          %v8591 = vunpack.c.l.b16 %v7166
          %v8592 = vunpack.c.h.b16 %v7166
          %v8593 = vunpack.c.l.b16 %v7167
          %v8594 = vunpack.c.h.b16 %v7167
          %v8595 = vunpack.c.l.b16 %v7168
          %v8596 = vunpack.c.h.b16 %v7168
          %v8597 = vunpack.c.l.b16 %v7169
          %v8598 = vunpack.c.h.b16 %v7169
          %v8599 = vunpack.c.l.b16 %v7170
          %v8600 = vunpack.c.h.b16 %v7170
          %v8601 = vunpack.c.l.b16 %v7171
          %v8602 = vunpack.c.h.b16 %v7171
          %v8603 = vunpack.c.l.b16 %v7172
          %v8604 = vunpack.c.h.b16 %v7172
          %v8605 = vunpack.c.l.b16 %v7173
          %v8606 = vunpack.c.h.b16 %v7173
          %v8607 = vunpack.c.l.b16 %v7174
          %v8608 = vunpack.c.h.b16 %v7174
          %v8609 = vunpack.c.l.b16 %v7175
          %v8610 = vunpack.c.h.b16 %v7175
          %v8611 = vunpack.c.l.b16 %v7176
          %v8612 = vunpack.c.h.b16 %v7176
          %v8613 = vunpack.c.l.b16 %v7177
          %v8614 = vunpack.c.h.b16 %v7177
          %v8615 = vunpack.c.l.b16 %v7178
          %v8616 = vunpack.c.h.b16 %v7178
          %v8617 = vunpack.c.l.b16 %v7179
          %v8618 = vunpack.c.h.b16 %v7179
          %v8619 = vunpack.c.l.b16 %v7180
          %v8620 = vunpack.c.h.b16 %v7180
          %v8621 = vunpack.c.l.b16 %v7181
          %v8622 = vunpack.c.h.b16 %v7181
          %v8623 = vunpack.c.l.b16 %v7182
          %v8624 = vunpack.c.h.b16 %v7182
          %v8625 = vunpack.c.l.b16 %v7183
          %v8626 = vunpack.c.h.b16 %v7183
          %v8627 = vunpack.c.l.b16 %v7184
          %v8628 = vunpack.c.h.b16 %v7184
          %v8629 = vunpack.c.l.b16 %v7185
          %v8630 = vunpack.c.h.b16 %v7185
          %v8631 = vunpack.c.l.b16 %v7186
          %v8632 = vunpack.c.h.b16 %v7186
          %v8633 = vunpack.c.l.b16 %v7187
          %v8634 = vunpack.c.h.b16 %v7187
          %v8635 = vunpack.c.l.b16 %v7188
          %v8636 = vunpack.c.h.b16 %v7188
          %v8637 = vunpack.c.l.b16 %v7189
          %v8638 = vunpack.c.h.b16 %v7189
          %v8639 = vunpack.c.l.b16 %v7190
          %v8640 = vunpack.c.h.b16 %v7190
          %v8641 = vunpack.c.l.b16 %v7191
          %v8642 = vunpack.c.h.b16 %v7191
          %v8643 = vunpack.c.l.b16 %v7192
          %v8644 = vunpack.c.h.b16 %v7192
          %v8645 = vunpack.c.l.b16 %v7193
          %v8646 = vunpack.c.h.b16 %v7193
          %v8647 = vunpack.c.l.b16 %v7194
          %v8648 = vunpack.c.h.b16 %v7194
          %v8649 = vunpack.c.l.b16 %v7195
          %v8650 = vunpack.c.h.b16 %v7195
          %v8651 = vunpack.c.l.b16 %v7196
          %v8652 = vunpack.c.h.b16 %v7196
          %v8653 = vunpack.c.l.b16 %v7197
          %v8654 = vunpack.c.h.b16 %v7197
          %v8655 = vunpack.c.l.b16 %v7198
          %v8656 = vunpack.c.h.b16 %v7198
          %v8657 = vunpack.c.l.b16 %v7199
          %v8658 = vunpack.c.h.b16 %v7199
          %v8659 = vunpack.c.l.b16 %v7200
          %v8660 = vunpack.c.h.b16 %v7200
          %v8661 = vunpack.c.l.b16 %v7201
          %v8662 = vunpack.c.h.b16 %v7201
          %v8663 = vunpack.c.l.b16 %v7202
          %v8664 = vunpack.c.h.b16 %v7202
          %v8665 = vunpack.c.l.b16 %v7203
          %v8666 = vunpack.c.h.b16 %v7203
          %v8667 = vunpack.c.l.b16 %v7204
          %v8668 = vunpack.c.h.b16 %v7204
          %v8669 = vunpack.c.l.b16 %v7205
          %v8670 = vunpack.c.h.b16 %v7205
          %v8671 = vunpack.c.l.b16 %v7206
          %v8672 = vunpack.c.h.b16 %v7206
          %v8673 = vunpack.c.l.b16 %v7207
          %v8674 = vunpack.c.h.b16 %v7207
          %v8675 = vunpack.c.l.b16 %v7208
          %v8676 = vunpack.c.h.b16 %v7208
          %v8677 = vunpack.c.l.b16 %v7209
          %v8678 = vunpack.c.h.b16 %v7209
          %v8679 = vunpack.c.l.b16 %v7210
          %v8680 = vunpack.c.h.b16 %v7210
          %v8681 = vunpack.c.l.b16 %v7211
          %v8682 = vunpack.c.h.b16 %v7211
          %v8683 = vunpack.c.l.b16 %v7212
          %v8684 = vunpack.c.h.b16 %v7212
          %v8685 = vunpack.c.l.b16 %v7213
          %v8686 = vunpack.c.h.b16 %v7213
          %v8687 = vunpack.c.l.b16 %v7214
          %v8688 = vunpack.c.h.b16 %v7214
          %v8689 = vunpack.c.l.b16 %v7215
          %v8690 = vunpack.c.h.b16 %v7215
          %v8691 = vunpack.c.l.b16 %v7216
          %v8692 = vunpack.c.h.b16 %v7216
          %v8693 = vunpack.c.l.b16 %v7217
          %v8694 = vunpack.c.h.b16 %v7217
          %v8695 = vunpack.c.l.b16 %v7218
          %v8696 = vunpack.c.h.b16 %v7218
          %v8697 = vunpack.c.l.b16 %v7219
          %v8698 = vunpack.c.h.b16 %v7219
          %v8699 = vunpack.c.l.b16 %v7220
          %v8700 = vunpack.c.h.b16 %v7220
          %v8701 = vunpack.c.l.b16 %v7221
          %v8702 = vunpack.c.h.b16 %v7221
          %v8703 = vunpack.c.l.b16 %v7222
          %v8704 = vunpack.c.h.b16 %v7222
          %v8705 = vunpack.c.l.b16 %v7223
          %v8706 = vunpack.c.h.b16 %v7223
          %v8707 = vunpack.c.l.b16 %v7224
          %v8708 = vunpack.c.h.b16 %v7224
          %v8709 = vunpack.c.l.b16 %v7225
          %v8710 = vunpack.c.h.b16 %v7225
          %v8711 = vunpack.c.l.b16 %v7226
          %v8712 = vunpack.c.h.b16 %v7226
          %v8713 = vunpack.c.l.b16 %v7227
          %v8714 = vunpack.c.h.b16 %v7227
          %v8715 = vunpack.c.l.b16 %v7228
          %v8716 = vunpack.c.h.b16 %v7228
          %v8717 = vunpack.c.l.b16 %v7229
          %v8718 = vunpack.c.h.b16 %v7229
          %v8719 = vunpack.c.l.b16 %v7230
          %v8720 = vunpack.c.h.b16 %v7230
          %v8721 = vunpack.c.l.b16 %v7231
          %v8722 = vunpack.c.h.b16 %v7231
          %v8723 = vunpack.c.l.b16 %v7232
          %v8724 = vunpack.c.h.b16 %v7232
          %v8725 = vunpack.c.l.b16 %v7233
          %v8726 = vunpack.c.h.b16 %v7233
          %v8727 = vunpack.c.l.b16 %v7234
          %v8728 = vunpack.c.h.b16 %v7234
          %v8729 = vunpack.c.l.b16 %v7235
          %v8730 = vunpack.c.h.b16 %v7235
          %v8731 = vunpack.c.l.b16 %v7236
          %v8732 = vunpack.c.h.b16 %v7236
          %v8733 = vunpack.c.l.b16 %v7237
          %v8734 = vunpack.c.h.b16 %v7237
          %v8735 = vunpack.c.l.b16 %v7238
          %v8736 = vunpack.c.h.b16 %v7238
          %v8737 = vunpack.c.l.b16 %v7239
          %v8738 = vunpack.c.h.b16 %v7239
          %v8739 = vunpack.c.l.b16 %v7240
          %v8740 = vunpack.c.h.b16 %v7240
          %v8741 = vunpack.c.l.b16 %v7241
          %v8742 = vunpack.c.h.b16 %v7241
          %v8743 = vunpack.c.l.b16 %v7242
          %v8744 = vunpack.c.h.b16 %v7242
          %v8745 = vunpack.c.l.b16 %v7243
          %v8746 = vunpack.c.h.b16 %v7243
          %v8747 = vunpack.c.l.b16 %v7244
          %v8748 = vunpack.c.h.b16 %v7244
          %v8749 = vunpack.c.l.b16 %v7245
          %v8750 = vunpack.c.h.b16 %v7245
          %v8751 = vunpack.c.l.b16 %v7246
          %v8752 = vunpack.c.h.b16 %v7246
          %v8753 = vunpack.c.l.b16 %v7247
          %v8754 = vunpack.c.h.b16 %v7247
          %v8755 = vunpack.c.l.b16 %v7248
          %v8756 = vunpack.c.h.b16 %v7248
          %v8757 = vunpack.c.l.b16 %v7249
          %v8758 = vunpack.c.h.b16 %v7249
          %v8759 = vunpack.c.l.b16 %v7250
          %v8760 = vunpack.c.h.b16 %v7250
          %v8761 = vunpack.c.l.b16 %v7251
          %v8762 = vunpack.c.h.b16 %v7251
          %v8763 = vunpack.c.l.b16 %v7252
          %v8764 = vunpack.c.h.b16 %v7252
          %v8765 = vunpack.c.l.b16 %v7253
          %v8766 = vunpack.c.h.b16 %v7253
          %v8767 = vunpack.c.l.b16 %v7254
          %v8768 = vunpack.c.h.b16 %v7254
          %v8769 = vunpack.c.l.b16 %v7255
          %v8770 = vunpack.c.h.b16 %v7255
          %v8771 = vunpack.c.l.b16 %v7256
          %v8772 = vunpack.c.h.b16 %v7256
          %v8773 = vunpack.c.l.b16 %v7257
          %v8774 = vunpack.c.h.b16 %v7257
          %v8775 = vunpack.c.l.b16 %v7258
          %v8776 = vunpack.c.h.b16 %v7258
          %v8777 = vunpack.c.l.b16 %v7259
          %v8778 = vunpack.c.h.b16 %v7259
          %v8779 = vunpack.c.l.b16 %v7260
          %v8780 = vunpack.c.h.b16 %v7260
          %v8781 = vunpack.c.l.b16 %v7261
          %v8782 = vunpack.c.h.b16 %v7261
          %v8783 = vunpack.c.l.b16 %v7262
          %v8784 = vunpack.c.h.b16 %v7262
          %v8785 = vunpack.c.l.b16 %v7263
          %v8786 = vunpack.c.h.b16 %v7263
          %v8787 = vunpack.c.l.b16 %v7264
          %v8788 = vunpack.c.h.b16 %v7264
          %v8789 = vunpack.c.l.b16 %v7265
          %v8790 = vunpack.c.h.b16 %v7265
          %v8791 = vunpack.c.l.b16 %v7266
          %v8792 = vunpack.c.h.b16 %v7266
          %v8793 = vunpack.c.l.b16 %v7267
          %v8794 = vunpack.c.h.b16 %v7267
          %v8795 = vunpack.c.l.b16 %v7268
          %v8796 = vunpack.c.h.b16 %v7268
          %v8797 = vunpack.c.l.b16 %v7269
          %v8798 = vunpack.c.h.b16 %v7269
          %v8799 = vunpack.c.l.b16 %v7270
          %v8800 = vunpack.c.h.b16 %v7270
          %v8801 = vunpack.c.l.b16 %v7271
          %v8802 = vunpack.c.h.b16 %v7271
          %v8803 = vunpack.c.l.b16 %v7272
          %v8804 = vunpack.c.h.b16 %v7272
          %v8805 = vunpack.c.l.b16 %v7273
          %v8806 = vunpack.c.h.b16 %v7273
          %v8807 = vunpack.c.l.b16 %v7274
          %v8808 = vunpack.c.h.b16 %v7274
          %v8809 = vunpack.c.l.b16 %v7275
          %v8810 = vunpack.c.h.b16 %v7275
          %v8811 = vunpack.c.l.b16 %v7276
          %v8812 = vunpack.c.h.b16 %v7276
          %v8813 = vunpack.c.l.b16 %v7277
          %v8814 = vunpack.c.h.b16 %v7277
          %v8815 = vunpack.c.l.b16 %v7278
          %v8816 = vunpack.c.h.b16 %v7278
          %v8817 = vunpack.c.l.b16 %v7279
          %v8818 = vunpack.c.h.b16 %v7279
          %v8819 = vunpack.c.l.b16 %v7280
          %v8820 = vunpack.c.h.b16 %v7280
          %v8821 = vunpack.c.l.b16 %v7281
          %v8822 = vunpack.c.h.b16 %v7281
          %v8823 = vunpack.c.l.b16 %v7282
          %v8824 = vunpack.c.h.b16 %v7282
          %v8825 = vunpack.c.l.b16 %v7283
          %v8826 = vunpack.c.h.b16 %v7283
          %v8827 = vunpack.c.l.b16 %v7284
          %v8828 = vunpack.c.h.b16 %v7284
          %v8829 = vunpack.c.l.b16 %v7285
          %v8830 = vunpack.c.h.b16 %v7285
          %v8831 = vunpack.c.l.b16 %v7286
          %v8832 = vunpack.c.h.b16 %v7286
          %v8833 = vunpack.c.l.b16 %v7287
          %v8834 = vunpack.c.h.b16 %v7287
          %v8835 = vunpack.c.l.b16 %v7288
          %v8836 = vunpack.c.h.b16 %v7288
          %v8837 = vunpack.c.l.b16 %v7289
          %v8838 = vunpack.c.h.b16 %v7289
          %v8839 = vunpack.c.l.b16 %v7290
          %v8840 = vunpack.c.h.b16 %v7290
          %v8841 = vunpack.c.l.b16 %v7291
          %v8842 = vunpack.c.h.b16 %v7291
          %v8843 = vunpack.c.l.b16 %v7292
          %v8844 = vunpack.c.h.b16 %v7292
          %v8845 = vunpack.c.l.b16 %v7293
          %v8846 = vunpack.c.h.b16 %v7293
          %v8847 = vunpack.c.l.b16 %v7294
          %v8848 = vunpack.c.h.b16 %v7294
          %v8849 = vunpack.c.l.b16 %v7295
          %v8850 = vunpack.c.h.b16 %v7295
          %v8851 = vunpack.c.l.b16 %v7296
          %v8852 = vunpack.c.h.b16 %v7296
          %v8853 = vunpack.c.l.b16 %v7297
          %v8854 = vunpack.c.h.b16 %v7297
          %v8855 = vunpack.c.l.b16 %v7298
          %v8856 = vunpack.c.h.b16 %v7298
          %v8857 = vunpack.c.l.b16 %v7299
          %v8858 = vunpack.c.h.b16 %v7299
          %v8859 = vunpack.c.l.b16 %v7300
          %v8860 = vunpack.c.h.b16 %v7300
          %v8861 = vunpack.c.l.b16 %v7301
          %v8862 = vunpack.c.h.b16 %v7301
          %v8863 = vunpack.c.l.b16 %v7302
          %v8864 = vunpack.c.h.b16 %v7302
          %v8865 = vunpack.c.l.b16 %v7303
          %v8866 = vunpack.c.h.b16 %v7303
          %v8867 = vunpack.c.l.b16 %v7304
          %v8868 = vunpack.c.h.b16 %v7304
          %v8869 = vunpack.c.l.b16 %v7305
          %v8870 = vunpack.c.h.b16 %v7305
          %v8871 = vunpack.c.l.b16 %v7306
          %v8872 = vunpack.c.h.b16 %v7306
          %v8873 = vunpack.c.l.b16 %v7307
          %v8874 = vunpack.c.h.b16 %v7307
          %v8875 = vunpack.c.l.b16 %v7308
          %v8876 = vunpack.c.h.b16 %v7308
          %v8877 = vunpack.c.l.b16 %v7309
          %v8878 = vunpack.c.h.b16 %v7309
          %v8879 = vunpack.c.l.b16 %v7310
          %v8880 = vunpack.c.h.b16 %v7310
          %v8881 = vunpack.c.l.b16 %v7311
          %v8882 = vunpack.c.h.b16 %v7311
          %v8883 = vunpack.c.l.b16 %v7312
          %v8884 = vunpack.c.h.b16 %v7312
          %v8885 = vunpack.c.l.b16 %v7313
          %v8886 = vunpack.c.h.b16 %v7313
          %v8887 = vunpack.c.l.b16 %v7314
          %v8888 = vunpack.c.h.b16 %v7314
          %v8889 = vunpack.c.l.b16 %v7315
          %v8890 = vunpack.c.h.b16 %v7315
          %v8891 = vunpack.c.l.b16 %v7316
          %v8892 = vunpack.c.h.b16 %v7316
          %v8893 = vunpack.c.l.b16 %v7317
          %v8894 = vunpack.c.h.b16 %v7317
          %v8895 = vunpack.c.l.b16 %v7318
          %v8896 = vunpack.c.h.b16 %v7318
          %v8897 = vpack.c.b16 %v7881, %v7873
          %v8898 = vpack.c.b16 %v7882, %v7874
          %v8899 = vpack.c.b16 %v7883, %v7875
          %v8900 = vpack.c.b16 %v7884, %v7876
          %v8901 = vpack.c.b16 %v7885, %v7877
          %v8902 = vpack.c.b16 %v7886, %v7878
          %v8903 = vpack.c.b16 %v7887, %v7879
          %v8904 = vpack.c.b16 %v7888, %v7880
          %v8905 = vpack.c.b16 %v7897, %v7889
          %v8906 = vpack.c.b16 %v7898, %v7890
          %v8907 = vpack.c.b16 %v7899, %v7891
          %v8908 = vpack.c.b16 %v7900, %v7892
          %v8909 = vpack.c.b16 %v7901, %v7893
          %v8910 = vpack.c.b16 %v7902, %v7894
          %v8911 = vpack.c.b16 %v7903, %v7895
          %v8912 = vpack.c.b16 %v7904, %v7896
          %v8913 = vpack.c.b16 %v7913, %v7905
          %v8914 = vpack.c.b16 %v7914, %v7906
          %v8915 = vpack.c.b16 %v7915, %v7907
          %v8916 = vpack.c.b16 %v7916, %v7908
          %v8917 = vpack.c.b16 %v7917, %v7909
          %v8918 = vpack.c.b16 %v7918, %v7910
          %v8919 = vpack.c.b16 %v7919, %v7911
          %v8920 = vpack.c.b16 %v7920, %v7912
          %v8921 = vpack.c.b16 %v7929, %v7921
          %v8922 = vpack.c.b16 %v7930, %v7922
          %v8923 = vpack.c.b16 %v7931, %v7923
          %v8924 = vpack.c.b16 %v7932, %v7924
          %v8925 = vpack.c.b16 %v7933, %v7925
          %v8926 = vpack.c.b16 %v7934, %v7926
          %v8927 = vpack.c.b16 %v7935, %v7927
          %v8928 = vpack.c.b16 %v7936, %v7928
          %v8929 = vpack.c.b16 %v7945, %v7937
          %v8930 = vpack.c.b16 %v7946, %v7938
          %v8931 = vpack.c.b16 %v7947, %v7939
          %v8932 = vpack.c.b16 %v7948, %v7940
          %v8933 = vpack.c.b16 %v7949, %v7941
          %v8934 = vpack.c.b16 %v7950, %v7942
          %v8935 = vpack.c.b16 %v7951, %v7943
          %v8936 = vpack.c.b16 %v7952, %v7944
          %v8937 = vpack.c.b16 %v7961, %v7953
          %v8938 = vpack.c.b16 %v7962, %v7954
          %v8939 = vpack.c.b16 %v7963, %v7955
          %v8940 = vpack.c.b16 %v7964, %v7956
          %v8941 = vpack.c.b16 %v7965, %v7957
          %v8942 = vpack.c.b16 %v7966, %v7958
          %v8943 = vpack.c.b16 %v7967, %v7959
          %v8944 = vpack.c.b16 %v7968, %v7960
          %v8945 = vpack.c.b16 %v7977, %v7969
          %v8946 = vpack.c.b16 %v7978, %v7970
          %v8947 = vpack.c.b16 %v7979, %v7971
          %v8948 = vpack.c.b16 %v7980, %v7972
          %v8949 = vpack.c.b16 %v7981, %v7973
          %v8950 = vpack.c.b16 %v7982, %v7974
          %v8951 = vpack.c.b16 %v7983, %v7975
          %v8952 = vpack.c.b16 %v7984, %v7976
          %v8953 = vpack.c.b16 %v7993, %v7985
          %v8954 = vpack.c.b16 %v7994, %v7986
          %v8955 = vpack.c.b16 %v7995, %v7987
          %v8956 = vpack.c.b16 %v7996, %v7988
          %v8957 = vpack.c.b16 %v7997, %v7989
          %v8958 = vpack.c.b16 %v7998, %v7990
          %v8959 = vpack.c.b16 %v7999, %v7991
          %v8960 = vpack.c.b16 %v8000, %v7992
          %v8961 = vpack.c.b16 %v8009, %v8001
          %v8962 = vpack.c.b16 %v8010, %v8002
          %v8963 = vpack.c.b16 %v8011, %v8003
          %v8964 = vpack.c.b16 %v8012, %v8004
          %v8965 = vpack.c.b16 %v8013, %v8005
          %v8966 = vpack.c.b16 %v8014, %v8006
          %v8967 = vpack.c.b16 %v8015, %v8007
          %v8968 = vpack.c.b16 %v8016, %v8008
          %v8969 = vpack.c.b16 %v8025, %v8017
          %v8970 = vpack.c.b16 %v8026, %v8018
          %v8971 = vpack.c.b16 %v8027, %v8019
          %v8972 = vpack.c.b16 %v8028, %v8020
          %v8973 = vpack.c.b16 %v8029, %v8021
          %v8974 = vpack.c.b16 %v8030, %v8022
          %v8975 = vpack.c.b16 %v8031, %v8023
          %v8976 = vpack.c.b16 %v8032, %v8024
          %v8977 = vpack.c.b16 %v8041, %v8033
          %v8978 = vpack.c.b16 %v8042, %v8034
          %v8979 = vpack.c.b16 %v8043, %v8035
          %v8980 = vpack.c.b16 %v8044, %v8036
          %v8981 = vpack.c.b16 %v8045, %v8037
          %v8982 = vpack.c.b16 %v8046, %v8038
          %v8983 = vpack.c.b16 %v8047, %v8039
          %v8984 = vpack.c.b16 %v8048, %v8040
          %v8985 = vpack.c.b16 %v8057, %v8049
          %v8986 = vpack.c.b16 %v8058, %v8050
          %v8987 = vpack.c.b16 %v8059, %v8051
          %v8988 = vpack.c.b16 %v8060, %v8052
          %v8989 = vpack.c.b16 %v8061, %v8053
          %v8990 = vpack.c.b16 %v8062, %v8054
          %v8991 = vpack.c.b16 %v8063, %v8055
          %v8992 = vpack.c.b16 %v8064, %v8056
          %v8993 = vpack.c.b16 %v8073, %v8065
          %v8994 = vpack.c.b16 %v8074, %v8066
          %v8995 = vpack.c.b16 %v8075, %v8067
          %v8996 = vpack.c.b16 %v8076, %v8068
          %v8997 = vpack.c.b16 %v8077, %v8069
          %v8998 = vpack.c.b16 %v8078, %v8070
          %v8999 = vpack.c.b16 %v8079, %v8071
          %v9000 = vpack.c.b16 %v8080, %v8072
          %v9001 = vpack.c.b16 %v8089, %v8081
          %v9002 = vpack.c.b16 %v8090, %v8082
          %v9003 = vpack.c.b16 %v8091, %v8083
          %v9004 = vpack.c.b16 %v8092, %v8084
          %v9005 = vpack.c.b16 %v8093, %v8085
          %v9006 = vpack.c.b16 %v8094, %v8086
          %v9007 = vpack.c.b16 %v8095, %v8087
          %v9008 = vpack.c.b16 %v8096, %v8088
          %v9009 = vpack.c.b16 %v8105, %v8097
          %v9010 = vpack.c.b16 %v8106, %v8098
          %v9011 = vpack.c.b16 %v8107, %v8099
          %v9012 = vpack.c.b16 %v8108, %v8100
          %v9013 = vpack.c.b16 %v8109, %v8101
          %v9014 = vpack.c.b16 %v8110, %v8102
          %v9015 = vpack.c.b16 %v8111, %v8103
          %v9016 = vpack.c.b16 %v8112, %v8104
          %v9017 = vpack.c.b16 %v8121, %v8113
          %v9018 = vpack.c.b16 %v8122, %v8114
          %v9019 = vpack.c.b16 %v8123, %v8115
          %v9020 = vpack.c.b16 %v8124, %v8116
          %v9021 = vpack.c.b16 %v8125, %v8117
          %v9022 = vpack.c.b16 %v8126, %v8118
          %v9023 = vpack.c.b16 %v8127, %v8119
          %v9024 = vpack.c.b16 %v8128, %v8120
          %v9025 = vpack.c.b16 %v8137, %v8129
          %v9026 = vpack.c.b16 %v8138, %v8130
          %v9027 = vpack.c.b16 %v8139, %v8131
          %v9028 = vpack.c.b16 %v8140, %v8132
          %v9029 = vpack.c.b16 %v8141, %v8133
          %v9030 = vpack.c.b16 %v8142, %v8134
          %v9031 = vpack.c.b16 %v8143, %v8135
          %v9032 = vpack.c.b16 %v8144, %v8136
          %v9033 = vpack.c.b16 %v8153, %v8145
          %v9034 = vpack.c.b16 %v8154, %v8146
          %v9035 = vpack.c.b16 %v8155, %v8147
          %v9036 = vpack.c.b16 %v8156, %v8148
          %v9037 = vpack.c.b16 %v8157, %v8149
          %v9038 = vpack.c.b16 %v8158, %v8150
          %v9039 = vpack.c.b16 %v8159, %v8151
          %v9040 = vpack.c.b16 %v8160, %v8152
          %v9041 = vpack.c.b16 %v8169, %v8161
          %v9042 = vpack.c.b16 %v8170, %v8162
          %v9043 = vpack.c.b16 %v8171, %v8163
          %v9044 = vpack.c.b16 %v8172, %v8164
          %v9045 = vpack.c.b16 %v8173, %v8165
          %v9046 = vpack.c.b16 %v8174, %v8166
          %v9047 = vpack.c.b16 %v8175, %v8167
          %v9048 = vpack.c.b16 %v8176, %v8168
          %v9049 = vpack.c.b16 %v8185, %v8177
          %v9050 = vpack.c.b16 %v8186, %v8178
          %v9051 = vpack.c.b16 %v8187, %v8179
          %v9052 = vpack.c.b16 %v8188, %v8180
          %v9053 = vpack.c.b16 %v8189, %v8181
          %v9054 = vpack.c.b16 %v8190, %v8182
          %v9055 = vpack.c.b16 %v8191, %v8183
          %v9056 = vpack.c.b16 %v8192, %v8184
          %v9057 = vpack.c.b16 %v8201, %v8193
          %v9058 = vpack.c.b16 %v8202, %v8194
          %v9059 = vpack.c.b16 %v8203, %v8195
          %v9060 = vpack.c.b16 %v8204, %v8196
          %v9061 = vpack.c.b16 %v8205, %v8197
          %v9062 = vpack.c.b16 %v8206, %v8198
          %v9063 = vpack.c.b16 %v8207, %v8199
          %v9064 = vpack.c.b16 %v8208, %v8200
          %v9065 = vpack.c.b16 %v8217, %v8209
          %v9066 = vpack.c.b16 %v8218, %v8210
          %v9067 = vpack.c.b16 %v8219, %v8211
          %v9068 = vpack.c.b16 %v8220, %v8212
          %v9069 = vpack.c.b16 %v8221, %v8213
          %v9070 = vpack.c.b16 %v8222, %v8214
          %v9071 = vpack.c.b16 %v8223, %v8215
          %v9072 = vpack.c.b16 %v8224, %v8216
          %v9073 = vpack.c.b16 %v8233, %v8225
          %v9074 = vpack.c.b16 %v8234, %v8226
          %v9075 = vpack.c.b16 %v8235, %v8227
          %v9076 = vpack.c.b16 %v8236, %v8228
          %v9077 = vpack.c.b16 %v8237, %v8229
          %v9078 = vpack.c.b16 %v8238, %v8230
          %v9079 = vpack.c.b16 %v8239, %v8231
          %v9080 = vpack.c.b16 %v8240, %v8232
          %v9081 = vpack.c.b16 %v8249, %v8241
          %v9082 = vpack.c.b16 %v8250, %v8242
          %v9083 = vpack.c.b16 %v8251, %v8243
          %v9084 = vpack.c.b16 %v8252, %v8244
          %v9085 = vpack.c.b16 %v8253, %v8245
          %v9086 = vpack.c.b16 %v8254, %v8246
          %v9087 = vpack.c.b16 %v8255, %v8247
          %v9088 = vpack.c.b16 %v8256, %v8248
          %v9089 = vpack.c.b16 %v8265, %v8257
          %v9090 = vpack.c.b16 %v8266, %v8258
          %v9091 = vpack.c.b16 %v8267, %v8259
          %v9092 = vpack.c.b16 %v8268, %v8260
          %v9093 = vpack.c.b16 %v8269, %v8261
          %v9094 = vpack.c.b16 %v8270, %v8262
          %v9095 = vpack.c.b16 %v8271, %v8263
          %v9096 = vpack.c.b16 %v8272, %v8264
          %v9097 = vpack.c.b16 %v8281, %v8273
          %v9098 = vpack.c.b16 %v8282, %v8274
          %v9099 = vpack.c.b16 %v8283, %v8275
          %v9100 = vpack.c.b16 %v8284, %v8276
          %v9101 = vpack.c.b16 %v8285, %v8277
          %v9102 = vpack.c.b16 %v8286, %v8278
          %v9103 = vpack.c.b16 %v8287, %v8279
          %v9104 = vpack.c.b16 %v8288, %v8280
          %v9105 = vpack.c.b16 %v8297, %v8289
          %v9106 = vpack.c.b16 %v8298, %v8290
          %v9107 = vpack.c.b16 %v8299, %v8291
          %v9108 = vpack.c.b16 %v8300, %v8292
          %v9109 = vpack.c.b16 %v8301, %v8293
          %v9110 = vpack.c.b16 %v8302, %v8294
          %v9111 = vpack.c.b16 %v8303, %v8295
          %v9112 = vpack.c.b16 %v8304, %v8296
          %v9113 = vpack.c.b16 %v8313, %v8305
          %v9114 = vpack.c.b16 %v8314, %v8306
          %v9115 = vpack.c.b16 %v8315, %v8307
          %v9116 = vpack.c.b16 %v8316, %v8308
          %v9117 = vpack.c.b16 %v8317, %v8309
          %v9118 = vpack.c.b16 %v8318, %v8310
          %v9119 = vpack.c.b16 %v8319, %v8311
          %v9120 = vpack.c.b16 %v8320, %v8312
          %v9121 = vpack.c.b16 %v8329, %v8321
          %v9122 = vpack.c.b16 %v8330, %v8322
          %v9123 = vpack.c.b16 %v8331, %v8323
          %v9124 = vpack.c.b16 %v8332, %v8324
          %v9125 = vpack.c.b16 %v8333, %v8325
          %v9126 = vpack.c.b16 %v8334, %v8326
          %v9127 = vpack.c.b16 %v8335, %v8327
          %v9128 = vpack.c.b16 %v8336, %v8328
          %v9129 = vpack.c.b16 %v8345, %v8337
          %v9130 = vpack.c.b16 %v8346, %v8338
          %v9131 = vpack.c.b16 %v8347, %v8339
          %v9132 = vpack.c.b16 %v8348, %v8340
          %v9133 = vpack.c.b16 %v8349, %v8341
          %v9134 = vpack.c.b16 %v8350, %v8342
          %v9135 = vpack.c.b16 %v8351, %v8343
          %v9136 = vpack.c.b16 %v8352, %v8344
          %v9137 = vpack.c.b16 %v8361, %v8353
          %v9138 = vpack.c.b16 %v8362, %v8354
          %v9139 = vpack.c.b16 %v8363, %v8355
          %v9140 = vpack.c.b16 %v8364, %v8356
          %v9141 = vpack.c.b16 %v8365, %v8357
          %v9142 = vpack.c.b16 %v8366, %v8358
          %v9143 = vpack.c.b16 %v8367, %v8359
          %v9144 = vpack.c.b16 %v8368, %v8360
          %v9145 = vpack.c.b16 %v8377, %v8369
          %v9146 = vpack.c.b16 %v8378, %v8370
          %v9147 = vpack.c.b16 %v8379, %v8371
          %v9148 = vpack.c.b16 %v8380, %v8372
          %v9149 = vpack.c.b16 %v8381, %v8373
          %v9150 = vpack.c.b16 %v8382, %v8374
          %v9151 = vpack.c.b16 %v8383, %v8375
          %v9152 = vpack.c.b16 %v8384, %v8376
          %v9153 = vpack.c.b16 %v8393, %v8385
          %v9154 = vpack.c.b16 %v8394, %v8386
          %v9155 = vpack.c.b16 %v8395, %v8387
          %v9156 = vpack.c.b16 %v8396, %v8388
          %v9157 = vpack.c.b16 %v8397, %v8389
          %v9158 = vpack.c.b16 %v8398, %v8390
          %v9159 = vpack.c.b16 %v8399, %v8391
          %v9160 = vpack.c.b16 %v8400, %v8392
          %v9161 = vpack.c.b16 %v8409, %v8401
          %v9162 = vpack.c.b16 %v8410, %v8402
          %v9163 = vpack.c.b16 %v8411, %v8403
          %v9164 = vpack.c.b16 %v8412, %v8404
          %v9165 = vpack.c.b16 %v8413, %v8405
          %v9166 = vpack.c.b16 %v8414, %v8406
          %v9167 = vpack.c.b16 %v8415, %v8407
          %v9168 = vpack.c.b16 %v8416, %v8408
          %v9169 = vpack.c.b16 %v8425, %v8417
          %v9170 = vpack.c.b16 %v8426, %v8418
          %v9171 = vpack.c.b16 %v8427, %v8419
          %v9172 = vpack.c.b16 %v8428, %v8420
          %v9173 = vpack.c.b16 %v8429, %v8421
          %v9174 = vpack.c.b16 %v8430, %v8422
          %v9175 = vpack.c.b16 %v8431, %v8423
          %v9176 = vpack.c.b16 %v8432, %v8424
          %v9177 = vpack.c.b16 %v8441, %v8433
          %v9178 = vpack.c.b16 %v8442, %v8434
          %v9179 = vpack.c.b16 %v8443, %v8435
          %v9180 = vpack.c.b16 %v8444, %v8436
          %v9181 = vpack.c.b16 %v8445, %v8437
          %v9182 = vpack.c.b16 %v8446, %v8438
          %v9183 = vpack.c.b16 %v8447, %v8439
          %v9184 = vpack.c.b16 %v8448, %v8440
          %v9185 = vpack.c.b16 %v8457, %v8449
          %v9186 = vpack.c.b16 %v8458, %v8450
          %v9187 = vpack.c.b16 %v8459, %v8451
          %v9188 = vpack.c.b16 %v8460, %v8452
          %v9189 = vpack.c.b16 %v8461, %v8453
          %v9190 = vpack.c.b16 %v8462, %v8454
          %v9191 = vpack.c.b16 %v8463, %v8455
          %v9192 = vpack.c.b16 %v8464, %v8456
          %v9193 = vpack.c.b16 %v8473, %v8465
          %v9194 = vpack.c.b16 %v8474, %v8466
          %v9195 = vpack.c.b16 %v8475, %v8467
          %v9196 = vpack.c.b16 %v8476, %v8468
          %v9197 = vpack.c.b16 %v8477, %v8469
          %v9198 = vpack.c.b16 %v8478, %v8470
          %v9199 = vpack.c.b16 %v8479, %v8471
          %v9200 = vpack.c.b16 %v8480, %v8472
          %v9201 = vpack.c.b16 %v8489, %v8481
          %v9202 = vpack.c.b16 %v8490, %v8482
          %v9203 = vpack.c.b16 %v8491, %v8483
          %v9204 = vpack.c.b16 %v8492, %v8484
          %v9205 = vpack.c.b16 %v8493, %v8485
          %v9206 = vpack.c.b16 %v8494, %v8486
          %v9207 = vpack.c.b16 %v8495, %v8487
          %v9208 = vpack.c.b16 %v8496, %v8488
          %v9209 = vpack.c.b16 %v8505, %v8497
          %v9210 = vpack.c.b16 %v8506, %v8498
          %v9211 = vpack.c.b16 %v8507, %v8499
          %v9212 = vpack.c.b16 %v8508, %v8500
          %v9213 = vpack.c.b16 %v8509, %v8501
          %v9214 = vpack.c.b16 %v8510, %v8502
          %v9215 = vpack.c.b16 %v8511, %v8503
          %v9216 = vpack.c.b16 %v8512, %v8504
          %v9217 = vpack.c.b16 %v8521, %v8513
          %v9218 = vpack.c.b16 %v8522, %v8514
          %v9219 = vpack.c.b16 %v8523, %v8515
          %v9220 = vpack.c.b16 %v8524, %v8516
          %v9221 = vpack.c.b16 %v8525, %v8517
          %v9222 = vpack.c.b16 %v8526, %v8518
          %v9223 = vpack.c.b16 %v8527, %v8519
          %v9224 = vpack.c.b16 %v8528, %v8520
          %v9225 = vpack.c.b16 %v8537, %v8529
          %v9226 = vpack.c.b16 %v8538, %v8530
          %v9227 = vpack.c.b16 %v8539, %v8531
          %v9228 = vpack.c.b16 %v8540, %v8532
          %v9229 = vpack.c.b16 %v8541, %v8533
          %v9230 = vpack.c.b16 %v8542, %v8534
          %v9231 = vpack.c.b16 %v8543, %v8535
          %v9232 = vpack.c.b16 %v8544, %v8536
          %v9233 = vpack.c.b16 %v8553, %v8545
          %v9234 = vpack.c.b16 %v8554, %v8546
          %v9235 = vpack.c.b16 %v8555, %v8547
          %v9236 = vpack.c.b16 %v8556, %v8548
          %v9237 = vpack.c.b16 %v8557, %v8549
          %v9238 = vpack.c.b16 %v8558, %v8550
          %v9239 = vpack.c.b16 %v8559, %v8551
          %v9240 = vpack.c.b16 %v8560, %v8552
          %v9241 = vpack.c.b16 %v8569, %v8561
          %v9242 = vpack.c.b16 %v8570, %v8562
          %v9243 = vpack.c.b16 %v8571, %v8563
          %v9244 = vpack.c.b16 %v8572, %v8564
          %v9245 = vpack.c.b16 %v8573, %v8565
          %v9246 = vpack.c.b16 %v8574, %v8566
          %v9247 = vpack.c.b16 %v8575, %v8567
          %v9248 = vpack.c.b16 %v8576, %v8568
          %v9249 = vpack.c.b16 %v8585, %v8577
          %v9250 = vpack.c.b16 %v8586, %v8578
          %v9251 = vpack.c.b16 %v8587, %v8579
          %v9252 = vpack.c.b16 %v8588, %v8580
          %v9253 = vpack.c.b16 %v8589, %v8581
          %v9254 = vpack.c.b16 %v8590, %v8582
          %v9255 = vpack.c.b16 %v8591, %v8583
          %v9256 = vpack.c.b16 %v8592, %v8584
          %v9257 = vpack.c.b16 %v8601, %v8593
          %v9258 = vpack.c.b16 %v8602, %v8594
          %v9259 = vpack.c.b16 %v8603, %v8595
          %v9260 = vpack.c.b16 %v8604, %v8596
          %v9261 = vpack.c.b16 %v8605, %v8597
          %v9262 = vpack.c.b16 %v8606, %v8598
          %v9263 = vpack.c.b16 %v8607, %v8599
          %v9264 = vpack.c.b16 %v8608, %v8600
          %v9265 = vpack.c.b16 %v8617, %v8609
          %v9266 = vpack.c.b16 %v8618, %v8610
          %v9267 = vpack.c.b16 %v8619, %v8611
          %v9268 = vpack.c.b16 %v8620, %v8612
          %v9269 = vpack.c.b16 %v8621, %v8613
          %v9270 = vpack.c.b16 %v8622, %v8614
          %v9271 = vpack.c.b16 %v8623, %v8615
          %v9272 = vpack.c.b16 %v8624, %v8616
          %v9273 = vpack.c.b16 %v8633, %v8625
          %v9274 = vpack.c.b16 %v8634, %v8626
          %v9275 = vpack.c.b16 %v8635, %v8627
          %v9276 = vpack.c.b16 %v8636, %v8628
          %v9277 = vpack.c.b16 %v8637, %v8629
          %v9278 = vpack.c.b16 %v8638, %v8630
          %v9279 = vpack.c.b16 %v8639, %v8631
          %v9280 = vpack.c.b16 %v8640, %v8632
          %v9281 = vpack.c.b16 %v8649, %v8641
          %v9282 = vpack.c.b16 %v8650, %v8642
          %v9283 = vpack.c.b16 %v8651, %v8643
          %v9284 = vpack.c.b16 %v8652, %v8644
          %v9285 = vpack.c.b16 %v8653, %v8645
          %v9286 = vpack.c.b16 %v8654, %v8646
          %v9287 = vpack.c.b16 %v8655, %v8647
          %v9288 = vpack.c.b16 %v8656, %v8648
          %v9289 = vpack.c.b16 %v8665, %v8657
          %v9290 = vpack.c.b16 %v8666, %v8658
          %v9291 = vpack.c.b16 %v8667, %v8659
          %v9292 = vpack.c.b16 %v8668, %v8660
          %v9293 = vpack.c.b16 %v8669, %v8661
          %v9294 = vpack.c.b16 %v8670, %v8662
          %v9295 = vpack.c.b16 %v8671, %v8663
          %v9296 = vpack.c.b16 %v8672, %v8664
          %v9297 = vpack.c.b16 %v8681, %v8673
          %v9298 = vpack.c.b16 %v8682, %v8674
          %v9299 = vpack.c.b16 %v8683, %v8675
          %v9300 = vpack.c.b16 %v8684, %v8676
          %v9301 = vpack.c.b16 %v8685, %v8677
          %v9302 = vpack.c.b16 %v8686, %v8678
          %v9303 = vpack.c.b16 %v8687, %v8679
          %v9304 = vpack.c.b16 %v8688, %v8680
          %v9305 = vpack.c.b16 %v8697, %v8689
          %v9306 = vpack.c.b16 %v8698, %v8690
          %v9307 = vpack.c.b16 %v8699, %v8691
          %v9308 = vpack.c.b16 %v8700, %v8692
          %v9309 = vpack.c.b16 %v8701, %v8693
          %v9310 = vpack.c.b16 %v8702, %v8694
          %v9311 = vpack.c.b16 %v8703, %v8695
          %v9312 = vpack.c.b16 %v8704, %v8696
          %v9313 = vpack.c.b16 %v8713, %v8705
          %v9314 = vpack.c.b16 %v8714, %v8706
          %v9315 = vpack.c.b16 %v8715, %v8707
          %v9316 = vpack.c.b16 %v8716, %v8708
          %v9317 = vpack.c.b16 %v8717, %v8709
          %v9318 = vpack.c.b16 %v8718, %v8710
          %v9319 = vpack.c.b16 %v8719, %v8711
          %v9320 = vpack.c.b16 %v8720, %v8712
          %v9321 = vpack.c.b16 %v8729, %v8721
          %v9322 = vpack.c.b16 %v8730, %v8722
          %v9323 = vpack.c.b16 %v8731, %v8723
          %v9324 = vpack.c.b16 %v8732, %v8724
          %v9325 = vpack.c.b16 %v8733, %v8725
          %v9326 = vpack.c.b16 %v8734, %v8726
          %v9327 = vpack.c.b16 %v8735, %v8727
          %v9328 = vpack.c.b16 %v8736, %v8728
          %v9329 = vpack.c.b16 %v8745, %v8737
          %v9330 = vpack.c.b16 %v8746, %v8738
          %v9331 = vpack.c.b16 %v8747, %v8739
          %v9332 = vpack.c.b16 %v8748, %v8740
          %v9333 = vpack.c.b16 %v8749, %v8741
          %v9334 = vpack.c.b16 %v8750, %v8742
          %v9335 = vpack.c.b16 %v8751, %v8743
          %v9336 = vpack.c.b16 %v8752, %v8744
          %v9337 = vpack.c.b16 %v8761, %v8753
          %v9338 = vpack.c.b16 %v8762, %v8754
          %v9339 = vpack.c.b16 %v8763, %v8755
          %v9340 = vpack.c.b16 %v8764, %v8756
          %v9341 = vpack.c.b16 %v8765, %v8757
          %v9342 = vpack.c.b16 %v8766, %v8758
          %v9343 = vpack.c.b16 %v8767, %v8759
          %v9344 = vpack.c.b16 %v8768, %v8760
          %v9345 = vpack.c.b16 %v8777, %v8769
          %v9346 = vpack.c.b16 %v8778, %v8770
          %v9347 = vpack.c.b16 %v8779, %v8771
          %v9348 = vpack.c.b16 %v8780, %v8772
          %v9349 = vpack.c.b16 %v8781, %v8773
          %v9350 = vpack.c.b16 %v8782, %v8774
          %v9351 = vpack.c.b16 %v8783, %v8775
          %v9352 = vpack.c.b16 %v8784, %v8776
          %v9353 = vpack.c.b16 %v8793, %v8785
          %v9354 = vpack.c.b16 %v8794, %v8786
          %v9355 = vpack.c.b16 %v8795, %v8787
          %v9356 = vpack.c.b16 %v8796, %v8788
          %v9357 = vpack.c.b16 %v8797, %v8789
          %v9358 = vpack.c.b16 %v8798, %v8790
          %v9359 = vpack.c.b16 %v8799, %v8791
          %v9360 = vpack.c.b16 %v8800, %v8792
          %v9361 = vpack.c.b16 %v8809, %v8801
          %v9362 = vpack.c.b16 %v8810, %v8802
          %v9363 = vpack.c.b16 %v8811, %v8803
          %v9364 = vpack.c.b16 %v8812, %v8804
          %v9365 = vpack.c.b16 %v8813, %v8805
          %v9366 = vpack.c.b16 %v8814, %v8806
          %v9367 = vpack.c.b16 %v8815, %v8807
          %v9368 = vpack.c.b16 %v8816, %v8808
          %v9369 = vpack.c.b16 %v8825, %v8817
          %v9370 = vpack.c.b16 %v8826, %v8818
          %v9371 = vpack.c.b16 %v8827, %v8819
          %v9372 = vpack.c.b16 %v8828, %v8820
          %v9373 = vpack.c.b16 %v8829, %v8821
          %v9374 = vpack.c.b16 %v8830, %v8822
          %v9375 = vpack.c.b16 %v8831, %v8823
          %v9376 = vpack.c.b16 %v8832, %v8824
          %v9377 = vpack.c.b16 %v8841, %v8833
          %v9378 = vpack.c.b16 %v8842, %v8834
          %v9379 = vpack.c.b16 %v8843, %v8835
          %v9380 = vpack.c.b16 %v8844, %v8836
          %v9381 = vpack.c.b16 %v8845, %v8837
          %v9382 = vpack.c.b16 %v8846, %v8838
          %v9383 = vpack.c.b16 %v8847, %v8839
          %v9384 = vpack.c.b16 %v8848, %v8840
          %v9385 = vpack.c.b16 %v8857, %v8849
          %v9386 = vpack.c.b16 %v8858, %v8850
          %v9387 = vpack.c.b16 %v8859, %v8851
          %v9388 = vpack.c.b16 %v8860, %v8852
          %v9389 = vpack.c.b16 %v8861, %v8853
          %v9390 = vpack.c.b16 %v8862, %v8854
          %v9391 = vpack.c.b16 %v8863, %v8855
          %v9392 = vpack.c.b16 %v8864, %v8856
          %v9393 = vpack.c.b16 %v8873, %v8865
          %v9394 = vpack.c.b16 %v8874, %v8866
          %v9395 = vpack.c.b16 %v8875, %v8867
          %v9396 = vpack.c.b16 %v8876, %v8868
          %v9397 = vpack.c.b16 %v8877, %v8869
          %v9398 = vpack.c.b16 %v8878, %v8870
          %v9399 = vpack.c.b16 %v8879, %v8871
          %v9400 = vpack.c.b16 %v8880, %v8872
          %v9401 = vpack.c.b16 %v8889, %v8881
          %v9402 = vpack.c.b16 %v8890, %v8882
          %v9403 = vpack.c.b16 %v8891, %v8883
          %v9404 = vpack.c.b16 %v8892, %v8884
          %v9405 = vpack.c.b16 %v8893, %v8885
          %v9406 = vpack.c.b16 %v8894, %v8886
          %v9407 = vpack.c.b16 %v8895, %v8887
          %v9408 = vpack.c.b16 %v8896, %v8888
          %9921 = vmatprep.subr.bf16.mxu0 %v8954
          %9922 = vmatpush1.bf16.msra.mxu0 %v8953
          %9923 = vmatprep.subr.bf16.mxu0 %v8946
          %9924 = vmatpush1.bf16.msra.mxu0 %v8945
          %9925 = vmatprep.subr.bf16.mxu0 %v8938
          %9926 = vmatpush1.bf16.msra.mxu0 %v8937
          %9927 = vmatprep.subr.bf16.mxu0 %v8930
          %9928 = vmatpush1.bf16.msra.mxu0 %v8929
          %9929 = vmatprep.subr.bf16.mxu0 %v8922
          %9930 = vmatpush1.bf16.msra.mxu0 %v8921
          %9931 = vmatprep.subr.bf16.mxu0 %v8914
          %9932 = vmatpush1.bf16.msra.mxu0 %v8913
          %9933 = vmatprep.subr.bf16.mxu0 %v8906
          %9934 = vmatpush1.bf16.msra.mxu0 %v8905
          %9935 = vmatprep.subr.bf16.mxu0 %v8898
          %9936 = vmatpush1.bf16.msra.mxu0 %v8897
          %9937 = vmatprep.subr.bf16.mxu0 %v9018
          %9938 = vmatpush2.bf16.msra.mxu0 %v9017
          %9939 = vmatprep.subr.bf16.mxu0 %v9010
          %9940 = vmatpush2.bf16.msra.mxu0 %v9009
          %9941 = vmatprep.subr.bf16.mxu0 %v9002
          %9942 = vmatpush2.bf16.msra.mxu0 %v9001
          %9943 = vmatprep.subr.bf16.mxu0 %v8994
          %9944 = vmatpush2.bf16.msra.mxu0 %v8993
          %9945 = vmatprep.subr.bf16.mxu0 %v8986
          %9946 = vmatpush2.bf16.msra.mxu0 %v8985
          %9947 = vmatprep.subr.bf16.mxu0 %v8978
          %9948 = vmatpush2.bf16.msra.mxu0 %v8977
          %9949 = vmatprep.subr.bf16.mxu0 %v8970
          %9950 = vmatpush2.bf16.msra.mxu0 %v8969
          %9951 = vmatprep.subr.bf16.mxu0 %v8962
          %9952 = vmatpush2.bf16.msra.mxu0 %v8961
          %9953 = vmatprep.mubr.bf16.mxu0 %v6800
          %9954 = vmatmul.mubr.bf16.gmra.mxu0 %v6799
          %v9955 = vpop.f32.mrf.mxu0
          %v9956 = vadd.f32 %v7324, %v9955
          %v9957 = vpop.f32.mrf.mxu0
          %v9958 = vadd.f32 %v7328, %v9957
          %v9959 = vpop.f32.mrf.mxu0
          %v9960 = vadd.f32 %v7324, %v9959
          %v9961 = vpop.f32.mrf.mxu0
          %v9962 = vadd.f32 %v7328, %v9961
          %9963 = vdwg.mxu0
          %9964 = vmatprep.subr.bf16.mxu0 %v9082
          %9965 = vmatpush1.bf16.msra.mxu0 %v9081
          %9966 = vmatprep.subr.bf16.mxu0 %v9074
          %9967 = vmatpush1.bf16.msra.mxu0 %v9073
          %9968 = vmatprep.subr.bf16.mxu0 %v9066
          %9969 = vmatpush1.bf16.msra.mxu0 %v9065
          %9970 = vmatprep.subr.bf16.mxu0 %v9058
          %9971 = vmatpush1.bf16.msra.mxu0 %v9057
          %9972 = vmatprep.subr.bf16.mxu0 %v9050
          %9973 = vmatpush1.bf16.msra.mxu0 %v9049
          %9974 = vmatprep.subr.bf16.mxu0 %v9042
          %9975 = vmatpush1.bf16.msra.mxu0 %v9041
          %9976 = vmatprep.subr.bf16.mxu0 %v9034
          %9977 = vmatpush1.bf16.msra.mxu0 %v9033
          %9978 = vmatprep.subr.bf16.mxu0 %v9026
          %9979 = vmatpush1.bf16.msra.mxu0 %v9025
          %9980 = vmatprep.subr.bf16.mxu0 %v9146
          %9981 = vmatpush2.bf16.msra.mxu0 %v9145
          %9982 = vmatprep.subr.bf16.mxu0 %v9138
          %9983 = vmatpush2.bf16.msra.mxu0 %v9137
          %9984 = vmatprep.subr.bf16.mxu0 %v9130
          %9985 = vmatpush2.bf16.msra.mxu0 %v9129
          %9986 = vmatprep.subr.bf16.mxu0 %v9122
          %9987 = vmatpush2.bf16.msra.mxu0 %v9121
          %9988 = vmatprep.subr.bf16.mxu0 %v9114
          %9989 = vmatpush2.bf16.msra.mxu0 %v9113
          %9990 = vmatprep.subr.bf16.mxu0 %v9106
          %9991 = vmatpush2.bf16.msra.mxu0 %v9105
          %9992 = vmatprep.subr.bf16.mxu0 %v9098
          %9993 = vmatpush2.bf16.msra.mxu0 %v9097
          %9994 = vmatprep.subr.bf16.mxu0 %v9090
          %9995 = vmatpush2.bf16.msra.mxu0 %v9089
          %9996 = vmatprep.mubr.bf16.mxu0 %v6802
          %9997 = vmatmul.mubr.bf16.gmra.mxu0 %v6801
          %v9998 = vpop.f32.mrf.mxu0
          %v9999 = vadd.f32 %v9956, %v9998
          %v10000 = vpop.f32.mrf.mxu0
          %v10001 = vadd.f32 %v9958, %v10000
          %v10002 = vpop.f32.mrf.mxu0
          %v10003 = vadd.f32 %v9960, %v10002
          %v10004 = vpop.f32.mrf.mxu0
          %v10005 = vadd.f32 %v9962, %v10004
          %10006 = vdwg.mxu0
          %10007 = vmatprep.subr.bf16.mxu0 %v9210
          %10008 = vmatpush1.bf16.msra.mxu0 %v9209
          %10009 = vmatprep.subr.bf16.mxu0 %v9202
          %10010 = vmatpush1.bf16.msra.mxu0 %v9201
          %10011 = vmatprep.subr.bf16.mxu0 %v9194
          %10012 = vmatpush1.bf16.msra.mxu0 %v9193
          %10013 = vmatprep.subr.bf16.mxu0 %v9186
          %10014 = vmatpush1.bf16.msra.mxu0 %v9185
          %10015 = vmatprep.subr.bf16.mxu0 %v9178
          %10016 = vmatpush1.bf16.msra.mxu0 %v9177
          %10017 = vmatprep.subr.bf16.mxu0 %v9170
          %10018 = vmatpush1.bf16.msra.mxu0 %v9169
          %10019 = vmatprep.subr.bf16.mxu0 %v9162
          %10020 = vmatpush1.bf16.msra.mxu0 %v9161
          %10021 = vmatprep.subr.bf16.mxu0 %v9154
          %10022 = vmatpush1.bf16.msra.mxu0 %v9153
          %10023 = vmatprep.subr.bf16.mxu0 %v9274
          %10024 = vmatpush2.bf16.msra.mxu0 %v9273
          %10025 = vmatprep.subr.bf16.mxu0 %v9266
          %10026 = vmatpush2.bf16.msra.mxu0 %v9265
          %10027 = vmatprep.subr.bf16.mxu0 %v9258
          %10028 = vmatpush2.bf16.msra.mxu0 %v9257
          %10029 = vmatprep.subr.bf16.mxu0 %v9250
          %10030 = vmatpush2.bf16.msra.mxu0 %v9249
          %10031 = vmatprep.subr.bf16.mxu0 %v9242
          %10032 = vmatpush2.bf16.msra.mxu0 %v9241
          %10033 = vmatprep.subr.bf16.mxu0 %v9234
          %10034 = vmatpush2.bf16.msra.mxu0 %v9233
          %10035 = vmatprep.subr.bf16.mxu0 %v9226
          %10036 = vmatpush2.bf16.msra.mxu0 %v9225
          %10037 = vmatprep.subr.bf16.mxu0 %v9218
          %10038 = vmatpush2.bf16.msra.mxu0 %v9217
          %10039 = vmatprep.mubr.bf16.mxu0 %v6804
          %10040 = vmatmul.mubr.bf16.gmra.mxu0 %v6803
          %v10041 = vpop.f32.mrf.mxu0
          %v10042 = vadd.f32 %v9999, %v10041
          %v10043 = vpop.f32.mrf.mxu0
          %v10044 = vadd.f32 %v10001, %v10043
          %v10045 = vpop.f32.mrf.mxu0
          %v10046 = vadd.f32 %v10003, %v10045
          %v10047 = vpop.f32.mrf.mxu0
          %v10048 = vadd.f32 %v10005, %v10047
          %10049 = vdwg.mxu0
          %10050 = vmatprep.subr.bf16.mxu0 %v9338
          %10051 = vmatpush1.bf16.msra.mxu0 %v9337
          %10052 = vmatprep.subr.bf16.mxu0 %v9330
          %10053 = vmatpush1.bf16.msra.mxu0 %v9329
          %10054 = vmatprep.subr.bf16.mxu0 %v9322
          %10055 = vmatpush1.bf16.msra.mxu0 %v9321
          %10056 = vmatprep.subr.bf16.mxu0 %v9314
          %10057 = vmatpush1.bf16.msra.mxu0 %v9313
          %10058 = vmatprep.subr.bf16.mxu0 %v9306
          %10059 = vmatpush1.bf16.msra.mxu0 %v9305
          %10060 = vmatprep.subr.bf16.mxu0 %v9298
          %10061 = vmatpush1.bf16.msra.mxu0 %v9297
          %10062 = vmatprep.subr.bf16.mxu0 %v9290
          %10063 = vmatpush1.bf16.msra.mxu0 %v9289
          %10064 = vmatprep.subr.bf16.mxu0 %v9282
          %10065 = vmatpush1.bf16.msra.mxu0 %v9281
          %10066 = vmatprep.subr.bf16.mxu0 %v9402
          %10067 = vmatpush2.bf16.msra.mxu0 %v9401
          %10068 = vmatprep.subr.bf16.mxu0 %v9394
          %10069 = vmatpush2.bf16.msra.mxu0 %v9393
          %10070 = vmatprep.subr.bf16.mxu0 %v9386
          %10071 = vmatpush2.bf16.msra.mxu0 %v9385
          %10072 = vmatprep.subr.bf16.mxu0 %v9378
          %10073 = vmatpush2.bf16.msra.mxu0 %v9377
          %10074 = vmatprep.subr.bf16.mxu0 %v9370
          %10075 = vmatpush2.bf16.msra.mxu0 %v9369
          %10076 = vmatprep.subr.bf16.mxu0 %v9362
          %10077 = vmatpush2.bf16.msra.mxu0 %v9361
          %10078 = vmatprep.subr.bf16.mxu0 %v9354
          %10079 = vmatpush2.bf16.msra.mxu0 %v9353
          %10080 = vmatprep.subr.bf16.mxu0 %v9346
          %10081 = vmatpush2.bf16.msra.mxu0 %v9345
          %10082 = vmatprep.mubr.bf16.mxu0 %v6806
          %10083 = vmatmul.mubr.bf16.gmra.mxu0 %v6805
          %v10084 = vpop.f32.mrf.mxu0
          %v10085 = vadd.f32 %v10042, %v10084
          %v10086 = vpop.f32.mrf.mxu0
          %v10087 = vadd.f32 %v10044, %v10086
          %v10088 = vpop.f32.mrf.mxu0
          %v10089 = vadd.f32 %v10046, %v10088
          %v10090 = vpop.f32.mrf.mxu0
          %v10091 = vadd.f32 %v10048, %v10090
          %10092 = vdwg.mxu0
          %10093 = vmatprep.subr.bf16.mxu0 %v8956
          %10094 = vmatpush1.bf16.msra.mxu0 %v8955
          %10095 = vmatprep.subr.bf16.mxu0 %v8948
          %10096 = vmatpush1.bf16.msra.mxu0 %v8947
          %10097 = vmatprep.subr.bf16.mxu0 %v8940
          %10098 = vmatpush1.bf16.msra.mxu0 %v8939
          %10099 = vmatprep.subr.bf16.mxu0 %v8932
          %10100 = vmatpush1.bf16.msra.mxu0 %v8931
          %10101 = vmatprep.subr.bf16.mxu0 %v8924
          %10102 = vmatpush1.bf16.msra.mxu0 %v8923
          %10103 = vmatprep.subr.bf16.mxu0 %v8916
          %10104 = vmatpush1.bf16.msra.mxu0 %v8915
          %10105 = vmatprep.subr.bf16.mxu0 %v8908
          %10106 = vmatpush1.bf16.msra.mxu0 %v8907
          %10107 = vmatprep.subr.bf16.mxu0 %v8900
          %10108 = vmatpush1.bf16.msra.mxu0 %v8899
          %10109 = vmatprep.subr.bf16.mxu0 %v9020
          %10110 = vmatpush2.bf16.msra.mxu0 %v9019
          %10111 = vmatprep.subr.bf16.mxu0 %v9012
          %10112 = vmatpush2.bf16.msra.mxu0 %v9011
          %10113 = vmatprep.subr.bf16.mxu0 %v9004
          %10114 = vmatpush2.bf16.msra.mxu0 %v9003
          %10115 = vmatprep.subr.bf16.mxu0 %v8996
          %10116 = vmatpush2.bf16.msra.mxu0 %v8995
          %10117 = vmatprep.subr.bf16.mxu0 %v8988
          %10118 = vmatpush2.bf16.msra.mxu0 %v8987
          %10119 = vmatprep.subr.bf16.mxu0 %v8980
          %10120 = vmatpush2.bf16.msra.mxu0 %v8979
          %10121 = vmatprep.subr.bf16.mxu0 %v8972
          %10122 = vmatpush2.bf16.msra.mxu0 %v8971
          %10123 = vmatprep.subr.bf16.mxu0 %v8964
          %10124 = vmatpush2.bf16.msra.mxu0 %v8963
          %10125 = vmatprep.mubr.bf16.mxu0 %v6800
          %10126 = vmatmul.mubr.bf16.gmra.mxu0 %v6799
          %v10127 = vpop.f32.mrf.mxu0
          %v10128 = vadd.f32 %v7332, %v10127
          %v10129 = vpop.f32.mrf.mxu0
          %v10130 = vadd.f32 %v7336, %v10129
          %v10131 = vpop.f32.mrf.mxu0
          %v10132 = vadd.f32 %v7332, %v10131
          %v10133 = vpop.f32.mrf.mxu0
          %v10134 = vadd.f32 %v7336, %v10133
          %10135 = vdwg.mxu0
          %10136 = vmatprep.subr.bf16.mxu0 %v9084
          %10137 = vmatpush1.bf16.msra.mxu0 %v9083
          %10138 = vmatprep.subr.bf16.mxu0 %v9076
          %10139 = vmatpush1.bf16.msra.mxu0 %v9075
          %10140 = vmatprep.subr.bf16.mxu0 %v9068
          %10141 = vmatpush1.bf16.msra.mxu0 %v9067
          %10142 = vmatprep.subr.bf16.mxu0 %v9060
          %10143 = vmatpush1.bf16.msra.mxu0 %v9059
          %10144 = vmatprep.subr.bf16.mxu0 %v9052
          %10145 = vmatpush1.bf16.msra.mxu0 %v9051
          %10146 = vmatprep.subr.bf16.mxu0 %v9044
          %10147 = vmatpush1.bf16.msra.mxu0 %v9043
          %10148 = vmatprep.subr.bf16.mxu0 %v9036
          %10149 = vmatpush1.bf16.msra.mxu0 %v9035
          %10150 = vmatprep.subr.bf16.mxu0 %v9028
          %10151 = vmatpush1.bf16.msra.mxu0 %v9027
          %10152 = vmatprep.subr.bf16.mxu0 %v9148
          %10153 = vmatpush2.bf16.msra.mxu0 %v9147
          %10154 = vmatprep.subr.bf16.mxu0 %v9140
          %10155 = vmatpush2.bf16.msra.mxu0 %v9139
          %10156 = vmatprep.subr.bf16.mxu0 %v9132
          %10157 = vmatpush2.bf16.msra.mxu0 %v9131
          %10158 = vmatprep.subr.bf16.mxu0 %v9124
          %10159 = vmatpush2.bf16.msra.mxu0 %v9123
          %10160 = vmatprep.subr.bf16.mxu0 %v9116
          %10161 = vmatpush2.bf16.msra.mxu0 %v9115
          %10162 = vmatprep.subr.bf16.mxu0 %v9108
          %10163 = vmatpush2.bf16.msra.mxu0 %v9107
          %10164 = vmatprep.subr.bf16.mxu0 %v9100
          %10165 = vmatpush2.bf16.msra.mxu0 %v9099
          %10166 = vmatprep.subr.bf16.mxu0 %v9092
          %10167 = vmatpush2.bf16.msra.mxu0 %v9091
          %10168 = vmatprep.mubr.bf16.mxu0 %v6802
          %10169 = vmatmul.mubr.bf16.gmra.mxu0 %v6801
          %v10170 = vpop.f32.mrf.mxu0
          %v10171 = vadd.f32 %v10128, %v10170
          %v10172 = vpop.f32.mrf.mxu0
          %v10173 = vadd.f32 %v10130, %v10172
          %v10174 = vpop.f32.mrf.mxu0
          %v10175 = vadd.f32 %v10132, %v10174
          %v10176 = vpop.f32.mrf.mxu0
          %v10177 = vadd.f32 %v10134, %v10176
          %10178 = vdwg.mxu0
          %10179 = vmatprep.subr.bf16.mxu0 %v9212
          %10180 = vmatpush1.bf16.msra.mxu0 %v9211
          %10181 = vmatprep.subr.bf16.mxu0 %v9204
          %10182 = vmatpush1.bf16.msra.mxu0 %v9203
          %10183 = vmatprep.subr.bf16.mxu0 %v9196
          %10184 = vmatpush1.bf16.msra.mxu0 %v9195
          %10185 = vmatprep.subr.bf16.mxu0 %v9188
          %10186 = vmatpush1.bf16.msra.mxu0 %v9187
          %10187 = vmatprep.subr.bf16.mxu0 %v9180
          %10188 = vmatpush1.bf16.msra.mxu0 %v9179
          %10189 = vmatprep.subr.bf16.mxu0 %v9172
          %10190 = vmatpush1.bf16.msra.mxu0 %v9171
          %10191 = vmatprep.subr.bf16.mxu0 %v9164
          %10192 = vmatpush1.bf16.msra.mxu0 %v9163
          %10193 = vmatprep.subr.bf16.mxu0 %v9156
          %10194 = vmatpush1.bf16.msra.mxu0 %v9155
          %10195 = vmatprep.subr.bf16.mxu0 %v9276
          %10196 = vmatpush2.bf16.msra.mxu0 %v9275
          %10197 = vmatprep.subr.bf16.mxu0 %v9268
          %10198 = vmatpush2.bf16.msra.mxu0 %v9267
          %10199 = vmatprep.subr.bf16.mxu0 %v9260
          %10200 = vmatpush2.bf16.msra.mxu0 %v9259
          %10201 = vmatprep.subr.bf16.mxu0 %v9252
          %10202 = vmatpush2.bf16.msra.mxu0 %v9251
          %10203 = vmatprep.subr.bf16.mxu0 %v9244
          %10204 = vmatpush2.bf16.msra.mxu0 %v9243
          %10205 = vmatprep.subr.bf16.mxu0 %v9236
          %10206 = vmatpush2.bf16.msra.mxu0 %v9235
          %10207 = vmatprep.subr.bf16.mxu0 %v9228
          %10208 = vmatpush2.bf16.msra.mxu0 %v9227
          %10209 = vmatprep.subr.bf16.mxu0 %v9220
          %10210 = vmatpush2.bf16.msra.mxu0 %v9219
          %10211 = vmatprep.mubr.bf16.mxu0 %v6804
          %10212 = vmatmul.mubr.bf16.gmra.mxu0 %v6803
          %v10213 = vpop.f32.mrf.mxu0
          %v10214 = vadd.f32 %v10171, %v10213
          %v10215 = vpop.f32.mrf.mxu0
          %v10216 = vadd.f32 %v10173, %v10215
          %v10217 = vpop.f32.mrf.mxu0
          %v10218 = vadd.f32 %v10175, %v10217
          %v10219 = vpop.f32.mrf.mxu0
          %v10220 = vadd.f32 %v10177, %v10219
          %10221 = vdwg.mxu0
          %10222 = vmatprep.subr.bf16.mxu0 %v9340
          %10223 = vmatpush1.bf16.msra.mxu0 %v9339
          %10224 = vmatprep.subr.bf16.mxu0 %v9332
          %10225 = vmatpush1.bf16.msra.mxu0 %v9331
          %10226 = vmatprep.subr.bf16.mxu0 %v9324
          %10227 = vmatpush1.bf16.msra.mxu0 %v9323
          %10228 = vmatprep.subr.bf16.mxu0 %v9316
          %10229 = vmatpush1.bf16.msra.mxu0 %v9315
          %10230 = vmatprep.subr.bf16.mxu0 %v9308
          %10231 = vmatpush1.bf16.msra.mxu0 %v9307
          %10232 = vmatprep.subr.bf16.mxu0 %v9300
          %10233 = vmatpush1.bf16.msra.mxu0 %v9299
          %10234 = vmatprep.subr.bf16.mxu0 %v9292
          %10235 = vmatpush1.bf16.msra.mxu0 %v9291
          %10236 = vmatprep.subr.bf16.mxu0 %v9284
          %10237 = vmatpush1.bf16.msra.mxu0 %v9283
          %10238 = vmatprep.subr.bf16.mxu0 %v9404
          %10239 = vmatpush2.bf16.msra.mxu0 %v9403
          %10240 = vmatprep.subr.bf16.mxu0 %v9396
          %10241 = vmatpush2.bf16.msra.mxu0 %v9395
          %10242 = vmatprep.subr.bf16.mxu0 %v9388
          %10243 = vmatpush2.bf16.msra.mxu0 %v9387
          %10244 = vmatprep.subr.bf16.mxu0 %v9380
          %10245 = vmatpush2.bf16.msra.mxu0 %v9379
          %10246 = vmatprep.subr.bf16.mxu0 %v9372
          %10247 = vmatpush2.bf16.msra.mxu0 %v9371
          %10248 = vmatprep.subr.bf16.mxu0 %v9364
          %10249 = vmatpush2.bf16.msra.mxu0 %v9363
          %10250 = vmatprep.subr.bf16.mxu0 %v9356
          %10251 = vmatpush2.bf16.msra.mxu0 %v9355
          %10252 = vmatprep.subr.bf16.mxu0 %v9348
          %10253 = vmatpush2.bf16.msra.mxu0 %v9347
          %10254 = vmatprep.mubr.bf16.mxu0 %v6806
          %10255 = vmatmul.mubr.bf16.gmra.mxu0 %v6805
          %v10256 = vpop.f32.mrf.mxu0
          %v10257 = vadd.f32 %v10214, %v10256
          %v10258 = vpop.f32.mrf.mxu0
          %v10259 = vadd.f32 %v10216, %v10258
          %v10260 = vpop.f32.mrf.mxu0
          %v10261 = vadd.f32 %v10218, %v10260
          %v10262 = vpop.f32.mrf.mxu0
          %v10263 = vadd.f32 %v10220, %v10262
          %10264 = vdwg.mxu0
          %10265 = vmatprep.subr.bf16.mxu0 %v8958
          %10266 = vmatpush1.bf16.msra.mxu0 %v8957
          %10267 = vmatprep.subr.bf16.mxu0 %v8950
          %10268 = vmatpush1.bf16.msra.mxu0 %v8949
          %10269 = vmatprep.subr.bf16.mxu0 %v8942
          %10270 = vmatpush1.bf16.msra.mxu0 %v8941
          %10271 = vmatprep.subr.bf16.mxu0 %v8934
          %10272 = vmatpush1.bf16.msra.mxu0 %v8933
          %10273 = vmatprep.subr.bf16.mxu0 %v8926
          %10274 = vmatpush1.bf16.msra.mxu0 %v8925
          %10275 = vmatprep.subr.bf16.mxu0 %v8918
          %10276 = vmatpush1.bf16.msra.mxu0 %v8917
          %10277 = vmatprep.subr.bf16.mxu0 %v8910
          %10278 = vmatpush1.bf16.msra.mxu0 %v8909
          %10279 = vmatprep.subr.bf16.mxu0 %v8902
          %10280 = vmatpush1.bf16.msra.mxu0 %v8901
          %10281 = vmatprep.subr.bf16.mxu0 %v9022
          %10282 = vmatpush2.bf16.msra.mxu0 %v9021
          %10283 = vmatprep.subr.bf16.mxu0 %v9014
          %10284 = vmatpush2.bf16.msra.mxu0 %v9013
          %10285 = vmatprep.subr.bf16.mxu0 %v9006
          %10286 = vmatpush2.bf16.msra.mxu0 %v9005
          %10287 = vmatprep.subr.bf16.mxu0 %v8998
          %10288 = vmatpush2.bf16.msra.mxu0 %v8997
          %10289 = vmatprep.subr.bf16.mxu0 %v8990
          %10290 = vmatpush2.bf16.msra.mxu0 %v8989
          %10291 = vmatprep.subr.bf16.mxu0 %v8982
          %10292 = vmatpush2.bf16.msra.mxu0 %v8981
          %10293 = vmatprep.subr.bf16.mxu0 %v8974
          %10294 = vmatpush2.bf16.msra.mxu0 %v8973
          %10295 = vmatprep.subr.bf16.mxu0 %v8966
          %10296 = vmatpush2.bf16.msra.mxu0 %v8965
          %10297 = vmatprep.mubr.bf16.mxu0 %v6800
          %10298 = vmatmul.mubr.bf16.gmra.mxu0 %v6799
          %v10299 = vpop.f32.mrf.mxu0
          %v10300 = vadd.f32 %v7340, %v10299
          %v10301 = vpop.f32.mrf.mxu0
          %v10302 = vadd.f32 %v7344, %v10301
          %v10303 = vpop.f32.mrf.mxu0
          %v10304 = vadd.f32 %v7340, %v10303
          %v10305 = vpop.f32.mrf.mxu0
          %v10306 = vadd.f32 %v7344, %v10305
          %10307 = vdwg.mxu0
          %10308 = vmatprep.subr.bf16.mxu0 %v9086
          %10309 = vmatpush1.bf16.msra.mxu0 %v9085
          %10310 = vmatprep.subr.bf16.mxu0 %v9078
          %10311 = vmatpush1.bf16.msra.mxu0 %v9077
          %10312 = vmatprep.subr.bf16.mxu0 %v9070
          %10313 = vmatpush1.bf16.msra.mxu0 %v9069
          %10314 = vmatprep.subr.bf16.mxu0 %v9062
          %10315 = vmatpush1.bf16.msra.mxu0 %v9061
          %10316 = vmatprep.subr.bf16.mxu0 %v9054
          %10317 = vmatpush1.bf16.msra.mxu0 %v9053
          %10318 = vmatprep.subr.bf16.mxu0 %v9046
          %10319 = vmatpush1.bf16.msra.mxu0 %v9045
          %10320 = vmatprep.subr.bf16.mxu0 %v9038
          %10321 = vmatpush1.bf16.msra.mxu0 %v9037
          %10322 = vmatprep.subr.bf16.mxu0 %v9030
          %10323 = vmatpush1.bf16.msra.mxu0 %v9029
          %10324 = vmatprep.subr.bf16.mxu0 %v9150
          %10325 = vmatpush2.bf16.msra.mxu0 %v9149
          %10326 = vmatprep.subr.bf16.mxu0 %v9142
          %10327 = vmatpush2.bf16.msra.mxu0 %v9141
          %10328 = vmatprep.subr.bf16.mxu0 %v9134
          %10329 = vmatpush2.bf16.msra.mxu0 %v9133
          %10330 = vmatprep.subr.bf16.mxu0 %v9126
          %10331 = vmatpush2.bf16.msra.mxu0 %v9125
          %10332 = vmatprep.subr.bf16.mxu0 %v9118
          %10333 = vmatpush2.bf16.msra.mxu0 %v9117
          %10334 = vmatprep.subr.bf16.mxu0 %v9110
          %10335 = vmatpush2.bf16.msra.mxu0 %v9109
          %10336 = vmatprep.subr.bf16.mxu0 %v9102
          %10337 = vmatpush2.bf16.msra.mxu0 %v9101
          %10338 = vmatprep.subr.bf16.mxu0 %v9094
          %10339 = vmatpush2.bf16.msra.mxu0 %v9093
          %10340 = vmatprep.mubr.bf16.mxu0 %v6802
          %10341 = vmatmul.mubr.bf16.gmra.mxu0 %v6801
          %v10342 = vpop.f32.mrf.mxu0
          %v10343 = vadd.f32 %v10300, %v10342
          %v10344 = vpop.f32.mrf.mxu0
          %v10345 = vadd.f32 %v10302, %v10344
          %v10346 = vpop.f32.mrf.mxu0
          %v10347 = vadd.f32 %v10304, %v10346
          %v10348 = vpop.f32.mrf.mxu0
          %v10349 = vadd.f32 %v10306, %v10348
          %10350 = vdwg.mxu0
          %10351 = vmatprep.subr.bf16.mxu0 %v9214
          %10352 = vmatpush1.bf16.msra.mxu0 %v9213
          %10353 = vmatprep.subr.bf16.mxu0 %v9206
          %10354 = vmatpush1.bf16.msra.mxu0 %v9205
          %10355 = vmatprep.subr.bf16.mxu0 %v9198
          %10356 = vmatpush1.bf16.msra.mxu0 %v9197
          %10357 = vmatprep.subr.bf16.mxu0 %v9190
          %10358 = vmatpush1.bf16.msra.mxu0 %v9189
          %10359 = vmatprep.subr.bf16.mxu0 %v9182
          %10360 = vmatpush1.bf16.msra.mxu0 %v9181
          %10361 = vmatprep.subr.bf16.mxu0 %v9174
          %10362 = vmatpush1.bf16.msra.mxu0 %v9173
          %10363 = vmatprep.subr.bf16.mxu0 %v9166
          %10364 = vmatpush1.bf16.msra.mxu0 %v9165
          %10365 = vmatprep.subr.bf16.mxu0 %v9158
          %10366 = vmatpush1.bf16.msra.mxu0 %v9157
          %10367 = vmatprep.subr.bf16.mxu0 %v9278
          %10368 = vmatpush2.bf16.msra.mxu0 %v9277
          %10369 = vmatprep.subr.bf16.mxu0 %v9270
          %10370 = vmatpush2.bf16.msra.mxu0 %v9269
          %10371 = vmatprep.subr.bf16.mxu0 %v9262
          %10372 = vmatpush2.bf16.msra.mxu0 %v9261
          %10373 = vmatprep.subr.bf16.mxu0 %v9254
          %10374 = vmatpush2.bf16.msra.mxu0 %v9253
          %10375 = vmatprep.subr.bf16.mxu0 %v9246
          %10376 = vmatpush2.bf16.msra.mxu0 %v9245
          %10377 = vmatprep.subr.bf16.mxu0 %v9238
          %10378 = vmatpush2.bf16.msra.mxu0 %v9237
          %10379 = vmatprep.subr.bf16.mxu0 %v9230
          %10380 = vmatpush2.bf16.msra.mxu0 %v9229
          %10381 = vmatprep.subr.bf16.mxu0 %v9222
          %10382 = vmatpush2.bf16.msra.mxu0 %v9221
          %10383 = vmatprep.mubr.bf16.mxu0 %v6804
          %10384 = vmatmul.mubr.bf16.gmra.mxu0 %v6803
          %v10385 = vpop.f32.mrf.mxu0
          %v10386 = vadd.f32 %v10343, %v10385
          %v10387 = vpop.f32.mrf.mxu0
          %v10388 = vadd.f32 %v10345, %v10387
          %v10389 = vpop.f32.mrf.mxu0
          %v10390 = vadd.f32 %v10347, %v10389
          %v10391 = vpop.f32.mrf.mxu0
          %v10392 = vadd.f32 %v10349, %v10391
          %10393 = vdwg.mxu0
          %10394 = vmatprep.subr.bf16.mxu0 %v9342
          %10395 = vmatpush1.bf16.msra.mxu0 %v9341
          %10396 = vmatprep.subr.bf16.mxu0 %v9334
          %10397 = vmatpush1.bf16.msra.mxu0 %v9333
          %10398 = vmatprep.subr.bf16.mxu0 %v9326
          %10399 = vmatpush1.bf16.msra.mxu0 %v9325
          %10400 = vmatprep.subr.bf16.mxu0 %v9318
          %10401 = vmatpush1.bf16.msra.mxu0 %v9317
          %10402 = vmatprep.subr.bf16.mxu0 %v9310
          %10403 = vmatpush1.bf16.msra.mxu0 %v9309
          %10404 = vmatprep.subr.bf16.mxu0 %v9302
          %10405 = vmatpush1.bf16.msra.mxu0 %v9301
          %10406 = vmatprep.subr.bf16.mxu0 %v9294
          %10407 = vmatpush1.bf16.msra.mxu0 %v9293
          %10408 = vmatprep.subr.bf16.mxu0 %v9286
          %10409 = vmatpush1.bf16.msra.mxu0 %v9285
          %10410 = vmatprep.subr.bf16.mxu0 %v9406
          %10411 = vmatpush2.bf16.msra.mxu0 %v9405
          %10412 = vmatprep.subr.bf16.mxu0 %v9398
          %10413 = vmatpush2.bf16.msra.mxu0 %v9397
          %10414 = vmatprep.subr.bf16.mxu0 %v9390
          %10415 = vmatpush2.bf16.msra.mxu0 %v9389
          %10416 = vmatprep.subr.bf16.mxu0 %v9382
          %10417 = vmatpush2.bf16.msra.mxu0 %v9381
          %10418 = vmatprep.subr.bf16.mxu0 %v9374
          %10419 = vmatpush2.bf16.msra.mxu0 %v9373
          %10420 = vmatprep.subr.bf16.mxu0 %v9366
          %10421 = vmatpush2.bf16.msra.mxu0 %v9365
          %10422 = vmatprep.subr.bf16.mxu0 %v9358
          %10423 = vmatpush2.bf16.msra.mxu0 %v9357
          %10424 = vmatprep.subr.bf16.mxu0 %v9350
          %10425 = vmatpush2.bf16.msra.mxu0 %v9349
          %10426 = vmatprep.mubr.bf16.mxu0 %v6806
          %10427 = vmatmul.mubr.bf16.gmra.mxu0 %v6805
          %v10428 = vpop.f32.mrf.mxu0
          %v10429 = vadd.f32 %v10386, %v10428
          %v10430 = vpop.f32.mrf.mxu0
          %v10431 = vadd.f32 %v10388, %v10430
          %v10432 = vpop.f32.mrf.mxu0
          %v10433 = vadd.f32 %v10390, %v10432
          %v10434 = vpop.f32.mrf.mxu0
          %v10435 = vadd.f32 %v10392, %v10434
          %10436 = vdwg.mxu0
          %10437 = vmatprep.subr.bf16.mxu0 %v8960
          %10438 = vmatpush1.bf16.msra.mxu0 %v8959
          %10439 = vmatprep.subr.bf16.mxu0 %v8952
          %10440 = vmatpush1.bf16.msra.mxu0 %v8951
          %10441 = vmatprep.subr.bf16.mxu0 %v8944
          %10442 = vmatpush1.bf16.msra.mxu0 %v8943
          %10443 = vmatprep.subr.bf16.mxu0 %v8936
          %10444 = vmatpush1.bf16.msra.mxu0 %v8935
          %10445 = vmatprep.subr.bf16.mxu0 %v8928
          %10446 = vmatpush1.bf16.msra.mxu0 %v8927
          %10447 = vmatprep.subr.bf16.mxu0 %v8920
          %10448 = vmatpush1.bf16.msra.mxu0 %v8919
          %10449 = vmatprep.subr.bf16.mxu0 %v8912
          %10450 = vmatpush1.bf16.msra.mxu0 %v8911
          %10451 = vmatprep.subr.bf16.mxu0 %v8904
          %10452 = vmatpush1.bf16.msra.mxu0 %v8903
          %10453 = vmatprep.subr.bf16.mxu0 %v9024
          %10454 = vmatpush2.bf16.msra.mxu0 %v9023
          %10455 = vmatprep.subr.bf16.mxu0 %v9016
          %10456 = vmatpush2.bf16.msra.mxu0 %v9015
          %10457 = vmatprep.subr.bf16.mxu0 %v9008
          %10458 = vmatpush2.bf16.msra.mxu0 %v9007
          %10459 = vmatprep.subr.bf16.mxu0 %v9000
          %10460 = vmatpush2.bf16.msra.mxu0 %v8999
          %10461 = vmatprep.subr.bf16.mxu0 %v8992
          %10462 = vmatpush2.bf16.msra.mxu0 %v8991
          %10463 = vmatprep.subr.bf16.mxu0 %v8984
          %10464 = vmatpush2.bf16.msra.mxu0 %v8983
          %10465 = vmatprep.subr.bf16.mxu0 %v8976
          %10466 = vmatpush2.bf16.msra.mxu0 %v8975
          %10467 = vmatprep.subr.bf16.mxu0 %v8968
          %10468 = vmatpush2.bf16.msra.mxu0 %v8967
          %10469 = vmatprep.mubr.bf16.mxu0 %v6800
          %10470 = vmatmul.mubr.bf16.gmra.mxu0 %v6799
          %v10471 = vpop.f32.mrf.mxu0
          %v10472 = vadd.f32 %v7348, %v10471
          %v10473 = vpop.f32.mrf.mxu0
          %v10474 = vadd.f32 %v7352, %v10473
          %v10475 = vpop.f32.mrf.mxu0
          %v10476 = vadd.f32 %v7348, %v10475
          %v10477 = vpop.f32.mrf.mxu0
          %v10478 = vadd.f32 %v7352, %v10477
          %10479 = vdwg.mxu0
          %10480 = vmatprep.subr.bf16.mxu0 %v9088
          %10481 = vmatpush1.bf16.msra.mxu0 %v9087
          %10482 = vmatprep.subr.bf16.mxu0 %v9080
          %10483 = vmatpush1.bf16.msra.mxu0 %v9079
          %10484 = vmatprep.subr.bf16.mxu0 %v9072
          %10485 = vmatpush1.bf16.msra.mxu0 %v9071
          %10486 = vmatprep.subr.bf16.mxu0 %v9064
          %10487 = vmatpush1.bf16.msra.mxu0 %v9063
          %10488 = vmatprep.subr.bf16.mxu0 %v9056
          %10489 = vmatpush1.bf16.msra.mxu0 %v9055
          %10490 = vmatprep.subr.bf16.mxu0 %v9048
          %10491 = vmatpush1.bf16.msra.mxu0 %v9047
          %10492 = vmatprep.subr.bf16.mxu0 %v9040
          %10493 = vmatpush1.bf16.msra.mxu0 %v9039
          %10494 = vmatprep.subr.bf16.mxu0 %v9032
          %10495 = vmatpush1.bf16.msra.mxu0 %v9031
          %10496 = vmatprep.subr.bf16.mxu0 %v9152
          %10497 = vmatpush2.bf16.msra.mxu0 %v9151
          %10498 = vmatprep.subr.bf16.mxu0 %v9144
          %10499 = vmatpush2.bf16.msra.mxu0 %v9143
          %10500 = vmatprep.subr.bf16.mxu0 %v9136
          %10501 = vmatpush2.bf16.msra.mxu0 %v9135
          %10502 = vmatprep.subr.bf16.mxu0 %v9128
          %10503 = vmatpush2.bf16.msra.mxu0 %v9127
          %10504 = vmatprep.subr.bf16.mxu0 %v9120
          %10505 = vmatpush2.bf16.msra.mxu0 %v9119
          %10506 = vmatprep.subr.bf16.mxu0 %v9112
          %10507 = vmatpush2.bf16.msra.mxu0 %v9111
          %10508 = vmatprep.subr.bf16.mxu0 %v9104
          %10509 = vmatpush2.bf16.msra.mxu0 %v9103
          %10510 = vmatprep.subr.bf16.mxu0 %v9096
          %10511 = vmatpush2.bf16.msra.mxu0 %v9095
          %10512 = vmatprep.mubr.bf16.mxu0 %v6802
          %10513 = vmatmul.mubr.bf16.gmra.mxu0 %v6801
          %v10514 = vpop.f32.mrf.mxu0
          %v10515 = vadd.f32 %v10472, %v10514
          %v10516 = vpop.f32.mrf.mxu0
          %v10517 = vadd.f32 %v10474, %v10516
          %v10518 = vpop.f32.mrf.mxu0
          %v10519 = vadd.f32 %v10476, %v10518
          %v10520 = vpop.f32.mrf.mxu0
          %v10521 = vadd.f32 %v10478, %v10520
          %10522 = vdwg.mxu0
          %10523 = vmatprep.subr.bf16.mxu0 %v9216
          %10524 = vmatpush1.bf16.msra.mxu0 %v9215
          %10525 = vmatprep.subr.bf16.mxu0 %v9208
          %10526 = vmatpush1.bf16.msra.mxu0 %v9207
          %10527 = vmatprep.subr.bf16.mxu0 %v9200
          %10528 = vmatpush1.bf16.msra.mxu0 %v9199
          %10529 = vmatprep.subr.bf16.mxu0 %v9192
          %10530 = vmatpush1.bf16.msra.mxu0 %v9191
          %10531 = vmatprep.subr.bf16.mxu0 %v9184
          %10532 = vmatpush1.bf16.msra.mxu0 %v9183
          %10533 = vmatprep.subr.bf16.mxu0 %v9176
          %10534 = vmatpush1.bf16.msra.mxu0 %v9175
          %10535 = vmatprep.subr.bf16.mxu0 %v9168
          %10536 = vmatpush1.bf16.msra.mxu0 %v9167
          %10537 = vmatprep.subr.bf16.mxu0 %v9160
          %10538 = vmatpush1.bf16.msra.mxu0 %v9159
          %10539 = vmatprep.subr.bf16.mxu0 %v9280
          %10540 = vmatpush2.bf16.msra.mxu0 %v9279
          %10541 = vmatprep.subr.bf16.mxu0 %v9272
          %10542 = vmatpush2.bf16.msra.mxu0 %v9271
          %10543 = vmatprep.subr.bf16.mxu0 %v9264
          %10544 = vmatpush2.bf16.msra.mxu0 %v9263
          %10545 = vmatprep.subr.bf16.mxu0 %v9256
          %10546 = vmatpush2.bf16.msra.mxu0 %v9255
          %10547 = vmatprep.subr.bf16.mxu0 %v9248
          %10548 = vmatpush2.bf16.msra.mxu0 %v9247
          %10549 = vmatprep.subr.bf16.mxu0 %v9240
          %10550 = vmatpush2.bf16.msra.mxu0 %v9239
          %10551 = vmatprep.subr.bf16.mxu0 %v9232
          %10552 = vmatpush2.bf16.msra.mxu0 %v9231
          %10553 = vmatprep.subr.bf16.mxu0 %v9224
          %10554 = vmatpush2.bf16.msra.mxu0 %v9223
          %10555 = vmatprep.mubr.bf16.mxu0 %v6804
          %10556 = vmatmul.mubr.bf16.gmra.mxu0 %v6803
          %v10557 = vpop.f32.mrf.mxu0
          %v10558 = vadd.f32 %v10515, %v10557
          %v10559 = vpop.f32.mrf.mxu0
          %v10560 = vadd.f32 %v10517, %v10559
          %v10561 = vpop.f32.mrf.mxu0
          %v10562 = vadd.f32 %v10519, %v10561
          %v10563 = vpop.f32.mrf.mxu0
          %v10564 = vadd.f32 %v10521, %v10563
          %10565 = vdwg.mxu0
          %10566 = vmatprep.subr.bf16.mxu0 %v9344
          %10567 = vmatpush1.bf16.msra.mxu0 %v9343
          %10568 = vmatprep.subr.bf16.mxu0 %v9336
          %10569 = vmatpush1.bf16.msra.mxu0 %v9335
          %10570 = vmatprep.subr.bf16.mxu0 %v9328
          %10571 = vmatpush1.bf16.msra.mxu0 %v9327
          %10572 = vmatprep.subr.bf16.mxu0 %v9320
          %10573 = vmatpush1.bf16.msra.mxu0 %v9319
          %10574 = vmatprep.subr.bf16.mxu0 %v9312
          %10575 = vmatpush1.bf16.msra.mxu0 %v9311
          %10576 = vmatprep.subr.bf16.mxu0 %v9304
          %10577 = vmatpush1.bf16.msra.mxu0 %v9303
          %10578 = vmatprep.subr.bf16.mxu0 %v9296
          %10579 = vmatpush1.bf16.msra.mxu0 %v9295
          %10580 = vmatprep.subr.bf16.mxu0 %v9288
          %10581 = vmatpush1.bf16.msra.mxu0 %v9287
          %10582 = vmatprep.subr.bf16.mxu0 %v9408
          %10583 = vmatpush2.bf16.msra.mxu0 %v9407
          %10584 = vmatprep.subr.bf16.mxu0 %v9400
          %10585 = vmatpush2.bf16.msra.mxu0 %v9399
          %10586 = vmatprep.subr.bf16.mxu0 %v9392
          %10587 = vmatpush2.bf16.msra.mxu0 %v9391
          %10588 = vmatprep.subr.bf16.mxu0 %v9384
          %10589 = vmatpush2.bf16.msra.mxu0 %v9383
          %10590 = vmatprep.subr.bf16.mxu0 %v9376
          %10591 = vmatpush2.bf16.msra.mxu0 %v9375
          %10592 = vmatprep.subr.bf16.mxu0 %v9368
          %10593 = vmatpush2.bf16.msra.mxu0 %v9367
          %10594 = vmatprep.subr.bf16.mxu0 %v9360
          %10595 = vmatpush2.bf16.msra.mxu0 %v9359
          %10596 = vmatprep.subr.bf16.mxu0 %v9352
          %10597 = vmatpush2.bf16.msra.mxu0 %v9351
          %10598 = vmatprep.mubr.bf16.mxu0 %v6806
          %10599 = vmatmul.mubr.bf16.gmra.mxu0 %v6805
          %v10600 = vpop.f32.mrf.mxu0
          %v10601 = vadd.f32 %v10558, %v10600
          %v10602 = vpop.f32.mrf.mxu0
          %v10603 = vadd.f32 %v10560, %v10602
          %v10604 = vpop.f32.mrf.mxu0
          %v10605 = vadd.f32 %v10562, %v10604
          %v10606 = vpop.f32.mrf.mxu0
          %v10607 = vadd.f32 %v10564, %v10606
          %10608 = vdwg.mxu0
          %v10609 = vmax.f32 %v10085, 0.0
          %v10610 = vmax.f32 %v10087, 0.0
          %v10611 = vmax.f32 %v10257, 0.0
          %v10612 = vmax.f32 %v10259, 0.0
          %v10613 = vmax.f32 %v10429, 0.0
          %v10614 = vmax.f32 %v10431, 0.0
          %v10615 = vmax.f32 %v10601, 0.0
          %v10616 = vmax.f32 %v10603, 0.0
          %v10617 = vmax.f32 %v10089, 0.0
          %v10618 = vmax.f32 %v10091, 0.0
          %v10619 = vmax.f32 %v10261, 0.0
          %v10620 = vmax.f32 %v10263, 0.0
          %v10621 = vmax.f32 %v10433, 0.0
          %v10622 = vmax.f32 %v10435, 0.0
          %v10623 = vmax.f32 %v10605, 0.0
          %v10624 = vmax.f32 %v10607, 0.0
          %v10625 = vpack.c.bf16 %v10617, %v10609
          %v10626 = vpack.c.bf16 %v10618, %v10610
          %v10627 = vpack.c.bf16 %v10619, %v10611
          %v10628 = vpack.c.bf16 %v10620, %v10612
          %v10629 = vpack.c.bf16 %v10621, %v10613
          %v10630 = vpack.c.bf16 %v10622, %v10614
          %v10631 = vpack.c.bf16 %v10623, %v10615
          %v10632 = vpack.c.bf16 %v10624, %v10616
          %v10633 = vld [vmem:[%s7] sm:$0xf]
          %v10634 = vld [vmem:[%s7 + $0x4] sm:$0xf]
          %v10635 = vld [vmem:[%s7 + $0x8] sm:$0xf]
          %v10636 = vld [vmem:[%s7 + $0xc] sm:$0xf]
          %v10637 = vld [vmem:[%s7 + $0x10] sm:$0xf]
          %v10638 = vld [vmem:[%s7 + $0x14] sm:$0xf]
          %v10639 = vld [vmem:[%s7 + $0x18] sm:$0xf]
          %v10640 = vld [vmem:[%s7 + $0x1c] sm:$0xf]
          %v10641 = vld [vmem:[%s7 + $0x20] sm:$0xf]
          %v10642 = vld [vmem:[%s7 + $0x24] sm:$0xf]
          %v10643 = vld [vmem:[%s7 + $0x28] sm:$0xf]
          %v10644 = vld [vmem:[%s7 + $0x2c] sm:$0xf]
          %v10645 = vld [vmem:[%s7 + $0x30] sm:$0xf]
          %v10646 = vld [vmem:[%s7 + $0x34] sm:$0xf]
          %v10647 = vld [vmem:[%s7 + $0x38] sm:$0xf]
          %v10648 = vld [vmem:[%s7 + $0x3c] sm:$0xf]
          %v10649 = vld [vmem:[%s7 + $0x40] sm:$0xf]
          %v10650 = vld [vmem:[%s7 + $0x44] sm:$0xf]
          %v10651 = vld [vmem:[%s7 + $0x48] sm:$0xf]
          %v10652 = vld [vmem:[%s7 + $0x4c] sm:$0xf]
          %v10653 = vld [vmem:[%s7 + $0x50] sm:$0xf]
          %v10654 = vld [vmem:[%s7 + $0x54] sm:$0xf]
          %v10655 = vld [vmem:[%s7 + $0x58] sm:$0xf]
          %v10656 = vld [vmem:[%s7 + $0x5c] sm:$0xf]
          %v10657 = vld [vmem:[%s7 + $0x60] sm:$0xf]
          %v10658 = vld [vmem:[%s7 + $0x64] sm:$0xf]
          %v10659 = vld [vmem:[%s7 + $0x68] sm:$0xf]
          %v10660 = vld [vmem:[%s7 + $0x6c] sm:$0xf]
          %v10661 = vld [vmem:[%s7 + $0x70] sm:$0xf]
          %v10662 = vld [vmem:[%s7 + $0x74] sm:$0xf]
          %v10663 = vld [vmem:[%s7 + $0x78] sm:$0xf]
          %v10664 = vld [vmem:[%s7 + $0x7c] sm:$0xf]
          %v10665 = vld [vmem:[%s7 + $0x80] sm:$0xf]
          %v10666 = vld [vmem:[%s7 + $0x84] sm:$0xf]
          %v10667 = vld [vmem:[%s7 + $0x88] sm:$0xf]
          %v10668 = vld [vmem:[%s7 + $0x8c] sm:$0xf]
          %v10669 = vld [vmem:[%s7 + $0x90] sm:$0xf]
          %v10670 = vld [vmem:[%s7 + $0x94] sm:$0xf]
          %v10671 = vld [vmem:[%s7 + $0x98] sm:$0xf]
          %v10672 = vld [vmem:[%s7 + $0x9c] sm:$0xf]
          %v10673 = vld [vmem:[%s7 + $0xa0] sm:$0xf]
          %v10674 = vld [vmem:[%s7 + $0xa4] sm:$0xf]
          %v10675 = vld [vmem:[%s7 + $0xa8] sm:$0xf]
          %v10676 = vld [vmem:[%s7 + $0xac] sm:$0xf]
          %v10677 = vld [vmem:[%s7 + $0xb0] sm:$0xf]
          %v10678 = vld [vmem:[%s7 + $0xb4] sm:$0xf]
          %v10679 = vld [vmem:[%s7 + $0xb8] sm:$0xf]
          %v10680 = vld [vmem:[%s7 + $0xbc] sm:$0xf]
          %v10681 = vld [vmem:[%s7 + $0xc0] sm:$0xf]
          %v10682 = vld [vmem:[%s7 + $0xc4] sm:$0xf]
          %v10683 = vld [vmem:[%s7 + $0xc8] sm:$0xf]
          %v10684 = vld [vmem:[%s7 + $0xcc] sm:$0xf]
          %v10685 = vld [vmem:[%s7 + $0xd0] sm:$0xf]
          %v10686 = vld [vmem:[%s7 + $0xd4] sm:$0xf]
          %v10687 = vld [vmem:[%s7 + $0xd8] sm:$0xf]
          %v10688 = vld [vmem:[%s7 + $0xdc] sm:$0xf]
          %v10689 = vld [vmem:[%s7 + $0xe0] sm:$0xf]
          %v10690 = vld [vmem:[%s7 + $0xe4] sm:$0xf]
          %v10691 = vld [vmem:[%s7 + $0xe8] sm:$0xf]
          %v10692 = vld [vmem:[%s7 + $0xec] sm:$0xf]
          %v10693 = vld [vmem:[%s7 + $0xf0] sm:$0xf]
          %v10694 = vld [vmem:[%s7 + $0xf4] sm:$0xf]
          %v10695 = vld [vmem:[%s7 + $0xf8] sm:$0xf]
          %v10696 = vld [vmem:[%s7 + $0xfc] sm:$0xf]
          %v10697 = vld [vmem:[%s7 + $0x100] sm:$0xf]
          %v10698 = vld [vmem:[%s7 + $0x104] sm:$0xf]
          %v10699 = vld [vmem:[%s7 + $0x108] sm:$0xf]
          %v10700 = vld [vmem:[%s7 + $0x10c] sm:$0xf]
          %v10701 = vld [vmem:[%s7 + $0x110] sm:$0xf]
          %v10702 = vld [vmem:[%s7 + $0x114] sm:$0xf]
          %v10703 = vld [vmem:[%s7 + $0x118] sm:$0xf]
          %v10704 = vld [vmem:[%s7 + $0x11c] sm:$0xf]
          %v10705 = vld [vmem:[%s7 + $0x120] sm:$0xf]
          %v10706 = vld [vmem:[%s7 + $0x124] sm:$0xf]
          %v10707 = vld [vmem:[%s7 + $0x128] sm:$0xf]
          %v10708 = vld [vmem:[%s7 + $0x12c] sm:$0xf]
          %v10709 = vld [vmem:[%s7 + $0x130] sm:$0xf]
          %v10710 = vld [vmem:[%s7 + $0x134] sm:$0xf]
          %v10711 = vld [vmem:[%s7 + $0x138] sm:$0xf]
          %v10712 = vld [vmem:[%s7 + $0x13c] sm:$0xf]
          %v10713 = vld [vmem:[%s7 + $0x140] sm:$0xf]
          %v10714 = vld [vmem:[%s7 + $0x144] sm:$0xf]
          %v10715 = vld [vmem:[%s7 + $0x148] sm:$0xf]
          %v10716 = vld [vmem:[%s7 + $0x14c] sm:$0xf]
          %v10717 = vld [vmem:[%s7 + $0x150] sm:$0xf]
          %v10718 = vld [vmem:[%s7 + $0x154] sm:$0xf]
          %v10719 = vld [vmem:[%s7 + $0x158] sm:$0xf]
          %v10720 = vld [vmem:[%s7 + $0x15c] sm:$0xf]
          %v10721 = vld [vmem:[%s7 + $0x160] sm:$0xf]
          %v10722 = vld [vmem:[%s7 + $0x164] sm:$0xf]
          %v10723 = vld [vmem:[%s7 + $0x168] sm:$0xf]
          %v10724 = vld [vmem:[%s7 + $0x16c] sm:$0xf]
          %v10725 = vld [vmem:[%s7 + $0x170] sm:$0xf]
          %v10726 = vld [vmem:[%s7 + $0x174] sm:$0xf]
          %v10727 = vld [vmem:[%s7 + $0x178] sm:$0xf]
          %v10728 = vld [vmem:[%s7 + $0x17c] sm:$0xf]
          %v10729 = vld [vmem:[%s7 + $0x180] sm:$0xf]
          %v10730 = vld [vmem:[%s7 + $0x184] sm:$0xf]
          %v10731 = vld [vmem:[%s7 + $0x188] sm:$0xf]
          %v10732 = vld [vmem:[%s7 + $0x18c] sm:$0xf]
          %v10733 = vld [vmem:[%s7 + $0x190] sm:$0xf]
          %v10734 = vld [vmem:[%s7 + $0x194] sm:$0xf]
          %v10735 = vld [vmem:[%s7 + $0x198] sm:$0xf]
          %v10736 = vld [vmem:[%s7 + $0x19c] sm:$0xf]
          %v10737 = vld [vmem:[%s7 + $0x1a0] sm:$0xf]
          %v10738 = vld [vmem:[%s7 + $0x1a4] sm:$0xf]
          %v10739 = vld [vmem:[%s7 + $0x1a8] sm:$0xf]
          %v10740 = vld [vmem:[%s7 + $0x1ac] sm:$0xf]
          %v10741 = vld [vmem:[%s7 + $0x1b0] sm:$0xf]
          %v10742 = vld [vmem:[%s7 + $0x1b4] sm:$0xf]
          %v10743 = vld [vmem:[%s7 + $0x1b8] sm:$0xf]
          %v10744 = vld [vmem:[%s7 + $0x1bc] sm:$0xf]
          %v10745 = vld [vmem:[%s7 + $0x1c0] sm:$0xf]
          %v10746 = vld [vmem:[%s7 + $0x1c4] sm:$0xf]
          %v10747 = vld [vmem:[%s7 + $0x1c8] sm:$0xf]
          %v10748 = vld [vmem:[%s7 + $0x1cc] sm:$0xf]
          %v10749 = vld [vmem:[%s7 + $0x1d0] sm:$0xf]
          %v10750 = vld [vmem:[%s7 + $0x1d4] sm:$0xf]
          %v10751 = vld [vmem:[%s7 + $0x1d8] sm:$0xf]
          %v10752 = vld [vmem:[%s7 + $0x1dc] sm:$0xf]
          %v10753 = vld [vmem:[%s7 + $0x1e0] sm:$0xf]
          %v10754 = vld [vmem:[%s7 + $0x1e4] sm:$0xf]
          %v10755 = vld [vmem:[%s7 + $0x1e8] sm:$0xf]
          %v10756 = vld [vmem:[%s7 + $0x1ec] sm:$0xf]
          %v10757 = vld [vmem:[%s7 + $0x1f0] sm:$0xf]
          %v10758 = vld [vmem:[%s7 + $0x1f4] sm:$0xf]
          %v10759 = vld [vmem:[%s7 + $0x1f8] sm:$0xf]
          %v10760 = vld [vmem:[%s7 + $0x1fc] sm:$0xf]
          %v10761 = vld [vmem:[%s8] sm:$0x1]
          %v10763 = vlaneseq
          %v10764 = vshrl.u32 %v10763, 7
          %v10765 = vsub.s32 0, %v10764
          %v10766 = vrot.slane %v10761, %v10765
          %v10896 = vunpack.c.l.b16 %v10633
          %v10897 = vunpack.c.l.b16 %v10634
          %v10898 = vunpack.c.l.b16 %v10635
          %v10899 = vunpack.c.l.b16 %v10636
          %v10900 = vunpack.c.l.b16 %v10637
          %v10901 = vunpack.c.l.b16 %v10638
          %v10902 = vunpack.c.l.b16 %v10639
          %v10903 = vunpack.c.l.b16 %v10640
          %v10904 = vunpack.c.l.b16 %v10641
          %v10905 = vunpack.c.l.b16 %v10642
          %v10906 = vunpack.c.l.b16 %v10643
          %v10907 = vunpack.c.l.b16 %v10644
          %v10908 = vunpack.c.l.b16 %v10645
          %v10909 = vunpack.c.l.b16 %v10646
          %v10910 = vunpack.c.l.b16 %v10647
          %v10911 = vunpack.c.l.b16 %v10648
          %v10912 = vunpack.c.l.b16 %v10649
          %v10913 = vunpack.c.l.b16 %v10650
          %v10914 = vunpack.c.l.b16 %v10651
          %v10915 = vunpack.c.l.b16 %v10652
          %v10916 = vunpack.c.l.b16 %v10653
          %v10917 = vunpack.c.l.b16 %v10654
          %v10918 = vunpack.c.l.b16 %v10655
          %v10919 = vunpack.c.l.b16 %v10656
          %v10920 = vunpack.c.l.b16 %v10657
          %v10921 = vunpack.c.l.b16 %v10658
          %v10922 = vunpack.c.l.b16 %v10659
          %v10923 = vunpack.c.l.b16 %v10660
          %v10924 = vunpack.c.l.b16 %v10661
          %v10925 = vunpack.c.l.b16 %v10662
          %v10926 = vunpack.c.l.b16 %v10663
          %v10927 = vunpack.c.l.b16 %v10664
          %v10928 = vunpack.c.l.b16 %v10665
          %v10929 = vunpack.c.l.b16 %v10666
          %v10930 = vunpack.c.l.b16 %v10667
          %v10931 = vunpack.c.l.b16 %v10668
          %v10932 = vunpack.c.l.b16 %v10669
          %v10933 = vunpack.c.l.b16 %v10670
          %v10934 = vunpack.c.l.b16 %v10671
          %v10935 = vunpack.c.l.b16 %v10672
          %v10936 = vunpack.c.l.b16 %v10673
          %v10937 = vunpack.c.l.b16 %v10674
          %v10938 = vunpack.c.l.b16 %v10675
          %v10939 = vunpack.c.l.b16 %v10676
          %v10940 = vunpack.c.l.b16 %v10677
          %v10941 = vunpack.c.l.b16 %v10678
          %v10942 = vunpack.c.l.b16 %v10679
          %v10943 = vunpack.c.l.b16 %v10680
          %v10944 = vunpack.c.l.b16 %v10681
          %v10945 = vunpack.c.l.b16 %v10682
          %v10946 = vunpack.c.l.b16 %v10683
          %v10947 = vunpack.c.l.b16 %v10684
          %v10948 = vunpack.c.l.b16 %v10685
          %v10949 = vunpack.c.l.b16 %v10686
          %v10950 = vunpack.c.l.b16 %v10687
          %v10951 = vunpack.c.l.b16 %v10688
          %v10952 = vunpack.c.l.b16 %v10689
          %v10953 = vunpack.c.l.b16 %v10690
          %v10954 = vunpack.c.l.b16 %v10691
          %v10955 = vunpack.c.l.b16 %v10692
          %v10956 = vunpack.c.l.b16 %v10693
          %v10957 = vunpack.c.l.b16 %v10694
          %v10958 = vunpack.c.l.b16 %v10695
          %v10959 = vunpack.c.l.b16 %v10696
          %v10960 = vunpack.c.l.b16 %v10697
          %v10961 = vunpack.c.l.b16 %v10698
          %v10962 = vunpack.c.l.b16 %v10699
          %v10963 = vunpack.c.l.b16 %v10700
          %v10964 = vunpack.c.l.b16 %v10701
          %v10965 = vunpack.c.l.b16 %v10702
          %v10966 = vunpack.c.l.b16 %v10703
          %v10967 = vunpack.c.l.b16 %v10704
          %v10968 = vunpack.c.l.b16 %v10705
          %v10969 = vunpack.c.l.b16 %v10706
          %v10970 = vunpack.c.l.b16 %v10707
          %v10971 = vunpack.c.l.b16 %v10708
          %v10972 = vunpack.c.l.b16 %v10709
          %v10973 = vunpack.c.l.b16 %v10710
          %v10974 = vunpack.c.l.b16 %v10711
          %v10975 = vunpack.c.l.b16 %v10712
          %v10976 = vunpack.c.l.b16 %v10713
          %v10977 = vunpack.c.l.b16 %v10714
          %v10978 = vunpack.c.l.b16 %v10715
          %v10979 = vunpack.c.l.b16 %v10716
          %v10980 = vunpack.c.l.b16 %v10717
          %v10981 = vunpack.c.l.b16 %v10718
          %v10982 = vunpack.c.l.b16 %v10719
          %v10983 = vunpack.c.l.b16 %v10720
          %v10984 = vunpack.c.l.b16 %v10721
          %v10985 = vunpack.c.l.b16 %v10722
          %v10986 = vunpack.c.l.b16 %v10723
          %v10987 = vunpack.c.l.b16 %v10724
          %v10988 = vunpack.c.l.b16 %v10725
          %v10989 = vunpack.c.l.b16 %v10726
          %v10990 = vunpack.c.l.b16 %v10727
          %v10991 = vunpack.c.l.b16 %v10728
          %v10992 = vunpack.c.l.b16 %v10729
          %v10993 = vunpack.c.l.b16 %v10730
          %v10994 = vunpack.c.l.b16 %v10731
          %v10995 = vunpack.c.l.b16 %v10732
          %v10996 = vunpack.c.l.b16 %v10733
          %v10997 = vunpack.c.l.b16 %v10734
          %v10998 = vunpack.c.l.b16 %v10735
          %v10999 = vunpack.c.l.b16 %v10736
          %v11000 = vunpack.c.l.b16 %v10737
          %v11001 = vunpack.c.l.b16 %v10738
          %v11002 = vunpack.c.l.b16 %v10739
          %v11003 = vunpack.c.l.b16 %v10740
          %v11004 = vunpack.c.l.b16 %v10741
          %v11005 = vunpack.c.l.b16 %v10742
          %v11006 = vunpack.c.l.b16 %v10743
          %v11007 = vunpack.c.l.b16 %v10744
          %v11008 = vunpack.c.l.b16 %v10745
          %v11009 = vunpack.c.l.b16 %v10746
          %v11010 = vunpack.c.l.b16 %v10747
          %v11011 = vunpack.c.l.b16 %v10748
          %v11012 = vunpack.c.l.b16 %v10749
          %v11013 = vunpack.c.l.b16 %v10750
          %v11014 = vunpack.c.l.b16 %v10751
          %v11015 = vunpack.c.l.b16 %v10752
          %v11016 = vunpack.c.l.b16 %v10753
          %v11017 = vunpack.c.l.b16 %v10754
          %v11018 = vunpack.c.l.b16 %v10755
          %v11019 = vunpack.c.l.b16 %v10756
          %v11020 = vunpack.c.l.b16 %v10757
          %v11021 = vunpack.c.l.b16 %v10758
          %v11022 = vunpack.c.l.b16 %v10759
          %v11023 = vunpack.c.l.b16 %v10760
          %v11024 = vpack.c.b16 %v10897, %v10896
          %v11025 = vpack.c.b16 %v10899, %v10898
          %v11026 = vpack.c.b16 %v10901, %v10900
          %v11027 = vpack.c.b16 %v10903, %v10902
          %v11028 = vpack.c.b16 %v10905, %v10904
          %v11029 = vpack.c.b16 %v10907, %v10906
          %v11030 = vpack.c.b16 %v10909, %v10908
          %v11031 = vpack.c.b16 %v10911, %v10910
          %v11032 = vpack.c.b16 %v10913, %v10912
          %v11033 = vpack.c.b16 %v10915, %v10914
          %v11034 = vpack.c.b16 %v10917, %v10916
          %v11035 = vpack.c.b16 %v10919, %v10918
          %v11036 = vpack.c.b16 %v10921, %v10920
          %v11037 = vpack.c.b16 %v10923, %v10922
          %v11038 = vpack.c.b16 %v10925, %v10924
          %v11039 = vpack.c.b16 %v10927, %v10926
          %v11040 = vpack.c.b16 %v10929, %v10928
          %v11041 = vpack.c.b16 %v10931, %v10930
          %v11042 = vpack.c.b16 %v10933, %v10932
          %v11043 = vpack.c.b16 %v10935, %v10934
          %v11044 = vpack.c.b16 %v10937, %v10936
          %v11045 = vpack.c.b16 %v10939, %v10938
          %v11046 = vpack.c.b16 %v10941, %v10940
          %v11047 = vpack.c.b16 %v10943, %v10942
          %v11048 = vpack.c.b16 %v10945, %v10944
          %v11049 = vpack.c.b16 %v10947, %v10946
          %v11050 = vpack.c.b16 %v10949, %v10948
          %v11051 = vpack.c.b16 %v10951, %v10950
          %v11052 = vpack.c.b16 %v10953, %v10952
          %v11053 = vpack.c.b16 %v10955, %v10954
          %v11054 = vpack.c.b16 %v10957, %v10956
          %v11055 = vpack.c.b16 %v10959, %v10958
          %v11056 = vpack.c.b16 %v10961, %v10960
          %v11057 = vpack.c.b16 %v10963, %v10962
          %v11058 = vpack.c.b16 %v10965, %v10964
          %v11059 = vpack.c.b16 %v10967, %v10966
          %v11060 = vpack.c.b16 %v10969, %v10968
          %v11061 = vpack.c.b16 %v10971, %v10970
          %v11062 = vpack.c.b16 %v10973, %v10972
          %v11063 = vpack.c.b16 %v10975, %v10974
          %v11064 = vpack.c.b16 %v10977, %v10976
          %v11065 = vpack.c.b16 %v10979, %v10978
          %v11066 = vpack.c.b16 %v10981, %v10980
          %v11067 = vpack.c.b16 %v10983, %v10982
          %v11068 = vpack.c.b16 %v10985, %v10984
          %v11069 = vpack.c.b16 %v10987, %v10986
          %v11070 = vpack.c.b16 %v10989, %v10988
          %v11071 = vpack.c.b16 %v10991, %v10990
          %v11072 = vpack.c.b16 %v10993, %v10992
          %v11073 = vpack.c.b16 %v10995, %v10994
          %v11074 = vpack.c.b16 %v10997, %v10996
          %v11075 = vpack.c.b16 %v10999, %v10998
          %v11076 = vpack.c.b16 %v11001, %v11000
          %v11077 = vpack.c.b16 %v11003, %v11002
          %v11078 = vpack.c.b16 %v11005, %v11004
          %v11079 = vpack.c.b16 %v11007, %v11006
          %v11080 = vpack.c.b16 %v11009, %v11008
          %v11081 = vpack.c.b16 %v11011, %v11010
          %v11082 = vpack.c.b16 %v11013, %v11012
          %v11083 = vpack.c.b16 %v11015, %v11014
          %v11084 = vpack.c.b16 %v11017, %v11016
          %v11085 = vpack.c.b16 %v11019, %v11018
          %v11086 = vpack.c.b16 %v11021, %v11020
          %v11087 = vpack.c.b16 %v11023, %v11022
          %11152 = vmatprep.subr.bf16.mxu0 0
          %11153 = vmatpush1.bf16.msra.mxu0 %v11031
          %11154 = vmatprep.subr.bf16.mxu0 0
          %11155 = vmatpush1.bf16.msra.mxu0 %v11030
          %11156 = vmatprep.subr.bf16.mxu0 0
          %11157 = vmatpush1.bf16.msra.mxu0 %v11029
          %11158 = vmatprep.subr.bf16.mxu0 0
          %11159 = vmatpush1.bf16.msra.mxu0 %v11028
          %11160 = vmatprep.subr.bf16.mxu0 0
          %11161 = vmatpush1.bf16.msra.mxu0 %v11027
          %11162 = vmatprep.subr.bf16.mxu0 0
          %11163 = vmatpush1.bf16.msra.mxu0 %v11026
          %11164 = vmatprep.subr.bf16.mxu0 0
          %11165 = vmatpush1.bf16.msra.mxu0 %v11025
          %11166 = vmatprep.subr.bf16.mxu0 0
          %11167 = vmatpush1.bf16.msra.mxu0 %v11024
          %11168 = vmatprep.subr.bf16.mxu0 0
          %11169 = vmatpush2.bf16.msra.mxu0 %v11039
          %11170 = vmatprep.subr.bf16.mxu0 0
          %11171 = vmatpush2.bf16.msra.mxu0 %v11038
          %11172 = vmatprep.subr.bf16.mxu0 0
          %11173 = vmatpush2.bf16.msra.mxu0 %v11037
          %11174 = vmatprep.subr.bf16.mxu0 0
          %11175 = vmatpush2.bf16.msra.mxu0 %v11036
          %11176 = vmatprep.subr.bf16.mxu0 0
          %11177 = vmatpush2.bf16.msra.mxu0 %v11035
          %11178 = vmatprep.subr.bf16.mxu0 0
          %11179 = vmatpush2.bf16.msra.mxu0 %v11034
          %11180 = vmatprep.subr.bf16.mxu0 0
          %11181 = vmatpush2.bf16.msra.mxu0 %v11033
          %11182 = vmatprep.subr.bf16.mxu0 0
          %11183 = vmatpush2.bf16.msra.mxu0 %v11032
          %11184 = vmatprep.mubr.bf16.mxu0 %v10626
          %11185 = vmatmul.mubr.bf16.gmra.mxu0 %v10625
          %v11186 = vpop.f32.mrf.mxu0
          %v11187 = vadd.f32 %v10766, %v11186
          %v11188 = vpop.f32.mrf.mxu0
          %v11189 = vpop.f32.mrf.mxu0
          %v11190 = vadd.f32 %v10766, %v11189
          %v11191 = vpop.f32.mrf.mxu0
          %11192 = vdwg.mxu0
          %11193 = vmatprep.subr.bf16.mxu0 0
          %11194 = vmatpush1.bf16.msra.mxu0 %v11047
          %11195 = vmatprep.subr.bf16.mxu0 0
          %11196 = vmatpush1.bf16.msra.mxu0 %v11046
          %11197 = vmatprep.subr.bf16.mxu0 0
          %11198 = vmatpush1.bf16.msra.mxu0 %v11045
          %11199 = vmatprep.subr.bf16.mxu0 0
          %11200 = vmatpush1.bf16.msra.mxu0 %v11044
          %11201 = vmatprep.subr.bf16.mxu0 0
          %11202 = vmatpush1.bf16.msra.mxu0 %v11043
          %11203 = vmatprep.subr.bf16.mxu0 0
          %11204 = vmatpush1.bf16.msra.mxu0 %v11042
          %11205 = vmatprep.subr.bf16.mxu0 0
          %11206 = vmatpush1.bf16.msra.mxu0 %v11041
          %11207 = vmatprep.subr.bf16.mxu0 0
          %11208 = vmatpush1.bf16.msra.mxu0 %v11040
          %11209 = vmatprep.subr.bf16.mxu0 0
          %11210 = vmatpush2.bf16.msra.mxu0 %v11055
          %11211 = vmatprep.subr.bf16.mxu0 0
          %11212 = vmatpush2.bf16.msra.mxu0 %v11054
          %11213 = vmatprep.subr.bf16.mxu0 0
          %11214 = vmatpush2.bf16.msra.mxu0 %v11053
          %11215 = vmatprep.subr.bf16.mxu0 0
          %11216 = vmatpush2.bf16.msra.mxu0 %v11052
          %11217 = vmatprep.subr.bf16.mxu0 0
          %11218 = vmatpush2.bf16.msra.mxu0 %v11051
          %11219 = vmatprep.subr.bf16.mxu0 0
          %11220 = vmatpush2.bf16.msra.mxu0 %v11050
          %11221 = vmatprep.subr.bf16.mxu0 0
          %11222 = vmatpush2.bf16.msra.mxu0 %v11049
          %11223 = vmatprep.subr.bf16.mxu0 0
          %11224 = vmatpush2.bf16.msra.mxu0 %v11048
          %11225 = vmatprep.mubr.bf16.mxu0 %v10628
          %11226 = vmatmul.mubr.bf16.gmra.mxu0 %v10627
          %v11227 = vpop.f32.mrf.mxu0
          %v11228 = vadd.f32 %v11187, %v11227
          %v11229 = vpop.f32.mrf.mxu0
          %v11230 = vpop.f32.mrf.mxu0
          %v11231 = vadd.f32 %v11190, %v11230
          %v11232 = vpop.f32.mrf.mxu0
          %11233 = vdwg.mxu0
          %11234 = vmatprep.subr.bf16.mxu0 0
          %11235 = vmatpush1.bf16.msra.mxu0 %v11063
          %11236 = vmatprep.subr.bf16.mxu0 0
          %11237 = vmatpush1.bf16.msra.mxu0 %v11062
          %11238 = vmatprep.subr.bf16.mxu0 0
          %11239 = vmatpush1.bf16.msra.mxu0 %v11061
          %11240 = vmatprep.subr.bf16.mxu0 0
          %11241 = vmatpush1.bf16.msra.mxu0 %v11060
          %11242 = vmatprep.subr.bf16.mxu0 0
          %11243 = vmatpush1.bf16.msra.mxu0 %v11059
          %11244 = vmatprep.subr.bf16.mxu0 0
          %11245 = vmatpush1.bf16.msra.mxu0 %v11058
          %11246 = vmatprep.subr.bf16.mxu0 0
          %11247 = vmatpush1.bf16.msra.mxu0 %v11057
          %11248 = vmatprep.subr.bf16.mxu0 0
          %11249 = vmatpush1.bf16.msra.mxu0 %v11056
          %11250 = vmatprep.subr.bf16.mxu0 0
          %11251 = vmatpush2.bf16.msra.mxu0 %v11071
          %11252 = vmatprep.subr.bf16.mxu0 0
          %11253 = vmatpush2.bf16.msra.mxu0 %v11070
          %11254 = vmatprep.subr.bf16.mxu0 0
          %11255 = vmatpush2.bf16.msra.mxu0 %v11069
          %11256 = vmatprep.subr.bf16.mxu0 0
          %11257 = vmatpush2.bf16.msra.mxu0 %v11068
          %11258 = vmatprep.subr.bf16.mxu0 0
          %11259 = vmatpush2.bf16.msra.mxu0 %v11067
          %11260 = vmatprep.subr.bf16.mxu0 0
          %11261 = vmatpush2.bf16.msra.mxu0 %v11066
          %11262 = vmatprep.subr.bf16.mxu0 0
          %11263 = vmatpush2.bf16.msra.mxu0 %v11065
          %11264 = vmatprep.subr.bf16.mxu0 0
          %11265 = vmatpush2.bf16.msra.mxu0 %v11064
          %11266 = vmatprep.mubr.bf16.mxu0 %v10630
          %11267 = vmatmul.mubr.bf16.gmra.mxu0 %v10629
          %v11268 = vpop.f32.mrf.mxu0
          %v11269 = vadd.f32 %v11228, %v11268
          %v11270 = vpop.f32.mrf.mxu0
          %v11271 = vpop.f32.mrf.mxu0
          %v11272 = vadd.f32 %v11231, %v11271
          %v11273 = vpop.f32.mrf.mxu0
          %11274 = vdwg.mxu0
          %11275 = vmatprep.subr.bf16.mxu0 0
          %11276 = vmatpush1.bf16.msra.mxu0 %v11079
          %11277 = vmatprep.subr.bf16.mxu0 0
          %11278 = vmatpush1.bf16.msra.mxu0 %v11078
          %11279 = vmatprep.subr.bf16.mxu0 0
          %11280 = vmatpush1.bf16.msra.mxu0 %v11077
          %11281 = vmatprep.subr.bf16.mxu0 0
          %11282 = vmatpush1.bf16.msra.mxu0 %v11076
          %11283 = vmatprep.subr.bf16.mxu0 0
          %11284 = vmatpush1.bf16.msra.mxu0 %v11075
          %11285 = vmatprep.subr.bf16.mxu0 0
          %11286 = vmatpush1.bf16.msra.mxu0 %v11074
          %11287 = vmatprep.subr.bf16.mxu0 0
          %11288 = vmatpush1.bf16.msra.mxu0 %v11073
          %11289 = vmatprep.subr.bf16.mxu0 0
          %11290 = vmatpush1.bf16.msra.mxu0 %v11072
          %11291 = vmatprep.subr.bf16.mxu0 0
          %11292 = vmatpush2.bf16.msra.mxu0 %v11087
          %11293 = vmatprep.subr.bf16.mxu0 0
          %11294 = vmatpush2.bf16.msra.mxu0 %v11086
          %11295 = vmatprep.subr.bf16.mxu0 0
          %11296 = vmatpush2.bf16.msra.mxu0 %v11085
          %11297 = vmatprep.subr.bf16.mxu0 0
          %11298 = vmatpush2.bf16.msra.mxu0 %v11084
          %11299 = vmatprep.subr.bf16.mxu0 0
          %11300 = vmatpush2.bf16.msra.mxu0 %v11083
          %11301 = vmatprep.subr.bf16.mxu0 0
          %11302 = vmatpush2.bf16.msra.mxu0 %v11082
          %11303 = vmatprep.subr.bf16.mxu0 0
          %11304 = vmatpush2.bf16.msra.mxu0 %v11081
          %11305 = vmatprep.subr.bf16.mxu0 0
          %11306 = vmatpush2.bf16.msra.mxu0 %v11080
          %11307 = vmatprep.mubr.bf16.mxu0 %v10632
          %11308 = vmatmul.mubr.bf16.gmra.mxu0 %v10631
          %v11309 = vpop.f32.mrf.mxu0
          %v11310 = vadd.f32 %v11269, %v11309
          %v11311 = vpop.f32.mrf.mxu0
          %v11312 = vpop.f32.mrf.mxu0
          %v11313 = vadd.f32 %v11272, %v11312
          %v11314 = vpop.f32.mrf.mxu0
          %11315 = vdwg.mxu0
          %v11316 = vmax.f32 %v11310, 0.0
          %v11317 = vmax.f32 %v11313, 0.0
          %v11318 = vpack.c.bf16 %v11317, %v11316
          %v11319 = vld [vmem:[%s9] sm:$0xf]
          %v11320 = vld [vmem:[%s9 + $0x4] sm:$0xf]
          %v11321 = vld [vmem:[%s9 + $0x8] sm:$0xf]
          %v11322 = vld [vmem:[%s9 + $0xc] sm:$0xf]
          %v11323 = vld [vmem:[%s10] sm:$0x1]
          %v11325 = vlaneseq
          %v11326 = vshrl.u32 %v11325, 7
          %v11327 = vsub.s32 0, %v11326
          %v11328 = vrot.slane %v11323, %v11327
          %v11334 = vunpack.c.l.b16 %v11319
          %v11335 = vunpack.c.l.b16 %v11320
          %v11336 = vunpack.c.l.b16 %v11321
          %v11337 = vunpack.c.l.b16 %v11322
          %v11338 = vpack.c.b16 %v11335, %v11334
          %v11339 = vpack.c.b16 %v11337, %v11336
          %vm11342 = vcmask 261120
          %v11344 = vsel %vm11342, %v11318, 0
          %11346 = vmatprep.subr.bf16.mxu0 0
          %11347 = vmatpush1.bf16.msra.mxu0 0
          %11348 = vmatprep.subr.bf16.mxu0 0
          %11349 = vmatpush1.bf16.msra.mxu0 0
          %11350 = vmatprep.subr.bf16.mxu0 0
          %11351 = vmatpush1.bf16.msra.mxu0 0
          %11352 = vmatprep.subr.bf16.mxu0 0
          %11353 = vmatpush1.bf16.msra.mxu0 0
          %11354 = vmatprep.subr.bf16.mxu0 0
          %11355 = vmatpush1.bf16.msra.mxu0 0
          %11356 = vmatprep.subr.bf16.mxu0 0
          %11357 = vmatpush1.bf16.msra.mxu0 0
          %11358 = vmatprep.subr.bf16.mxu0 0
          %11359 = vmatpush1.bf16.msra.mxu0 %v11339
          %11360 = vmatprep.subr.bf16.mxu0 0
          %11361 = vmatpush1.bf16.msra.mxu0 %v11338
          %11362 = vmatprep.subr.bf16.mxu0 0
          %11363 = vmatpush2.bf16.msra.mxu0 0
          %11364 = vmatprep.subr.bf16.mxu0 0
          %11365 = vmatpush2.bf16.msra.mxu0 0
          %11366 = vmatprep.subr.bf16.mxu0 0
          %11367 = vmatpush2.bf16.msra.mxu0 0
          %11368 = vmatprep.subr.bf16.mxu0 0
          %11369 = vmatpush2.bf16.msra.mxu0 0
          %11370 = vmatprep.subr.bf16.mxu0 0
          %11371 = vmatpush2.bf16.msra.mxu0 0
          %11372 = vmatprep.subr.bf16.mxu0 0
          %11373 = vmatpush2.bf16.msra.mxu0 0
          %11374 = vmatprep.subr.bf16.mxu0 0
          %11375 = vmatpush2.bf16.msra.mxu0 0
          %11376 = vmatprep.subr.bf16.mxu0 0
          %11377 = vmatpush2.bf16.msra.mxu0 0
          %11378 = vmatprep.mubr.bf16.mxu0 0
          %11379 = vmatmul.mubr.bf16.gmra.mxu0 %v11344
          %v11380 = vpop.f32.mrf.mxu0
          %v11381 = vadd.f32 %v11328, %v11380
          %v11382 = vpop.f32.mrf.mxu0
          %v11383 = vpop.f32.mrf.mxu0
          %v11384 = vadd.f32 %v11328, %v11383
          %v11385 = vpop.f32.mrf.mxu0
          %11386 = vdwg.mxu0
          %11387 = vmax.xlane.f32.xlu0 %v11381
          %v11388 = vpop.xlane.xlu0 %11387
          %11389 = vmax.xlane.f32.xlu0 %v11384
          %v11390 = vpop.xlane.xlu0 %11389
          %v11391 = vsub.f32 %v11381, %v11388
          %v11392 = vsub.f32 %v11384, %v11390
          %v11393 = vmul.f32 %v11391, 1.442695
          %v11394 = vpow.pop %v11393
          %v11395 = vmul.f32 %v11392, 1.442695
          %v11396 = vpow.pop %v11395
          %11397 = vadd.xlane.f32.xlu0 %v11394
          %v11398 = vpop.xlane.xlu0 %11397
          %11399 = vadd.xlane.f32.xlu0 %v11396
          %v11400 = vpop.xlane.xlu0 %11399
          %v11401 = vrcp.pop %v11398
          %v11402 = vmul.f32 %v11394, %v11401
          %v11403 = vrcp.pop %v11400
          %v11404 = vmul.f32 %v11396, %v11403
          %11405 = vst [vmem:[#allocation5] sm:$0xff] %v11402
          %11406 = vst [vmem:[#allocation5 + $0x8] sm:$0xff] %v11404
          %v11407 = vld [vmem:[#allocation3] sm:$0xff]
          %v11408 = vld [vmem:[#allocation3 + $0x8] sm:$0xff]
          %v11409 = vlaneseq
          %v11410 = vshrl.u32 %v11409, 7
          %v11411 = vadd.s32 %v11410, 8
          %v11412 = vlaneseq
          %v11413 = vand.u32 %v11412, 127
          %vm11414 = vcmp.eq.s32.totalorder %v11410, %v11413
          %vm11415 = vcmp.eq.s32.totalorder %v11411, %v11413
          %v11416 = vsel %vm11414, %v11407, 0.0
          %v11417 = vsel %vm11415, %v11408, 0.0
          %v11418 = vsel %vm2329, %v11416, 0.0
          %11419 = vadd.xlane.f32.xlu0 %v11418
          %v11420 = vpop.xlane.xlu0 %11419
          %v11421 = vsel %vm2329, %v11417, 0.0
          %11422 = vadd.xlane.f32.xlu0 %v11421
          %v11423 = vpop.xlane.xlu0 %11422
          %v11424 = vadd.f32 %v11418, %v11421
          %v11425 = vrot.slane %v11424, 4
          %v11426 = vadd.f32 %v11424, %v11425
          %v11427 = vrot.slane %v11426, 2
          %v11428 = vadd.f32 %v11426, %v11427
          %v11429 = vrot.slane %v11428, 1
          %v11430 = vadd.f32 %v11428, %v11429
          %v11431 = vmul.f32 %v11420, %v11430
          %v11432 = vmul.f32 %v11423, %v11430
          %v11433 = vmax.f32 %v11431, 1e-24
          %v11434 = vmax.f32 %v11432, 1e-24
          %v11435 = vrsqrt.pop %v11433
          %v11436 = vrsqrt.pop %v11434
          %v11437 = vmul.f32 %v11407, %v11435
          %v11438 = vmul.f32 %v11408, %v11436
          %11439 = vst.msk [vmem:[#allocation7] sm:$0xff] %vm2329, %v11437
          %11440 = vst.msk [vmem:[#allocation7 + $0x8] sm:$0xff] %vm2329, %v11438
        $region98: #{_device_forward.1} parent=85 // pred_fallthru
          _
        // Predicated region
        $region99: #{_device_forward.1} parent=85 // pred_check
          %p11441 = pneg %p280
        $region100: #{_device_forward.1} parent=85 // pred_check_branch
          %11443 = sbr.rel (%p11441) target = $region102
        $region101: #{_device_forward.1} parent=85 // pred_region
          %s11445 = ssub.s32 256, 256
          %11446 = vsyncadd [#allocation6], %s11445
          %s11447 = sshll.u32 [#allocation5], 4
          %s11448 = int_to_ptr.vmem [resolvable:$true] %s11447
          %11453 = dma.vmem_to_hbm [thread:$0]  %s11448, 256, %s11, [#allocation6], 128, 128, 8
        $region102: #{_device_forward.1} parent=85 // pred_fallthru
          _
        // Predicated region
        $region103: #{_device_forward.1} parent=85 // pred_check
          %p11454 = pneg %p301
        $region104: #{_device_forward.1} parent=85 // pred_check_branch
          %11456 = sbr.rel (%p11454) target = $region106
        $region105: #{_device_forward.1} parent=85 // pred_region
          %s11458 = ssub.s32 256, 256
          %11459 = vsyncadd [#allocation8], %s11458
          %s11460 = sshll.u32 [#allocation7], 4
          %s11461 = int_to_ptr.vmem [resolvable:$true] %s11460
          %11466 = dma.vmem_to_hbm [thread:$0]  %s11461, 256, %s12, [#allocation8], 128, 128, 8
        $region106: #{_device_forward.1} parent=85 // pred_fallthru
          _
        // Predicated region
        $region107: #{_device_forward.1} parent=85 // pred_check
          %p11467 = pneg %p280
        $region108: #{_device_forward.1} parent=85 // pred_check_branch
          %11469 = sbr.rel (%p11467) target = $region110
        $region109: #{_device_forward.1} parent=85 // pred_region
          %11470 = dma.done [#allocation6], 256
        $region110: #{_device_forward.1} parent=85 // pred_fallthru
          _
        // Predicated region
        $region111: #{_device_forward.1} parent=85 // pred_check
          %p11471 = pneg %p301
        $region112: #{_device_forward.1} parent=85 // pred_check_branch
          %11473 = sbr.rel (%p11471) target = $region114
        $region113: #{_device_forward.1} parent=85 // pred_region
          %11474 = dma.done [#allocation8], 256
        $region114: #{_device_forward.1} parent=85 // pred_fallthru
          _
      $region86: #{_device_forward.1} parent=5 // pred_fallthru
        _
      %p11475 = scmp.le.s32.totalorder 2, %s21
      // Predicated region
      $region115: #{_device_forward.1} parent=5 // pred_check
        %p11476 = pneg %p11475
      $region116: #{_device_forward.1} parent=5 // pred_check_branch
        %11478 = sbr.rel (%p11476) target = $region118
      $region117: #{_device_forward.1} parent=5 // pred_region
        %s11479 = ssub.s32 %s21, 2
      $region118: #{_device_forward.1} parent=5 // pred_fallthru
        _
    $region6: #{_device_forward.1} parent=1 // loop_footer
      %s25 = sadd.s32 1, %s21
    $region7: #{_device_forward.1} parent=1 // loop_footer_branch
      %20 = sbr.rel target = $region3
    $region8: #{_device_forward.1} parent=1 // loop_exit
      _
    %11480 = vsyncpa [#allocation6], 1
    %s11481 = scalar_lea.sflag [#allocation6], 1
    %11482 = vsyncpa %s11481, 1
    %11483 = vsyncpa [#allocation8], 1

</llo_original>
